<compile_context>
chip_gen: v7x
topology: tpu7x:2x2x1
jax: 0.10.0
libtpu: 0.0.40
codegen_flags: <defaults>
</compile_context>

<pallas_src>
import functools
import math

import jax
import jax.numpy as jnp
from jax.experimental import pallas as pl
from jax.experimental.pallas import tpu as pltpu

LN_EPS = 1e-5                       # nn.LayerNorm default


# --------------------------------------------------------------------------
# Generation-aware VMEM budgeting
# --------------------------------------------------------------------------
def _round_up(x, m):
    return -(-x // m) * m


def _vmem_budgets():
    """(vmem_limit_bytes, per-step tile budget) derived from the chip's VMEM."""
    try:
        cap = int(pltpu.get_tpu_info().vmem_capacity_bytes)
    except Exception:
        cap = 64 * 1024 * 1024      # conservative v7x-sized fallback
    limit = (cap * 3) // 4          # 96 MiB on v5e/v6e, 48 MiB on v7x
    if cap >= 96 * 1024 * 1024:
        tile_budget = cap // 4      # 32 MiB on 128-MiB parts
    else:
        tile_budget = cap // 8      # 8 MiB on v7x
    return limit, tile_budget


def _layer_weight_bytes(E, H, ff):
    """Per-layer weight/bias VMEM (default pipeline double-buffers them)."""
    bf16, f32 = 2, 4
    w = (3 * E * E + E * E + E * ff + ff * E + 2 * E * H) * bf16
    b = (3 * E + E + ff + E + 4 * E) * f32
    return 2 * (w + b)


def _layer_tile_bytes(L, tn, E, H, ff):
    """Conservative per-grid-step VMEM footprint of the encoder-layer kernel:
    double-buffered bf16 in/out x-tiles + f32/bf16 intermediates, with
    sublane(8)/lane(128) padding included (compiler buffer reuse ignored)."""
    bf16, f32 = 2, 4
    rows = _round_up(L * tn, 8)
    tnr = _round_up(tn, 8)
    io = 2 * 2 * rows * E * bf16                       # x in + out, 2 bufs each
    qkv = rows * 3 * E * f32                           # fused qkv result
    body = 6 * rows * E * f32                          # xf, ctx, attn, y, ffn, y2
    ffn = rows * _round_up(ff, 128) * (f32 + bf16)     # relu hidden (+bf16 copy)
    att = (L * L) * 3 * tnr * 128 * f32                # (tn, H) score/prob temps
    att += 2 * rows * E * f32                          # q*k product / p-expand temps
    return io + qkv + body + ffn + att


def _choose_n_tile(L, N, E, H, ff, budget):
    """Largest N-tile (multiple of 8 dividing N, or N itself) fitting `budget`,
    preferring >= 2 grid steps (pipelining + dual-TC on v7x) when that does not
    starve the MXU of rows."""
    cands = sorted({d for d in range(8, N + 1, 8) if N % d == 0} | {N},
                   reverse=True)
    fitting = [t for t in cands if _layer_tile_bytes(L, t, E, H, ff) <= budget]
    if not fitting:
        fitting = [cands[-1]]
    best = fitting[0]
    multi = [t for t in fitting if t <= N // 2]
    if multi and (L * multi[0] >= 256 or L * best < 256):
        best = multi[0]
    return best


# --------------------------------------------------------------------------
# Encoder layer kernel (post-norm nn.TransformerEncoderLayer, ReLU FFN)
# --------------------------------------------------------------------------
def _layernorm(x, g, b):
    mean = jnp.mean(x, axis=-1, keepdims=True)
    var = jnp.mean((x - mean) ** 2, axis=-1, keepdims=True)
    return (x - mean) * jax.lax.rsqrt(var + LN_EPS) * g + b


def encoder_layer_kernel(x_ref, wqkv_ref, bqkv_ref, wo_ref, bo_ref,
                         ln1g_ref, ln1b_ref, w1_ref, b1_ref, w2_ref, b2_ref,
                         ln2g_ref, ln2b_ref, sel_ref, selt_ref,
                         o_ref, *, num_heads):
    """One encoder layer on one (L, tn, E) tile of the activations."""
    L, TN, E = x_ref.shape
    H = num_heads
    hd = E // H
    scale = 1.0 / math.sqrt(hd)
    rows = L * TN

    xb = x_ref[...].reshape(rows, E)          # bf16, rows ordered (l, n)
    xf = xb.astype(jnp.float32)

    # ---- fused q/k/v projection: bf16 MXU operands, f32 accumulation ----
    qkv = jnp.dot(xb, wqkv_ref[...],
                  preferred_element_type=jnp.float32) + bqkv_ref[...]
    # 128-aligned lane slices are free (E is a multiple of 128).
    q = (qkv[:, :E] * scale).reshape(L, TN, E)          # fold 1/sqrt(hd) into q
    k = qkv[:, E:2 * E].reshape(L, TN, E)
    v = qkv[:, 2 * E:].reshape(L, TN, E)

    sel = sel_ref[...]                        # (E, H)  1 if lane e belongs to head h
    selt = selt_ref[...]                      # (H, E)

    # ---- attention over the L axis (module batch_first=False semantics) ----
    # L is the module's batch and is tiny, so unroll over (l, m) pairs and do
    # the per-head reduce/expand with selector matmuls: no relayouts at all.
    # TODO(synk): for large L a batched-MXU attention path would be preferable.
    ctx_rows = []
    for l in range(L):
        ql = q[l]                                             # (TN, E) f32
        s_list = []
        for m in range(L):
            prod = (ql * k[m]).astype(jnp.bfloat16)           # (TN, E)
            s_list.append(jnp.dot(prod, sel,                  # (TN, H) f32
                                  preferred_element_type=jnp.float32))
        s_max = s_list[0]
        for s in s_list[1:]:
            s_max = jnp.maximum(s_max, s)
        e_list = [jnp.exp(s - s_max) for s in s_list]
        denom = e_list[0]
        for e in e_list[1:]:
            denom = denom + e
        inv = 1.0 / denom                                     # exact softmax denom
        ctx_l = None
        for m in range(L):
            p_m = (e_list[m] * inv).astype(jnp.bfloat16)      # (TN, H)
            p_exp = jnp.dot(p_m, selt,                        # (TN, E) f32
                            preferred_element_type=jnp.float32)
            term = p_exp * v[m]
            ctx_l = term if ctx_l is None else ctx_l + term
        ctx_rows.append(ctx_l)
    ctx = ctx_rows[0] if L == 1 else jnp.concatenate(ctx_rows, axis=0)

    attn = jnp.dot(ctx.astype(jnp.bfloat16), wo_ref[...],
                   preferred_element_type=jnp.float32) + bo_ref[...]

    # residual + LayerNorm 1 (dropout == identity), f32 vector math
    y = _layernorm(xf + attn, ln1g_ref[...], ln1b_ref[...])

    # ---- feed forward (ReLU) ----
    h = jnp.maximum(
        jnp.dot(y.astype(jnp.bfloat16), w1_ref[...],
                preferred_element_type=jnp.float32) + b1_ref[...], 0.0)
    f = jnp.dot(h.astype(jnp.bfloat16), w2_ref[...],
                preferred_element_type=jnp.float32) + b2_ref[...]

    # residual + LayerNorm 2
    y2 = _layernorm(y + f, ln2g_ref[...], ln2b_ref[...])

    o_ref[...] = y2.astype(jnp.bfloat16).reshape(L, TN, E)


def run_encoder_layer(x, lp, sel, selt, *, num_heads, vmem_limit, tile_budget):
    L, N, E = x.shape
    ff = lp['w1_t'].shape[1]
    budget = max(min(tile_budget, vmem_limit - _layer_weight_bytes(E, num_heads, ff)), 1)
    tn = _choose_n_tile(L, N, E, num_heads, ff, budget)

    args = (x, lp['wqkv_t'], lp['bqkv'], lp['wo_t'], lp['bo'],
            lp['ln1_g'], lp['ln1_b'], lp['w1_t'], lp['b1'],
            lp['w2_t'], lp['b2'], lp['ln2_g'], lp['ln2_b'], sel, selt)

    def full_spec(a):
        nd = a.ndim
        return pl.BlockSpec(a.shape, lambda j, _nd=nd: (0,) * _nd)

    in_specs = [pl.BlockSpec((L, tn, E), lambda j: (0, j, 0))]
    in_specs += [full_spec(a) for a in args[1:]]

    return pl.pallas_call(
        functools.partial(encoder_layer_kernel, num_heads=num_heads),
        out_shape=jax.ShapeDtypeStruct((L, N, E), jnp.bfloat16),
        grid=(N // tn,),
        in_specs=in_specs,
        out_specs=pl.BlockSpec((L, tn, E), lambda j: (0, j, 0)),
        compiler_params=pltpu.CompilerParams(
            dimension_semantics=("parallel",),
            vmem_limit_bytes=vmem_limit),
    )(*args)


# --------------------------------------------------------------------------
# Final vocab projection
# --------------------------------------------------------------------------
def logits_kernel(x_ref, w_ref, b_ref, o_ref):
    o_ref[...] = (jnp.dot(x_ref[...], w_ref[...],
                          preferred_element_type=jnp.float32) + b_ref[...])


def _logits_tiles(M, E, V, budget):
    bf16, f32 = 2, 4

    def fits(tm, tv):
        return (2 * tm * E * bf16 + 2 * E * tv * bf16 +
                2 * tm * tv * f32 + 2 * tv * f32) <= budget

    tms = [M] + [t for t in (2048, 1024, 512, 256, 128, 64, 32, 16, 8)
                 if t < M and M % t == 0]
    tvs = [t for t in (8192, 4096, 2048, 1024, 512, 256, 128)
           if t <= V and V % t == 0] or [V]
    # Maximize the token tile first (fewest passes over w_t), then lane width.
    for tm in tms:
        for tv in tvs:
            if fits(tm, tv):
                return tm, tv
    return tms[-1], tvs[-1]
    # TODO(synk): vocab sizes not divisible by 128 (e.g. 50257) should be padded
    # to a lane-dense multiple at init time.


def project_logits(xf, w_t, b, *, vmem_limit, tile_budget):
    """Output projection, tiled over tokens and vocab; vocab is the OUTER grid
    axis so each (E, tile_v) weight tile is DMA'd once and reused across all
    token tiles."""
    M, E = xf.shape
    V = w_t.shape[1]
    tm, tv = _logits_tiles(M, E, V, tile_budget)
    return pl.pallas_call(
        logits_kernel,
        out_shape=jax.ShapeDtypeStruct((M, V), jnp.float32),
        grid=(V // tv, M // tm),
        in_specs=[pl.BlockSpec((tm, E), lambda i, j: (j, 0)),
                  pl.BlockSpec((E, tv), lambda i, j: (0, i)),
                  pl.BlockSpec((1, tv), lambda i, j: (0, i))],
        out_specs=pl.BlockSpec((tm, tv), lambda i, j: (j, i)),
        compiler_params=pltpu.CompilerParams(
            dimension_semantics=("parallel", "parallel"),
            vmem_limit_bytes=vmem_limit),
    )(xf, w_t, b.reshape(1, V))


# --------------------------------------------------------------------------
# Full forward pass + parameter construction
# --------------------------------------------------------------------------
def minimal_llm_forward(input_ids, params, *, num_heads):
    B, S = input_ids.shape
    # token + positional embeddings (gather is glue, kept in plain JAX)
    emb = jnp.take(params['token_emb'], input_ids, axis=0)       # (B, S, E)
    emb = emb + params['pos_emb'][:, :S, :]
    x = emb.astype(jnp.bfloat16)                                 # (L=B, N=S, E)

    vmem_limit, tile_budget = _vmem_budgets()
    for lp in params['layers']:
        x = run_encoder_layer(x, lp, params['sel'], params['selt'],
                              num_heads=num_heads,
                              vmem_limit=vmem_limit, tile_budget=tile_budget)
    E = x.shape[-1]
    logits = project_logits(x.reshape(B * S, E), params['out_w_t'],
                            params['out_b'],
                            vmem_limit=vmem_limit, tile_budget=tile_budget)
    return logits.reshape(B, S, -1)


def _head_selectors(embed_dim, num_heads):
    hd = embed_dim // num_heads
    heads = jnp.arange(embed_dim) // hd
    sel = (heads[:, None] == jnp.arange(num_heads)[None, :]).astype(jnp.bfloat16)
    return sel, jnp.transpose(sel)            # (E, H), (H, E)


def init_params(key, vocab_size, embed_dim, num_heads, num_layers, ff_dim, max_pos):
    ks = jax.random.split(key, 3 + num_layers)
    scale = 0.02

    def w(k, shape):
        # matmul weights stored pre-transposed (in, out) in bf16; kernels do
        # x_bf16 @ W + b with f32 accumulation.
        return (scale * jax.random.normal(k, shape, jnp.float32)).astype(jnp.bfloat16)

    sel, selt = _head_selectors(embed_dim, num_heads)
    params = {
        'token_emb': scale * jax.random.normal(ks[0], (vocab_size, embed_dim), jnp.float32),
        'pos_emb': scale * jax.random.normal(ks[1], (1, max_pos, embed_dim), jnp.float32),
        'out_w_t': w(ks[2], (embed_dim, vocab_size)),
        'out_b': jnp.zeros((vocab_size,), jnp.float32),
        'sel': sel,
        'selt': selt,
        'layers': [],
    }
    for i in range(num_layers):
        lk = jax.random.split(ks[3 + i], 4)
        params['layers'].append({
            'wqkv_t': w(lk[0], (embed_dim, 3 * embed_dim)),
            'bqkv': jnp.zeros((1, 3 * embed_dim), jnp.float32),
            'wo_t': w(lk[1], (embed_dim, embed_dim)),
            'bo': jnp.zeros((1, embed_dim), jnp.float32),
            'ln1_g': jnp.ones((1, embed_dim), jnp.float32),
            'ln1_b': jnp.zeros((1, embed_dim), jnp.float32),
            'w1_t': w(lk[2], (embed_dim, ff_dim)),
            'b1': jnp.zeros((1, ff_dim), jnp.float32),
            'w2_t': w(lk[3], (ff_dim, embed_dim)),
            'b2': jnp.zeros((1, embed_dim), jnp.float32),
            'ln2_g': jnp.ones((1, embed_dim), jnp.float32),
            'ln2_b': jnp.zeros((1, embed_dim), jnp.float32),
        })
    return params


if __name__ == "__main__":
    # Small, lane-dense configuration consistent with the module's structure
    # (head_dim = 64 matches the 768/12 reference).
    vocab_size = 1024
    embed_dim = 256
    num_heads = 4
    num_layers = 2
    ff_dim = 512
    max_pos = 32
    batch, seq = 2, 16

    key = jax.random.PRNGKey(0)
    k_params, k_ids = jax.random.split(key)
    params = init_params(k_params, vocab_size, embed_dim, num_heads,
                         num_layers, ff_dim, max_pos)
    input_ids = jax.random.randint(k_ids, (batch, seq), 0, vocab_size, dtype=jnp.int32)

    fwd = jax.jit(functools.partial(minimal_llm_forward, num_heads=num_heads))
    logits = fwd(input_ids, params)
    jax.block_until_ready(logits)
    assert logits.shape == (batch, seq, vocab_size), logits.shape
    assert bool(jnp.isfinite(logits).all())
    print("KERNEL_OK")
</pallas_src>

<mosaic_0001>
module attributes {stable_mosaic.version = 11 : i64} {
  func.func @encoder_layer_kernel(%arg0: i32, %arg1: memref<2x8x256xbf16, #tpu.memory_space<vmem>>, %arg2: memref<256x768xbf16, #tpu.memory_space<vmem>>, %arg3: memref<1x768xf32, #tpu.memory_space<vmem>>, %arg4: memref<256x256xbf16, #tpu.memory_space<vmem>>, %arg5: memref<1x256xf32, #tpu.memory_space<vmem>>, %arg6: memref<1x256xf32, #tpu.memory_space<vmem>>, %arg7: memref<1x256xf32, #tpu.memory_space<vmem>>, %arg8: memref<256x512xbf16, #tpu.memory_space<vmem>>, %arg9: memref<1x512xf32, #tpu.memory_space<vmem>>, %arg10: memref<512x256xbf16, #tpu.memory_space<vmem>>, %arg11: memref<1x256xf32, #tpu.memory_space<vmem>>, %arg12: memref<1x256xf32, #tpu.memory_space<vmem>>, %arg13: memref<1x256xf32, #tpu.memory_space<vmem>>, %arg14: memref<256x4xbf16, #tpu.memory_space<vmem>>, %arg15: memref<4x256xbf16, #tpu.memory_space<vmem>>, %arg16: memref<2x8x256xbf16, #tpu.memory_space<vmem>>) attributes {dimension_semantics = [#tpu.dimension_semantics<parallel>], iteration_bounds = array<i64: 2>, scalar_prefetch = 0 : i64, scratch_operands = 0 : i64, tpu.core_type = #tpu.core_type<tc>, window_params = [{transform_indices = @transform_0, window_bounds = array<i64: 2, 8, 256>}, {pipeline_mode = #tpu.pipeline_mode<synchronous>, transform_indices = @transform_1, window_bounds = array<i64: 256, 768>}, {pipeline_mode = #tpu.pipeline_mode<synchronous>, transform_indices = @transform_2, window_bounds = array<i64: 1, 768>}, {pipeline_mode = #tpu.pipeline_mode<synchronous>, transform_indices = @transform_3, window_bounds = array<i64: 256, 256>}, {pipeline_mode = #tpu.pipeline_mode<synchronous>, transform_indices = @transform_4, window_bounds = array<i64: 1, 256>}, {pipeline_mode = #tpu.pipeline_mode<synchronous>, transform_indices = @transform_5, window_bounds = array<i64: 1, 256>}, {pipeline_mode = #tpu.pipeline_mode<synchronous>, transform_indices = @transform_6, window_bounds = array<i64: 1, 256>}, {pipeline_mode = #tpu.pipeline_mode<synchronous>, transform_indices = @transform_7, window_bounds = array<i64: 256, 512>}, {pipeline_mode = #tpu.pipeline_mode<synchronous>, transform_indices = @transform_8, window_bounds = array<i64: 1, 512>}, {pipeline_mode = #tpu.pipeline_mode<synchronous>, transform_indices = @transform_9, window_bounds = array<i64: 512, 256>}, {pipeline_mode = #tpu.pipeline_mode<synchronous>, transform_indices = @transform_10, window_bounds = array<i64: 1, 256>}, {pipeline_mode = #tpu.pipeline_mode<synchronous>, transform_indices = @transform_11, window_bounds = array<i64: 1, 256>}, {pipeline_mode = #tpu.pipeline_mode<synchronous>, transform_indices = @transform_12, window_bounds = array<i64: 1, 256>}, {pipeline_mode = #tpu.pipeline_mode<synchronous>, transform_indices = @transform_13, window_bounds = array<i64: 256, 4>}, {pipeline_mode = #tpu.pipeline_mode<synchronous>, transform_indices = @transform_14, window_bounds = array<i64: 4, 256>}, {transform_indices = @transform_15, window_bounds = array<i64: 2, 8, 256>}]} {
    %c0 = arith.constant 0 : index
    %c0_0 = arith.constant 0 : index
    %c0_1 = arith.constant 0 : index
    %0 = vector.load %arg1[%c0, %c0_0, %c0_1] : memref<2x8x256xbf16, #tpu.memory_space<vmem>>, vector<2x8x256xbf16>
    %1 = vector.shape_cast %0 : vector<2x8x256xbf16> to vector<16x256xbf16>
    %2 = arith.extf %1 : vector<16x256xbf16> to vector<16x256xf32>
    %c0_2 = arith.constant 0 : index
    %c0_3 = arith.constant 0 : index
    %3 = vector.load %arg2[%c0_2, %c0_3] : memref<256x768xbf16, #tpu.memory_space<vmem>>, vector<256x768xbf16>
    %cst = arith.constant dense<0.000000e+00> : vector<16x768xf32>
    %4 = tpu.matmul %1, %3, %cst {dimension_numbers = #tpu.dot_dimension_numbers<[1], [0], [0], [1], [0, 0, 1, 1], [], []>} : vector<16x256xbf16>, vector<256x768xbf16>, vector<16x768xf32> -> vector<16x768xf32>
    %c0_4 = arith.constant 0 : index
    %c0_5 = arith.constant 0 : index
    %5 = vector.load %arg3[%c0_4, %c0_5] : memref<1x768xf32, #tpu.memory_space<vmem>>, vector<1x768xf32>
    %6 = vector.broadcast %5 : vector<1x768xf32> to vector<16x768xf32>
    %7 = arith.addf %4, %6 : vector<16x768xf32>
    %8 = vector.extract_strided_slice %7 {offsets = [0, 0], sizes = [16, 256], strides = [1, 1]} : vector<16x768xf32> to vector<16x256xf32>
    %cst_6 = arith.constant 1.250000e-01 : f32
    %9 = vector.broadcast %cst_6 : f32 to vector<16x256xf32>
    %10 = arith.mulf %8, %9 : vector<16x256xf32>
    %11 = vector.shape_cast %10 : vector<16x256xf32> to vector<2x8x256xf32>
    %12 = vector.extract_strided_slice %7 {offsets = [0, 256], sizes = [16, 256], strides = [1, 1]} : vector<16x768xf32> to vector<16x256xf32>
    %13 = vector.shape_cast %12 : vector<16x256xf32> to vector<2x8x256xf32>
    %14 = vector.extract_strided_slice %7 {offsets = [0, 512], sizes = [16, 256], strides = [1, 1]} : vector<16x768xf32> to vector<16x256xf32>
    %15 = vector.shape_cast %14 : vector<16x256xf32> to vector<2x8x256xf32>
    %c0_7 = arith.constant 0 : index
    %c0_8 = arith.constant 0 : index
    %16 = vector.load %arg14[%c0_7, %c0_8] : memref<256x4xbf16, #tpu.memory_space<vmem>>, vector<256x4xbf16>
    %c0_9 = arith.constant 0 : index
    %c0_10 = arith.constant 0 : index
    %17 = vector.load %arg15[%c0_9, %c0_10] : memref<4x256xbf16, #tpu.memory_space<vmem>>, vector<4x256xbf16>
    %18 = vector.extract_strided_slice %11 {offsets = [0, 0, 0], sizes = [1, 8, 256], strides = [1, 1, 1]} : vector<2x8x256xf32> to vector<1x8x256xf32>
    %19 = vector.shape_cast %18 : vector<1x8x256xf32> to vector<8x256xf32>
    %20 = vector.extract_strided_slice %13 {offsets = [0, 0, 0], sizes = [1, 8, 256], strides = [1, 1, 1]} : vector<2x8x256xf32> to vector<1x8x256xf32>
    %21 = vector.shape_cast %20 : vector<1x8x256xf32> to vector<8x256xf32>
    %22 = arith.mulf %19, %21 : vector<8x256xf32>
    %23 = arith.truncf %22 : vector<8x256xf32> to vector<8x256xbf16>
    %cst_11 = arith.constant dense<0.000000e+00> : vector<8x4xf32>
    %24 = tpu.matmul %23, %16, %cst_11 {dimension_numbers = #tpu.dot_dimension_numbers<[1], [0], [0], [1], [0, 0, 1, 1], [], []>} : vector<8x256xbf16>, vector<256x4xbf16>, vector<8x4xf32> -> vector<8x4xf32>
    %25 = vector.extract_strided_slice %13 {offsets = [1, 0, 0], sizes = [1, 8, 256], strides = [1, 1, 1]} : vector<2x8x256xf32> to vector<1x8x256xf32>
    %26 = vector.shape_cast %25 : vector<1x8x256xf32> to vector<8x256xf32>
    %27 = arith.mulf %19, %26 : vector<8x256xf32>
    %28 = arith.truncf %27 : vector<8x256xf32> to vector<8x256xbf16>
    %cst_12 = arith.constant dense<0.000000e+00> : vector<8x4xf32>
    %29 = tpu.matmul %28, %16, %cst_12 {dimension_numbers = #tpu.dot_dimension_numbers<[1], [0], [0], [1], [0, 0, 1, 1], [], []>} : vector<8x256xbf16>, vector<256x4xbf16>, vector<8x4xf32> -> vector<8x4xf32>
    %30 = arith.maximumf %24, %29 : vector<8x4xf32>
    %31 = arith.subf %24, %30 : vector<8x4xf32>
    %32 = math.exp %31 : vector<8x4xf32>
    %33 = arith.subf %29, %30 : vector<8x4xf32>
    %34 = math.exp %33 : vector<8x4xf32>
    %35 = arith.addf %32, %34 : vector<8x4xf32>
    %cst_13 = arith.constant 1.000000e+00 : f32
    %36 = vector.broadcast %cst_13 : f32 to vector<8x4xf32>
    %37 = arith.divf %36, %35 : vector<8x4xf32>
    %38 = arith.mulf %32, %37 : vector<8x4xf32>
    %39 = arith.truncf %38 : vector<8x4xf32> to vector<8x4xbf16>
    %cst_14 = arith.constant dense<0.000000e+00> : vector<8x256xf32>
    %40 = tpu.matmul %39, %17, %cst_14 {dimension_numbers = #tpu.dot_dimension_numbers<[1], [0], [0], [1], [0, 0, 1, 1], [], []>} : vector<8x4xbf16>, vector<4x256xbf16>, vector<8x256xf32> -> vector<8x256xf32>
    %41 = vector.extract_strided_slice %15 {offsets = [0, 0, 0], sizes = [1, 8, 256], strides = [1, 1, 1]} : vector<2x8x256xf32> to vector<1x8x256xf32>
    %42 = vector.shape_cast %41 : vector<1x8x256xf32> to vector<8x256xf32>
    %43 = arith.mulf %40, %42 : vector<8x256xf32>
    %44 = arith.mulf %34, %37 : vector<8x4xf32>
    %45 = arith.truncf %44 : vector<8x4xf32> to vector<8x4xbf16>
    %cst_15 = arith.constant dense<0.000000e+00> : vector<8x256xf32>
    %46 = tpu.matmul %45, %17, %cst_15 {dimension_numbers = #tpu.dot_dimension_numbers<[1], [0], [0], [1], [0, 0, 1, 1], [], []>} : vector<8x4xbf16>, vector<4x256xbf16>, vector<8x256xf32> -> vector<8x256xf32>
    %47 = vector.extract_strided_slice %15 {offsets = [1, 0, 0], sizes = [1, 8, 256], strides = [1, 1, 1]} : vector<2x8x256xf32> to vector<1x8x256xf32>
    %48 = vector.shape_cast %47 : vector<1x8x256xf32> to vector<8x256xf32>
    %49 = arith.mulf %46, %48 : vector<8x256xf32>
    %50 = arith.addf %43, %49 : vector<8x256xf32>
    %51 = vector.extract_strided_slice %11 {offsets = [1, 0, 0], sizes = [1, 8, 256], strides = [1, 1, 1]} : vector<2x8x256xf32> to vector<1x8x256xf32>
    %52 = vector.shape_cast %51 : vector<1x8x256xf32> to vector<8x256xf32>
    %53 = vector.extract_strided_slice %13 {offsets = [0, 0, 0], sizes = [1, 8, 256], strides = [1, 1, 1]} : vector<2x8x256xf32> to vector<1x8x256xf32>
    %54 = vector.shape_cast %53 : vector<1x8x256xf32> to vector<8x256xf32>
    %55 = arith.mulf %52, %54 : vector<8x256xf32>
    %56 = arith.truncf %55 : vector<8x256xf32> to vector<8x256xbf16>
    %cst_16 = arith.constant dense<0.000000e+00> : vector<8x4xf32>
    %57 = tpu.matmul %56, %16, %cst_16 {dimension_numbers = #tpu.dot_dimension_numbers<[1], [0], [0], [1], [0, 0, 1, 1], [], []>} : vector<8x256xbf16>, vector<256x4xbf16>, vector<8x4xf32> -> vector<8x4xf32>
    %58 = vector.extract_strided_slice %13 {offsets = [1, 0, 0], sizes = [1, 8, 256], strides = [1, 1, 1]} : vector<2x8x256xf32> to vector<1x8x256xf32>
    %59 = vector.shape_cast %58 : vector<1x8x256xf32> to vector<8x256xf32>
    %60 = arith.mulf %52, %59 : vector<8x256xf32>
    %61 = arith.truncf %60 : vector<8x256xf32> to vector<8x256xbf16>
    %cst_17 = arith.constant dense<0.000000e+00> : vector<8x4xf32>
    %62 = tpu.matmul %61, %16, %cst_17 {dimension_numbers = #tpu.dot_dimension_numbers<[1], [0], [0], [1], [0, 0, 1, 1], [], []>} : vector<8x256xbf16>, vector<256x4xbf16>, vector<8x4xf32> -> vector<8x4xf32>
    %63 = arith.maximumf %57, %62 : vector<8x4xf32>
    %64 = arith.subf %57, %63 : vector<8x4xf32>
    %65 = math.exp %64 : vector<8x4xf32>
    %66 = arith.subf %62, %63 : vector<8x4xf32>
    %67 = math.exp %66 : vector<8x4xf32>
    %68 = arith.addf %65, %67 : vector<8x4xf32>
    %cst_18 = arith.constant 1.000000e+00 : f32
    %69 = vector.broadcast %cst_18 : f32 to vector<8x4xf32>
    %70 = arith.divf %69, %68 : vector<8x4xf32>
    %71 = arith.mulf %65, %70 : vector<8x4xf32>
    %72 = arith.truncf %71 : vector<8x4xf32> to vector<8x4xbf16>
    %cst_19 = arith.constant dense<0.000000e+00> : vector<8x256xf32>
    %73 = tpu.matmul %72, %17, %cst_19 {dimension_numbers = #tpu.dot_dimension_numbers<[1], [0], [0], [1], [0, 0, 1, 1], [], []>} : vector<8x4xbf16>, vector<4x256xbf16>, vector<8x256xf32> -> vector<8x256xf32>
    %74 = vector.extract_strided_slice %15 {offsets = [0, 0, 0], sizes = [1, 8, 256], strides = [1, 1, 1]} : vector<2x8x256xf32> to vector<1x8x256xf32>
    %75 = vector.shape_cast %74 : vector<1x8x256xf32> to vector<8x256xf32>
    %76 = arith.mulf %73, %75 : vector<8x256xf32>
    %77 = arith.mulf %67, %70 : vector<8x4xf32>
    %78 = arith.truncf %77 : vector<8x4xf32> to vector<8x4xbf16>
    %cst_20 = arith.constant dense<0.000000e+00> : vector<8x256xf32>
    %79 = tpu.matmul %78, %17, %cst_20 {dimension_numbers = #tpu.dot_dimension_numbers<[1], [0], [0], [1], [0, 0, 1, 1], [], []>} : vector<8x4xbf16>, vector<4x256xbf16>, vector<8x256xf32> -> vector<8x256xf32>
    %80 = vector.extract_strided_slice %15 {offsets = [1, 0, 0], sizes = [1, 8, 256], strides = [1, 1, 1]} : vector<2x8x256xf32> to vector<1x8x256xf32>
    %81 = vector.shape_cast %80 : vector<1x8x256xf32> to vector<8x256xf32>
    %82 = arith.mulf %79, %81 : vector<8x256xf32>
    %83 = arith.addf %76, %82 : vector<8x256xf32>
    %84 = tpu.concatenate %50, %83 in 0 : vector<8x256xf32>, vector<8x256xf32> -> vector<16x256xf32>
    %85 = arith.truncf %84 : vector<16x256xf32> to vector<16x256xbf16>
    %c0_21 = arith.constant 0 : index
    %c0_22 = arith.constant 0 : index
    %86 = vector.load %arg4[%c0_21, %c0_22] : memref<256x256xbf16, #tpu.memory_space<vmem>>, vector<256x256xbf16>
    %cst_23 = arith.constant dense<0.000000e+00> : vector<16x256xf32>
    %87 = tpu.matmul %85, %86, %cst_23 {dimension_numbers = #tpu.dot_dimension_numbers<[1], [0], [0], [1], [0, 0, 1, 1], [], []>} : vector<16x256xbf16>, vector<256x256xbf16>, vector<16x256xf32> -> vector<16x256xf32>
    %c0_24 = arith.constant 0 : index
    %c0_25 = arith.constant 0 : index
    %88 = vector.load %arg5[%c0_24, %c0_25] : memref<1x256xf32, #tpu.memory_space<vmem>>, vector<1x256xf32>
    %89 = vector.broadcast %88 : vector<1x256xf32> to vector<16x256xf32>
    %90 = arith.addf %87, %89 : vector<16x256xf32>
    %91 = arith.addf %2, %90 : vector<16x256xf32>
    %c0_26 = arith.constant 0 : index
    %c0_27 = arith.constant 0 : index
    %92 = vector.load %arg6[%c0_26, %c0_27] : memref<1x256xf32, #tpu.memory_space<vmem>>, vector<1x256xf32>
    %c0_28 = arith.constant 0 : index
    %c0_29 = arith.constant 0 : index
    %93 = vector.load %arg7[%c0_28, %c0_29] : memref<1x256xf32, #tpu.memory_space<vmem>>, vector<1x256xf32>
    %cst_30 = arith.constant dense<0.000000e+00> : vector<16xf32>
    %94 = vector.multi_reduction <add>, %91, %cst_30 [1] : vector<16x256xf32> to vector<16xf32>
    %95 = vector.shape_cast %94 : vector<16xf32> to vector<16x1xf32>
    %cst_31 = arith.constant 2.560000e+02 : f32
    %96 = vector.broadcast %cst_31 : f32 to vector<16x1xf32>
    %97 = arith.divf %95, %96 : vector<16x1xf32>
    %98 = vector.broadcast %97 : vector<16x1xf32> to vector<16x256xf32>
    %99 = arith.subf %91, %98 : vector<16x256xf32>
    %100 = arith.mulf %99, %99 : vector<16x256xf32>
    %cst_32 = arith.constant dense<0.000000e+00> : vector<16xf32>
    %101 = vector.multi_reduction <add>, %100, %cst_32 [1] : vector<16x256xf32> to vector<16xf32>
    %102 = vector.shape_cast %101 : vector<16xf32> to vector<16x1xf32>
    %cst_33 = arith.constant 2.560000e+02 : f32
    %103 = vector.broadcast %cst_33 : f32 to vector<16x1xf32>
    %104 = arith.divf %102, %103 : vector<16x1xf32>
    %105 = vector.broadcast %97 : vector<16x1xf32> to vector<16x256xf32>
    %106 = arith.subf %91, %105 : vector<16x256xf32>
    %cst_34 = arith.constant 9.99999974E-6 : f32
    %107 = vector.broadcast %cst_34 : f32 to vector<16x1xf32>
    %108 = arith.addf %104, %107 : vector<16x1xf32>
    %109 = math.rsqrt %108 : vector<16x1xf32>
    %110 = vector.broadcast %109 : vector<16x1xf32> to vector<16x256xf32>
    %111 = arith.mulf %106, %110 : vector<16x256xf32>
    %112 = vector.broadcast %92 : vector<1x256xf32> to vector<16x256xf32>
    %113 = arith.mulf %111, %112 : vector<16x256xf32>
    %114 = vector.broadcast %93 : vector<1x256xf32> to vector<16x256xf32>
    %115 = arith.addf %113, %114 : vector<16x256xf32>
    %116 = arith.truncf %115 : vector<16x256xf32> to vector<16x256xbf16>
    %c0_35 = arith.constant 0 : index
    %c0_36 = arith.constant 0 : index
    %117 = vector.load %arg8[%c0_35, %c0_36] : memref<256x512xbf16, #tpu.memory_space<vmem>>, vector<256x512xbf16>
    %cst_37 = arith.constant dense<0.000000e+00> : vector<16x512xf32>
    %118 = tpu.matmul %116, %117, %cst_37 {dimension_numbers = #tpu.dot_dimension_numbers<[1], [0], [0], [1], [0, 0, 1, 1], [], []>} : vector<16x256xbf16>, vector<256x512xbf16>, vector<16x512xf32> -> vector<16x512xf32>
    %c0_38 = arith.constant 0 : index
    %c0_39 = arith.constant 0 : index
    %119 = vector.load %arg9[%c0_38, %c0_39] : memref<1x512xf32, #tpu.memory_space<vmem>>, vector<1x512xf32>
    %120 = vector.broadcast %119 : vector<1x512xf32> to vector<16x512xf32>
    %121 = arith.addf %118, %120 : vector<16x512xf32>
    %cst_40 = arith.constant 0.000000e+00 : f32
    %122 = vector.broadcast %cst_40 : f32 to vector<16x512xf32>
    %123 = arith.maximumf %121, %122 : vector<16x512xf32>
    %124 = arith.truncf %123 : vector<16x512xf32> to vector<16x512xbf16>
    %c0_41 = arith.constant 0 : index
    %c0_42 = arith.constant 0 : index
    %125 = vector.load %arg10[%c0_41, %c0_42] : memref<512x256xbf16, #tpu.memory_space<vmem>>, vector<512x256xbf16>
    %cst_43 = arith.constant dense<0.000000e+00> : vector<16x256xf32>
    %126 = tpu.matmul %124, %125, %cst_43 {dimension_numbers = #tpu.dot_dimension_numbers<[1], [0], [0], [1], [0, 0, 1, 1], [], []>} : vector<16x512xbf16>, vector<512x256xbf16>, vector<16x256xf32> -> vector<16x256xf32>
    %c0_44 = arith.constant 0 : index
    %c0_45 = arith.constant 0 : index
    %127 = vector.load %arg11[%c0_44, %c0_45] : memref<1x256xf32, #tpu.memory_space<vmem>>, vector<1x256xf32>
    %128 = vector.broadcast %127 : vector<1x256xf32> to vector<16x256xf32>
    %129 = arith.addf %126, %128 : vector<16x256xf32>
    %130 = arith.addf %115, %129 : vector<16x256xf32>
    %c0_46 = arith.constant 0 : index
    %c0_47 = arith.constant 0 : index
    %131 = vector.load %arg12[%c0_46, %c0_47] : memref<1x256xf32, #tpu.memory_space<vmem>>, vector<1x256xf32>
    %c0_48 = arith.constant 0 : index
    %c0_49 = arith.constant 0 : index
    %132 = vector.load %arg13[%c0_48, %c0_49] : memref<1x256xf32, #tpu.memory_space<vmem>>, vector<1x256xf32>
    %cst_50 = arith.constant dense<0.000000e+00> : vector<16xf32>
    %133 = vector.multi_reduction <add>, %130, %cst_50 [1] : vector<16x256xf32> to vector<16xf32>
    %134 = vector.shape_cast %133 : vector<16xf32> to vector<16x1xf32>
    %cst_51 = arith.constant 2.560000e+02 : f32
    %135 = vector.broadcast %cst_51 : f32 to vector<16x1xf32>
    %136 = arith.divf %134, %135 : vector<16x1xf32>
    %137 = vector.broadcast %136 : vector<16x1xf32> to vector<16x256xf32>
    %138 = arith.subf %130, %137 : vector<16x256xf32>
    %139 = arith.mulf %138, %138 : vector<16x256xf32>
    %cst_52 = arith.constant dense<0.000000e+00> : vector<16xf32>
    %140 = vector.multi_reduction <add>, %139, %cst_52 [1] : vector<16x256xf32> to vector<16xf32>
    %141 = vector.shape_cast %140 : vector<16xf32> to vector<16x1xf32>
    %cst_53 = arith.constant 2.560000e+02 : f32
    %142 = vector.broadcast %cst_53 : f32 to vector<16x1xf32>
    %143 = arith.divf %141, %142 : vector<16x1xf32>
    %144 = vector.broadcast %136 : vector<16x1xf32> to vector<16x256xf32>
    %145 = arith.subf %130, %144 : vector<16x256xf32>
    %cst_54 = arith.constant 9.99999974E-6 : f32
    %146 = vector.broadcast %cst_54 : f32 to vector<16x1xf32>
    %147 = arith.addf %143, %146 : vector<16x1xf32>
    %148 = math.rsqrt %147 : vector<16x1xf32>
    %149 = vector.broadcast %148 : vector<16x1xf32> to vector<16x256xf32>
    %150 = arith.mulf %145, %149 : vector<16x256xf32>
    %151 = vector.broadcast %131 : vector<1x256xf32> to vector<16x256xf32>
    %152 = arith.mulf %150, %151 : vector<16x256xf32>
    %153 = vector.broadcast %132 : vector<1x256xf32> to vector<16x256xf32>
    %154 = arith.addf %152, %153 : vector<16x256xf32>
    %155 = arith.truncf %154 : vector<16x256xf32> to vector<16x256xbf16>
    %156 = vector.shape_cast %155 : vector<16x256xbf16> to vector<2x8x256xbf16>
    %c0_55 = arith.constant 0 : index
    %c0_56 = arith.constant 0 : index
    %c0_57 = arith.constant 0 : index
    %157 = vector.load %arg16[%c0_55, %c0_56, %c0_57] : memref<2x8x256xbf16, #tpu.memory_space<vmem>>, vector<2x8x256xbf16>
    tpu.vector_store %arg16[%c0_55, %c0_56, %c0_57], %156 {strides = array<i32>} : memref<2x8x256xbf16, #tpu.memory_space<vmem>>, vector<2x8x256xbf16>,
    return
  }
  func.func @transform_0(%arg0: i32) -> (i32, i32, i32) {
    %c0_i32 = arith.constant 0 : i32
    %c0_i32_0 = arith.constant 0 : i32
    %c0_i32_1 = arith.constant 0 : i32
    return %c0_i32, %arg0, %c0_i32_0 : i32, i32, i32
  }
  func.func @transform_1(%arg0: i32) -> (i32, i32) {
    %c0_i32 = arith.constant 0 : i32
    %c0_i32_0 = arith.constant 0 : i32
    %c0_i32_1 = arith.constant 0 : i32
    return %c0_i32, %c0_i32_0 : i32, i32
  }
  func.func @transform_2(%arg0: i32) -> (i32, i32) {
    %c0_i32 = arith.constant 0 : i32
    %c0_i32_0 = arith.constant 0 : i32
    %c0_i32_1 = arith.constant 0 : i32
    return %c0_i32, %c0_i32_0 : i32, i32
  }
  func.func @transform_3(%arg0: i32) -> (i32, i32) {
    %c0_i32 = arith.constant 0 : i32
    %c0_i32_0 = arith.constant 0 : i32
    %c0_i32_1 = arith.constant 0 : i32
    return %c0_i32, %c0_i32_0 : i32, i32
  }
  func.func @transform_4(%arg0: i32) -> (i32, i32) {
    %c0_i32 = arith.constant 0 : i32
    %c0_i32_0 = arith.constant 0 : i32
    %c0_i32_1 = arith.constant 0 : i32
    return %c0_i32, %c0_i32_0 : i32, i32
  }
  func.func @transform_5(%arg0: i32) -> (i32, i32) {
    %c0_i32 = arith.constant 0 : i32
    %c0_i32_0 = arith.constant 0 : i32
    %c0_i32_1 = arith.constant 0 : i32
    return %c0_i32, %c0_i32_0 : i32, i32
  }
  func.func @transform_6(%arg0: i32) -> (i32, i32) {
    %c0_i32 = arith.constant 0 : i32
    %c0_i32_0 = arith.constant 0 : i32
    %c0_i32_1 = arith.constant 0 : i32
    return %c0_i32, %c0_i32_0 : i32, i32
  }
  func.func @transform_7(%arg0: i32) -> (i32, i32) {
    %c0_i32 = arith.constant 0 : i32
    %c0_i32_0 = arith.constant 0 : i32
    %c0_i32_1 = arith.constant 0 : i32
    return %c0_i32, %c0_i32_0 : i32, i32
  }
  func.func @transform_8(%arg0: i32) -> (i32, i32) {
    %c0_i32 = arith.constant 0 : i32
    %c0_i32_0 = arith.constant 0 : i32
    %c0_i32_1 = arith.constant 0 : i32
    return %c0_i32, %c0_i32_0 : i32, i32
  }
  func.func @transform_9(%arg0: i32) -> (i32, i32) {
    %c0_i32 = arith.constant 0 : i32
    %c0_i32_0 = arith.constant 0 : i32
    %c0_i32_1 = arith.constant 0 : i32
    return %c0_i32, %c0_i32_0 : i32, i32
  }
  func.func @transform_10(%arg0: i32) -> (i32, i32) {
    %c0_i32 = arith.constant 0 : i32
    %c0_i32_0 = arith.constant 0 : i32
    %c0_i32_1 = arith.constant 0 : i32
    return %c0_i32, %c0_i32_0 : i32, i32
  }
  func.func @transform_11(%arg0: i32) -> (i32, i32) {
    %c0_i32 = arith.constant 0 : i32
    %c0_i32_0 = arith.constant 0 : i32
    %c0_i32_1 = arith.constant 0 : i32
    return %c0_i32, %c0_i32_0 : i32, i32
  }
  func.func @transform_12(%arg0: i32) -> (i32, i32) {
    %c0_i32 = arith.constant 0 : i32
    %c0_i32_0 = arith.constant 0 : i32
    %c0_i32_1 = arith.constant 0 : i32
    return %c0_i32, %c0_i32_0 : i32, i32
  }
  func.func @transform_13(%arg0: i32) -> (i32, i32) {
    %c0_i32 = arith.constant 0 : i32
    %c0_i32_0 = arith.constant 0 : i32
    %c0_i32_1 = arith.constant 0 : i32
    return %c0_i32, %c0_i32_0 : i32, i32
  }
  func.func @transform_14(%arg0: i32) -> (i32, i32) {
    %c0_i32 = arith.constant 0 : i32
    %c0_i32_0 = arith.constant 0 : i32
    %c0_i32_1 = arith.constant 0 : i32
    return %c0_i32, %c0_i32_0 : i32, i32
  }
  func.func @transform_15(%arg0: i32) -> (i32, i32, i32) {
    %c0_i32 = arith.constant 0 : i32
    %c0_i32_0 = arith.constant 0 : i32
    %c0_i32_1 = arith.constant 0 : i32
    return %c0_i32, %arg0, %c0_i32_0 : i32, i32, i32
  }
}

module attributes {stable_mosaic.version = 11 : i64} {
  func.func @encoder_layer_kernel(%arg0: i32, %arg1: memref<2x8x256xbf16, #tpu.memory_space<vmem>>, %arg2: memref<256x768xbf16, #tpu.memory_space<vmem>>, %arg3: memref<1x768xf32, #tpu.memory_space<vmem>>, %arg4: memref<256x256xbf16, #tpu.memory_space<vmem>>, %arg5: memref<1x256xf32, #tpu.memory_space<vmem>>, %arg6: memref<1x256xf32, #tpu.memory_space<vmem>>, %arg7: memref<1x256xf32, #tpu.memory_space<vmem>>, %arg8: memref<256x512xbf16, #tpu.memory_space<vmem>>, %arg9: memref<1x512xf32, #tpu.memory_space<vmem>>, %arg10: memref<512x256xbf16, #tpu.memory_space<vmem>>, %arg11: memref<1x256xf32, #tpu.memory_space<vmem>>, %arg12: memref<1x256xf32, #tpu.memory_space<vmem>>, %arg13: memref<1x256xf32, #tpu.memory_space<vmem>>, %arg14: memref<256x4xbf16, #tpu.memory_space<vmem>>, %arg15: memref<4x256xbf16, #tpu.memory_space<vmem>>, %arg16: memref<2x8x256xbf16, #tpu.memory_space<vmem>>) attributes {dimension_semantics = [#tpu.dimension_semantics<parallel>], iteration_bounds = array<i64: 2>, scalar_prefetch = 0 : i64, scratch_operands = 0 : i64, tpu.core_type = #tpu.core_type<tc>, window_params = [{transform_indices = @transform_0, window_bounds = array<i64: 2, 8, 256>}, {pipeline_mode = #tpu.pipeline_mode<synchronous>, transform_indices = @transform_1, window_bounds = array<i64: 256, 768>}, {pipeline_mode = #tpu.pipeline_mode<synchronous>, transform_indices = @transform_2, window_bounds = array<i64: 1, 768>}, {pipeline_mode = #tpu.pipeline_mode<synchronous>, transform_indices = @transform_3, window_bounds = array<i64: 256, 256>}, {pipeline_mode = #tpu.pipeline_mode<synchronous>, transform_indices = @transform_4, window_bounds = array<i64: 1, 256>}, {pipeline_mode = #tpu.pipeline_mode<synchronous>, transform_indices = @transform_5, window_bounds = array<i64: 1, 256>}, {pipeline_mode = #tpu.pipeline_mode<synchronous>, transform_indices = @transform_6, window_bounds = array<i64: 1, 256>}, {pipeline_mode = #tpu.pipeline_mode<synchronous>, transform_indices = @transform_7, window_bounds = array<i64: 256, 512>}, {pipeline_mode = #tpu.pipeline_mode<synchronous>, transform_indices = @transform_8, window_bounds = array<i64: 1, 512>}, {pipeline_mode = #tpu.pipeline_mode<synchronous>, transform_indices = @transform_9, window_bounds = array<i64: 512, 256>}, {pipeline_mode = #tpu.pipeline_mode<synchronous>, transform_indices = @transform_10, window_bounds = array<i64: 1, 256>}, {pipeline_mode = #tpu.pipeline_mode<synchronous>, transform_indices = @transform_11, window_bounds = array<i64: 1, 256>}, {pipeline_mode = #tpu.pipeline_mode<synchronous>, transform_indices = @transform_12, window_bounds = array<i64: 1, 256>}, {pipeline_mode = #tpu.pipeline_mode<synchronous>, transform_indices = @transform_13, window_bounds = array<i64: 256, 4>}, {pipeline_mode = #tpu.pipeline_mode<synchronous>, transform_indices = @transform_14, window_bounds = array<i64: 4, 256>}, {transform_indices = @transform_15, window_bounds = array<i64: 2, 8, 256>}]} {
    %c0 = arith.constant 0 : index
    %c0_0 = arith.constant 0 : index
    %c0_1 = arith.constant 0 : index
    %0 = vector.load %arg1[%c0, %c0_0, %c0_1] : memref<2x8x256xbf16, #tpu.memory_space<vmem>>, vector<2x8x256xbf16>
    %1 = vector.shape_cast %0 : vector<2x8x256xbf16> to vector<16x256xbf16>
    %2 = arith.extf %1 : vector<16x256xbf16> to vector<16x256xf32>
    %c0_2 = arith.constant 0 : index
    %c0_3 = arith.constant 0 : index
    %3 = vector.load %arg2[%c0_2, %c0_3] : memref<256x768xbf16, #tpu.memory_space<vmem>>, vector<256x768xbf16>
    %cst = arith.constant dense<0.000000e+00> : vector<16x768xf32>
    %4 = tpu.matmul %1, %3, %cst {dimension_numbers = #tpu.dot_dimension_numbers<[1], [0], [0], [1], [0, 0, 1, 1], [], []>} : vector<16x256xbf16>, vector<256x768xbf16>, vector<16x768xf32> -> vector<16x768xf32>
    %c0_4 = arith.constant 0 : index
    %c0_5 = arith.constant 0 : index
    %5 = vector.load %arg3[%c0_4, %c0_5] : memref<1x768xf32, #tpu.memory_space<vmem>>, vector<1x768xf32>
    %6 = vector.broadcast %5 : vector<1x768xf32> to vector<16x768xf32>
    %7 = arith.addf %4, %6 : vector<16x768xf32>
    %8 = vector.extract_strided_slice %7 {offsets = [0, 0], sizes = [16, 256], strides = [1, 1]} : vector<16x768xf32> to vector<16x256xf32>
    %cst_6 = arith.constant 1.250000e-01 : f32
    %9 = vector.broadcast %cst_6 : f32 to vector<16x256xf32>
    %10 = arith.mulf %8, %9 : vector<16x256xf32>
    %11 = vector.shape_cast %10 : vector<16x256xf32> to vector<2x8x256xf32>
    %12 = vector.extract_strided_slice %7 {offsets = [0, 256], sizes = [16, 256], strides = [1, 1]} : vector<16x768xf32> to vector<16x256xf32>
    %13 = vector.shape_cast %12 : vector<16x256xf32> to vector<2x8x256xf32>
    %14 = vector.extract_strided_slice %7 {offsets = [0, 512], sizes = [16, 256], strides = [1, 1]} : vector<16x768xf32> to vector<16x256xf32>
    %15 = vector.shape_cast %14 : vector<16x256xf32> to vector<2x8x256xf32>
    %c0_7 = arith.constant 0 : index
    %c0_8 = arith.constant 0 : index
    %16 = vector.load %arg14[%c0_7, %c0_8] : memref<256x4xbf16, #tpu.memory_space<vmem>>, vector<256x4xbf16>
    %c0_9 = arith.constant 0 : index
    %c0_10 = arith.constant 0 : index
    %17 = vector.load %arg15[%c0_9, %c0_10] : memref<4x256xbf16, #tpu.memory_space<vmem>>, vector<4x256xbf16>
    %18 = vector.extract_strided_slice %11 {offsets = [0, 0, 0], sizes = [1, 8, 256], strides = [1, 1, 1]} : vector<2x8x256xf32> to vector<1x8x256xf32>
    %19 = vector.shape_cast %18 : vector<1x8x256xf32> to vector<8x256xf32>
    %20 = vector.extract_strided_slice %13 {offsets = [0, 0, 0], sizes = [1, 8, 256], strides = [1, 1, 1]} : vector<2x8x256xf32> to vector<1x8x256xf32>
    %21 = vector.shape_cast %20 : vector<1x8x256xf32> to vector<8x256xf32>
    %22 = arith.mulf %19, %21 : vector<8x256xf32>
    %23 = arith.truncf %22 : vector<8x256xf32> to vector<8x256xbf16>
    %cst_11 = arith.constant dense<0.000000e+00> : vector<8x4xf32>
    %24 = tpu.matmul %23, %16, %cst_11 {dimension_numbers = #tpu.dot_dimension_numbers<[1], [0], [0], [1], [0, 0, 1, 1], [], []>} : vector<8x256xbf16>, vector<256x4xbf16>, vector<8x4xf32> -> vector<8x4xf32>
    %25 = vector.extract_strided_slice %13 {offsets = [1, 0, 0], sizes = [1, 8, 256], strides = [1, 1, 1]} : vector<2x8x256xf32> to vector<1x8x256xf32>
    %26 = vector.shape_cast %25 : vector<1x8x256xf32> to vector<8x256xf32>
    %27 = arith.mulf %19, %26 : vector<8x256xf32>
    %28 = arith.truncf %27 : vector<8x256xf32> to vector<8x256xbf16>
    %cst_12 = arith.constant dense<0.000000e+00> : vector<8x4xf32>
    %29 = tpu.matmul %28, %16, %cst_12 {dimension_numbers = #tpu.dot_dimension_numbers<[1], [0], [0], [1], [0, 0, 1, 1], [], []>} : vector<8x256xbf16>, vector<256x4xbf16>, vector<8x4xf32> -> vector<8x4xf32>
    %30 = arith.maximumf %24, %29 : vector<8x4xf32>
    %31 = arith.subf %24, %30 : vector<8x4xf32>
    %32 = math.exp %31 : vector<8x4xf32>
    %33 = arith.subf %29, %30 : vector<8x4xf32>
    %34 = math.exp %33 : vector<8x4xf32>
    %35 = arith.addf %32, %34 : vector<8x4xf32>
    %cst_13 = arith.constant 1.000000e+00 : f32
    %36 = vector.broadcast %cst_13 : f32 to vector<8x4xf32>
    %37 = arith.divf %36, %35 : vector<8x4xf32>
    %38 = arith.mulf %32, %37 : vector<8x4xf32>
    %39 = arith.truncf %38 : vector<8x4xf32> to vector<8x4xbf16>
    %cst_14 = arith.constant dense<0.000000e+00> : vector<8x256xf32>
    %40 = tpu.matmul %39, %17, %cst_14 {dimension_numbers = #tpu.dot_dimension_numbers<[1], [0], [0], [1], [0, 0, 1, 1], [], []>} : vector<8x4xbf16>, vector<4x256xbf16>, vector<8x256xf32> -> vector<8x256xf32>
    %41 = vector.extract_strided_slice %15 {offsets = [0, 0, 0], sizes = [1, 8, 256], strides = [1, 1, 1]} : vector<2x8x256xf32> to vector<1x8x256xf32>
    %42 = vector.shape_cast %41 : vector<1x8x256xf32> to vector<8x256xf32>
    %43 = arith.mulf %40, %42 : vector<8x256xf32>
    %44 = arith.mulf %34, %37 : vector<8x4xf32>
    %45 = arith.truncf %44 : vector<8x4xf32> to vector<8x4xbf16>
    %cst_15 = arith.constant dense<0.000000e+00> : vector<8x256xf32>
    %46 = tpu.matmul %45, %17, %cst_15 {dimension_numbers = #tpu.dot_dimension_numbers<[1], [0], [0], [1], [0, 0, 1, 1], [], []>} : vector<8x4xbf16>, vector<4x256xbf16>, vector<8x256xf32> -> vector<8x256xf32>
    %47 = vector.extract_strided_slice %15 {offsets = [1, 0, 0], sizes = [1, 8, 256], strides = [1, 1, 1]} : vector<2x8x256xf32> to vector<1x8x256xf32>
    %48 = vector.shape_cast %47 : vector<1x8x256xf32> to vector<8x256xf32>
    %49 = arith.mulf %46, %48 : vector<8x256xf32>
    %50 = arith.addf %43, %49 : vector<8x256xf32>
    %51 = vector.extract_strided_slice %11 {offsets = [1, 0, 0], sizes = [1, 8, 256], strides = [1, 1, 1]} : vector<2x8x256xf32> to vector<1x8x256xf32>
    %52 = vector.shape_cast %51 : vector<1x8x256xf32> to vector<8x256xf32>
    %53 = vector.extract_strided_slice %13 {offsets = [0, 0, 0], sizes = [1, 8, 256], strides = [1, 1, 1]} : vector<2x8x256xf32> to vector<1x8x256xf32>
    %54 = vector.shape_cast %53 : vector<1x8x256xf32> to vector<8x256xf32>
    %55 = arith.mulf %52, %54 : vector<8x256xf32>
    %56 = arith.truncf %55 : vector<8x256xf32> to vector<8x256xbf16>
    %cst_16 = arith.constant dense<0.000000e+00> : vector<8x4xf32>
    %57 = tpu.matmul %56, %16, %cst_16 {dimension_numbers = #tpu.dot_dimension_numbers<[1], [0], [0], [1], [0, 0, 1, 1], [], []>} : vector<8x256xbf16>, vector<256x4xbf16>, vector<8x4xf32> -> vector<8x4xf32>
    %58 = vector.extract_strided_slice %13 {offsets = [1, 0, 0], sizes = [1, 8, 256], strides = [1, 1, 1]} : vector<2x8x256xf32> to vector<1x8x256xf32>
    %59 = vector.shape_cast %58 : vector<1x8x256xf32> to vector<8x256xf32>
    %60 = arith.mulf %52, %59 : vector<8x256xf32>
    %61 = arith.truncf %60 : vector<8x256xf32> to vector<8x256xbf16>
    %cst_17 = arith.constant dense<0.000000e+00> : vector<8x4xf32>
    %62 = tpu.matmul %61, %16, %cst_17 {dimension_numbers = #tpu.dot_dimension_numbers<[1], [0], [0], [1], [0, 0, 1, 1], [], []>} : vector<8x256xbf16>, vector<256x4xbf16>, vector<8x4xf32> -> vector<8x4xf32>
    %63 = arith.maximumf %57, %62 : vector<8x4xf32>
    %64 = arith.subf %57, %63 : vector<8x4xf32>
    %65 = math.exp %64 : vector<8x4xf32>
    %66 = arith.subf %62, %63 : vector<8x4xf32>
    %67 = math.exp %66 : vector<8x4xf32>
    %68 = arith.addf %65, %67 : vector<8x4xf32>
    %cst_18 = arith.constant 1.000000e+00 : f32
    %69 = vector.broadcast %cst_18 : f32 to vector<8x4xf32>
    %70 = arith.divf %69, %68 : vector<8x4xf32>
    %71 = arith.mulf %65, %70 : vector<8x4xf32>
    %72 = arith.truncf %71 : vector<8x4xf32> to vector<8x4xbf16>
    %cst_19 = arith.constant dense<0.000000e+00> : vector<8x256xf32>
    %73 = tpu.matmul %72, %17, %cst_19 {dimension_numbers = #tpu.dot_dimension_numbers<[1], [0], [0], [1], [0, 0, 1, 1], [], []>} : vector<8x4xbf16>, vector<4x256xbf16>, vector<8x256xf32> -> vector<8x256xf32>
    %74 = vector.extract_strided_slice %15 {offsets = [0, 0, 0], sizes = [1, 8, 256], strides = [1, 1, 1]} : vector<2x8x256xf32> to vector<1x8x256xf32>
    %75 = vector.shape_cast %74 : vector<1x8x256xf32> to vector<8x256xf32>
    %76 = arith.mulf %73, %75 : vector<8x256xf32>
    %77 = arith.mulf %67, %70 : vector<8x4xf32>
    %78 = arith.truncf %77 : vector<8x4xf32> to vector<8x4xbf16>
    %cst_20 = arith.constant dense<0.000000e+00> : vector<8x256xf32>
    %79 = tpu.matmul %78, %17, %cst_20 {dimension_numbers = #tpu.dot_dimension_numbers<[1], [0], [0], [1], [0, 0, 1, 1], [], []>} : vector<8x4xbf16>, vector<4x256xbf16>, vector<8x256xf32> -> vector<8x256xf32>
    %80 = vector.extract_strided_slice %15 {offsets = [1, 0, 0], sizes = [1, 8, 256], strides = [1, 1, 1]} : vector<2x8x256xf32> to vector<1x8x256xf32>
    %81 = vector.shape_cast %80 : vector<1x8x256xf32> to vector<8x256xf32>
    %82 = arith.mulf %79, %81 : vector<8x256xf32>
    %83 = arith.addf %76, %82 : vector<8x256xf32>
    %84 = tpu.concatenate %50, %83 in 0 : vector<8x256xf32>, vector<8x256xf32> -> vector<16x256xf32>
    %85 = arith.truncf %84 : vector<16x256xf32> to vector<16x256xbf16>
    %c0_21 = arith.constant 0 : index
    %c0_22 = arith.constant 0 : index
    %86 = vector.load %arg4[%c0_21, %c0_22] : memref<256x256xbf16, #tpu.memory_space<vmem>>, vector<256x256xbf16>
    %cst_23 = arith.constant dense<0.000000e+00> : vector<16x256xf32>
    %87 = tpu.matmul %85, %86, %cst_23 {dimension_numbers = #tpu.dot_dimension_numbers<[1], [0], [0], [1], [0, 0, 1, 1], [], []>} : vector<16x256xbf16>, vector<256x256xbf16>, vector<16x256xf32> -> vector<16x256xf32>
    %c0_24 = arith.constant 0 : index
    %c0_25 = arith.constant 0 : index
    %88 = vector.load %arg5[%c0_24, %c0_25] : memref<1x256xf32, #tpu.memory_space<vmem>>, vector<1x256xf32>
    %89 = vector.broadcast %88 : vector<1x256xf32> to vector<16x256xf32>
    %90 = arith.addf %87, %89 : vector<16x256xf32>
    %91 = arith.addf %2, %90 : vector<16x256xf32>
    %c0_26 = arith.constant 0 : index
    %c0_27 = arith.constant 0 : index
    %92 = vector.load %arg6[%c0_26, %c0_27] : memref<1x256xf32, #tpu.memory_space<vmem>>, vector<1x256xf32>
    %c0_28 = arith.constant 0 : index
    %c0_29 = arith.constant 0 : index
    %93 = vector.load %arg7[%c0_28, %c0_29] : memref<1x256xf32, #tpu.memory_space<vmem>>, vector<1x256xf32>
    %cst_30 = arith.constant dense<0.000000e+00> : vector<16xf32>
    %94 = vector.multi_reduction <add>, %91, %cst_30 [1] : vector<16x256xf32> to vector<16xf32>
    %95 = vector.shape_cast %94 : vector<16xf32> to vector<16x1xf32>
    %cst_31 = arith.constant 2.560000e+02 : f32
    %96 = vector.broadcast %cst_31 : f32 to vector<16x1xf32>
    %97 = arith.divf %95, %96 : vector<16x1xf32>
    %98 = vector.broadcast %97 : vector<16x1xf32> to vector<16x256xf32>
    %99 = arith.subf %91, %98 : vector<16x256xf32>
    %100 = arith.mulf %99, %99 : vector<16x256xf32>
    %cst_32 = arith.constant dense<0.000000e+00> : vector<16xf32>
    %101 = vector.multi_reduction <add>, %100, %cst_32 [1] : vector<16x256xf32> to vector<16xf32>
    %102 = vector.shape_cast %101 : vector<16xf32> to vector<16x1xf32>
    %cst_33 = arith.constant 2.560000e+02 : f32
    %103 = vector.broadcast %cst_33 : f32 to vector<16x1xf32>
    %104 = arith.divf %102, %103 : vector<16x1xf32>
    %105 = vector.broadcast %97 : vector<16x1xf32> to vector<16x256xf32>
    %106 = arith.subf %91, %105 : vector<16x256xf32>
    %cst_34 = arith.constant 9.99999974E-6 : f32
    %107 = vector.broadcast %cst_34 : f32 to vector<16x1xf32>
    %108 = arith.addf %104, %107 : vector<16x1xf32>
    %109 = math.rsqrt %108 : vector<16x1xf32>
    %110 = vector.broadcast %109 : vector<16x1xf32> to vector<16x256xf32>
    %111 = arith.mulf %106, %110 : vector<16x256xf32>
    %112 = vector.broadcast %92 : vector<1x256xf32> to vector<16x256xf32>
    %113 = arith.mulf %111, %112 : vector<16x256xf32>
    %114 = vector.broadcast %93 : vector<1x256xf32> to vector<16x256xf32>
    %115 = arith.addf %113, %114 : vector<16x256xf32>
    %116 = arith.truncf %115 : vector<16x256xf32> to vector<16x256xbf16>
    %c0_35 = arith.constant 0 : index
    %c0_36 = arith.constant 0 : index
    %117 = vector.load %arg8[%c0_35, %c0_36] : memref<256x512xbf16, #tpu.memory_space<vmem>>, vector<256x512xbf16>
    %cst_37 = arith.constant dense<0.000000e+00> : vector<16x512xf32>
    %118 = tpu.matmul %116, %117, %cst_37 {dimension_numbers = #tpu.dot_dimension_numbers<[1], [0], [0], [1], [0, 0, 1, 1], [], []>} : vector<16x256xbf16>, vector<256x512xbf16>, vector<16x512xf32> -> vector<16x512xf32>
    %c0_38 = arith.constant 0 : index
    %c0_39 = arith.constant 0 : index
    %119 = vector.load %arg9[%c0_38, %c0_39] : memref<1x512xf32, #tpu.memory_space<vmem>>, vector<1x512xf32>
    %120 = vector.broadcast %119 : vector<1x512xf32> to vector<16x512xf32>
    %121 = arith.addf %118, %120 : vector<16x512xf32>
    %cst_40 = arith.constant 0.000000e+00 : f32
    %122 = vector.broadcast %cst_40 : f32 to vector<16x512xf32>
    %123 = arith.maximumf %121, %122 : vector<16x512xf32>
    %124 = arith.truncf %123 : vector<16x512xf32> to vector<16x512xbf16>
    %c0_41 = arith.constant 0 : index
    %c0_42 = arith.constant 0 : index
    %125 = vector.load %arg10[%c0_41, %c0_42] : memref<512x256xbf16, #tpu.memory_space<vmem>>, vector<512x256xbf16>
    %cst_43 = arith.constant dense<0.000000e+00> : vector<16x256xf32>
    %126 = tpu.matmul %124, %125, %cst_43 {dimension_numbers = #tpu.dot_dimension_numbers<[1], [0], [0], [1], [0, 0, 1, 1], [], []>} : vector<16x512xbf16>, vector<512x256xbf16>, vector<16x256xf32> -> vector<16x256xf32>
    %c0_44 = arith.constant 0 : index
    %c0_45 = arith.constant 0 : index
    %127 = vector.load %arg11[%c0_44, %c0_45] : memref<1x256xf32, #tpu.memory_space<vmem>>, vector<1x256xf32>
    %128 = vector.broadcast %127 : vector<1x256xf32> to vector<16x256xf32>
    %129 = arith.addf %126, %128 : vector<16x256xf32>
    %130 = arith.addf %115, %129 : vector<16x256xf32>
    %c0_46 = arith.constant 0 : index
    %c0_47 = arith.constant 0 : index
    %131 = vector.load %arg12[%c0_46, %c0_47] : memref<1x256xf32, #tpu.memory_space<vmem>>, vector<1x256xf32>
    %c0_48 = arith.constant 0 : index
    %c0_49 = arith.constant 0 : index
    %132 = vector.load %arg13[%c0_48, %c0_49] : memref<1x256xf32, #tpu.memory_space<vmem>>, vector<1x256xf32>
    %cst_50 = arith.constant dense<0.000000e+00> : vector<16xf32>
    %133 = vector.multi_reduction <add>, %130, %cst_50 [1] : vector<16x256xf32> to vector<16xf32>
    %134 = vector.shape_cast %133 : vector<16xf32> to vector<16x1xf32>
    %cst_51 = arith.constant 2.560000e+02 : f32
    %135 = vector.broadcast %cst_51 : f32 to vector<16x1xf32>
    %136 = arith.divf %134, %135 : vector<16x1xf32>
    %137 = vector.broadcast %136 : vector<16x1xf32> to vector<16x256xf32>
    %138 = arith.subf %130, %137 : vector<16x256xf32>
    %139 = arith.mulf %138, %138 : vector<16x256xf32>
    %cst_52 = arith.constant dense<0.000000e+00> : vector<16xf32>
    %140 = vector.multi_reduction <add>, %139, %cst_52 [1] : vector<16x256xf32> to vector<16xf32>
    %141 = vector.shape_cast %140 : vector<16xf32> to vector<16x1xf32>
    %cst_53 = arith.constant 2.560000e+02 : f32
    %142 = vector.broadcast %cst_53 : f32 to vector<16x1xf32>
    %143 = arith.divf %141, %142 : vector<16x1xf32>
    %144 = vector.broadcast %136 : vector<16x1xf32> to vector<16x256xf32>
    %145 = arith.subf %130, %144 : vector<16x256xf32>
    %cst_54 = arith.constant 9.99999974E-6 : f32
    %146 = vector.broadcast %cst_54 : f32 to vector<16x1xf32>
    %147 = arith.addf %143, %146 : vector<16x1xf32>
    %148 = math.rsqrt %147 : vector<16x1xf32>
    %149 = vector.broadcast %148 : vector<16x1xf32> to vector<16x256xf32>
    %150 = arith.mulf %145, %149 : vector<16x256xf32>
    %151 = vector.broadcast %131 : vector<1x256xf32> to vector<16x256xf32>
    %152 = arith.mulf %150, %151 : vector<16x256xf32>
    %153 = vector.broadcast %132 : vector<1x256xf32> to vector<16x256xf32>
    %154 = arith.addf %152, %153 : vector<16x256xf32>
    %155 = arith.truncf %154 : vector<16x256xf32> to vector<16x256xbf16>
    %156 = vector.shape_cast %155 : vector<16x256xbf16> to vector<2x8x256xbf16>
    %c0_55 = arith.constant 0 : index
    %c0_56 = arith.constant 0 : index
    %c0_57 = arith.constant 0 : index
    %157 = vector.load %arg16[%c0_55, %c0_56, %c0_57] : memref<2x8x256xbf16, #tpu.memory_space<vmem>>, vector<2x8x256xbf16>
    tpu.vector_store %arg16[%c0_55, %c0_56, %c0_57], %156 {strides = array<i32>} : memref<2x8x256xbf16, #tpu.memory_space<vmem>>, vector<2x8x256xbf16>,
    return
  }
  func.func @transform_0(%arg0: i32) -> (i32, i32, i32) {
    %c0_i32 = arith.constant 0 : i32
    %c0_i32_0 = arith.constant 0 : i32
    %c0_i32_1 = arith.constant 0 : i32
    return %c0_i32, %arg0, %c0_i32_0 : i32, i32, i32
  }
  func.func @transform_1(%arg0: i32) -> (i32, i32) {
    %c0_i32 = arith.constant 0 : i32
    %c0_i32_0 = arith.constant 0 : i32
    %c0_i32_1 = arith.constant 0 : i32
    return %c0_i32, %c0_i32_0 : i32, i32
  }
  func.func @transform_2(%arg0: i32) -> (i32, i32) {
    %c0_i32 = arith.constant 0 : i32
    %c0_i32_0 = arith.constant 0 : i32
    %c0_i32_1 = arith.constant 0 : i32
    return %c0_i32, %c0_i32_0 : i32, i32
  }
  func.func @transform_3(%arg0: i32) -> (i32, i32) {
    %c0_i32 = arith.constant 0 : i32
    %c0_i32_0 = arith.constant 0 : i32
    %c0_i32_1 = arith.constant 0 : i32
    return %c0_i32, %c0_i32_0 : i32, i32
  }
  func.func @transform_4(%arg0: i32) -> (i32, i32) {
    %c0_i32 = arith.constant 0 : i32
    %c0_i32_0 = arith.constant 0 : i32
    %c0_i32_1 = arith.constant 0 : i32
    return %c0_i32, %c0_i32_0 : i32, i32
  }
  func.func @transform_5(%arg0: i32) -> (i32, i32) {
    %c0_i32 = arith.constant 0 : i32
    %c0_i32_0 = arith.constant 0 : i32
    %c0_i32_1 = arith.constant 0 : i32
    return %c0_i32, %c0_i32_0 : i32, i32
  }
  func.func @transform_6(%arg0: i32) -> (i32, i32) {
    %c0_i32 = arith.constant 0 : i32
    %c0_i32_0 = arith.constant 0 : i32
    %c0_i32_1 = arith.constant 0 : i32
    return %c0_i32, %c0_i32_0 : i32, i32
  }
  func.func @transform_7(%arg0: i32) -> (i32, i32) {
    %c0_i32 = arith.constant 0 : i32
    %c0_i32_0 = arith.constant 0 : i32
    %c0_i32_1 = arith.constant 0 : i32
    return %c0_i32, %c0_i32_0 : i32, i32
  }
  func.func @transform_8(%arg0: i32) -> (i32, i32) {
    %c0_i32 = arith.constant 0 : i32
    %c0_i32_0 = arith.constant 0 : i32
    %c0_i32_1 = arith.constant 0 : i32
    return %c0_i32, %c0_i32_0 : i32, i32
  }
  func.func @transform_9(%arg0: i32) -> (i32, i32) {
    %c0_i32 = arith.constant 0 : i32
    %c0_i32_0 = arith.constant 0 : i32
    %c0_i32_1 = arith.constant 0 : i32
    return %c0_i32, %c0_i32_0 : i32, i32
  }
  func.func @transform_10(%arg0: i32) -> (i32, i32) {
    %c0_i32 = arith.constant 0 : i32
    %c0_i32_0 = arith.constant 0 : i32
    %c0_i32_1 = arith.constant 0 : i32
    return %c0_i32, %c0_i32_0 : i32, i32
  }
  func.func @transform_11(%arg0: i32) -> (i32, i32) {
    %c0_i32 = arith.constant 0 : i32
    %c0_i32_0 = arith.constant 0 : i32
    %c0_i32_1 = arith.constant 0 : i32
    return %c0_i32, %c0_i32_0 : i32, i32
  }
  func.func @transform_12(%arg0: i32) -> (i32, i32) {
    %c0_i32 = arith.constant 0 : i32
    %c0_i32_0 = arith.constant 0 : i32
    %c0_i32_1 = arith.constant 0 : i32
    return %c0_i32, %c0_i32_0 : i32, i32
  }
  func.func @transform_13(%arg0: i32) -> (i32, i32) {
    %c0_i32 = arith.constant 0 : i32
    %c0_i32_0 = arith.constant 0 : i32
    %c0_i32_1 = arith.constant 0 : i32
    return %c0_i32, %c0_i32_0 : i32, i32
  }
  func.func @transform_14(%arg0: i32) -> (i32, i32) {
    %c0_i32 = arith.constant 0 : i32
    %c0_i32_0 = arith.constant 0 : i32
    %c0_i32_1 = arith.constant 0 : i32
    return %c0_i32, %c0_i32_0 : i32, i32
  }
  func.func @transform_15(%arg0: i32) -> (i32, i32, i32) {
    %c0_i32 = arith.constant 0 : i32
    %c0_i32_0 = arith.constant 0 : i32
    %c0_i32_1 = arith.constant 0 : i32
    return %c0_i32, %arg0, %c0_i32_0 : i32, i32, i32
  }
}

module attributes {stable_mosaic.version = 11 : i64} {
  func.func @logits_kernel(%arg0: i32, %arg1: i32, %arg2: memref<32x256xbf16, #tpu.memory_space<vmem>>, %arg3: memref<256x1024xbf16, #tpu.memory_space<vmem>>, %arg4: memref<1x1024xf32, #tpu.memory_space<vmem>>, %arg5: memref<32x1024xf32, #tpu.memory_space<vmem>>) attributes {dimension_semantics = [#tpu.dimension_semantics<parallel>, #tpu.dimension_semantics<parallel>], iteration_bounds = array<i64: 1, 1>, scalar_prefetch = 0 : i64, scratch_operands = 0 : i64, tpu.core_type = #tpu.core_type<tc>, window_params = [{transform_indices = @transform_0, window_bounds = array<i64: 32, 256>}, {transform_indices = @transform_1, window_bounds = array<i64: 256, 1024>}, {transform_indices = @transform_2, window_bounds = array<i64: 1, 1024>}, {transform_indices = @transform_3, window_bounds = array<i64: 32, 1024>}]} {
    %c0 = arith.constant 0 : index
    %c0_0 = arith.constant 0 : index
    %0 = vector.load %arg2[%c0, %c0_0] : memref<32x256xbf16, #tpu.memory_space<vmem>>, vector<32x256xbf16>
    %c0_1 = arith.constant 0 : index
    %c0_2 = arith.constant 0 : index
    %1 = vector.load %arg3[%c0_1, %c0_2] : memref<256x1024xbf16, #tpu.memory_space<vmem>>, vector<256x1024xbf16>
    %cst = arith.constant dense<0.000000e+00> : vector<32x1024xf32>
    %2 = tpu.matmul %0, %1, %cst {dimension_numbers = #tpu.dot_dimension_numbers<[1], [0], [0], [1], [0, 0, 1, 1], [], []>} : vector<32x256xbf16>, vector<256x1024xbf16>, vector<32x1024xf32> -> vector<32x1024xf32>
    %c0_3 = arith.constant 0 : index
    %c0_4 = arith.constant 0 : index
    %3 = vector.load %arg4[%c0_3, %c0_4] : memref<1x1024xf32, #tpu.memory_space<vmem>>, vector<1x1024xf32>
    %4 = vector.broadcast %3 : vector<1x1024xf32> to vector<32x1024xf32>
    %5 = arith.addf %2, %4 : vector<32x1024xf32>
    %c0_5 = arith.constant 0 : index
    %c0_6 = arith.constant 0 : index
    %6 = vector.load %arg5[%c0_5, %c0_6] : memref<32x1024xf32, #tpu.memory_space<vmem>>, vector<32x1024xf32>
    tpu.vector_store %arg5[%c0_5, %c0_6], %5 {strides = array<i32>} : memref<32x1024xf32, #tpu.memory_space<vmem>>, vector<32x1024xf32>,
    return
  }
  func.func @transform_0(%arg0: i32, %arg1: i32) -> (i32, i32) {
    %c0_i32 = arith.constant 0 : i32
    %c0_i32_0 = arith.constant 0 : i32
    return %arg1, %c0_i32 : i32, i32
  }
  func.func @transform_1(%arg0: i32, %arg1: i32) -> (i32, i32) {
    %c0_i32 = arith.constant 0 : i32
    %c0_i32_0 = arith.constant 0 : i32
    return %c0_i32, %arg0 : i32, i32
  }
  func.func @transform_2(%arg0: i32, %arg1: i32) -> (i32, i32) {
    %c0_i32 = arith.constant 0 : i32
    %c0_i32_0 = arith.constant 0 : i32
    return %c0_i32, %arg0 : i32, i32
  }
  func.func @transform_3(%arg0: i32, %arg1: i32) -> (i32, i32) {
    %c0_i32 = arith.constant 0 : i32
    return %arg1, %arg0 : i32, i32
  }
}

</mosaic_0001>

<llo_original>
// kernel: minimal_llm_forward.5
$region0: #{minimal_llm_forward.5}
  #allocation0 [shape = 'u32[]', space=smem, size = 0x4, offset = 0x4, fixed_abs, tag = 'smem constant byte address 0x4 - core index']
  #allocation1 [shape = 'u32[144,128]{1,0:T(1,128)}', space=vmem, size = 0x12000, scoped, tag = 'internal scratch']
  %s0 = inlined_call_operand.vmem [shape: bf16[32,256], index: 0, kind: input, shape index: {}]
  %s1 = inlined_call_operand.vmem [shape: bf16[256,1024], index: 1, kind: input, shape index: {}]
  %s2 = inlined_call_operand.vmem [shape: f32[1,1024], index: 2, kind: input, shape index: {}]
  %s3 = inlined_call_operand.hbm [shape: f32[32,1024], index: 3, kind: output, shape index: {}]
  %s4 = sld [smem:[#allocation0]]
  $region22: #{minimal_llm_forward.5} parent=0
    _
  %s6 = ssub.s32 1, %s4
  %s7 = scalar_select 0, %s6, %s4
  $region1: #{minimal_llm_forward.5} parent=0
    #allocation2 [shape = 'u8[131072]{0}', space=vmem, size = 0x20000, scoped, tag = 'output window, operand 0, single buffered']
    #allocation3 [shape = 's32[1]{0}', space=sflag, size = 0x4, scoped, tag = 'scoped memory for minimal_llm_forward.5']
    %8 = vsyncpa [#allocation3], 0
    // Predicated region
    $region2: #{minimal_llm_forward.5} parent=1 // pred_check
      _
    $region3: #{minimal_llm_forward.5} parent=1 // pred_check_branch
      %10 = sbr.rel (0) target = $region5
    $region4: #{minimal_llm_forward.5} parent=1 // pred_region
      _
    $region5: #{minimal_llm_forward.5} parent=1 // pred_fallthru
      _
    // Predicated region
    $region6: #{minimal_llm_forward.5} parent=1 // pred_check
      _
    $region7: #{minimal_llm_forward.5} parent=1 // pred_check_branch
      %12 = sbr.rel (0) target = $region9
    $region8: #{minimal_llm_forward.5} parent=1 // pred_region
      _
    $region9: #{minimal_llm_forward.5} parent=1 // pred_fallthru
      _
    // Predicated region
    $region10: #{minimal_llm_forward.5} parent=1 // pred_check
      _
    $region11: #{minimal_llm_forward.5} parent=1 // pred_check_branch
      %14 = sbr.rel (0) target = $region13
    $region12: #{minimal_llm_forward.5} parent=1 // pred_region
      _
    $region13: #{minimal_llm_forward.5} parent=1 // pred_fallthru
      _
    %v15 = vld [vmem:[%s0] sm:$0xff]
    %v16 = vld [vmem:[%s0 + $0x8] sm:$0xff]
    %v17 = vld [vmem:[%s0 + $0x10] sm:$0xff]
    %v18 = vld [vmem:[%s0 + $0x18] sm:$0xff]
    %v19 = vld [vmem:[%s1] sm:$0xff]
    %v20 = vld [vmem:[%s1 + $0x8] sm:$0xff]
    %v21 = vld [vmem:[%s1 + $0x10] sm:$0xff]
    %v22 = vld [vmem:[%s1 + $0x18] sm:$0xff]
    %v23 = vld [vmem:[%s1 + $0x20] sm:$0xff]
    %v24 = vld [vmem:[%s1 + $0x28] sm:$0xff]
    %v25 = vld [vmem:[%s1 + $0x30] sm:$0xff]
    %v26 = vld [vmem:[%s1 + $0x38] sm:$0xff]
    %v27 = vld [vmem:[%s1 + $0x40] sm:$0xff]
    %v28 = vld [vmem:[%s1 + $0x48] sm:$0xff]
    %v29 = vld [vmem:[%s1 + $0x50] sm:$0xff]
    %v30 = vld [vmem:[%s1 + $0x58] sm:$0xff]
    %v31 = vld [vmem:[%s1 + $0x60] sm:$0xff]
    %v32 = vld [vmem:[%s1 + $0x68] sm:$0xff]
    %v33 = vld [vmem:[%s1 + $0x70] sm:$0xff]
    %v34 = vld [vmem:[%s1 + $0x78] sm:$0xff]
    %v35 = vld [vmem:[%s1 + $0x80] sm:$0xff]
    %v36 = vld [vmem:[%s1 + $0x88] sm:$0xff]
    %v37 = vld [vmem:[%s1 + $0x90] sm:$0xff]
    %v38 = vld [vmem:[%s1 + $0x98] sm:$0xff]
    %v39 = vld [vmem:[%s1 + $0xa0] sm:$0xff]
    %v40 = vld [vmem:[%s1 + $0xa8] sm:$0xff]
    %v41 = vld [vmem:[%s1 + $0xb0] sm:$0xff]
    %v42 = vld [vmem:[%s1 + $0xb8] sm:$0xff]
    %v43 = vld [vmem:[%s1 + $0xc0] sm:$0xff]
    %v44 = vld [vmem:[%s1 + $0xc8] sm:$0xff]
    %v45 = vld [vmem:[%s1 + $0xd0] sm:$0xff]
    %v46 = vld [vmem:[%s1 + $0xd8] sm:$0xff]
    %v47 = vld [vmem:[%s1 + $0xe0] sm:$0xff]
    %v48 = vld [vmem:[%s1 + $0xe8] sm:$0xff]
    %v49 = vld [vmem:[%s1 + $0xf0] sm:$0xff]
    %v50 = vld [vmem:[%s1 + $0xf8] sm:$0xff]
    %v51 = vld [vmem:[%s1 + $0x100] sm:$0xff]
    %v52 = vld [vmem:[%s1 + $0x108] sm:$0xff]
    %v53 = vld [vmem:[%s1 + $0x110] sm:$0xff]
    %v54 = vld [vmem:[%s1 + $0x118] sm:$0xff]
    %v55 = vld [vmem:[%s1 + $0x120] sm:$0xff]
    %v56 = vld [vmem:[%s1 + $0x128] sm:$0xff]
    %v57 = vld [vmem:[%s1 + $0x130] sm:$0xff]
    %v58 = vld [vmem:[%s1 + $0x138] sm:$0xff]
    %v59 = vld [vmem:[%s1 + $0x140] sm:$0xff]
    %v60 = vld [vmem:[%s1 + $0x148] sm:$0xff]
    %v61 = vld [vmem:[%s1 + $0x150] sm:$0xff]
    %v62 = vld [vmem:[%s1 + $0x158] sm:$0xff]
    %v63 = vld [vmem:[%s1 + $0x160] sm:$0xff]
    %v64 = vld [vmem:[%s1 + $0x168] sm:$0xff]
    %v65 = vld [vmem:[%s1 + $0x170] sm:$0xff]
    %v66 = vld [vmem:[%s1 + $0x178] sm:$0xff]
    %v67 = vld [vmem:[%s1 + $0x180] sm:$0xff]
    %v68 = vld [vmem:[%s1 + $0x188] sm:$0xff]
    %v69 = vld [vmem:[%s1 + $0x190] sm:$0xff]
    %v70 = vld [vmem:[%s1 + $0x198] sm:$0xff]
    %v71 = vld [vmem:[%s1 + $0x1a0] sm:$0xff]
    %v72 = vld [vmem:[%s1 + $0x1a8] sm:$0xff]
    %v73 = vld [vmem:[%s1 + $0x1b0] sm:$0xff]
    %v74 = vld [vmem:[%s1 + $0x1b8] sm:$0xff]
    %v75 = vld [vmem:[%s1 + $0x1c0] sm:$0xff]
    %v76 = vld [vmem:[%s1 + $0x1c8] sm:$0xff]
    %v77 = vld [vmem:[%s1 + $0x1d0] sm:$0xff]
    %v78 = vld [vmem:[%s1 + $0x1d8] sm:$0xff]
    %v79 = vld [vmem:[%s1 + $0x1e0] sm:$0xff]
    %v80 = vld [vmem:[%s1 + $0x1e8] sm:$0xff]
    %v81 = vld [vmem:[%s1 + $0x1f0] sm:$0xff]
    %v82 = vld [vmem:[%s1 + $0x1f8] sm:$0xff]
    %v83 = vld [vmem:[%s1 + $0x200] sm:$0xff]
    %v84 = vld [vmem:[%s1 + $0x208] sm:$0xff]
    %v85 = vld [vmem:[%s1 + $0x210] sm:$0xff]
    %v86 = vld [vmem:[%s1 + $0x218] sm:$0xff]
    %v87 = vld [vmem:[%s1 + $0x220] sm:$0xff]
    %v88 = vld [vmem:[%s1 + $0x228] sm:$0xff]
    %v89 = vld [vmem:[%s1 + $0x230] sm:$0xff]
    %v90 = vld [vmem:[%s1 + $0x238] sm:$0xff]
    %v91 = vld [vmem:[%s1 + $0x240] sm:$0xff]
    %v92 = vld [vmem:[%s1 + $0x248] sm:$0xff]
    %v93 = vld [vmem:[%s1 + $0x250] sm:$0xff]
    %v94 = vld [vmem:[%s1 + $0x258] sm:$0xff]
    %v95 = vld [vmem:[%s1 + $0x260] sm:$0xff]
    %v96 = vld [vmem:[%s1 + $0x268] sm:$0xff]
    %v97 = vld [vmem:[%s1 + $0x270] sm:$0xff]
    %v98 = vld [vmem:[%s1 + $0x278] sm:$0xff]
    %v99 = vld [vmem:[%s1 + $0x280] sm:$0xff]
    %v100 = vld [vmem:[%s1 + $0x288] sm:$0xff]
    %v101 = vld [vmem:[%s1 + $0x290] sm:$0xff]
    %v102 = vld [vmem:[%s1 + $0x298] sm:$0xff]
    %v103 = vld [vmem:[%s1 + $0x2a0] sm:$0xff]
    %v104 = vld [vmem:[%s1 + $0x2a8] sm:$0xff]
    %v105 = vld [vmem:[%s1 + $0x2b0] sm:$0xff]
    %v106 = vld [vmem:[%s1 + $0x2b8] sm:$0xff]
    %v107 = vld [vmem:[%s1 + $0x2c0] sm:$0xff]
    %v108 = vld [vmem:[%s1 + $0x2c8] sm:$0xff]
    %v109 = vld [vmem:[%s1 + $0x2d0] sm:$0xff]
    %v110 = vld [vmem:[%s1 + $0x2d8] sm:$0xff]
    %v111 = vld [vmem:[%s1 + $0x2e0] sm:$0xff]
    %v112 = vld [vmem:[%s1 + $0x2e8] sm:$0xff]
    %v113 = vld [vmem:[%s1 + $0x2f0] sm:$0xff]
    %v114 = vld [vmem:[%s1 + $0x2f8] sm:$0xff]
    %v115 = vld [vmem:[%s1 + $0x300] sm:$0xff]
    %v116 = vld [vmem:[%s1 + $0x308] sm:$0xff]
    %v117 = vld [vmem:[%s1 + $0x310] sm:$0xff]
    %v118 = vld [vmem:[%s1 + $0x318] sm:$0xff]
    %v119 = vld [vmem:[%s1 + $0x320] sm:$0xff]
    %v120 = vld [vmem:[%s1 + $0x328] sm:$0xff]
    %v121 = vld [vmem:[%s1 + $0x330] sm:$0xff]
    %v122 = vld [vmem:[%s1 + $0x338] sm:$0xff]
    %v123 = vld [vmem:[%s1 + $0x340] sm:$0xff]
    %v124 = vld [vmem:[%s1 + $0x348] sm:$0xff]
    %v125 = vld [vmem:[%s1 + $0x350] sm:$0xff]
    %v126 = vld [vmem:[%s1 + $0x358] sm:$0xff]
    %v127 = vld [vmem:[%s1 + $0x360] sm:$0xff]
    %v128 = vld [vmem:[%s1 + $0x368] sm:$0xff]
    %v129 = vld [vmem:[%s1 + $0x370] sm:$0xff]
    %v130 = vld [vmem:[%s1 + $0x378] sm:$0xff]
    %v131 = vld [vmem:[%s1 + $0x380] sm:$0xff]
    %v132 = vld [vmem:[%s1 + $0x388] sm:$0xff]
    %v133 = vld [vmem:[%s1 + $0x390] sm:$0xff]
    %v134 = vld [vmem:[%s1 + $0x398] sm:$0xff]
    %v135 = vld [vmem:[%s1 + $0x3a0] sm:$0xff]
    %v136 = vld [vmem:[%s1 + $0x3a8] sm:$0xff]
    %v137 = vld [vmem:[%s1 + $0x3b0] sm:$0xff]
    %v138 = vld [vmem:[%s1 + $0x3b8] sm:$0xff]
    %v139 = vld [vmem:[%s1 + $0x3c0] sm:$0xff]
    %v140 = vld [vmem:[%s1 + $0x3c8] sm:$0xff]
    %v141 = vld [vmem:[%s1 + $0x3d0] sm:$0xff]
    %v142 = vld [vmem:[%s1 + $0x3d8] sm:$0xff]
    %v143 = vld [vmem:[%s1 + $0x3e0] sm:$0xff]
    %v144 = vld [vmem:[%s1 + $0x3e8] sm:$0xff]
    %v145 = vld [vmem:[%s1 + $0x3f0] sm:$0xff]
    %v146 = vld [vmem:[%s1 + $0x3f8] sm:$0xff]
    %v147 = vld [vmem:[%s2] sm:$0xff]
    %v149 = vlaneseq
    %v150 = vshrl.u32 %v149, 7
    %v151 = vsub.s32 0, %v150
    %v152 = vrot.slane %v147, %v151
    %v153 = vlaneseq
    %v154 = vshrl.u32 %v153, 7
    %v155 = vsub.s32 1, %v154
    %v156 = vrot.slane %v147, %v155
    %v157 = vlaneseq
    %v158 = vshrl.u32 %v157, 7
    %v159 = vsub.s32 2, %v158
    %v160 = vrot.slane %v147, %v159
    %v161 = vlaneseq
    %v162 = vshrl.u32 %v161, 7
    %v163 = vsub.s32 3, %v162
    %v164 = vrot.slane %v147, %v163
    %v165 = vlaneseq
    %v166 = vshrl.u32 %v165, 7
    %v167 = vsub.s32 4, %v166
    %v168 = vrot.slane %v147, %v167
    %v169 = vlaneseq
    %v170 = vshrl.u32 %v169, 7
    %v171 = vsub.s32 5, %v170
    %v172 = vrot.slane %v147, %v171
    %v173 = vlaneseq
    %v174 = vshrl.u32 %v173, 7
    %v175 = vsub.s32 6, %v174
    %v176 = vrot.slane %v147, %v175
    %v177 = vlaneseq
    %v178 = vshrl.u32 %v177, 7
    %v179 = vsub.s32 7, %v178
    %v180 = vrot.slane %v147, %v179
    %v193 = vunpack.c.l.b16 %v15
    %v194 = vunpack.c.h.b16 %v15
    %v195 = vunpack.c.l.b16 %v16
    %v196 = vunpack.c.h.b16 %v16
    %v197 = vunpack.c.l.b16 %v17
    %v198 = vunpack.c.h.b16 %v17
    %v199 = vunpack.c.l.b16 %v18
    %v200 = vunpack.c.h.b16 %v18
    %v201 = vpack.c.b16 %v195, %v193
    %v202 = vpack.c.b16 %v196, %v194
    %v203 = vpack.c.b16 %v199, %v197
    %v204 = vpack.c.b16 %v200, %v198
    %v337 = vunpack.c.l.b16 %v19
    %v338 = vunpack.c.h.b16 %v19
    %v339 = vunpack.c.l.b16 %v20
    %v340 = vunpack.c.h.b16 %v20
    %v341 = vunpack.c.l.b16 %v21
    %v342 = vunpack.c.h.b16 %v21
    %v343 = vunpack.c.l.b16 %v22
    %v344 = vunpack.c.h.b16 %v22
    %v345 = vunpack.c.l.b16 %v23
    %v346 = vunpack.c.h.b16 %v23
    %v347 = vunpack.c.l.b16 %v24
    %v348 = vunpack.c.h.b16 %v24
    %v349 = vunpack.c.l.b16 %v25
    %v350 = vunpack.c.h.b16 %v25
    %v351 = vunpack.c.l.b16 %v26
    %v352 = vunpack.c.h.b16 %v26
    %v353 = vunpack.c.l.b16 %v27
    %v354 = vunpack.c.h.b16 %v27
    %v355 = vunpack.c.l.b16 %v28
    %v356 = vunpack.c.h.b16 %v28
    %v357 = vunpack.c.l.b16 %v29
    %v358 = vunpack.c.h.b16 %v29
    %v359 = vunpack.c.l.b16 %v30
    %v360 = vunpack.c.h.b16 %v30
    %v361 = vunpack.c.l.b16 %v31
    %v362 = vunpack.c.h.b16 %v31
    %v363 = vunpack.c.l.b16 %v32
    %v364 = vunpack.c.h.b16 %v32
    %v365 = vunpack.c.l.b16 %v33
    %v366 = vunpack.c.h.b16 %v33
    %v367 = vunpack.c.l.b16 %v34
    %v368 = vunpack.c.h.b16 %v34
    %v369 = vunpack.c.l.b16 %v35
    %v370 = vunpack.c.h.b16 %v35
    %v371 = vunpack.c.l.b16 %v36
    %v372 = vunpack.c.h.b16 %v36
    %v373 = vunpack.c.l.b16 %v37
    %v374 = vunpack.c.h.b16 %v37
    %v375 = vunpack.c.l.b16 %v38
    %v376 = vunpack.c.h.b16 %v38
    %v377 = vunpack.c.l.b16 %v39
    %v378 = vunpack.c.h.b16 %v39
    %v379 = vunpack.c.l.b16 %v40
    %v380 = vunpack.c.h.b16 %v40
    %v381 = vunpack.c.l.b16 %v41
    %v382 = vunpack.c.h.b16 %v41
    %v383 = vunpack.c.l.b16 %v42
    %v384 = vunpack.c.h.b16 %v42
    %v385 = vunpack.c.l.b16 %v43
    %v386 = vunpack.c.h.b16 %v43
    %v387 = vunpack.c.l.b16 %v44
    %v388 = vunpack.c.h.b16 %v44
    %v389 = vunpack.c.l.b16 %v45
    %v390 = vunpack.c.h.b16 %v45
    %v391 = vunpack.c.l.b16 %v46
    %v392 = vunpack.c.h.b16 %v46
    %v393 = vunpack.c.l.b16 %v47
    %v394 = vunpack.c.h.b16 %v47
    %v395 = vunpack.c.l.b16 %v48
    %v396 = vunpack.c.h.b16 %v48
    %v397 = vunpack.c.l.b16 %v49
    %v398 = vunpack.c.h.b16 %v49
    %v399 = vunpack.c.l.b16 %v50
    %v400 = vunpack.c.h.b16 %v50
    %v401 = vunpack.c.l.b16 %v51
    %v402 = vunpack.c.h.b16 %v51
    %v403 = vunpack.c.l.b16 %v52
    %v404 = vunpack.c.h.b16 %v52
    %v405 = vunpack.c.l.b16 %v53
    %v406 = vunpack.c.h.b16 %v53
    %v407 = vunpack.c.l.b16 %v54
    %v408 = vunpack.c.h.b16 %v54
    %v409 = vunpack.c.l.b16 %v55
    %v410 = vunpack.c.h.b16 %v55
    %v411 = vunpack.c.l.b16 %v56
    %v412 = vunpack.c.h.b16 %v56
    %v413 = vunpack.c.l.b16 %v57
    %v414 = vunpack.c.h.b16 %v57
    %v415 = vunpack.c.l.b16 %v58
    %v416 = vunpack.c.h.b16 %v58
    %v417 = vunpack.c.l.b16 %v59
    %v418 = vunpack.c.h.b16 %v59
    %v419 = vunpack.c.l.b16 %v60
    %v420 = vunpack.c.h.b16 %v60
    %v421 = vunpack.c.l.b16 %v61
    %v422 = vunpack.c.h.b16 %v61
    %v423 = vunpack.c.l.b16 %v62
    %v424 = vunpack.c.h.b16 %v62
    %v425 = vunpack.c.l.b16 %v63
    %v426 = vunpack.c.h.b16 %v63
    %v427 = vunpack.c.l.b16 %v64
    %v428 = vunpack.c.h.b16 %v64
    %v429 = vunpack.c.l.b16 %v65
    %v430 = vunpack.c.h.b16 %v65
    %v431 = vunpack.c.l.b16 %v66
    %v432 = vunpack.c.h.b16 %v66
    %v433 = vunpack.c.l.b16 %v67
    %v434 = vunpack.c.h.b16 %v67
    %v435 = vunpack.c.l.b16 %v68
    %v436 = vunpack.c.h.b16 %v68
    %v437 = vunpack.c.l.b16 %v69
    %v438 = vunpack.c.h.b16 %v69
    %v439 = vunpack.c.l.b16 %v70
    %v440 = vunpack.c.h.b16 %v70
    %v441 = vunpack.c.l.b16 %v71
    %v442 = vunpack.c.h.b16 %v71
    %v443 = vunpack.c.l.b16 %v72
    %v444 = vunpack.c.h.b16 %v72
    %v445 = vunpack.c.l.b16 %v73
    %v446 = vunpack.c.h.b16 %v73
    %v447 = vunpack.c.l.b16 %v74
    %v448 = vunpack.c.h.b16 %v74
    %v449 = vunpack.c.l.b16 %v75
    %v450 = vunpack.c.h.b16 %v75
    %v451 = vunpack.c.l.b16 %v76
    %v452 = vunpack.c.h.b16 %v76
    %v453 = vunpack.c.l.b16 %v77
    %v454 = vunpack.c.h.b16 %v77
    %v455 = vunpack.c.l.b16 %v78
    %v456 = vunpack.c.h.b16 %v78
    %v457 = vunpack.c.l.b16 %v79
    %v458 = vunpack.c.h.b16 %v79
    %v459 = vunpack.c.l.b16 %v80
    %v460 = vunpack.c.h.b16 %v80
    %v461 = vunpack.c.l.b16 %v81
    %v462 = vunpack.c.h.b16 %v81
    %v463 = vunpack.c.l.b16 %v82
    %v464 = vunpack.c.h.b16 %v82
    %v465 = vunpack.c.l.b16 %v83
    %v466 = vunpack.c.h.b16 %v83
    %v467 = vunpack.c.l.b16 %v84
    %v468 = vunpack.c.h.b16 %v84
    %v469 = vunpack.c.l.b16 %v85
    %v470 = vunpack.c.h.b16 %v85
    %v471 = vunpack.c.l.b16 %v86
    %v472 = vunpack.c.h.b16 %v86
    %v473 = vunpack.c.l.b16 %v87
    %v474 = vunpack.c.h.b16 %v87
    %v475 = vunpack.c.l.b16 %v88
    %v476 = vunpack.c.h.b16 %v88
    %v477 = vunpack.c.l.b16 %v89
    %v478 = vunpack.c.h.b16 %v89
    %v479 = vunpack.c.l.b16 %v90
    %v480 = vunpack.c.h.b16 %v90
    %v481 = vunpack.c.l.b16 %v91
    %v482 = vunpack.c.h.b16 %v91
    %v483 = vunpack.c.l.b16 %v92
    %v484 = vunpack.c.h.b16 %v92
    %v485 = vunpack.c.l.b16 %v93
    %v486 = vunpack.c.h.b16 %v93
    %v487 = vunpack.c.l.b16 %v94
    %v488 = vunpack.c.h.b16 %v94
    %v489 = vunpack.c.l.b16 %v95
    %v490 = vunpack.c.h.b16 %v95
    %v491 = vunpack.c.l.b16 %v96
    %v492 = vunpack.c.h.b16 %v96
    %v493 = vunpack.c.l.b16 %v97
    %v494 = vunpack.c.h.b16 %v97
    %v495 = vunpack.c.l.b16 %v98
    %v496 = vunpack.c.h.b16 %v98
    %v497 = vunpack.c.l.b16 %v99
    %v498 = vunpack.c.h.b16 %v99
    %v499 = vunpack.c.l.b16 %v100
    %v500 = vunpack.c.h.b16 %v100
    %v501 = vunpack.c.l.b16 %v101
    %v502 = vunpack.c.h.b16 %v101
    %v503 = vunpack.c.l.b16 %v102
    %v504 = vunpack.c.h.b16 %v102
    %v505 = vunpack.c.l.b16 %v103
    %v506 = vunpack.c.h.b16 %v103
    %v507 = vunpack.c.l.b16 %v104
    %v508 = vunpack.c.h.b16 %v104
    %v509 = vunpack.c.l.b16 %v105
    %v510 = vunpack.c.h.b16 %v105
    %v511 = vunpack.c.l.b16 %v106
    %v512 = vunpack.c.h.b16 %v106
    %v513 = vunpack.c.l.b16 %v107
    %v514 = vunpack.c.h.b16 %v107
    %v515 = vunpack.c.l.b16 %v108
    %v516 = vunpack.c.h.b16 %v108
    %v517 = vunpack.c.l.b16 %v109
    %v518 = vunpack.c.h.b16 %v109
    %v519 = vunpack.c.l.b16 %v110
    %v520 = vunpack.c.h.b16 %v110
    %v521 = vunpack.c.l.b16 %v111
    %v522 = vunpack.c.h.b16 %v111
    %v523 = vunpack.c.l.b16 %v112
    %v524 = vunpack.c.h.b16 %v112
    %v525 = vunpack.c.l.b16 %v113
    %v526 = vunpack.c.h.b16 %v113
    %v527 = vunpack.c.l.b16 %v114
    %v528 = vunpack.c.h.b16 %v114
    %v529 = vunpack.c.l.b16 %v115
    %v530 = vunpack.c.h.b16 %v115
    %v531 = vunpack.c.l.b16 %v116
    %v532 = vunpack.c.h.b16 %v116
    %v533 = vunpack.c.l.b16 %v117
    %v534 = vunpack.c.h.b16 %v117
    %v535 = vunpack.c.l.b16 %v118
    %v536 = vunpack.c.h.b16 %v118
    %v537 = vunpack.c.l.b16 %v119
    %v538 = vunpack.c.h.b16 %v119
    %v539 = vunpack.c.l.b16 %v120
    %v540 = vunpack.c.h.b16 %v120
    %v541 = vunpack.c.l.b16 %v121
    %v542 = vunpack.c.h.b16 %v121
    %v543 = vunpack.c.l.b16 %v122
    %v544 = vunpack.c.h.b16 %v122
    %v545 = vunpack.c.l.b16 %v123
    %v546 = vunpack.c.h.b16 %v123
    %v547 = vunpack.c.l.b16 %v124
    %v548 = vunpack.c.h.b16 %v124
    %v549 = vunpack.c.l.b16 %v125
    %v550 = vunpack.c.h.b16 %v125
    %v551 = vunpack.c.l.b16 %v126
    %v552 = vunpack.c.h.b16 %v126
    %v553 = vunpack.c.l.b16 %v127
    %v554 = vunpack.c.h.b16 %v127
    %v555 = vunpack.c.l.b16 %v128
    %v556 = vunpack.c.h.b16 %v128
    %v557 = vunpack.c.l.b16 %v129
    %v558 = vunpack.c.h.b16 %v129
    %v559 = vunpack.c.l.b16 %v130
    %v560 = vunpack.c.h.b16 %v130
    %v561 = vunpack.c.l.b16 %v131
    %v562 = vunpack.c.h.b16 %v131
    %v563 = vunpack.c.l.b16 %v132
    %v564 = vunpack.c.h.b16 %v132
    %v565 = vunpack.c.l.b16 %v133
    %v566 = vunpack.c.h.b16 %v133
    %v567 = vunpack.c.l.b16 %v134
    %v568 = vunpack.c.h.b16 %v134
    %v569 = vunpack.c.l.b16 %v135
    %v570 = vunpack.c.h.b16 %v135
    %v571 = vunpack.c.l.b16 %v136
    %v572 = vunpack.c.h.b16 %v136
    %v573 = vunpack.c.l.b16 %v137
    %v574 = vunpack.c.h.b16 %v137
    %v575 = vunpack.c.l.b16 %v138
    %v576 = vunpack.c.h.b16 %v138
    %v577 = vunpack.c.l.b16 %v139
    %v578 = vunpack.c.h.b16 %v139
    %v579 = vunpack.c.l.b16 %v140
    %v580 = vunpack.c.h.b16 %v140
    %v581 = vunpack.c.l.b16 %v141
    %v582 = vunpack.c.h.b16 %v141
    %v583 = vunpack.c.l.b16 %v142
    %v584 = vunpack.c.h.b16 %v142
    %v585 = vunpack.c.l.b16 %v143
    %v586 = vunpack.c.h.b16 %v143
    %v587 = vunpack.c.l.b16 %v144
    %v588 = vunpack.c.h.b16 %v144
    %v589 = vunpack.c.l.b16 %v145
    %v590 = vunpack.c.h.b16 %v145
    %v591 = vunpack.c.l.b16 %v146
    %v592 = vunpack.c.h.b16 %v146
    %v593 = vpack.c.b16 %v345, %v337
    %v594 = vpack.c.b16 %v346, %v338
    %v595 = vpack.c.b16 %v347, %v339
    %v596 = vpack.c.b16 %v348, %v340
    %v597 = vpack.c.b16 %v349, %v341
    %v598 = vpack.c.b16 %v350, %v342
    %v599 = vpack.c.b16 %v351, %v343
    %v600 = vpack.c.b16 %v352, %v344
    %v601 = vpack.c.b16 %v361, %v353
    %v602 = vpack.c.b16 %v362, %v354
    %v603 = vpack.c.b16 %v363, %v355
    %v604 = vpack.c.b16 %v364, %v356
    %v605 = vpack.c.b16 %v365, %v357
    %v606 = vpack.c.b16 %v366, %v358
    %v607 = vpack.c.b16 %v367, %v359
    %v608 = vpack.c.b16 %v368, %v360
    %v609 = vpack.c.b16 %v377, %v369
    %v610 = vpack.c.b16 %v378, %v370
    %v611 = vpack.c.b16 %v379, %v371
    %v612 = vpack.c.b16 %v380, %v372
    %v613 = vpack.c.b16 %v381, %v373
    %v614 = vpack.c.b16 %v382, %v374
    %v615 = vpack.c.b16 %v383, %v375
    %v616 = vpack.c.b16 %v384, %v376
    %v617 = vpack.c.b16 %v393, %v385
    %v618 = vpack.c.b16 %v394, %v386
    %v619 = vpack.c.b16 %v395, %v387
    %v620 = vpack.c.b16 %v396, %v388
    %v621 = vpack.c.b16 %v397, %v389
    %v622 = vpack.c.b16 %v398, %v390
    %v623 = vpack.c.b16 %v399, %v391
    %v624 = vpack.c.b16 %v400, %v392
    %v625 = vpack.c.b16 %v409, %v401
    %v626 = vpack.c.b16 %v410, %v402
    %v627 = vpack.c.b16 %v411, %v403
    %v628 = vpack.c.b16 %v412, %v404
    %v629 = vpack.c.b16 %v413, %v405
    %v630 = vpack.c.b16 %v414, %v406
    %v631 = vpack.c.b16 %v415, %v407
    %v632 = vpack.c.b16 %v416, %v408
    %v633 = vpack.c.b16 %v425, %v417
    %v634 = vpack.c.b16 %v426, %v418
    %v635 = vpack.c.b16 %v427, %v419
    %v636 = vpack.c.b16 %v428, %v420
    %v637 = vpack.c.b16 %v429, %v421
    %v638 = vpack.c.b16 %v430, %v422
    %v639 = vpack.c.b16 %v431, %v423
    %v640 = vpack.c.b16 %v432, %v424
    %v641 = vpack.c.b16 %v441, %v433
    %v642 = vpack.c.b16 %v442, %v434
    %v643 = vpack.c.b16 %v443, %v435
    %v644 = vpack.c.b16 %v444, %v436
    %v645 = vpack.c.b16 %v445, %v437
    %v646 = vpack.c.b16 %v446, %v438
    %v647 = vpack.c.b16 %v447, %v439
    %v648 = vpack.c.b16 %v448, %v440
    %v649 = vpack.c.b16 %v457, %v449
    %v650 = vpack.c.b16 %v458, %v450
    %v651 = vpack.c.b16 %v459, %v451
    %v652 = vpack.c.b16 %v460, %v452
    %v653 = vpack.c.b16 %v461, %v453
    %v654 = vpack.c.b16 %v462, %v454
    %v655 = vpack.c.b16 %v463, %v455
    %v656 = vpack.c.b16 %v464, %v456
    %v657 = vpack.c.b16 %v473, %v465
    %v658 = vpack.c.b16 %v474, %v466
    %v659 = vpack.c.b16 %v475, %v467
    %v660 = vpack.c.b16 %v476, %v468
    %v661 = vpack.c.b16 %v477, %v469
    %v662 = vpack.c.b16 %v478, %v470
    %v663 = vpack.c.b16 %v479, %v471
    %v664 = vpack.c.b16 %v480, %v472
    %v665 = vpack.c.b16 %v489, %v481
    %v666 = vpack.c.b16 %v490, %v482
    %v667 = vpack.c.b16 %v491, %v483
    %v668 = vpack.c.b16 %v492, %v484
    %v669 = vpack.c.b16 %v493, %v485
    %v670 = vpack.c.b16 %v494, %v486
    %v671 = vpack.c.b16 %v495, %v487
    %v672 = vpack.c.b16 %v496, %v488
    %v673 = vpack.c.b16 %v505, %v497
    %v674 = vpack.c.b16 %v506, %v498
    %v675 = vpack.c.b16 %v507, %v499
    %v676 = vpack.c.b16 %v508, %v500
    %v677 = vpack.c.b16 %v509, %v501
    %v678 = vpack.c.b16 %v510, %v502
    %v679 = vpack.c.b16 %v511, %v503
    %v680 = vpack.c.b16 %v512, %v504
    %v681 = vpack.c.b16 %v521, %v513
    %v682 = vpack.c.b16 %v522, %v514
    %v683 = vpack.c.b16 %v523, %v515
    %v684 = vpack.c.b16 %v524, %v516
    %v685 = vpack.c.b16 %v525, %v517
    %v686 = vpack.c.b16 %v526, %v518
    %v687 = vpack.c.b16 %v527, %v519
    %v688 = vpack.c.b16 %v528, %v520
    %v689 = vpack.c.b16 %v537, %v529
    %v690 = vpack.c.b16 %v538, %v530
    %v691 = vpack.c.b16 %v539, %v531
    %v692 = vpack.c.b16 %v540, %v532
    %v693 = vpack.c.b16 %v541, %v533
    %v694 = vpack.c.b16 %v542, %v534
    %v695 = vpack.c.b16 %v543, %v535
    %v696 = vpack.c.b16 %v544, %v536
    %v697 = vpack.c.b16 %v553, %v545
    %v698 = vpack.c.b16 %v554, %v546
    %v699 = vpack.c.b16 %v555, %v547
    %v700 = vpack.c.b16 %v556, %v548
    %v701 = vpack.c.b16 %v557, %v549
    %v702 = vpack.c.b16 %v558, %v550
    %v703 = vpack.c.b16 %v559, %v551
    %v704 = vpack.c.b16 %v560, %v552
    %v705 = vpack.c.b16 %v569, %v561
    %v706 = vpack.c.b16 %v570, %v562
    %v707 = vpack.c.b16 %v571, %v563
    %v708 = vpack.c.b16 %v572, %v564
    %v709 = vpack.c.b16 %v573, %v565
    %v710 = vpack.c.b16 %v574, %v566
    %v711 = vpack.c.b16 %v575, %v567
    %v712 = vpack.c.b16 %v576, %v568
    %v713 = vpack.c.b16 %v585, %v577
    %v714 = vpack.c.b16 %v586, %v578
    %v715 = vpack.c.b16 %v587, %v579
    %v716 = vpack.c.b16 %v588, %v580
    %v717 = vpack.c.b16 %v589, %v581
    %v718 = vpack.c.b16 %v590, %v582
    %v719 = vpack.c.b16 %v591, %v583
    %v720 = vpack.c.b16 %v592, %v584
    %849 = vmatprep.subr.bf16.mxu0 %v594
    %850 = vmatpush1.bf16.msra.mxu0 %v593
    %851 = vmatprep.subr.bf16.mxu0 %v602
    %852 = vmatpush1.bf16.msra.mxu0 %v601
    %853 = vmatprep.subr.bf16.mxu0 %v610
    %854 = vmatpush1.bf16.msra.mxu0 %v609
    %855 = vmatprep.subr.bf16.mxu0 %v618
    %856 = vmatpush1.bf16.msra.mxu0 %v617
    %857 = vmatprep.subr.bf16.mxu0 %v626
    %858 = vmatpush1.bf16.msra.mxu0 %v625
    %859 = vmatprep.subr.bf16.mxu0 %v634
    %860 = vmatpush1.bf16.msra.mxu0 %v633
    %861 = vmatprep.subr.bf16.mxu0 %v642
    %862 = vmatpush1.bf16.msra.mxu0 %v641
    %863 = vmatprep.subr.bf16.mxu0 %v650
    %864 = vmatpush1.bf16.msra.mxu0 %v649
    %865 = vmatprep.subr.bf16.mxu0 %v658
    %866 = vmatpush1.bf16.msra.mxu0 %v657
    %867 = vmatprep.subr.bf16.mxu0 %v666
    %868 = vmatpush1.bf16.msra.mxu0 %v665
    %869 = vmatprep.subr.bf16.mxu0 %v674
    %870 = vmatpush1.bf16.msra.mxu0 %v673
    %871 = vmatprep.subr.bf16.mxu0 %v682
    %872 = vmatpush1.bf16.msra.mxu0 %v681
    %873 = vmatprep.subr.bf16.mxu0 %v690
    %874 = vmatpush1.bf16.msra.mxu0 %v689
    %875 = vmatprep.subr.bf16.mxu0 %v698
    %876 = vmatpush1.bf16.msra.mxu0 %v697
    %877 = vmatprep.subr.bf16.mxu0 %v706
    %878 = vmatpush1.bf16.msra.mxu0 %v705
    %879 = vmatprep.subr.bf16.mxu0 %v714
    %880 = vmatpush1.bf16.msra.mxu0 %v713
    %881 = vmatprep.mubr.bf16.mxu0 %v202
    %882 = vmatmul.mubr.bf16.gmra.mrb[0].mxu0 %v201
    %v883 = vpop.f32.mrb[0].mxu0
    %v884 = vadd.f32 %v152, %v883
    %v885 = vpop.f32.mrb[0].mxu0
    %v886 = vadd.f32 %v156, %v885
    %v887 = vpop.f32.mrb[0].mxu0
    %v888 = vadd.f32 %v152, %v887
    %v889 = vpop.f32.mrb[0].mxu0
    %v890 = vadd.f32 %v156, %v889
    %891 = vmatprep.mubr.bf16.mxu0 %v204
    %892 = vmatmul.mubr.bf16.gmra.mrb[0].mxu0 %v203
    %v893 = vpop.f32.mrb[0].mxu0
    %v894 = vadd.f32 %v152, %v893
    %v895 = vpop.f32.mrb[0].mxu0
    %v896 = vadd.f32 %v156, %v895
    %v897 = vpop.f32.mrb[0].mxu0
    %v898 = vadd.f32 %v152, %v897
    %v899 = vpop.f32.mrb[0].mxu0
    %v900 = vadd.f32 %v156, %v899
    %901 = vdwg.mxu0
    %902 = vmatprep.subr.bf16.mxu0 %v596
    %903 = vmatpush1.bf16.msra.mxu0 %v595
    %904 = vmatprep.subr.bf16.mxu0 %v604
    %905 = vmatpush1.bf16.msra.mxu0 %v603
    %906 = vmatprep.subr.bf16.mxu0 %v612
    %907 = vmatpush1.bf16.msra.mxu0 %v611
    %908 = vmatprep.subr.bf16.mxu0 %v620
    %909 = vmatpush1.bf16.msra.mxu0 %v619
    %910 = vmatprep.subr.bf16.mxu0 %v628
    %911 = vmatpush1.bf16.msra.mxu0 %v627
    %912 = vmatprep.subr.bf16.mxu0 %v636
    %913 = vmatpush1.bf16.msra.mxu0 %v635
    %914 = vmatprep.subr.bf16.mxu0 %v644
    %915 = vmatpush1.bf16.msra.mxu0 %v643
    %916 = vmatprep.subr.bf16.mxu0 %v652
    %917 = vmatpush1.bf16.msra.mxu0 %v651
    %918 = vmatprep.subr.bf16.mxu0 %v660
    %919 = vmatpush1.bf16.msra.mxu0 %v659
    %920 = vmatprep.subr.bf16.mxu0 %v668
    %921 = vmatpush1.bf16.msra.mxu0 %v667
    %922 = vmatprep.subr.bf16.mxu0 %v676
    %923 = vmatpush1.bf16.msra.mxu0 %v675
    %924 = vmatprep.subr.bf16.mxu0 %v684
    %925 = vmatpush1.bf16.msra.mxu0 %v683
    %926 = vmatprep.subr.bf16.mxu0 %v692
    %927 = vmatpush1.bf16.msra.mxu0 %v691
    %928 = vmatprep.subr.bf16.mxu0 %v700
    %929 = vmatpush1.bf16.msra.mxu0 %v699
    %930 = vmatprep.subr.bf16.mxu0 %v708
    %931 = vmatpush1.bf16.msra.mxu0 %v707
    %932 = vmatprep.subr.bf16.mxu0 %v716
    %933 = vmatpush1.bf16.msra.mxu0 %v715
    %934 = vmatprep.mubr.bf16.mxu0 %v202
    %935 = vmatmul.mubr.bf16.gmra.mrb[0].mxu0 %v201
    %v936 = vpop.f32.mrb[0].mxu0
    %v937 = vadd.f32 %v160, %v936
    %v938 = vpop.f32.mrb[0].mxu0
    %v939 = vadd.f32 %v164, %v938
    %v940 = vpop.f32.mrb[0].mxu0
    %v941 = vadd.f32 %v160, %v940
    %v942 = vpop.f32.mrb[0].mxu0
    %v943 = vadd.f32 %v164, %v942
    %944 = vmatprep.mubr.bf16.mxu0 %v204
    %945 = vmatmul.mubr.bf16.gmra.mrb[0].mxu0 %v203
    %v946 = vpop.f32.mrb[0].mxu0
    %v947 = vadd.f32 %v160, %v946
    %v948 = vpop.f32.mrb[0].mxu0
    %v949 = vadd.f32 %v164, %v948
    %v950 = vpop.f32.mrb[0].mxu0
    %v951 = vadd.f32 %v160, %v950
    %v952 = vpop.f32.mrb[0].mxu0
    %v953 = vadd.f32 %v164, %v952
    %954 = vdwg.mxu0
    %955 = vmatprep.subr.bf16.mxu0 %v598
    %956 = vmatpush1.bf16.msra.mxu0 %v597
    %957 = vmatprep.subr.bf16.mxu0 %v606
    %958 = vmatpush1.bf16.msra.mxu0 %v605
    %959 = vmatprep.subr.bf16.mxu0 %v614
    %960 = vmatpush1.bf16.msra.mxu0 %v613
    %961 = vmatprep.subr.bf16.mxu0 %v622
    %962 = vmatpush1.bf16.msra.mxu0 %v621
    %963 = vmatprep.subr.bf16.mxu0 %v630
    %964 = vmatpush1.bf16.msra.mxu0 %v629
    %965 = vmatprep.subr.bf16.mxu0 %v638
    %966 = vmatpush1.bf16.msra.mxu0 %v637
    %967 = vmatprep.subr.bf16.mxu0 %v646
    %968 = vmatpush1.bf16.msra.mxu0 %v645
    %969 = vmatprep.subr.bf16.mxu0 %v654
    %970 = vmatpush1.bf16.msra.mxu0 %v653
    %971 = vmatprep.subr.bf16.mxu0 %v662
    %972 = vmatpush1.bf16.msra.mxu0 %v661
    %973 = vmatprep.subr.bf16.mxu0 %v670
    %974 = vmatpush1.bf16.msra.mxu0 %v669
    %975 = vmatprep.subr.bf16.mxu0 %v678
    %976 = vmatpush1.bf16.msra.mxu0 %v677
    %977 = vmatprep.subr.bf16.mxu0 %v686
    %978 = vmatpush1.bf16.msra.mxu0 %v685
    %979 = vmatprep.subr.bf16.mxu0 %v694
    %980 = vmatpush1.bf16.msra.mxu0 %v693
    %981 = vmatprep.subr.bf16.mxu0 %v702
    %982 = vmatpush1.bf16.msra.mxu0 %v701
    %983 = vmatprep.subr.bf16.mxu0 %v710
    %984 = vmatpush1.bf16.msra.mxu0 %v709
    %985 = vmatprep.subr.bf16.mxu0 %v718
    %986 = vmatpush1.bf16.msra.mxu0 %v717
    %987 = vmatprep.mubr.bf16.mxu0 %v202
    %988 = vmatmul.mubr.bf16.gmra.mrb[0].mxu0 %v201
    %v989 = vpop.f32.mrb[0].mxu0
    %v990 = vadd.f32 %v168, %v989
    %v991 = vpop.f32.mrb[0].mxu0
    %v992 = vadd.f32 %v172, %v991
    %v993 = vpop.f32.mrb[0].mxu0
    %v994 = vadd.f32 %v168, %v993
    %v995 = vpop.f32.mrb[0].mxu0
    %v996 = vadd.f32 %v172, %v995
    %997 = vmatprep.mubr.bf16.mxu0 %v204
    %998 = vmatmul.mubr.bf16.gmra.mrb[0].mxu0 %v203
    %v999 = vpop.f32.mrb[0].mxu0
    %v1000 = vadd.f32 %v168, %v999
    %v1001 = vpop.f32.mrb[0].mxu0
    %v1002 = vadd.f32 %v172, %v1001
    %v1003 = vpop.f32.mrb[0].mxu0
    %v1004 = vadd.f32 %v168, %v1003
    %v1005 = vpop.f32.mrb[0].mxu0
    %v1006 = vadd.f32 %v172, %v1005
    %1007 = vdwg.mxu0
    %1008 = vmatprep.subr.bf16.mxu0 %v600
    %1009 = vmatpush1.bf16.msra.mxu0 %v599
    %1010 = vmatprep.subr.bf16.mxu0 %v608
    %1011 = vmatpush1.bf16.msra.mxu0 %v607
    %1012 = vmatprep.subr.bf16.mxu0 %v616
    %1013 = vmatpush1.bf16.msra.mxu0 %v615
    %1014 = vmatprep.subr.bf16.mxu0 %v624
    %1015 = vmatpush1.bf16.msra.mxu0 %v623
    %1016 = vmatprep.subr.bf16.mxu0 %v632
    %1017 = vmatpush1.bf16.msra.mxu0 %v631
    %1018 = vmatprep.subr.bf16.mxu0 %v640
    %1019 = vmatpush1.bf16.msra.mxu0 %v639
    %1020 = vmatprep.subr.bf16.mxu0 %v648
    %1021 = vmatpush1.bf16.msra.mxu0 %v647
    %1022 = vmatprep.subr.bf16.mxu0 %v656
    %1023 = vmatpush1.bf16.msra.mxu0 %v655
    %1024 = vmatprep.subr.bf16.mxu0 %v664
    %1025 = vmatpush1.bf16.msra.mxu0 %v663
    %1026 = vmatprep.subr.bf16.mxu0 %v672
    %1027 = vmatpush1.bf16.msra.mxu0 %v671
    %1028 = vmatprep.subr.bf16.mxu0 %v680
    %1029 = vmatpush1.bf16.msra.mxu0 %v679
    %1030 = vmatprep.subr.bf16.mxu0 %v688
    %1031 = vmatpush1.bf16.msra.mxu0 %v687
    %1032 = vmatprep.subr.bf16.mxu0 %v696
    %1033 = vmatpush1.bf16.msra.mxu0 %v695
    %1034 = vmatprep.subr.bf16.mxu0 %v704
    %1035 = vmatpush1.bf16.msra.mxu0 %v703
    %1036 = vmatprep.subr.bf16.mxu0 %v712
    %1037 = vmatpush1.bf16.msra.mxu0 %v711
    %1038 = vmatprep.subr.bf16.mxu0 %v720
    %1039 = vmatpush1.bf16.msra.mxu0 %v719
    %1040 = vmatprep.mubr.bf16.mxu0 %v202
    %1041 = vmatmul.mubr.bf16.gmra.mrb[0].mxu0 %v201
    %v1042 = vpop.f32.mrb[0].mxu0
    %v1043 = vadd.f32 %v176, %v1042
    %v1044 = vpop.f32.mrb[0].mxu0
    %v1045 = vadd.f32 %v180, %v1044
    %v1046 = vpop.f32.mrb[0].mxu0
    %v1047 = vadd.f32 %v176, %v1046
    %v1048 = vpop.f32.mrb[0].mxu0
    %v1049 = vadd.f32 %v180, %v1048
    %1050 = vmatprep.mubr.bf16.mxu0 %v204
    %1051 = vmatmul.mubr.bf16.gmra.mrb[0].mxu0 %v203
    %v1052 = vpop.f32.mrb[0].mxu0
    %v1053 = vadd.f32 %v176, %v1052
    %v1054 = vpop.f32.mrb[0].mxu0
    %v1055 = vadd.f32 %v180, %v1054
    %v1056 = vpop.f32.mrb[0].mxu0
    %v1057 = vadd.f32 %v176, %v1056
    %v1058 = vpop.f32.mrb[0].mxu0
    %v1059 = vadd.f32 %v180, %v1058
    %1060 = vdwg.mxu0
    %1061 = vst [vmem:[#allocation2] sm:$0xff] %v884
    %1062 = vst [vmem:[#allocation2 + $0x8] sm:$0xff] %v886
    %1063 = vst [vmem:[#allocation2 + $0x10] sm:$0xff] %v937
    %1064 = vst [vmem:[#allocation2 + $0x18] sm:$0xff] %v939
    %1065 = vst [vmem:[#allocation2 + $0x20] sm:$0xff] %v990
    %1066 = vst [vmem:[#allocation2 + $0x28] sm:$0xff] %v992
    %1067 = vst [vmem:[#allocation2 + $0x30] sm:$0xff] %v1043
    %1068 = vst [vmem:[#allocation2 + $0x38] sm:$0xff] %v1045
    %1069 = vst [vmem:[#allocation2 + $0x40] sm:$0xff] %v888
    %1070 = vst [vmem:[#allocation2 + $0x48] sm:$0xff] %v890
    %1071 = vst [vmem:[#allocation2 + $0x50] sm:$0xff] %v941
    %1072 = vst [vmem:[#allocation2 + $0x58] sm:$0xff] %v943
    %1073 = vst [vmem:[#allocation2 + $0x60] sm:$0xff] %v994
    %1074 = vst [vmem:[#allocation2 + $0x68] sm:$0xff] %v996
    %1075 = vst [vmem:[#allocation2 + $0x70] sm:$0xff] %v1047
    %1076 = vst [vmem:[#allocation2 + $0x78] sm:$0xff] %v1049
    %1077 = vst [vmem:[#allocation2 + $0x80] sm:$0xff] %v894
    %1078 = vst [vmem:[#allocation2 + $0x88] sm:$0xff] %v896
    %1079 = vst [vmem:[#allocation2 + $0x90] sm:$0xff] %v947
    %1080 = vst [vmem:[#allocation2 + $0x98] sm:$0xff] %v949
    %1081 = vst [vmem:[#allocation2 + $0xa0] sm:$0xff] %v1000
    %1082 = vst [vmem:[#allocation2 + $0xa8] sm:$0xff] %v1002
    %1083 = vst [vmem:[#allocation2 + $0xb0] sm:$0xff] %v1053
    %1084 = vst [vmem:[#allocation2 + $0xb8] sm:$0xff] %v1055
    %1085 = vst [vmem:[#allocation2 + $0xc0] sm:$0xff] %v898
    %1086 = vst [vmem:[#allocation2 + $0xc8] sm:$0xff] %v900
    %1087 = vst [vmem:[#allocation2 + $0xd0] sm:$0xff] %v951
    %1088 = vst [vmem:[#allocation2 + $0xd8] sm:$0xff] %v953
    %1089 = vst [vmem:[#allocation2 + $0xe0] sm:$0xff] %v1004
    %1090 = vst [vmem:[#allocation2 + $0xe8] sm:$0xff] %v1006
    %1091 = vst [vmem:[#allocation2 + $0xf0] sm:$0xff] %v1057
    %1092 = vst [vmem:[#allocation2 + $0xf8] sm:$0xff] %v1059
    // Predicated region
    $region14: #{minimal_llm_forward.5} parent=1 // pred_check
      _
    $region15: #{minimal_llm_forward.5} parent=1 // pred_check_branch
      %1094 = sbr.rel (0) target = $region17
    $region16: #{minimal_llm_forward.5} parent=1 // pred_region
      %s1096 = ssub.s32 4096, 4096
      %1097 = vsyncadd [#allocation3], %s1096
      %s1098 = sshll.u32 [#allocation2], 4
      %s1099 = int_to_ptr.vmem [resolvable:$true] %s1098
      %1104 = dma.vmem_to_hbm [thread:$0]  %s1099, 4096, %s3, [#allocation3], 1024, 1024, 64
    $region17: #{minimal_llm_forward.5} parent=1 // pred_fallthru
      _
    // Predicated region
    $region18: #{minimal_llm_forward.5} parent=1 // pred_check
      _
    $region19: #{minimal_llm_forward.5} parent=1 // pred_check_branch
      %1106 = sbr.rel (0) target = $region21
    $region20: #{minimal_llm_forward.5} parent=1 // pred_region
      %1107 = dma.done [#allocation3], 4096
    $region21: #{minimal_llm_forward.5} parent=1 // pred_fallthru
      _
    %1108 = vsyncpa [#allocation3], 1

// kernel: minimal_llm_forward.3
$region0: #{minimal_llm_forward.3}
  #allocation0 [shape = 'u32[]', space=smem, size = 0x4, offset = 0x4, fixed_abs, tag = 'smem constant byte address 0x4 - core index']
  #allocation1 [shape = 'u32[144,128]{1,0:T(1,128)}', space=vmem, size = 0x12000, scoped, tag = 'internal scratch']
  %s0 = inlined_call_operand.vmem [shape: bf16[2,16,256], index: 0, kind: input, shape index: {}]
  %s1 = inlined_call_operand.vmem [shape: bf16[256,768], index: 1, kind: input, shape index: {}]
  %s2 = inlined_call_operand.vmem [shape: f32[1,768], index: 2, kind: input, shape index: {}]
  %s3 = inlined_call_operand.hbm [shape: bf16[256,256], index: 3, kind: input, shape index: {}]
  %s4 = inlined_call_operand.vmem [shape: f32[1,256], index: 4, kind: input, shape index: {}]
  %s5 = inlined_call_operand.vmem [shape: f32[1,256], index: 5, kind: input, shape index: {}]
  %s6 = inlined_call_operand.vmem [shape: f32[1,256], index: 6, kind: input, shape index: {}]
  %s7 = inlined_call_operand.hbm [shape: bf16[256,512], index: 7, kind: input, shape index: {}]
  %s8 = inlined_call_operand.vmem [shape: f32[1,512], index: 8, kind: input, shape index: {}]
  %s9 = inlined_call_operand.hbm [shape: bf16[512,256], index: 9, kind: input, shape index: {}]
  %s10 = inlined_call_operand.vmem [shape: f32[1,256], index: 10, kind: input, shape index: {}]
  %s11 = inlined_call_operand.vmem [shape: f32[1,256], index: 11, kind: input, shape index: {}]
  %s12 = inlined_call_operand.vmem [shape: f32[1,256], index: 12, kind: input, shape index: {}]
  %s13 = inlined_call_operand.vmem [shape: bf16[256,4], index: 13, kind: input, shape index: {}]
  %s14 = inlined_call_operand.vmem [shape: bf16[4,256], index: 14, kind: input, shape index: {}]
  %s15 = inlined_call_operand.vmem [shape: bf16[2,16,256], index: 15, kind: output, shape index: {}]
  %s16 = sld [smem:[#allocation0]]
  $region177: #{minimal_llm_forward.3} parent=0
    _
  %s18 = ssub.s32 1, %s16
  %s19 = scalar_select 0, %s18, %s16
  $region1: #{minimal_llm_forward.3} parent=0
    #allocation2 [shape = 'u8[16384]{0}', space=vmem, size = 0x4000, scoped, tag = 'input window, operand 0']
    #allocation3 [shape = 'u8[131072]{0}', space=vmem, size = 0x20000, scoped, tag = 'input window, operand 3, single buffered']
    #allocation4 [shape = 's32[2]{0}', space=sflag, size = 0x8, scoped, tag = 'scoped memory for minimal_llm_forward.3']
    #allocation5 [shape = 'u8[262144]{0}', space=vmem, size = 0x40000, scoped, tag = 'input window, operand 7, single buffered']
    #allocation6 [shape = 's32[1]{0}', space=sflag, size = 0x4, scoped, tag = 'scoped memory for minimal_llm_forward.3']
    #allocation7 [shape = 'u8[262144]{0}', space=vmem, size = 0x40000, scoped, tag = 'input window, operand 9, single buffered']
    #allocation8 [shape = 'u8[16384]{0}', space=vmem, size = 0x4000, scoped, tag = 'output window, operand 0']
    %20 = vsyncpa [#allocation4], 0
    %21 = vsyncpa [#allocation6], 0
    loop: start=0, step=1, limit=4
    $region2: #{minimal_llm_forward.3} parent=1 // loop_pre_header
      _
    $region3: #{minimal_llm_forward.3} parent=1 // loop_header
      %s23 = sphi 0, %s27
      %p24 = scmp.ge.s32.totalorder %s23, 4
      %s33 = sphi 0, %s35
      %s36 = sphi 0, %s33
      %s37 = sphi 0, %s36
      %s53 = sphi 0, %s37
      %s57 = sphi 0, %s57
      %s59 = sphi 0, %s57
      %s60 = sphi 0, %s59
      %s74 = sphi 0, %s60
      %s78 = sphi 0, %s78
      %s80 = sphi 0, %s78
      %s81 = sphi 0, %s80
      %s95 = sphi 0, %s81
      %s99 = sphi 0, %s99
      %s101 = sphi 0, %s99
      %s102 = sphi 0, %s101
      %s116 = sphi 0, %s102
      %s120 = sphi 0, %s120
      %s122 = sphi 0, %s120
      %s123 = sphi 0, %s122
      %s137 = sphi 0, %s123
      %s141 = sphi 0, %s141
      %s143 = sphi 0, %s141
      %s144 = sphi 0, %s143
      %s158 = sphi 0, %s144
      %s162 = sphi 0, %s162
      %s164 = sphi 0, %s162
      %s165 = sphi 0, %s164
      %s179 = sphi 0, %s165
      %s183 = sphi 0, %s183
      %s185 = sphi 0, %s183
      %s186 = sphi 0, %s185
      %s200 = sphi 0, %s186
      %s204 = sphi 0, %s204
      %s206 = sphi 0, %s204
      %s207 = sphi 0, %s206
      %s221 = sphi 0, %s207
      %s225 = sphi 0, %s225
      %s227 = sphi 0, %s225
      %s228 = sphi 0, %s227
      %s242 = sphi 0, %s228
      %s246 = sphi 0, %s246
      %s248 = sphi 0, %s246
      %s249 = sphi 0, %s248
      %s263 = sphi 0, %s249
      %s267 = sphi 0, %s267
      %s269 = sphi 0, %s267
      %s270 = sphi 0, %s269
      %s284 = sphi 0, %s270
      %s288 = sphi 0, %s288
      %s290 = sphi 0, %s288
      %s291 = sphi 0, %s290
      %s305 = sphi 0, %s291
      %s309 = sphi 0, %s309
      %s311 = sphi 0, %s309
      %s312 = sphi 0, %s311
      %s326 = sphi 0, %s312
      %s330 = sphi 0, %s330
      %s332 = sphi 0, %s330
      %s333 = sphi 0, %s332
      %s347 = sphi 0, %s333
      %s353 = sphi 0, %s355
      %s356 = sphi 0, %s353
      %s357 = sphi 0, %s356
      %s373 = sphi 0, %s357
    $region4: #{minimal_llm_forward.3} parent=1 // loop_header_branch
      %26 = sbr.rel (%p24) target = $region8
    $region5: #{minimal_llm_forward.3} parent=1 // loop_body
      %s28 = ssub.s32 %s23, 1
      %s29 = ssub.s32 %s23, 2
      %s30 = sadd.s32 %s23, 1
      %s31 = ssub.s32 %s23, %s30
      %p32 = scmp.eq.s32.totalorder %s31, 0
      %s34 = sadd.s32 %s33, 1
      %s35 = scalar_select %p32, %s33, %s34
      %p38 = pneg %p32
      %p39 = scmp.eq.s32.totalorder %s23, 1
      %p40 = por %p38, %p39
      %p41 = scmp.ne.s32.totalorder %s33, %s36
      %p42 = scmp.eq.s32.totalorder %s23, 0
      %p43 = por %p41, %p42
      %p44 = scmp.ne.s32.totalorder %s33, %s36
      %p45 = scmp.eq.s32.totalorder %s28, 1
      %p46 = por %p44, %p45
      %p47 = scmp.ne.s32.totalorder %s36, %s37
      %p48 = scmp.eq.s32.totalorder %s28, 0
      %p49 = por %p47, %p48
      %p50 = scmp.ne.s32.totalorder %s36, %s37
      %p51 = scmp.eq.s32.totalorder %s29, 1
      %p52 = por %p50, %p51
      %p54 = scmp.ne.s32.totalorder %s37, %s53
      %p55 = scmp.eq.s32.totalorder %s29, 0
      %p56 = por %p54, %p55
      %s58 = sadd.s32 %s57, 1
      %p61 = scmp.eq.s32.totalorder %s23, 1
      %p62 = scmp.ne.s32.totalorder %s57, %s59
      %p63 = scmp.eq.s32.totalorder %s23, 0
      %p64 = por %p62, %p63
      %p65 = scmp.ne.s32.totalorder %s57, %s59
      %p66 = scmp.eq.s32.totalorder %s28, 1
      %p67 = por %p65, %p66
      %p68 = scmp.ne.s32.totalorder %s59, %s60
      %p69 = scmp.eq.s32.totalorder %s28, 0
      %p70 = por %p68, %p69
      %p71 = scmp.ne.s32.totalorder %s59, %s60
      %p72 = scmp.eq.s32.totalorder %s29, 1
      %p73 = por %p71, %p72
      %p75 = scmp.ne.s32.totalorder %s60, %s74
      %p76 = scmp.eq.s32.totalorder %s29, 0
      %p77 = por %p75, %p76
      %s79 = sadd.s32 %s78, 1
      %p82 = scmp.eq.s32.totalorder %s23, 1
      %p83 = scmp.ne.s32.totalorder %s78, %s80
      %p84 = scmp.eq.s32.totalorder %s23, 0
      %p85 = por %p83, %p84
      %p86 = scmp.ne.s32.totalorder %s78, %s80
      %p87 = scmp.eq.s32.totalorder %s28, 1
      %p88 = por %p86, %p87
      %p89 = scmp.ne.s32.totalorder %s80, %s81
      %p90 = scmp.eq.s32.totalorder %s28, 0
      %p91 = por %p89, %p90
      %p92 = scmp.ne.s32.totalorder %s80, %s81
      %p93 = scmp.eq.s32.totalorder %s29, 1
      %p94 = por %p92, %p93
      %p96 = scmp.ne.s32.totalorder %s81, %s95
      %p97 = scmp.eq.s32.totalorder %s29, 0
      %p98 = por %p96, %p97
      %s100 = sadd.s32 %s99, 1
      %p103 = scmp.eq.s32.totalorder %s23, 1
      %p104 = scmp.ne.s32.totalorder %s99, %s101
      %p105 = scmp.eq.s32.totalorder %s23, 0
      %p106 = por %p104, %p105
      %p107 = scmp.ne.s32.totalorder %s99, %s101
      %p108 = scmp.eq.s32.totalorder %s28, 1
      %p109 = por %p107, %p108
      %p110 = scmp.ne.s32.totalorder %s101, %s102
      %p111 = scmp.eq.s32.totalorder %s28, 0
      %p112 = por %p110, %p111
      %p113 = scmp.ne.s32.totalorder %s101, %s102
      %p114 = scmp.eq.s32.totalorder %s29, 1
      %p115 = por %p113, %p114
      %p117 = scmp.ne.s32.totalorder %s102, %s116
      %p118 = scmp.eq.s32.totalorder %s29, 0
      %p119 = por %p117, %p118
      %s121 = sadd.s32 %s120, 1
      %p124 = scmp.eq.s32.totalorder %s23, 1
      %p125 = scmp.ne.s32.totalorder %s120, %s122
      %p126 = scmp.eq.s32.totalorder %s23, 0
      %p127 = por %p125, %p126
      %p128 = scmp.ne.s32.totalorder %s120, %s122
      %p129 = scmp.eq.s32.totalorder %s28, 1
      %p130 = por %p128, %p129
      %p131 = scmp.ne.s32.totalorder %s122, %s123
      %p132 = scmp.eq.s32.totalorder %s28, 0
      %p133 = por %p131, %p132
      %p134 = scmp.ne.s32.totalorder %s122, %s123
      %p135 = scmp.eq.s32.totalorder %s29, 1
      %p136 = por %p134, %p135
      %p138 = scmp.ne.s32.totalorder %s123, %s137
      %p139 = scmp.eq.s32.totalorder %s29, 0
      %p140 = por %p138, %p139
      %s142 = sadd.s32 %s141, 1
      %p145 = scmp.eq.s32.totalorder %s23, 1
      %p146 = scmp.ne.s32.totalorder %s141, %s143
      %p147 = scmp.eq.s32.totalorder %s23, 0
      %p148 = por %p146, %p147
      %p149 = scmp.ne.s32.totalorder %s141, %s143
      %p150 = scmp.eq.s32.totalorder %s28, 1
      %p151 = por %p149, %p150
      %p152 = scmp.ne.s32.totalorder %s143, %s144
      %p153 = scmp.eq.s32.totalorder %s28, 0
      %p154 = por %p152, %p153
      %p155 = scmp.ne.s32.totalorder %s143, %s144
      %p156 = scmp.eq.s32.totalorder %s29, 1
      %p157 = por %p155, %p156
      %p159 = scmp.ne.s32.totalorder %s144, %s158
      %p160 = scmp.eq.s32.totalorder %s29, 0
      %p161 = por %p159, %p160
      %s163 = sadd.s32 %s162, 1
      %p166 = scmp.eq.s32.totalorder %s23, 1
      %p167 = scmp.ne.s32.totalorder %s162, %s164
      %p168 = scmp.eq.s32.totalorder %s23, 0
      %p169 = por %p167, %p168
      %p170 = scmp.ne.s32.totalorder %s162, %s164
      %p171 = scmp.eq.s32.totalorder %s28, 1
      %p172 = por %p170, %p171
      %p173 = scmp.ne.s32.totalorder %s164, %s165
      %p174 = scmp.eq.s32.totalorder %s28, 0
      %p175 = por %p173, %p174
      %p176 = scmp.ne.s32.totalorder %s164, %s165
      %p177 = scmp.eq.s32.totalorder %s29, 1
      %p178 = por %p176, %p177
      %p180 = scmp.ne.s32.totalorder %s165, %s179
      %p181 = scmp.eq.s32.totalorder %s29, 0
      %p182 = por %p180, %p181
      %s184 = sadd.s32 %s183, 1
      %p187 = scmp.eq.s32.totalorder %s23, 1
      %p188 = scmp.ne.s32.totalorder %s183, %s185
      %p189 = scmp.eq.s32.totalorder %s23, 0
      %p190 = por %p188, %p189
      %p191 = scmp.ne.s32.totalorder %s183, %s185
      %p192 = scmp.eq.s32.totalorder %s28, 1
      %p193 = por %p191, %p192
      %p194 = scmp.ne.s32.totalorder %s185, %s186
      %p195 = scmp.eq.s32.totalorder %s28, 0
      %p196 = por %p194, %p195
      %p197 = scmp.ne.s32.totalorder %s185, %s186
      %p198 = scmp.eq.s32.totalorder %s29, 1
      %p199 = por %p197, %p198
      %p201 = scmp.ne.s32.totalorder %s186, %s200
      %p202 = scmp.eq.s32.totalorder %s29, 0
      %p203 = por %p201, %p202
      %s205 = sadd.s32 %s204, 1
      %p208 = scmp.eq.s32.totalorder %s23, 1
      %p209 = scmp.ne.s32.totalorder %s204, %s206
      %p210 = scmp.eq.s32.totalorder %s23, 0
      %p211 = por %p209, %p210
      %p212 = scmp.ne.s32.totalorder %s204, %s206
      %p213 = scmp.eq.s32.totalorder %s28, 1
      %p214 = por %p212, %p213
      %p215 = scmp.ne.s32.totalorder %s206, %s207
      %p216 = scmp.eq.s32.totalorder %s28, 0
      %p217 = por %p215, %p216
      %p218 = scmp.ne.s32.totalorder %s206, %s207
      %p219 = scmp.eq.s32.totalorder %s29, 1
      %p220 = por %p218, %p219
      %p222 = scmp.ne.s32.totalorder %s207, %s221
      %p223 = scmp.eq.s32.totalorder %s29, 0
      %p224 = por %p222, %p223
      %s226 = sadd.s32 %s225, 1
      %p229 = scmp.eq.s32.totalorder %s23, 1
      %p230 = scmp.ne.s32.totalorder %s225, %s227
      %p231 = scmp.eq.s32.totalorder %s23, 0
      %p232 = por %p230, %p231
      %p233 = scmp.ne.s32.totalorder %s225, %s227
      %p234 = scmp.eq.s32.totalorder %s28, 1
      %p235 = por %p233, %p234
      %p236 = scmp.ne.s32.totalorder %s227, %s228
      %p237 = scmp.eq.s32.totalorder %s28, 0
      %p238 = por %p236, %p237
      %p239 = scmp.ne.s32.totalorder %s227, %s228
      %p240 = scmp.eq.s32.totalorder %s29, 1
      %p241 = por %p239, %p240
      %p243 = scmp.ne.s32.totalorder %s228, %s242
      %p244 = scmp.eq.s32.totalorder %s29, 0
      %p245 = por %p243, %p244
      %s247 = sadd.s32 %s246, 1
      %p250 = scmp.eq.s32.totalorder %s23, 1
      %p251 = scmp.ne.s32.totalorder %s246, %s248
      %p252 = scmp.eq.s32.totalorder %s23, 0
      %p253 = por %p251, %p252
      %p254 = scmp.ne.s32.totalorder %s246, %s248
      %p255 = scmp.eq.s32.totalorder %s28, 1
      %p256 = por %p254, %p255
      %p257 = scmp.ne.s32.totalorder %s248, %s249
      %p258 = scmp.eq.s32.totalorder %s28, 0
      %p259 = por %p257, %p258
      %p260 = scmp.ne.s32.totalorder %s248, %s249
      %p261 = scmp.eq.s32.totalorder %s29, 1
      %p262 = por %p260, %p261
      %p264 = scmp.ne.s32.totalorder %s249, %s263
      %p265 = scmp.eq.s32.totalorder %s29, 0
      %p266 = por %p264, %p265
      %s268 = sadd.s32 %s267, 1
      %p271 = scmp.eq.s32.totalorder %s23, 1
      %p272 = scmp.ne.s32.totalorder %s267, %s269
      %p273 = scmp.eq.s32.totalorder %s23, 0
      %p274 = por %p272, %p273
      %p275 = scmp.ne.s32.totalorder %s267, %s269
      %p276 = scmp.eq.s32.totalorder %s28, 1
      %p277 = por %p275, %p276
      %p278 = scmp.ne.s32.totalorder %s269, %s270
      %p279 = scmp.eq.s32.totalorder %s28, 0
      %p280 = por %p278, %p279
      %p281 = scmp.ne.s32.totalorder %s269, %s270
      %p282 = scmp.eq.s32.totalorder %s29, 1
      %p283 = por %p281, %p282
      %p285 = scmp.ne.s32.totalorder %s270, %s284
      %p286 = scmp.eq.s32.totalorder %s29, 0
      %p287 = por %p285, %p286
      %s289 = sadd.s32 %s288, 1
      %p292 = scmp.eq.s32.totalorder %s23, 1
      %p293 = scmp.ne.s32.totalorder %s288, %s290
      %p294 = scmp.eq.s32.totalorder %s23, 0
      %p295 = por %p293, %p294
      %p296 = scmp.ne.s32.totalorder %s288, %s290
      %p297 = scmp.eq.s32.totalorder %s28, 1
      %p298 = por %p296, %p297
      %p299 = scmp.ne.s32.totalorder %s290, %s291
      %p300 = scmp.eq.s32.totalorder %s28, 0
      %p301 = por %p299, %p300
      %p302 = scmp.ne.s32.totalorder %s290, %s291
      %p303 = scmp.eq.s32.totalorder %s29, 1
      %p304 = por %p302, %p303
      %p306 = scmp.ne.s32.totalorder %s291, %s305
      %p307 = scmp.eq.s32.totalorder %s29, 0
      %p308 = por %p306, %p307
      %s310 = sadd.s32 %s309, 1
      %p313 = scmp.eq.s32.totalorder %s23, 1
      %p314 = scmp.ne.s32.totalorder %s309, %s311
      %p315 = scmp.eq.s32.totalorder %s23, 0
      %p316 = por %p314, %p315
      %p317 = scmp.ne.s32.totalorder %s309, %s311
      %p318 = scmp.eq.s32.totalorder %s28, 1
      %p319 = por %p317, %p318
      %p320 = scmp.ne.s32.totalorder %s311, %s312
      %p321 = scmp.eq.s32.totalorder %s28, 0
      %p322 = por %p320, %p321
      %p323 = scmp.ne.s32.totalorder %s311, %s312
      %p324 = scmp.eq.s32.totalorder %s29, 1
      %p325 = por %p323, %p324
      %p327 = scmp.ne.s32.totalorder %s312, %s326
      %p328 = scmp.eq.s32.totalorder %s29, 0
      %p329 = por %p327, %p328
      %s331 = sadd.s32 %s330, 1
      %p334 = scmp.eq.s32.totalorder %s23, 1
      %p335 = scmp.ne.s32.totalorder %s330, %s332
      %p336 = scmp.eq.s32.totalorder %s23, 0
      %p337 = por %p335, %p336
      %p338 = scmp.ne.s32.totalorder %s330, %s332
      %p339 = scmp.eq.s32.totalorder %s28, 1
      %p340 = por %p338, %p339
      %p341 = scmp.ne.s32.totalorder %s332, %s333
      %p342 = scmp.eq.s32.totalorder %s28, 0
      %p343 = por %p341, %p342
      %p344 = scmp.ne.s32.totalorder %s332, %s333
      %p345 = scmp.eq.s32.totalorder %s29, 1
      %p346 = por %p344, %p345
      %p348 = scmp.ne.s32.totalorder %s333, %s347
      %p349 = scmp.eq.s32.totalorder %s29, 0
      %p350 = por %p348, %p349
      %s351 = ssub.s32 %s23, %s30
      %p352 = scmp.eq.s32.totalorder %s351, 0
      %s354 = sadd.s32 %s353, 1
      %s355 = scalar_select %p352, %s353, %s354
      %p358 = pneg %p352
      %p359 = scmp.eq.s32.totalorder %s23, 1
      %p360 = por %p358, %p359
      %p361 = scmp.ne.s32.totalorder %s353, %s356
      %p362 = scmp.eq.s32.totalorder %s23, 0
      %p363 = por %p361, %p362
      %p364 = scmp.ne.s32.totalorder %s353, %s356
      %p365 = scmp.eq.s32.totalorder %s28, 1
      %p366 = por %p364, %p365
      %p367 = scmp.ne.s32.totalorder %s356, %s357
      %p368 = scmp.eq.s32.totalorder %s28, 0
      %p369 = por %p367, %p368
      %p370 = scmp.ne.s32.totalorder %s356, %s357
      %p371 = scmp.eq.s32.totalorder %s29, 1
      %p372 = por %p370, %p371
      %p374 = scmp.ne.s32.totalorder %s357, %s373
      %p375 = scmp.eq.s32.totalorder %s29, 0
      %p376 = por %p374, %p375
      %p377 = scmp.le.s32.totalorder 1, %s23
      %p378 = scmp.lt.s32.totalorder %s23, 3
      %p379 = pnand %p377, %p378
      %p380 = pneg %p379
      // Predicated region
      $region9: #{minimal_llm_forward.3} parent=5 // pred_check
        _
      $region10: #{minimal_llm_forward.3} parent=5 // pred_check_branch
        %382 = sbr.rel (%p379) target = $region12
      $region11: #{minimal_llm_forward.3} parent=5 // pred_region
        %s383 = ssub.s32 %s23, 1
        // Predicated region
        $region13: #{minimal_llm_forward.3} parent=11 // pred_check
          %p384 = pneg %p70
        $region14: #{minimal_llm_forward.3} parent=11 // pred_check_branch
          %386 = sbr.rel (%p384) target = $region16
        $region15: #{minimal_llm_forward.3} parent=11 // pred_region
          _
        $region16: #{minimal_llm_forward.3} parent=11 // pred_fallthru
          _
        // Predicated region
        $region17: #{minimal_llm_forward.3} parent=11 // pred_check
          %p387 = pneg %p91
        $region18: #{minimal_llm_forward.3} parent=11 // pred_check_branch
          %389 = sbr.rel (%p387) target = $region20
        $region19: #{minimal_llm_forward.3} parent=11 // pred_region
          _
        $region20: #{minimal_llm_forward.3} parent=11 // pred_fallthru
          _
        // Predicated region
        $region21: #{minimal_llm_forward.3} parent=11 // pred_check
          %p390 = pneg %p112
        $region22: #{minimal_llm_forward.3} parent=11 // pred_check_branch
          %392 = sbr.rel (%p390) target = $region24
        $region23: #{minimal_llm_forward.3} parent=11 // pred_region
          %s394 = ssub.s32 4096, 4096
          %395 = vsyncadd [#allocation4], %s394
          %s396 = sshll.u32 [#allocation3], 4
          %s397 = int_to_ptr.vmem [resolvable:$true] %s396
          %402 = dma.hbm_to_vmem [thread:$0]  %s3, 4096, %s397, [#allocation4], 128, 128, 8
        $region24: #{minimal_llm_forward.3} parent=11 // pred_fallthru
          _
        // Predicated region
        $region25: #{minimal_llm_forward.3} parent=11 // pred_check
          %p403 = pneg %p133
        $region26: #{minimal_llm_forward.3} parent=11 // pred_check_branch
          %405 = sbr.rel (%p403) target = $region28
        $region27: #{minimal_llm_forward.3} parent=11 // pred_region
          _
        $region28: #{minimal_llm_forward.3} parent=11 // pred_fallthru
          _
        // Predicated region
        $region29: #{minimal_llm_forward.3} parent=11 // pred_check
          %p406 = pneg %p154
        $region30: #{minimal_llm_forward.3} parent=11 // pred_check_branch
          %408 = sbr.rel (%p406) target = $region32
        $region31: #{minimal_llm_forward.3} parent=11 // pred_region
          _
        $region32: #{minimal_llm_forward.3} parent=11 // pred_fallthru
          _
        // Predicated region
        $region33: #{minimal_llm_forward.3} parent=11 // pred_check
          %p409 = pneg %p175
        $region34: #{minimal_llm_forward.3} parent=11 // pred_check_branch
          %411 = sbr.rel (%p409) target = $region36
        $region35: #{minimal_llm_forward.3} parent=11 // pred_region
          _
        $region36: #{minimal_llm_forward.3} parent=11 // pred_fallthru
          _
        // Predicated region
        $region37: #{minimal_llm_forward.3} parent=11 // pred_check
          %p412 = pneg %p196
        $region38: #{minimal_llm_forward.3} parent=11 // pred_check_branch
          %414 = sbr.rel (%p412) target = $region40
        $region39: #{minimal_llm_forward.3} parent=11 // pred_region
          %s416 = ssub.s32 8192, 8192
          %417 = vsyncadd [#allocation6], %s416
          %s418 = sshll.u32 [#allocation5], 4
          %s419 = int_to_ptr.vmem [resolvable:$true] %s418
          %424 = dma.hbm_to_vmem [thread:$0]  %s7, 8192, %s419, [#allocation6], 256, 256, 16
        $region40: #{minimal_llm_forward.3} parent=11 // pred_fallthru
          _
        // Predicated region
        $region41: #{minimal_llm_forward.3} parent=11 // pred_check
          %p425 = pneg %p217
        $region42: #{minimal_llm_forward.3} parent=11 // pred_check_branch
          %427 = sbr.rel (%p425) target = $region44
        $region43: #{minimal_llm_forward.3} parent=11 // pred_region
          _
        $region44: #{minimal_llm_forward.3} parent=11 // pred_fallthru
          _
        // Predicated region
        $region45: #{minimal_llm_forward.3} parent=11 // pred_check
          %p428 = pneg %p238
        $region46: #{minimal_llm_forward.3} parent=11 // pred_check_branch
          %430 = sbr.rel (%p428) target = $region48
        $region47: #{minimal_llm_forward.3} parent=11 // pred_region
          %s432 = ssub.s32 8192, 8192
          %433 = vsyncadd [#allocation6], %s432
          %s434 = sshll.u32 [#allocation7], 4
          %s435 = int_to_ptr.vmem [resolvable:$true] %s434
          %440 = dma.hbm_to_vmem [thread:$0]  %s9, 8192, %s435, [#allocation6], 128, 128, 8
        $region48: #{minimal_llm_forward.3} parent=11 // pred_fallthru
          _
        // Predicated region
        $region49: #{minimal_llm_forward.3} parent=11 // pred_check
          %p441 = pneg %p259
        $region50: #{minimal_llm_forward.3} parent=11 // pred_check_branch
          %443 = sbr.rel (%p441) target = $region52
        $region51: #{minimal_llm_forward.3} parent=11 // pred_region
          _
        $region52: #{minimal_llm_forward.3} parent=11 // pred_fallthru
          _
        // Predicated region
        $region53: #{minimal_llm_forward.3} parent=11 // pred_check
          %p444 = pneg %p280
        $region54: #{minimal_llm_forward.3} parent=11 // pred_check_branch
          %446 = sbr.rel (%p444) target = $region56
        $region55: #{minimal_llm_forward.3} parent=11 // pred_region
          _
        $region56: #{minimal_llm_forward.3} parent=11 // pred_fallthru
          _
        // Predicated region
        $region57: #{minimal_llm_forward.3} parent=11 // pred_check
          %p447 = pneg %p301
        $region58: #{minimal_llm_forward.3} parent=11 // pred_check_branch
          %449 = sbr.rel (%p447) target = $region60
        $region59: #{minimal_llm_forward.3} parent=11 // pred_region
          _
        $region60: #{minimal_llm_forward.3} parent=11 // pred_fallthru
          _
        // Predicated region
        $region61: #{minimal_llm_forward.3} parent=11 // pred_check
          %p450 = pneg %p322
        $region62: #{minimal_llm_forward.3} parent=11 // pred_check_branch
          %452 = sbr.rel (%p450) target = $region64
        $region63: #{minimal_llm_forward.3} parent=11 // pred_region
          _
        $region64: #{minimal_llm_forward.3} parent=11 // pred_fallthru
          _
        // Predicated region
        $region65: #{minimal_llm_forward.3} parent=11 // pred_check
          %p453 = pneg %p343
        $region66: #{minimal_llm_forward.3} parent=11 // pred_check_branch
          %455 = sbr.rel (%p453) target = $region68
        $region67: #{minimal_llm_forward.3} parent=11 // pred_region
          _
        $region68: #{minimal_llm_forward.3} parent=11 // pred_fallthru
          _
      $region12: #{minimal_llm_forward.3} parent=5 // pred_fallthru
        _
      %p456 = scmp.lt.s32.totalorder %s23, 2
      // Predicated region
      $region69: #{minimal_llm_forward.3} parent=5 // pred_check
        %p457 = pneg %p456
      $region70: #{minimal_llm_forward.3} parent=5 // pred_check_branch
        %459 = sbr.rel (%p457) target = $region72
      $region71: #{minimal_llm_forward.3} parent=5 // pred_region
        // Predicated region
        $region73: #{minimal_llm_forward.3} parent=71 // pred_check
          %p460 = pneg %p43
        $region74: #{minimal_llm_forward.3} parent=71 // pred_check_branch
          %462 = sbr.rel (%p460) target = $region76
        $region75: #{minimal_llm_forward.3} parent=71 // pred_region
          %s463 = sand.u32 %s33, 1
          %s464 = sand.u32 %s33, 1
          %s465 = smul.addr %s464, 16
          %s466 = scalar_lea.vmem [#allocation2], %s465
          %s467 = smul.addr %s23, 2
          %s468 = smul.addr %s467, 4
          %s469 = scalar_lea.vmem %s0, %s468
          // Predicated region
          $region77: #{minimal_llm_forward.3} parent=75 // pred_check
            _
          $region78: #{minimal_llm_forward.3} parent=75 // pred_check_branch
            %471 = sbr.rel (0) target = $region80
          $region79: #{minimal_llm_forward.3} parent=75 // pred_region
            // Predicated region
            $region81: #{minimal_llm_forward.3} parent=79 // pred_check
              _
            $region82: #{minimal_llm_forward.3} parent=79 // pred_check_branch
              %473 = sbr.rel (0) target = $region84
            $region83: #{minimal_llm_forward.3} parent=79 // pred_region
              // Predicated region
              $region96: #{minimal_llm_forward.3} parent=83 // pred_check
                _
              $region97: #{minimal_llm_forward.3} parent=83 // pred_check_branch
                %490 = sbr.rel (0) target = $region99
              $region98: #{minimal_llm_forward.3} parent=83 // pred_region
                loop: start=0, step=1, limit=1
                $region100: #{minimal_llm_forward.3} parent=98 // loop_pre_header
                  _
                $region101: #{minimal_llm_forward.3} parent=98 // loop_header
                  %s492 = sphi 0, %s496
                  %p493 = scmp.ge.s32.totalorder %s492, 1
                  %s497 = sphi %s469, %s469
                  %s498 = sphi %s466, %s466
                $region102: #{minimal_llm_forward.3} parent=98 // loop_header_branch
                  %495 = sbr.rel (%p493) target = $region106
                $region103: #{minimal_llm_forward.3} parent=98 // loop_body
                  %v499 = vld [vmem:[%s497] sm:$0xff]
                  %500 = vst [vmem:[%s498] sm:$0xff] %v499
                  %v501 = vld [vmem:[%s497 + $0x10] sm:$0xff]
                  %502 = vst [vmem:[%s498 + $0x8] sm:$0xff] %v501
                $region104: #{minimal_llm_forward.3} parent=98 // loop_footer
                  %s496 = sadd.s32 1, %s492
                $region105: #{minimal_llm_forward.3} parent=98 // loop_footer_branch
                  %491 = sbr.rel target = $region101
                $region106: #{minimal_llm_forward.3} parent=98 // loop_exit
                  _
              $region99: #{minimal_llm_forward.3} parent=83 // pred_fallthru
                _
              // Predicated region
              $region107: #{minimal_llm_forward.3} parent=83 // pred_check
                _
              $region108: #{minimal_llm_forward.3} parent=83 // pred_check_branch
                %504 = sbr.rel target = $region110
              $region109: #{minimal_llm_forward.3} parent=83 // pred_region
                _
              $region110: #{minimal_llm_forward.3} parent=83 // pred_fallthru
                _
            $region84: #{minimal_llm_forward.3} parent=79 // pred_fallthru
              _
            // Predicated region
            $region85: #{minimal_llm_forward.3} parent=79 // pred_check
              _
            $region86: #{minimal_llm_forward.3} parent=79 // pred_check_branch
              %475 = sbr.rel target = $region88
            $region87: #{minimal_llm_forward.3} parent=79 // pred_region
              loop: start=0, step=1, limit=1
              $region89: #{minimal_llm_forward.3} parent=87 // loop_pre_header
                _
              $region90: #{minimal_llm_forward.3} parent=87 // loop_header
                %s478 = sphi 0, %s482
                %p479 = scmp.ge.s32.totalorder %s478, 1
                %s483 = sphi %s469, %s469
                %s484 = sphi %s466, %s466
              $region91: #{minimal_llm_forward.3} parent=87 // loop_header_branch
                %481 = sbr.rel (%p479) target = $region95
              $region92: #{minimal_llm_forward.3} parent=87 // loop_body
                %v485 = vld [vmem:[%s483] sm:$0xff]
                %486 = vst [vmem:[%s484] sm:$0xff] %v485
                %v487 = vld [vmem:[%s483 + $0x10] sm:$0xff]
                %488 = vst [vmem:[%s484 + $0x8] sm:$0xff] %v487
              $region93: #{minimal_llm_forward.3} parent=87 // loop_footer
                %s482 = sadd.s32 1, %s478
              $region94: #{minimal_llm_forward.3} parent=87 // loop_footer_branch
                %477 = sbr.rel target = $region90
              $region95: #{minimal_llm_forward.3} parent=87 // loop_exit
                _
            $region88: #{minimal_llm_forward.3} parent=79 // pred_fallthru
              _
          $region80: #{minimal_llm_forward.3} parent=75 // pred_fallthru
            _
          %505 = vnop
        $region76: #{minimal_llm_forward.3} parent=71 // pred_fallthru
          _
      $region72: #{minimal_llm_forward.3} parent=5 // pred_fallthru
        _
      %p506 = scmp.le.s32.totalorder 1, %s23
      %p507 = scmp.lt.s32.totalorder %s23, 3
      %p508 = pnand %p506, %p507
      %p509 = pneg %p508
      // Predicated region
      $region111: #{minimal_llm_forward.3} parent=5 // pred_check
        _
      $region112: #{minimal_llm_forward.3} parent=5 // pred_check_branch
        %511 = sbr.rel (%p508) target = $region114
      $region113: #{minimal_llm_forward.3} parent=5 // pred_region
        %s512 = ssub.s32 %s23, 1
        %s513 = sand.u32 %s36, 1
        %s514 = sand.u32 %s36, 1
        %s515 = smul.addr %s514, 16
        %s516 = scalar_lea.vmem [#allocation2], %s515
        // Predicated region
        $region115: #{minimal_llm_forward.3} parent=113 // pred_check
          %p517 = pneg %p49
        $region116: #{minimal_llm_forward.3} parent=113 // pred_check_branch
          %519 = sbr.rel (%p517) target = $region118
        $region117: #{minimal_llm_forward.3} parent=113 // pred_region
          _
        $region118: #{minimal_llm_forward.3} parent=113 // pred_fallthru
          _
        // Predicated region
        $region119: #{minimal_llm_forward.3} parent=113 // pred_check
          %p520 = pneg %p112
        $region120: #{minimal_llm_forward.3} parent=113 // pred_check_branch
          %522 = sbr.rel (%p520) target = $region122
        $region121: #{minimal_llm_forward.3} parent=113 // pred_region
          %523 = dma.done [#allocation4], 4096
        $region122: #{minimal_llm_forward.3} parent=113 // pred_fallthru
          _
        // Predicated region
        $region123: #{minimal_llm_forward.3} parent=113 // pred_check
          %p524 = pneg %p196
        $region124: #{minimal_llm_forward.3} parent=113 // pred_check_branch
          %526 = sbr.rel (%p524) target = $region126
        $region125: #{minimal_llm_forward.3} parent=113 // pred_region
          %527 = dma.done [#allocation6], 8192
        $region126: #{minimal_llm_forward.3} parent=113 // pred_fallthru
          _
        // Predicated region
        $region127: #{minimal_llm_forward.3} parent=113 // pred_check
          %p528 = pneg %p238
        $region128: #{minimal_llm_forward.3} parent=113 // pred_check_branch
          %530 = sbr.rel (%p528) target = $region130
        $region129: #{minimal_llm_forward.3} parent=113 // pred_region
          %531 = dma.done [#allocation6], 8192
        $region130: #{minimal_llm_forward.3} parent=113 // pred_fallthru
          _
        %s532 = sand.u32 %s36, 1
        %s533 = sand.u32 %s36, 1
        %s534 = smul.addr %s533, 16
        %s535 = scalar_lea.vmem [#allocation2], %s534
        %p536 = pneg %p49
        %p537 = pneg %p46
        %p538 = pneg %p70
        %p539 = pneg %p67
        %p540 = pneg %p91
        %p541 = pneg %p88
        %p542 = pneg %p112
        %p543 = pneg %p109
        %p544 = pneg %p133
        %p545 = pneg %p130
        %p546 = pneg %p154
        %p547 = pneg %p151
        %p548 = pneg %p175
        %p549 = pneg %p172
        %p550 = pneg %p196
        %p551 = pneg %p193
        %p552 = pneg %p217
        %p553 = pneg %p214
        %p554 = pneg %p238
        %p555 = pneg %p235
        %p556 = pneg %p259
        %p557 = pneg %p256
        %p558 = pneg %p280
        %p559 = pneg %p277
        %p560 = pneg %p301
        %p561 = pneg %p298
        %p562 = pneg %p322
        %p563 = pneg %p319
        %p564 = pneg %p343
        %p565 = pneg %p340
        %p566 = pneg %p369
        %p567 = pneg %p366
        %s568 = sand.u32 %s356, 1
        %s569 = sand.u32 %s356, 1
        %s570 = smul.addr %s569, 16
        %s571 = scalar_lea.vmem [#allocation8], %s570
        %v573 = vld [vmem:[%s516] sm:$0xff]
        %v574 = vld [vmem:[%s516 + $0x8] sm:$0xff]
        %v575 = vunpack.c.l.bf16 %v573
        %v576 = vunpack.c.h.bf16 %v573
        %v577 = vunpack.c.l.bf16 %v574
        %v578 = vunpack.c.h.bf16 %v574
        %v579 = vld [vmem:[%s1] sm:$0xff]
        %v580 = vld [vmem:[%s1 + $0x8] sm:$0xff]
        %v581 = vld [vmem:[%s1 + $0x10] sm:$0xff]
        %v582 = vld [vmem:[%s1 + $0x18] sm:$0xff]
        %v583 = vld [vmem:[%s1 + $0x20] sm:$0xff]
        %v584 = vld [vmem:[%s1 + $0x28] sm:$0xff]
        %v585 = vld [vmem:[%s1 + $0x30] sm:$0xff]
        %v586 = vld [vmem:[%s1 + $0x38] sm:$0xff]
        %v587 = vld [vmem:[%s1 + $0x40] sm:$0xff]
        %v588 = vld [vmem:[%s1 + $0x48] sm:$0xff]
        %v589 = vld [vmem:[%s1 + $0x50] sm:$0xff]
        %v590 = vld [vmem:[%s1 + $0x58] sm:$0xff]
        %v591 = vld [vmem:[%s1 + $0x60] sm:$0xff]
        %v592 = vld [vmem:[%s1 + $0x68] sm:$0xff]
        %v593 = vld [vmem:[%s1 + $0x70] sm:$0xff]
        %v594 = vld [vmem:[%s1 + $0x78] sm:$0xff]
        %v595 = vld [vmem:[%s1 + $0x80] sm:$0xff]
        %v596 = vld [vmem:[%s1 + $0x88] sm:$0xff]
        %v597 = vld [vmem:[%s1 + $0x90] sm:$0xff]
        %v598 = vld [vmem:[%s1 + $0x98] sm:$0xff]
        %v599 = vld [vmem:[%s1 + $0xa0] sm:$0xff]
        %v600 = vld [vmem:[%s1 + $0xa8] sm:$0xff]
        %v601 = vld [vmem:[%s1 + $0xb0] sm:$0xff]
        %v602 = vld [vmem:[%s1 + $0xb8] sm:$0xff]
        %v603 = vld [vmem:[%s1 + $0xc0] sm:$0xff]
        %v604 = vld [vmem:[%s1 + $0xc8] sm:$0xff]
        %v605 = vld [vmem:[%s1 + $0xd0] sm:$0xff]
        %v606 = vld [vmem:[%s1 + $0xd8] sm:$0xff]
        %v607 = vld [vmem:[%s1 + $0xe0] sm:$0xff]
        %v608 = vld [vmem:[%s1 + $0xe8] sm:$0xff]
        %v609 = vld [vmem:[%s1 + $0xf0] sm:$0xff]
        %v610 = vld [vmem:[%s1 + $0xf8] sm:$0xff]
        %v611 = vld [vmem:[%s1 + $0x100] sm:$0xff]
        %v612 = vld [vmem:[%s1 + $0x108] sm:$0xff]
        %v613 = vld [vmem:[%s1 + $0x110] sm:$0xff]
        %v614 = vld [vmem:[%s1 + $0x118] sm:$0xff]
        %v615 = vld [vmem:[%s1 + $0x120] sm:$0xff]
        %v616 = vld [vmem:[%s1 + $0x128] sm:$0xff]
        %v617 = vld [vmem:[%s1 + $0x130] sm:$0xff]
        %v618 = vld [vmem:[%s1 + $0x138] sm:$0xff]
        %v619 = vld [vmem:[%s1 + $0x140] sm:$0xff]
        %v620 = vld [vmem:[%s1 + $0x148] sm:$0xff]
        %v621 = vld [vmem:[%s1 + $0x150] sm:$0xff]
        %v622 = vld [vmem:[%s1 + $0x158] sm:$0xff]
        %v623 = vld [vmem:[%s1 + $0x160] sm:$0xff]
        %v624 = vld [vmem:[%s1 + $0x168] sm:$0xff]
        %v625 = vld [vmem:[%s1 + $0x170] sm:$0xff]
        %v626 = vld [vmem:[%s1 + $0x178] sm:$0xff]
        %v627 = vld [vmem:[%s1 + $0x180] sm:$0xff]
        %v628 = vld [vmem:[%s1 + $0x188] sm:$0xff]
        %v629 = vld [vmem:[%s1 + $0x190] sm:$0xff]
        %v630 = vld [vmem:[%s1 + $0x198] sm:$0xff]
        %v631 = vld [vmem:[%s1 + $0x1a0] sm:$0xff]
        %v632 = vld [vmem:[%s1 + $0x1a8] sm:$0xff]
        %v633 = vld [vmem:[%s1 + $0x1b0] sm:$0xff]
        %v634 = vld [vmem:[%s1 + $0x1b8] sm:$0xff]
        %v635 = vld [vmem:[%s1 + $0x1c0] sm:$0xff]
        %v636 = vld [vmem:[%s1 + $0x1c8] sm:$0xff]
        %v637 = vld [vmem:[%s1 + $0x1d0] sm:$0xff]
        %v638 = vld [vmem:[%s1 + $0x1d8] sm:$0xff]
        %v639 = vld [vmem:[%s1 + $0x1e0] sm:$0xff]
        %v640 = vld [vmem:[%s1 + $0x1e8] sm:$0xff]
        %v641 = vld [vmem:[%s1 + $0x1f0] sm:$0xff]
        %v642 = vld [vmem:[%s1 + $0x1f8] sm:$0xff]
        %v643 = vld [vmem:[%s1 + $0x200] sm:$0xff]
        %v644 = vld [vmem:[%s1 + $0x208] sm:$0xff]
        %v645 = vld [vmem:[%s1 + $0x210] sm:$0xff]
        %v646 = vld [vmem:[%s1 + $0x218] sm:$0xff]
        %v647 = vld [vmem:[%s1 + $0x220] sm:$0xff]
        %v648 = vld [vmem:[%s1 + $0x228] sm:$0xff]
        %v649 = vld [vmem:[%s1 + $0x230] sm:$0xff]
        %v650 = vld [vmem:[%s1 + $0x238] sm:$0xff]
        %v651 = vld [vmem:[%s1 + $0x240] sm:$0xff]
        %v652 = vld [vmem:[%s1 + $0x248] sm:$0xff]
        %v653 = vld [vmem:[%s1 + $0x250] sm:$0xff]
        %v654 = vld [vmem:[%s1 + $0x258] sm:$0xff]
        %v655 = vld [vmem:[%s1 + $0x260] sm:$0xff]
        %v656 = vld [vmem:[%s1 + $0x268] sm:$0xff]
        %v657 = vld [vmem:[%s1 + $0x270] sm:$0xff]
        %v658 = vld [vmem:[%s1 + $0x278] sm:$0xff]
        %v659 = vld [vmem:[%s1 + $0x280] sm:$0xff]
        %v660 = vld [vmem:[%s1 + $0x288] sm:$0xff]
        %v661 = vld [vmem:[%s1 + $0x290] sm:$0xff]
        %v662 = vld [vmem:[%s1 + $0x298] sm:$0xff]
        %v663 = vld [vmem:[%s1 + $0x2a0] sm:$0xff]
        %v664 = vld [vmem:[%s1 + $0x2a8] sm:$0xff]
        %v665 = vld [vmem:[%s1 + $0x2b0] sm:$0xff]
        %v666 = vld [vmem:[%s1 + $0x2b8] sm:$0xff]
        %v667 = vld [vmem:[%s1 + $0x2c0] sm:$0xff]
        %v668 = vld [vmem:[%s1 + $0x2c8] sm:$0xff]
        %v669 = vld [vmem:[%s1 + $0x2d0] sm:$0xff]
        %v670 = vld [vmem:[%s1 + $0x2d8] sm:$0xff]
        %v671 = vld [vmem:[%s1 + $0x2e0] sm:$0xff]
        %v672 = vld [vmem:[%s1 + $0x2e8] sm:$0xff]
        %v673 = vld [vmem:[%s1 + $0x2f0] sm:$0xff]
        %v674 = vld [vmem:[%s1 + $0x2f8] sm:$0xff]
        %v675 = vld [vmem:[%s2] sm:$0x3f]
        %v677 = vlaneseq
        %v678 = vshrl.u32 %v677, 7
        %v679 = vsub.s32 0, %v678
        %v680 = vrot.slane %v675, %v679
        %v681 = vlaneseq
        %v682 = vshrl.u32 %v681, 7
        %v683 = vsub.s32 1, %v682
        %v684 = vrot.slane %v675, %v683
        %v685 = vlaneseq
        %v686 = vshrl.u32 %v685, 7
        %v687 = vsub.s32 2, %v686
        %v688 = vrot.slane %v675, %v687
        %v689 = vlaneseq
        %v690 = vshrl.u32 %v689, 7
        %v691 = vsub.s32 3, %v690
        %v692 = vrot.slane %v675, %v691
        %v693 = vlaneseq
        %v694 = vshrl.u32 %v693, 7
        %v695 = vsub.s32 4, %v694
        %v696 = vrot.slane %v675, %v695
        %v697 = vlaneseq
        %v698 = vshrl.u32 %v697, 7
        %v699 = vsub.s32 5, %v698
        %v700 = vrot.slane %v675, %v699
        %v709 = vunpack.c.l.b16 %v573
        %v710 = vunpack.c.h.b16 %v573
        %v711 = vunpack.c.l.b16 %v574
        %v712 = vunpack.c.h.b16 %v574
        %v713 = vpack.c.b16 %v711, %v709
        %v714 = vpack.c.b16 %v712, %v710
        %v813 = vunpack.c.l.b16 %v579
        %v814 = vunpack.c.h.b16 %v579
        %v815 = vunpack.c.l.b16 %v580
        %v816 = vunpack.c.h.b16 %v580
        %v817 = vunpack.c.l.b16 %v581
        %v818 = vunpack.c.h.b16 %v581
        %v819 = vunpack.c.l.b16 %v582
        %v820 = vunpack.c.h.b16 %v582
        %v821 = vunpack.c.l.b16 %v583
        %v822 = vunpack.c.h.b16 %v583
        %v823 = vunpack.c.l.b16 %v584
        %v824 = vunpack.c.h.b16 %v584
        %v825 = vunpack.c.l.b16 %v585
        %v826 = vunpack.c.h.b16 %v585
        %v827 = vunpack.c.l.b16 %v586
        %v828 = vunpack.c.h.b16 %v586
        %v829 = vunpack.c.l.b16 %v587
        %v830 = vunpack.c.h.b16 %v587
        %v831 = vunpack.c.l.b16 %v588
        %v832 = vunpack.c.h.b16 %v588
        %v833 = vunpack.c.l.b16 %v589
        %v834 = vunpack.c.h.b16 %v589
        %v835 = vunpack.c.l.b16 %v590
        %v836 = vunpack.c.h.b16 %v590
        %v837 = vunpack.c.l.b16 %v591
        %v838 = vunpack.c.h.b16 %v591
        %v839 = vunpack.c.l.b16 %v592
        %v840 = vunpack.c.h.b16 %v592
        %v841 = vunpack.c.l.b16 %v593
        %v842 = vunpack.c.h.b16 %v593
        %v843 = vunpack.c.l.b16 %v594
        %v844 = vunpack.c.h.b16 %v594
        %v845 = vunpack.c.l.b16 %v595
        %v846 = vunpack.c.h.b16 %v595
        %v847 = vunpack.c.l.b16 %v596
        %v848 = vunpack.c.h.b16 %v596
        %v849 = vunpack.c.l.b16 %v597
        %v850 = vunpack.c.h.b16 %v597
        %v851 = vunpack.c.l.b16 %v598
        %v852 = vunpack.c.h.b16 %v598
        %v853 = vunpack.c.l.b16 %v599
        %v854 = vunpack.c.h.b16 %v599
        %v855 = vunpack.c.l.b16 %v600
        %v856 = vunpack.c.h.b16 %v600
        %v857 = vunpack.c.l.b16 %v601
        %v858 = vunpack.c.h.b16 %v601
        %v859 = vunpack.c.l.b16 %v602
        %v860 = vunpack.c.h.b16 %v602
        %v861 = vunpack.c.l.b16 %v603
        %v862 = vunpack.c.h.b16 %v603
        %v863 = vunpack.c.l.b16 %v604
        %v864 = vunpack.c.h.b16 %v604
        %v865 = vunpack.c.l.b16 %v605
        %v866 = vunpack.c.h.b16 %v605
        %v867 = vunpack.c.l.b16 %v606
        %v868 = vunpack.c.h.b16 %v606
        %v869 = vunpack.c.l.b16 %v607
        %v870 = vunpack.c.h.b16 %v607
        %v871 = vunpack.c.l.b16 %v608
        %v872 = vunpack.c.h.b16 %v608
        %v873 = vunpack.c.l.b16 %v609
        %v874 = vunpack.c.h.b16 %v609
        %v875 = vunpack.c.l.b16 %v610
        %v876 = vunpack.c.h.b16 %v610
        %v877 = vunpack.c.l.b16 %v611
        %v878 = vunpack.c.h.b16 %v611
        %v879 = vunpack.c.l.b16 %v612
        %v880 = vunpack.c.h.b16 %v612
        %v881 = vunpack.c.l.b16 %v613
        %v882 = vunpack.c.h.b16 %v613
        %v883 = vunpack.c.l.b16 %v614
        %v884 = vunpack.c.h.b16 %v614
        %v885 = vunpack.c.l.b16 %v615
        %v886 = vunpack.c.h.b16 %v615
        %v887 = vunpack.c.l.b16 %v616
        %v888 = vunpack.c.h.b16 %v616
        %v889 = vunpack.c.l.b16 %v617
        %v890 = vunpack.c.h.b16 %v617
        %v891 = vunpack.c.l.b16 %v618
        %v892 = vunpack.c.h.b16 %v618
        %v893 = vunpack.c.l.b16 %v619
        %v894 = vunpack.c.h.b16 %v619
        %v895 = vunpack.c.l.b16 %v620
        %v896 = vunpack.c.h.b16 %v620
        %v897 = vunpack.c.l.b16 %v621
        %v898 = vunpack.c.h.b16 %v621
        %v899 = vunpack.c.l.b16 %v622
        %v900 = vunpack.c.h.b16 %v622
        %v901 = vunpack.c.l.b16 %v623
        %v902 = vunpack.c.h.b16 %v623
        %v903 = vunpack.c.l.b16 %v624
        %v904 = vunpack.c.h.b16 %v624
        %v905 = vunpack.c.l.b16 %v625
        %v906 = vunpack.c.h.b16 %v625
        %v907 = vunpack.c.l.b16 %v626
        %v908 = vunpack.c.h.b16 %v626
        %v909 = vunpack.c.l.b16 %v627
        %v910 = vunpack.c.h.b16 %v627
        %v911 = vunpack.c.l.b16 %v628
        %v912 = vunpack.c.h.b16 %v628
        %v913 = vunpack.c.l.b16 %v629
        %v914 = vunpack.c.h.b16 %v629
        %v915 = vunpack.c.l.b16 %v630
        %v916 = vunpack.c.h.b16 %v630
        %v917 = vunpack.c.l.b16 %v631
        %v918 = vunpack.c.h.b16 %v631
        %v919 = vunpack.c.l.b16 %v632
        %v920 = vunpack.c.h.b16 %v632
        %v921 = vunpack.c.l.b16 %v633
        %v922 = vunpack.c.h.b16 %v633
        %v923 = vunpack.c.l.b16 %v634
        %v924 = vunpack.c.h.b16 %v634
        %v925 = vunpack.c.l.b16 %v635
        %v926 = vunpack.c.h.b16 %v635
        %v927 = vunpack.c.l.b16 %v636
        %v928 = vunpack.c.h.b16 %v636
        %v929 = vunpack.c.l.b16 %v637
        %v930 = vunpack.c.h.b16 %v637
        %v931 = vunpack.c.l.b16 %v638
        %v932 = vunpack.c.h.b16 %v638
        %v933 = vunpack.c.l.b16 %v639
        %v934 = vunpack.c.h.b16 %v639
        %v935 = vunpack.c.l.b16 %v640
        %v936 = vunpack.c.h.b16 %v640
        %v937 = vunpack.c.l.b16 %v641
        %v938 = vunpack.c.h.b16 %v641
        %v939 = vunpack.c.l.b16 %v642
        %v940 = vunpack.c.h.b16 %v642
        %v941 = vunpack.c.l.b16 %v643
        %v942 = vunpack.c.h.b16 %v643
        %v943 = vunpack.c.l.b16 %v644
        %v944 = vunpack.c.h.b16 %v644
        %v945 = vunpack.c.l.b16 %v645
        %v946 = vunpack.c.h.b16 %v645
        %v947 = vunpack.c.l.b16 %v646
        %v948 = vunpack.c.h.b16 %v646
        %v949 = vunpack.c.l.b16 %v647
        %v950 = vunpack.c.h.b16 %v647
        %v951 = vunpack.c.l.b16 %v648
        %v952 = vunpack.c.h.b16 %v648
        %v953 = vunpack.c.l.b16 %v649
        %v954 = vunpack.c.h.b16 %v649
        %v955 = vunpack.c.l.b16 %v650
        %v956 = vunpack.c.h.b16 %v650
        %v957 = vunpack.c.l.b16 %v651
        %v958 = vunpack.c.h.b16 %v651
        %v959 = vunpack.c.l.b16 %v652
        %v960 = vunpack.c.h.b16 %v652
        %v961 = vunpack.c.l.b16 %v653
        %v962 = vunpack.c.h.b16 %v653
        %v963 = vunpack.c.l.b16 %v654
        %v964 = vunpack.c.h.b16 %v654
        %v965 = vunpack.c.l.b16 %v655
        %v966 = vunpack.c.h.b16 %v655
        %v967 = vunpack.c.l.b16 %v656
        %v968 = vunpack.c.h.b16 %v656
        %v969 = vunpack.c.l.b16 %v657
        %v970 = vunpack.c.h.b16 %v657
        %v971 = vunpack.c.l.b16 %v658
        %v972 = vunpack.c.h.b16 %v658
        %v973 = vunpack.c.l.b16 %v659
        %v974 = vunpack.c.h.b16 %v659
        %v975 = vunpack.c.l.b16 %v660
        %v976 = vunpack.c.h.b16 %v660
        %v977 = vunpack.c.l.b16 %v661
        %v978 = vunpack.c.h.b16 %v661
        %v979 = vunpack.c.l.b16 %v662
        %v980 = vunpack.c.h.b16 %v662
        %v981 = vunpack.c.l.b16 %v663
        %v982 = vunpack.c.h.b16 %v663
        %v983 = vunpack.c.l.b16 %v664
        %v984 = vunpack.c.h.b16 %v664
        %v985 = vunpack.c.l.b16 %v665
        %v986 = vunpack.c.h.b16 %v665
        %v987 = vunpack.c.l.b16 %v666
        %v988 = vunpack.c.h.b16 %v666
        %v989 = vunpack.c.l.b16 %v667
        %v990 = vunpack.c.h.b16 %v667
        %v991 = vunpack.c.l.b16 %v668
        %v992 = vunpack.c.h.b16 %v668
        %v993 = vunpack.c.l.b16 %v669
        %v994 = vunpack.c.h.b16 %v669
        %v995 = vunpack.c.l.b16 %v670
        %v996 = vunpack.c.h.b16 %v670
        %v997 = vunpack.c.l.b16 %v671
        %v998 = vunpack.c.h.b16 %v671
        %v999 = vunpack.c.l.b16 %v672
        %v1000 = vunpack.c.h.b16 %v672
        %v1001 = vunpack.c.l.b16 %v673
        %v1002 = vunpack.c.h.b16 %v673
        %v1003 = vunpack.c.l.b16 %v674
        %v1004 = vunpack.c.h.b16 %v674
        %v1005 = vpack.c.b16 %v819, %v813
        %v1006 = vpack.c.b16 %v820, %v814
        %v1007 = vpack.c.b16 %v821, %v815
        %v1008 = vpack.c.b16 %v822, %v816
        %v1009 = vpack.c.b16 %v823, %v817
        %v1010 = vpack.c.b16 %v824, %v818
        %v1011 = vpack.c.b16 %v831, %v825
        %v1012 = vpack.c.b16 %v832, %v826
        %v1013 = vpack.c.b16 %v833, %v827
        %v1014 = vpack.c.b16 %v834, %v828
        %v1015 = vpack.c.b16 %v835, %v829
        %v1016 = vpack.c.b16 %v836, %v830
        %v1017 = vpack.c.b16 %v843, %v837
        %v1018 = vpack.c.b16 %v844, %v838
        %v1019 = vpack.c.b16 %v845, %v839
        %v1020 = vpack.c.b16 %v846, %v840
        %v1021 = vpack.c.b16 %v847, %v841
        %v1022 = vpack.c.b16 %v848, %v842
        %v1023 = vpack.c.b16 %v855, %v849
        %v1024 = vpack.c.b16 %v856, %v850
        %v1025 = vpack.c.b16 %v857, %v851
        %v1026 = vpack.c.b16 %v858, %v852
        %v1027 = vpack.c.b16 %v859, %v853
        %v1028 = vpack.c.b16 %v860, %v854
        %v1029 = vpack.c.b16 %v867, %v861
        %v1030 = vpack.c.b16 %v868, %v862
        %v1031 = vpack.c.b16 %v869, %v863
        %v1032 = vpack.c.b16 %v870, %v864
        %v1033 = vpack.c.b16 %v871, %v865
        %v1034 = vpack.c.b16 %v872, %v866
        %v1035 = vpack.c.b16 %v879, %v873
        %v1036 = vpack.c.b16 %v880, %v874
        %v1037 = vpack.c.b16 %v881, %v875
        %v1038 = vpack.c.b16 %v882, %v876
        %v1039 = vpack.c.b16 %v883, %v877
        %v1040 = vpack.c.b16 %v884, %v878
        %v1041 = vpack.c.b16 %v891, %v885
        %v1042 = vpack.c.b16 %v892, %v886
        %v1043 = vpack.c.b16 %v893, %v887
        %v1044 = vpack.c.b16 %v894, %v888
        %v1045 = vpack.c.b16 %v895, %v889
        %v1046 = vpack.c.b16 %v896, %v890
        %v1047 = vpack.c.b16 %v903, %v897
        %v1048 = vpack.c.b16 %v904, %v898
        %v1049 = vpack.c.b16 %v905, %v899
        %v1050 = vpack.c.b16 %v906, %v900
        %v1051 = vpack.c.b16 %v907, %v901
        %v1052 = vpack.c.b16 %v908, %v902
        %v1053 = vpack.c.b16 %v915, %v909
        %v1054 = vpack.c.b16 %v916, %v910
        %v1055 = vpack.c.b16 %v917, %v911
        %v1056 = vpack.c.b16 %v918, %v912
        %v1057 = vpack.c.b16 %v919, %v913
        %v1058 = vpack.c.b16 %v920, %v914
        %v1059 = vpack.c.b16 %v927, %v921
        %v1060 = vpack.c.b16 %v928, %v922
        %v1061 = vpack.c.b16 %v929, %v923
        %v1062 = vpack.c.b16 %v930, %v924
        %v1063 = vpack.c.b16 %v931, %v925
        %v1064 = vpack.c.b16 %v932, %v926
        %v1065 = vpack.c.b16 %v939, %v933
        %v1066 = vpack.c.b16 %v940, %v934
        %v1067 = vpack.c.b16 %v941, %v935
        %v1068 = vpack.c.b16 %v942, %v936
        %v1069 = vpack.c.b16 %v943, %v937
        %v1070 = vpack.c.b16 %v944, %v938
        %v1071 = vpack.c.b16 %v951, %v945
        %v1072 = vpack.c.b16 %v952, %v946
        %v1073 = vpack.c.b16 %v953, %v947
        %v1074 = vpack.c.b16 %v954, %v948
        %v1075 = vpack.c.b16 %v955, %v949
        %v1076 = vpack.c.b16 %v956, %v950
        %v1077 = vpack.c.b16 %v963, %v957
        %v1078 = vpack.c.b16 %v964, %v958
        %v1079 = vpack.c.b16 %v965, %v959
        %v1080 = vpack.c.b16 %v966, %v960
        %v1081 = vpack.c.b16 %v967, %v961
        %v1082 = vpack.c.b16 %v968, %v962
        %v1083 = vpack.c.b16 %v975, %v969
        %v1084 = vpack.c.b16 %v976, %v970
        %v1085 = vpack.c.b16 %v977, %v971
        %v1086 = vpack.c.b16 %v978, %v972
        %v1087 = vpack.c.b16 %v979, %v973
        %v1088 = vpack.c.b16 %v980, %v974
        %v1089 = vpack.c.b16 %v987, %v981
        %v1090 = vpack.c.b16 %v988, %v982
        %v1091 = vpack.c.b16 %v989, %v983
        %v1092 = vpack.c.b16 %v990, %v984
        %v1093 = vpack.c.b16 %v991, %v985
        %v1094 = vpack.c.b16 %v992, %v986
        %v1095 = vpack.c.b16 %v999, %v993
        %v1096 = vpack.c.b16 %v1000, %v994
        %v1097 = vpack.c.b16 %v1001, %v995
        %v1098 = vpack.c.b16 %v1002, %v996
        %v1099 = vpack.c.b16 %v1003, %v997
        %v1100 = vpack.c.b16 %v1004, %v998
        %1197 = vmatprep.subr.bf16.mxu0 %v1006
        %1198 = vmatpush1.bf16.msra.mxu0 %v1005
        %1199 = vmatprep.subr.bf16.mxu0 %v1012
        %1200 = vmatpush1.bf16.msra.mxu0 %v1011
        %1201 = vmatprep.subr.bf16.mxu0 %v1018
        %1202 = vmatpush1.bf16.msra.mxu0 %v1017
        %1203 = vmatprep.subr.bf16.mxu0 %v1024
        %1204 = vmatpush1.bf16.msra.mxu0 %v1023
        %1205 = vmatprep.subr.bf16.mxu0 %v1030
        %1206 = vmatpush1.bf16.msra.mxu0 %v1029
        %1207 = vmatprep.subr.bf16.mxu0 %v1036
        %1208 = vmatpush1.bf16.msra.mxu0 %v1035
        %1209 = vmatprep.subr.bf16.mxu0 %v1042
        %1210 = vmatpush1.bf16.msra.mxu0 %v1041
        %1211 = vmatprep.subr.bf16.mxu0 %v1048
        %1212 = vmatpush1.bf16.msra.mxu0 %v1047
        %1213 = vmatprep.subr.bf16.mxu0 %v1054
        %1214 = vmatpush1.bf16.msra.mxu0 %v1053
        %1215 = vmatprep.subr.bf16.mxu0 %v1060
        %1216 = vmatpush1.bf16.msra.mxu0 %v1059
        %1217 = vmatprep.subr.bf16.mxu0 %v1066
        %1218 = vmatpush1.bf16.msra.mxu0 %v1065
        %1219 = vmatprep.subr.bf16.mxu0 %v1072
        %1220 = vmatpush1.bf16.msra.mxu0 %v1071
        %1221 = vmatprep.subr.bf16.mxu0 %v1078
        %1222 = vmatpush1.bf16.msra.mxu0 %v1077
        %1223 = vmatprep.subr.bf16.mxu0 %v1084
        %1224 = vmatpush1.bf16.msra.mxu0 %v1083
        %1225 = vmatprep.subr.bf16.mxu0 %v1090
        %1226 = vmatpush1.bf16.msra.mxu0 %v1089
        %1227 = vmatprep.subr.bf16.mxu0 %v1096
        %1228 = vmatpush1.bf16.msra.mxu0 %v1095
        %1229 = vmatprep.mubr.bf16.mxu0 %v714
        %1230 = vmatmul.mubr.bf16.gmra.mrb[0].mxu0 %v713
        %v1231 = vpop.f32.mrb[0].mxu0
        %v1232 = vadd.f32 %v680, %v1231
        %v1233 = vpop.f32.mrb[0].mxu0
        %v1234 = vadd.f32 %v684, %v1233
        %v1235 = vpop.f32.mrb[0].mxu0
        %v1236 = vadd.f32 %v680, %v1235
        %v1237 = vpop.f32.mrb[0].mxu0
        %v1238 = vadd.f32 %v684, %v1237
        %1239 = vdwg.mxu0
        %1240 = vmatprep.subr.bf16.mxu0 %v1008
        %1241 = vmatpush1.bf16.msra.mxu0 %v1007
        %1242 = vmatprep.subr.bf16.mxu0 %v1014
        %1243 = vmatpush1.bf16.msra.mxu0 %v1013
        %1244 = vmatprep.subr.bf16.mxu0 %v1020
        %1245 = vmatpush1.bf16.msra.mxu0 %v1019
        %1246 = vmatprep.subr.bf16.mxu0 %v1026
        %1247 = vmatpush1.bf16.msra.mxu0 %v1025
        %1248 = vmatprep.subr.bf16.mxu0 %v1032
        %1249 = vmatpush1.bf16.msra.mxu0 %v1031
        %1250 = vmatprep.subr.bf16.mxu0 %v1038
        %1251 = vmatpush1.bf16.msra.mxu0 %v1037
        %1252 = vmatprep.subr.bf16.mxu0 %v1044
        %1253 = vmatpush1.bf16.msra.mxu0 %v1043
        %1254 = vmatprep.subr.bf16.mxu0 %v1050
        %1255 = vmatpush1.bf16.msra.mxu0 %v1049
        %1256 = vmatprep.subr.bf16.mxu0 %v1056
        %1257 = vmatpush1.bf16.msra.mxu0 %v1055
        %1258 = vmatprep.subr.bf16.mxu0 %v1062
        %1259 = vmatpush1.bf16.msra.mxu0 %v1061
        %1260 = vmatprep.subr.bf16.mxu0 %v1068
        %1261 = vmatpush1.bf16.msra.mxu0 %v1067
        %1262 = vmatprep.subr.bf16.mxu0 %v1074
        %1263 = vmatpush1.bf16.msra.mxu0 %v1073
        %1264 = vmatprep.subr.bf16.mxu0 %v1080
        %1265 = vmatpush1.bf16.msra.mxu0 %v1079
        %1266 = vmatprep.subr.bf16.mxu0 %v1086
        %1267 = vmatpush1.bf16.msra.mxu0 %v1085
        %1268 = vmatprep.subr.bf16.mxu0 %v1092
        %1269 = vmatpush1.bf16.msra.mxu0 %v1091
        %1270 = vmatprep.subr.bf16.mxu0 %v1098
        %1271 = vmatpush1.bf16.msra.mxu0 %v1097
        %1272 = vmatprep.mubr.bf16.mxu0 %v714
        %1273 = vmatmul.mubr.bf16.gmra.mrb[0].mxu0 %v713
        %v1274 = vpop.f32.mrb[0].mxu0
        %v1275 = vadd.f32 %v688, %v1274
        %v1276 = vpop.f32.mrb[0].mxu0
        %v1277 = vadd.f32 %v692, %v1276
        %v1278 = vpop.f32.mrb[0].mxu0
        %v1279 = vadd.f32 %v688, %v1278
        %v1280 = vpop.f32.mrb[0].mxu0
        %v1281 = vadd.f32 %v692, %v1280
        %1282 = vdwg.mxu0
        %1283 = vmatprep.subr.bf16.mxu0 %v1010
        %1284 = vmatpush1.bf16.msra.mxu0 %v1009
        %1285 = vmatprep.subr.bf16.mxu0 %v1016
        %1286 = vmatpush1.bf16.msra.mxu0 %v1015
        %1287 = vmatprep.subr.bf16.mxu0 %v1022
        %1288 = vmatpush1.bf16.msra.mxu0 %v1021
        %1289 = vmatprep.subr.bf16.mxu0 %v1028
        %1290 = vmatpush1.bf16.msra.mxu0 %v1027
        %1291 = vmatprep.subr.bf16.mxu0 %v1034
        %1292 = vmatpush1.bf16.msra.mxu0 %v1033
        %1293 = vmatprep.subr.bf16.mxu0 %v1040
        %1294 = vmatpush1.bf16.msra.mxu0 %v1039
        %1295 = vmatprep.subr.bf16.mxu0 %v1046
        %1296 = vmatpush1.bf16.msra.mxu0 %v1045
        %1297 = vmatprep.subr.bf16.mxu0 %v1052
        %1298 = vmatpush1.bf16.msra.mxu0 %v1051
        %1299 = vmatprep.subr.bf16.mxu0 %v1058
        %1300 = vmatpush1.bf16.msra.mxu0 %v1057
        %1301 = vmatprep.subr.bf16.mxu0 %v1064
        %1302 = vmatpush1.bf16.msra.mxu0 %v1063
        %1303 = vmatprep.subr.bf16.mxu0 %v1070
        %1304 = vmatpush1.bf16.msra.mxu0 %v1069
        %1305 = vmatprep.subr.bf16.mxu0 %v1076
        %1306 = vmatpush1.bf16.msra.mxu0 %v1075
        %1307 = vmatprep.subr.bf16.mxu0 %v1082
        %1308 = vmatpush1.bf16.msra.mxu0 %v1081
        %1309 = vmatprep.subr.bf16.mxu0 %v1088
        %1310 = vmatpush1.bf16.msra.mxu0 %v1087
        %1311 = vmatprep.subr.bf16.mxu0 %v1094
        %1312 = vmatpush1.bf16.msra.mxu0 %v1093
        %1313 = vmatprep.subr.bf16.mxu0 %v1100
        %1314 = vmatpush1.bf16.msra.mxu0 %v1099
        %1315 = vmatprep.mubr.bf16.mxu0 %v714
        %1316 = vmatmul.mubr.bf16.gmra.mrb[0].mxu0 %v713
        %v1317 = vpop.f32.mrb[0].mxu0
        %v1318 = vadd.f32 %v696, %v1317
        %v1319 = vpop.f32.mrb[0].mxu0
        %v1320 = vadd.f32 %v700, %v1319
        %v1321 = vpop.f32.mrb[0].mxu0
        %v1322 = vadd.f32 %v696, %v1321
        %v1323 = vpop.f32.mrb[0].mxu0
        %v1324 = vadd.f32 %v700, %v1323
        %1325 = vdwg.mxu0
        %v1326 = vmul.f32 %v1232, 0.125
        %v1327 = vmul.f32 %v1234, 0.125
        %v1328 = vmul.f32 %v1236, 0.125
        %v1329 = vmul.f32 %v1238, 0.125
        %v1330 = vld [vmem:[%s13] sm:$0xf]
        %v1331 = vld [vmem:[%s13 + $0x4] sm:$0xf]
        %v1332 = vld [vmem:[%s13 + $0x8] sm:$0xf]
        %v1333 = vld [vmem:[%s13 + $0xc] sm:$0xf]
        %v1334 = vld [vmem:[%s13 + $0x10] sm:$0xf]
        %v1335 = vld [vmem:[%s13 + $0x14] sm:$0xf]
        %v1336 = vld [vmem:[%s13 + $0x18] sm:$0xf]
        %v1337 = vld [vmem:[%s13 + $0x1c] sm:$0xf]
        %v1338 = vld [vmem:[%s13 + $0x20] sm:$0xf]
        %v1339 = vld [vmem:[%s13 + $0x24] sm:$0xf]
        %v1340 = vld [vmem:[%s13 + $0x28] sm:$0xf]
        %v1341 = vld [vmem:[%s13 + $0x2c] sm:$0xf]
        %v1342 = vld [vmem:[%s13 + $0x30] sm:$0xf]
        %v1343 = vld [vmem:[%s13 + $0x34] sm:$0xf]
        %v1344 = vld [vmem:[%s13 + $0x38] sm:$0xf]
        %v1345 = vld [vmem:[%s13 + $0x3c] sm:$0xf]
        %v1346 = vld [vmem:[%s13 + $0x40] sm:$0xf]
        %v1347 = vld [vmem:[%s13 + $0x44] sm:$0xf]
        %v1348 = vld [vmem:[%s13 + $0x48] sm:$0xf]
        %v1349 = vld [vmem:[%s13 + $0x4c] sm:$0xf]
        %v1350 = vld [vmem:[%s13 + $0x50] sm:$0xf]
        %v1351 = vld [vmem:[%s13 + $0x54] sm:$0xf]
        %v1352 = vld [vmem:[%s13 + $0x58] sm:$0xf]
        %v1353 = vld [vmem:[%s13 + $0x5c] sm:$0xf]
        %v1354 = vld [vmem:[%s13 + $0x60] sm:$0xf]
        %v1355 = vld [vmem:[%s13 + $0x64] sm:$0xf]
        %v1356 = vld [vmem:[%s13 + $0x68] sm:$0xf]
        %v1357 = vld [vmem:[%s13 + $0x6c] sm:$0xf]
        %v1358 = vld [vmem:[%s13 + $0x70] sm:$0xf]
        %v1359 = vld [vmem:[%s13 + $0x74] sm:$0xf]
        %v1360 = vld [vmem:[%s13 + $0x78] sm:$0xf]
        %v1361 = vld [vmem:[%s13 + $0x7c] sm:$0xf]
        %v1362 = vld [vmem:[%s14] sm:$0xf]
        %v1363 = vmul.f32 %v1326, %v1275
        %v1364 = vmul.f32 %v1327, %v1277
        %v1365 = vpack.c.bf16 %v1363, %v1363
        %v1366 = vpack.c.bf16 %v1364, %v1364
        %v1399 = vunpack.c.l.b16 %v1330
        %v1400 = vunpack.c.l.b16 %v1331
        %v1401 = vunpack.c.l.b16 %v1332
        %v1402 = vunpack.c.l.b16 %v1333
        %v1403 = vunpack.c.l.b16 %v1334
        %v1404 = vunpack.c.l.b16 %v1335
        %v1405 = vunpack.c.l.b16 %v1336
        %v1406 = vunpack.c.l.b16 %v1337
        %v1407 = vunpack.c.l.b16 %v1338
        %v1408 = vunpack.c.l.b16 %v1339
        %v1409 = vunpack.c.l.b16 %v1340
        %v1410 = vunpack.c.l.b16 %v1341
        %v1411 = vunpack.c.l.b16 %v1342
        %v1412 = vunpack.c.l.b16 %v1343
        %v1413 = vunpack.c.l.b16 %v1344
        %v1414 = vunpack.c.l.b16 %v1345
        %v1415 = vunpack.c.l.b16 %v1346
        %v1416 = vunpack.c.l.b16 %v1347
        %v1417 = vunpack.c.l.b16 %v1348
        %v1418 = vunpack.c.l.b16 %v1349
        %v1419 = vunpack.c.l.b16 %v1350
        %v1420 = vunpack.c.l.b16 %v1351
        %v1421 = vunpack.c.l.b16 %v1352
        %v1422 = vunpack.c.l.b16 %v1353
        %v1423 = vunpack.c.l.b16 %v1354
        %v1424 = vunpack.c.l.b16 %v1355
        %v1425 = vunpack.c.l.b16 %v1356
        %v1426 = vunpack.c.l.b16 %v1357
        %v1427 = vunpack.c.l.b16 %v1358
        %v1428 = vunpack.c.l.b16 %v1359
        %v1429 = vunpack.c.l.b16 %v1360
        %v1430 = vunpack.c.l.b16 %v1361
        %v1431 = vpack.c.b16 %v1400, %v1399
        %v1432 = vpack.c.b16 %v1402, %v1401
        %v1433 = vpack.c.b16 %v1404, %v1403
        %v1434 = vpack.c.b16 %v1406, %v1405
        %v1435 = vpack.c.b16 %v1408, %v1407
        %v1436 = vpack.c.b16 %v1410, %v1409
        %v1437 = vpack.c.b16 %v1412, %v1411
        %v1438 = vpack.c.b16 %v1414, %v1413
        %v1439 = vpack.c.b16 %v1416, %v1415
        %v1440 = vpack.c.b16 %v1418, %v1417
        %v1441 = vpack.c.b16 %v1420, %v1419
        %v1442 = vpack.c.b16 %v1422, %v1421
        %v1443 = vpack.c.b16 %v1424, %v1423
        %v1444 = vpack.c.b16 %v1426, %v1425
        %v1445 = vpack.c.b16 %v1428, %v1427
        %v1446 = vpack.c.b16 %v1430, %v1429
        %1463 = vmatprep.subr.bf16.mxu0 0
        %1464 = vmatpush1.bf16.msra.mxu0 %v1431
        %1465 = vmatprep.subr.bf16.mxu0 0
        %1466 = vmatpush1.bf16.msra.mxu0 %v1432
        %1467 = vmatprep.subr.bf16.mxu0 0
        %1468 = vmatpush1.bf16.msra.mxu0 %v1433
        %1469 = vmatprep.subr.bf16.mxu0 0
        %1470 = vmatpush1.bf16.msra.mxu0 %v1434
        %1471 = vmatprep.subr.bf16.mxu0 0
        %1472 = vmatpush1.bf16.msra.mxu0 %v1435
        %1473 = vmatprep.subr.bf16.mxu0 0
        %1474 = vmatpush1.bf16.msra.mxu0 %v1436
        %1475 = vmatprep.subr.bf16.mxu0 0
        %1476 = vmatpush1.bf16.msra.mxu0 %v1437
        %1477 = vmatprep.subr.bf16.mxu0 0
        %1478 = vmatpush1.bf16.msra.mxu0 %v1438
        %1479 = vmatprep.subr.bf16.mxu0 0
        %1480 = vmatpush1.bf16.msra.mxu0 %v1439
        %1481 = vmatprep.subr.bf16.mxu0 0
        %1482 = vmatpush1.bf16.msra.mxu0 %v1440
        %1483 = vmatprep.subr.bf16.mxu0 0
        %1484 = vmatpush1.bf16.msra.mxu0 %v1441
        %1485 = vmatprep.subr.bf16.mxu0 0
        %1486 = vmatpush1.bf16.msra.mxu0 %v1442
        %1487 = vmatprep.subr.bf16.mxu0 0
        %1488 = vmatpush1.bf16.msra.mxu0 %v1443
        %1489 = vmatprep.subr.bf16.mxu0 0
        %1490 = vmatpush1.bf16.msra.mxu0 %v1444
        %1491 = vmatprep.subr.bf16.mxu0 0
        %1492 = vmatpush1.bf16.msra.mxu0 %v1445
        %1493 = vmatprep.subr.bf16.mxu0 0
        %1494 = vmatpush1.bf16.msra.mxu0 %v1446
        %1495 = vmatprep.mubr.bf16.mxu0 %v1366
        %1496 = vmatmul.mubr.bf16.gmra.mrb[0].mxu0 %v1365
        %v1497 = vpop.f32.mrb[0].mxu0
        %v1498 = vadd.f32 0.0, %v1497
        %v1499 = vpop.f32.mrb[0].mxu0
        %v1500 = vpop.f32.mrb[0].mxu0
        %v1501 = vpop.f32.mrb[0].mxu0
        %1502 = vdwg.mxu0
        %v1503 = vmul.f32 %v1326, %v1279
        %v1504 = vmul.f32 %v1327, %v1281
        %v1505 = vpack.c.bf16 %v1503, %v1503
        %v1506 = vpack.c.bf16 %v1504, %v1504
        %1507 = vmatprep.subr.bf16.mxu0 0
        %1508 = vmatpush1.bf16.msra.mxu0 %v1431
        %1509 = vmatprep.subr.bf16.mxu0 0
        %1510 = vmatpush1.bf16.msra.mxu0 %v1432
        %1511 = vmatprep.subr.bf16.mxu0 0
        %1512 = vmatpush1.bf16.msra.mxu0 %v1433
        %1513 = vmatprep.subr.bf16.mxu0 0
        %1514 = vmatpush1.bf16.msra.mxu0 %v1434
        %1515 = vmatprep.subr.bf16.mxu0 0
        %1516 = vmatpush1.bf16.msra.mxu0 %v1435
        %1517 = vmatprep.subr.bf16.mxu0 0
        %1518 = vmatpush1.bf16.msra.mxu0 %v1436
        %1519 = vmatprep.subr.bf16.mxu0 0
        %1520 = vmatpush1.bf16.msra.mxu0 %v1437
        %1521 = vmatprep.subr.bf16.mxu0 0
        %1522 = vmatpush1.bf16.msra.mxu0 %v1438
        %1523 = vmatprep.subr.bf16.mxu0 0
        %1524 = vmatpush1.bf16.msra.mxu0 %v1439
        %1525 = vmatprep.subr.bf16.mxu0 0
        %1526 = vmatpush1.bf16.msra.mxu0 %v1440
        %1527 = vmatprep.subr.bf16.mxu0 0
        %1528 = vmatpush1.bf16.msra.mxu0 %v1441
        %1529 = vmatprep.subr.bf16.mxu0 0
        %1530 = vmatpush1.bf16.msra.mxu0 %v1442
        %1531 = vmatprep.subr.bf16.mxu0 0
        %1532 = vmatpush1.bf16.msra.mxu0 %v1443
        %1533 = vmatprep.subr.bf16.mxu0 0
        %1534 = vmatpush1.bf16.msra.mxu0 %v1444
        %1535 = vmatprep.subr.bf16.mxu0 0
        %1536 = vmatpush1.bf16.msra.mxu0 %v1445
        %1537 = vmatprep.subr.bf16.mxu0 0
        %1538 = vmatpush1.bf16.msra.mxu0 %v1446
        %1539 = vmatprep.mubr.bf16.mxu0 %v1506
        %1540 = vmatmul.mubr.bf16.gmra.mrb[0].mxu0 %v1505
        %v1541 = vpop.f32.mrb[0].mxu0
        %v1542 = vadd.f32 0.0, %v1541
        %v1543 = vpop.f32.mrb[0].mxu0
        %v1544 = vpop.f32.mrb[0].mxu0
        %v1545 = vpop.f32.mrb[0].mxu0
        %1546 = vdwg.mxu0
        %v1547 = vmax.f32 %v1498, %v1542
        %v1548 = vsub.f32 %v1498, %v1547
        %v1549 = vmul.f32 %v1548, 1.442695
        %v1550 = vpow.pop %v1549
        %v1551 = vsub.f32 %v1542, %v1547
        %v1552 = vmul.f32 %v1551, 1.442695
        %v1553 = vpow.pop %v1552
        %v1554 = vadd.f32 %v1550, %v1553
        %v1555 = vrcp.pop %v1554
        %v1556 = vmul.f32 1.0, %v1555
        %v1557 = vmul.f32 %v1550, %v1556
        %v1558 = vpack.c.bf16 %v1557, %v1557
        %v1561 = vunpack.c.l.s4 1983009808
        %v1562 = vunpack.c.0.s8 %v1561
        %v1563 = vlaneseq
        %v1564 = vshrl.u32 %v1563, 7
        %v1565 = vsub.s32 %v1562, %v1564
        %v1566 = vrot.slane %v1362, %v1565
        %v1567 = vcombine.high %v1566, %v1566
        %vm1568 = vcmask 31744
        %v1570 = vsel %vm1568, %v1558, 0
        %vm1572 = vcmask 1041408
        %v1574 = vsel %vm1572, %v1566, 0
        %v1577 = vsel %vm1572, %v1567, 0
        %1579 = vmatprep.subr.bf16.mxu0 %v1577
        %1580 = vmatpush1.bf16.msra.mxu0 %v1574
        %1581 = vmatprep.subr.bf16.mxu0 0
        %1582 = vmatpush1.bf16.msra.mxu0 0
        %1583 = vmatprep.subr.bf16.mxu0 0
        %1584 = vmatpush1.bf16.msra.mxu0 0
        %1585 = vmatprep.subr.bf16.mxu0 0
        %1586 = vmatpush1.bf16.msra.mxu0 0
        %1587 = vmatprep.subr.bf16.mxu0 0
        %1588 = vmatpush1.bf16.msra.mxu0 0
        %1589 = vmatprep.subr.bf16.mxu0 0
        %1590 = vmatpush1.bf16.msra.mxu0 0
        %1591 = vmatprep.subr.bf16.mxu0 0
        %1592 = vmatpush1.bf16.msra.mxu0 0
        %1593 = vmatprep.subr.bf16.mxu0 0
        %1594 = vmatpush1.bf16.msra.mxu0 0
        %1595 = vmatprep.subr.bf16.mxu0 0
        %1596 = vmatpush1.bf16.msra.mxu0 0
        %1597 = vmatprep.subr.bf16.mxu0 0
        %1598 = vmatpush1.bf16.msra.mxu0 0
        %1599 = vmatprep.subr.bf16.mxu0 0
        %1600 = vmatpush1.bf16.msra.mxu0 0
        %1601 = vmatprep.subr.bf16.mxu0 0
        %1602 = vmatpush1.bf16.msra.mxu0 0
        %1603 = vmatprep.subr.bf16.mxu0 0
        %1604 = vmatpush1.bf16.msra.mxu0 0
        %1605 = vmatprep.subr.bf16.mxu0 0
        %1606 = vmatpush1.bf16.msra.mxu0 0
        %1607 = vmatprep.subr.bf16.mxu0 0
        %1608 = vmatpush1.bf16.msra.mxu0 0
        %1609 = vmatprep.subr.bf16.mxu0 0
        %1610 = vmatpush1.bf16.msra.mxu0 0
        %1611 = vmatprep.mubr.bf16.mxu0 0
        %1612 = vmatmul.mubr.bf16.gmra.mrb[0].mxu0 %v1570
        %v1613 = vpop.f32.mrb[0].mxu0
        %v1614 = vadd.f32 0.0, %v1613
        %v1615 = vpop.f32.mrb[0].mxu0
        %v1616 = vadd.f32 0.0, %v1615
        %v1617 = vpop.f32.mrb[0].mxu0
        %v1618 = vpop.f32.mrb[0].mxu0
        %1619 = vdwg.mxu0
        %v1620 = vmul.f32 %v1614, %v1318
        %v1621 = vmul.f32 %v1616, %v1320
        %v1622 = vmul.f32 %v1553, %v1556
        %v1623 = vpack.c.bf16 %v1622, %v1622
        %v1625 = vsel %vm1568, %v1623, 0
        %1627 = vmatprep.subr.bf16.mxu0 %v1577
        %1628 = vmatpush1.bf16.msra.mxu0 %v1574
        %1629 = vmatprep.subr.bf16.mxu0 0
        %1630 = vmatpush1.bf16.msra.mxu0 0
        %1631 = vmatprep.subr.bf16.mxu0 0
        %1632 = vmatpush1.bf16.msra.mxu0 0
        %1633 = vmatprep.subr.bf16.mxu0 0
        %1634 = vmatpush1.bf16.msra.mxu0 0
        %1635 = vmatprep.subr.bf16.mxu0 0
        %1636 = vmatpush1.bf16.msra.mxu0 0
        %1637 = vmatprep.subr.bf16.mxu0 0
        %1638 = vmatpush1.bf16.msra.mxu0 0
        %1639 = vmatprep.subr.bf16.mxu0 0
        %1640 = vmatpush1.bf16.msra.mxu0 0
        %1641 = vmatprep.subr.bf16.mxu0 0
        %1642 = vmatpush1.bf16.msra.mxu0 0
        %1643 = vmatprep.subr.bf16.mxu0 0
        %1644 = vmatpush1.bf16.msra.mxu0 0
        %1645 = vmatprep.subr.bf16.mxu0 0
        %1646 = vmatpush1.bf16.msra.mxu0 0
        %1647 = vmatprep.subr.bf16.mxu0 0
        %1648 = vmatpush1.bf16.msra.mxu0 0
        %1649 = vmatprep.subr.bf16.mxu0 0
        %1650 = vmatpush1.bf16.msra.mxu0 0
        %1651 = vmatprep.subr.bf16.mxu0 0
        %1652 = vmatpush1.bf16.msra.mxu0 0
        %1653 = vmatprep.subr.bf16.mxu0 0
        %1654 = vmatpush1.bf16.msra.mxu0 0
        %1655 = vmatprep.subr.bf16.mxu0 0
        %1656 = vmatpush1.bf16.msra.mxu0 0
        %1657 = vmatprep.subr.bf16.mxu0 0
        %1658 = vmatpush1.bf16.msra.mxu0 0
        %1659 = vmatprep.mubr.bf16.mxu0 0
        %1660 = vmatmul.mubr.bf16.gmra.mrb[0].mxu0 %v1625
        %v1661 = vpop.f32.mrb[0].mxu0
        %v1662 = vadd.f32 0.0, %v1661
        %v1663 = vpop.f32.mrb[0].mxu0
        %v1664 = vadd.f32 0.0, %v1663
        %v1665 = vpop.f32.mrb[0].mxu0
        %v1666 = vpop.f32.mrb[0].mxu0
        %1667 = vdwg.mxu0
        %v1668 = vmul.f32 %v1662, %v1322
        %v1669 = vmul.f32 %v1664, %v1324
        %v1670 = vadd.f32 %v1620, %v1668
        %v1671 = vadd.f32 %v1621, %v1669
        %v1672 = vmul.f32 %v1328, %v1275
        %v1673 = vmul.f32 %v1329, %v1277
        %v1674 = vpack.c.bf16 %v1672, %v1672
        %v1675 = vpack.c.bf16 %v1673, %v1673
        %1676 = vmatprep.subr.bf16.mxu0 0
        %1677 = vmatpush1.bf16.msra.mxu0 %v1431
        %1678 = vmatprep.subr.bf16.mxu0 0
        %1679 = vmatpush1.bf16.msra.mxu0 %v1432
        %1680 = vmatprep.subr.bf16.mxu0 0
        %1681 = vmatpush1.bf16.msra.mxu0 %v1433
        %1682 = vmatprep.subr.bf16.mxu0 0
        %1683 = vmatpush1.bf16.msra.mxu0 %v1434
        %1684 = vmatprep.subr.bf16.mxu0 0
        %1685 = vmatpush1.bf16.msra.mxu0 %v1435
        %1686 = vmatprep.subr.bf16.mxu0 0
        %1687 = vmatpush1.bf16.msra.mxu0 %v1436
        %1688 = vmatprep.subr.bf16.mxu0 0
        %1689 = vmatpush1.bf16.msra.mxu0 %v1437
        %1690 = vmatprep.subr.bf16.mxu0 0
        %1691 = vmatpush1.bf16.msra.mxu0 %v1438
        %1692 = vmatprep.subr.bf16.mxu0 0
        %1693 = vmatpush1.bf16.msra.mxu0 %v1439
        %1694 = vmatprep.subr.bf16.mxu0 0
        %1695 = vmatpush1.bf16.msra.mxu0 %v1440
        %1696 = vmatprep.subr.bf16.mxu0 0
        %1697 = vmatpush1.bf16.msra.mxu0 %v1441
        %1698 = vmatprep.subr.bf16.mxu0 0
        %1699 = vmatpush1.bf16.msra.mxu0 %v1442
        %1700 = vmatprep.subr.bf16.mxu0 0
        %1701 = vmatpush1.bf16.msra.mxu0 %v1443
        %1702 = vmatprep.subr.bf16.mxu0 0
        %1703 = vmatpush1.bf16.msra.mxu0 %v1444
        %1704 = vmatprep.subr.bf16.mxu0 0
        %1705 = vmatpush1.bf16.msra.mxu0 %v1445
        %1706 = vmatprep.subr.bf16.mxu0 0
        %1707 = vmatpush1.bf16.msra.mxu0 %v1446
        %1708 = vmatprep.mubr.bf16.mxu0 %v1675
        %1709 = vmatmul.mubr.bf16.gmra.mrb[0].mxu0 %v1674
        %v1710 = vpop.f32.mrb[0].mxu0
        %v1711 = vadd.f32 0.0, %v1710
        %v1712 = vpop.f32.mrb[0].mxu0
        %v1713 = vpop.f32.mrb[0].mxu0
        %v1714 = vpop.f32.mrb[0].mxu0
        %1715 = vdwg.mxu0
        %v1716 = vmul.f32 %v1328, %v1279
        %v1717 = vmul.f32 %v1329, %v1281
        %v1718 = vpack.c.bf16 %v1716, %v1716
        %v1719 = vpack.c.bf16 %v1717, %v1717
        %1720 = vmatprep.subr.bf16.mxu0 0
        %1721 = vmatpush1.bf16.msra.mxu0 %v1431
        %1722 = vmatprep.subr.bf16.mxu0 0
        %1723 = vmatpush1.bf16.msra.mxu0 %v1432
        %1724 = vmatprep.subr.bf16.mxu0 0
        %1725 = vmatpush1.bf16.msra.mxu0 %v1433
        %1726 = vmatprep.subr.bf16.mxu0 0
        %1727 = vmatpush1.bf16.msra.mxu0 %v1434
        %1728 = vmatprep.subr.bf16.mxu0 0
        %1729 = vmatpush1.bf16.msra.mxu0 %v1435
        %1730 = vmatprep.subr.bf16.mxu0 0
        %1731 = vmatpush1.bf16.msra.mxu0 %v1436
        %1732 = vmatprep.subr.bf16.mxu0 0
        %1733 = vmatpush1.bf16.msra.mxu0 %v1437
        %1734 = vmatprep.subr.bf16.mxu0 0
        %1735 = vmatpush1.bf16.msra.mxu0 %v1438
        %1736 = vmatprep.subr.bf16.mxu0 0
        %1737 = vmatpush1.bf16.msra.mxu0 %v1439
        %1738 = vmatprep.subr.bf16.mxu0 0
        %1739 = vmatpush1.bf16.msra.mxu0 %v1440
        %1740 = vmatprep.subr.bf16.mxu0 0
        %1741 = vmatpush1.bf16.msra.mxu0 %v1441
        %1742 = vmatprep.subr.bf16.mxu0 0
        %1743 = vmatpush1.bf16.msra.mxu0 %v1442
        %1744 = vmatprep.subr.bf16.mxu0 0
        %1745 = vmatpush1.bf16.msra.mxu0 %v1443
        %1746 = vmatprep.subr.bf16.mxu0 0
        %1747 = vmatpush1.bf16.msra.mxu0 %v1444
        %1748 = vmatprep.subr.bf16.mxu0 0
        %1749 = vmatpush1.bf16.msra.mxu0 %v1445
        %1750 = vmatprep.subr.bf16.mxu0 0
        %1751 = vmatpush1.bf16.msra.mxu0 %v1446
        %1752 = vmatprep.mubr.bf16.mxu0 %v1719
        %1753 = vmatmul.mubr.bf16.gmra.mrb[0].mxu0 %v1718
        %v1754 = vpop.f32.mrb[0].mxu0
        %v1755 = vadd.f32 0.0, %v1754
        %v1756 = vpop.f32.mrb[0].mxu0
        %v1757 = vpop.f32.mrb[0].mxu0
        %v1758 = vpop.f32.mrb[0].mxu0
        %1759 = vdwg.mxu0
        %v1760 = vmax.f32 %v1711, %v1755
        %v1761 = vsub.f32 %v1711, %v1760
        %v1762 = vmul.f32 %v1761, 1.442695
        %v1763 = vpow.pop %v1762
        %v1764 = vsub.f32 %v1755, %v1760
        %v1765 = vmul.f32 %v1764, 1.442695
        %v1766 = vpow.pop %v1765
        %v1767 = vadd.f32 %v1763, %v1766
        %v1768 = vrcp.pop %v1767
        %v1769 = vmul.f32 1.0, %v1768
        %v1770 = vmul.f32 %v1763, %v1769
        %v1771 = vpack.c.bf16 %v1770, %v1770
        %v1773 = vsel %vm1568, %v1771, 0
        %1775 = vmatprep.subr.bf16.mxu0 %v1577
        %1776 = vmatpush1.bf16.msra.mxu0 %v1574
        %1777 = vmatprep.subr.bf16.mxu0 0
        %1778 = vmatpush1.bf16.msra.mxu0 0
        %1779 = vmatprep.subr.bf16.mxu0 0
        %1780 = vmatpush1.bf16.msra.mxu0 0
        %1781 = vmatprep.subr.bf16.mxu0 0
        %1782 = vmatpush1.bf16.msra.mxu0 0
        %1783 = vmatprep.subr.bf16.mxu0 0
        %1784 = vmatpush1.bf16.msra.mxu0 0
        %1785 = vmatprep.subr.bf16.mxu0 0
        %1786 = vmatpush1.bf16.msra.mxu0 0
        %1787 = vmatprep.subr.bf16.mxu0 0
        %1788 = vmatpush1.bf16.msra.mxu0 0
        %1789 = vmatprep.subr.bf16.mxu0 0
        %1790 = vmatpush1.bf16.msra.mxu0 0
        %1791 = vmatprep.subr.bf16.mxu0 0
        %1792 = vmatpush1.bf16.msra.mxu0 0
        %1793 = vmatprep.subr.bf16.mxu0 0
        %1794 = vmatpush1.bf16.msra.mxu0 0
        %1795 = vmatprep.subr.bf16.mxu0 0
        %1796 = vmatpush1.bf16.msra.mxu0 0
        %1797 = vmatprep.subr.bf16.mxu0 0
        %1798 = vmatpush1.bf16.msra.mxu0 0
        %1799 = vmatprep.subr.bf16.mxu0 0
        %1800 = vmatpush1.bf16.msra.mxu0 0
        %1801 = vmatprep.subr.bf16.mxu0 0
        %1802 = vmatpush1.bf16.msra.mxu0 0
        %1803 = vmatprep.subr.bf16.mxu0 0
        %1804 = vmatpush1.bf16.msra.mxu0 0
        %1805 = vmatprep.subr.bf16.mxu0 0
        %1806 = vmatpush1.bf16.msra.mxu0 0
        %1807 = vmatprep.mubr.bf16.mxu0 0
        %1808 = vmatmul.mubr.bf16.gmra.mrb[0].mxu0 %v1773
        %v1809 = vpop.f32.mrb[0].mxu0
        %v1810 = vadd.f32 0.0, %v1809
        %v1811 = vpop.f32.mrb[0].mxu0
        %v1812 = vadd.f32 0.0, %v1811
        %v1813 = vpop.f32.mrb[0].mxu0
        %v1814 = vpop.f32.mrb[0].mxu0
        %1815 = vdwg.mxu0
        %v1816 = vmul.f32 %v1810, %v1318
        %v1817 = vmul.f32 %v1812, %v1320
        %v1818 = vmul.f32 %v1766, %v1769
        %v1819 = vpack.c.bf16 %v1818, %v1818
        %v1821 = vsel %vm1568, %v1819, 0
        %1823 = vmatprep.subr.bf16.mxu0 %v1577
        %1824 = vmatpush1.bf16.msra.mxu0 %v1574
        %1825 = vmatprep.subr.bf16.mxu0 0
        %1826 = vmatpush1.bf16.msra.mxu0 0
        %1827 = vmatprep.subr.bf16.mxu0 0
        %1828 = vmatpush1.bf16.msra.mxu0 0
        %1829 = vmatprep.subr.bf16.mxu0 0
        %1830 = vmatpush1.bf16.msra.mxu0 0
        %1831 = vmatprep.subr.bf16.mxu0 0
        %1832 = vmatpush1.bf16.msra.mxu0 0
        %1833 = vmatprep.subr.bf16.mxu0 0
        %1834 = vmatpush1.bf16.msra.mxu0 0
        %1835 = vmatprep.subr.bf16.mxu0 0
        %1836 = vmatpush1.bf16.msra.mxu0 0
        %1837 = vmatprep.subr.bf16.mxu0 0
        %1838 = vmatpush1.bf16.msra.mxu0 0
        %1839 = vmatprep.subr.bf16.mxu0 0
        %1840 = vmatpush1.bf16.msra.mxu0 0
        %1841 = vmatprep.subr.bf16.mxu0 0
        %1842 = vmatpush1.bf16.msra.mxu0 0
        %1843 = vmatprep.subr.bf16.mxu0 0
        %1844 = vmatpush1.bf16.msra.mxu0 0
        %1845 = vmatprep.subr.bf16.mxu0 0
        %1846 = vmatpush1.bf16.msra.mxu0 0
        %1847 = vmatprep.subr.bf16.mxu0 0
        %1848 = vmatpush1.bf16.msra.mxu0 0
        %1849 = vmatprep.subr.bf16.mxu0 0
        %1850 = vmatpush1.bf16.msra.mxu0 0
        %1851 = vmatprep.subr.bf16.mxu0 0
        %1852 = vmatpush1.bf16.msra.mxu0 0
        %1853 = vmatprep.subr.bf16.mxu0 0
        %1854 = vmatpush1.bf16.msra.mxu0 0
        %1855 = vmatprep.mubr.bf16.mxu0 0
        %1856 = vmatmul.mubr.bf16.gmra.mrb[0].mxu0 %v1821
        %v1857 = vpop.f32.mrb[0].mxu0
        %v1858 = vadd.f32 0.0, %v1857
        %v1859 = vpop.f32.mrb[0].mxu0
        %v1860 = vadd.f32 0.0, %v1859
        %v1861 = vpop.f32.mrb[0].mxu0
        %v1862 = vpop.f32.mrb[0].mxu0
        %1863 = vdwg.mxu0
        %v1864 = vmul.f32 %v1858, %v1322
        %v1865 = vmul.f32 %v1860, %v1324
        %v1866 = vadd.f32 %v1816, %v1864
        %v1867 = vadd.f32 %v1817, %v1865
        %v1868 = vpack.c.bf16 %v1866, %v1670
        %v1869 = vpack.c.bf16 %v1867, %v1671
        %v1870 = vld [vmem:[#allocation3] sm:$0xff]
        %v1871 = vld [vmem:[#allocation3 + $0x8] sm:$0xff]
        %v1872 = vld [vmem:[#allocation3 + $0x10] sm:$0xff]
        %v1873 = vld [vmem:[#allocation3 + $0x18] sm:$0xff]
        %v1874 = vld [vmem:[#allocation3 + $0x20] sm:$0xff]
        %v1875 = vld [vmem:[#allocation3 + $0x28] sm:$0xff]
        %v1876 = vld [vmem:[#allocation3 + $0x30] sm:$0xff]
        %v1877 = vld [vmem:[#allocation3 + $0x38] sm:$0xff]
        %v1878 = vld [vmem:[#allocation3 + $0x40] sm:$0xff]
        %v1879 = vld [vmem:[#allocation3 + $0x48] sm:$0xff]
        %v1880 = vld [vmem:[#allocation3 + $0x50] sm:$0xff]
        %v1881 = vld [vmem:[#allocation3 + $0x58] sm:$0xff]
        %v1882 = vld [vmem:[#allocation3 + $0x60] sm:$0xff]
        %v1883 = vld [vmem:[#allocation3 + $0x68] sm:$0xff]
        %v1884 = vld [vmem:[#allocation3 + $0x70] sm:$0xff]
        %v1885 = vld [vmem:[#allocation3 + $0x78] sm:$0xff]
        %v1886 = vld [vmem:[#allocation3 + $0x80] sm:$0xff]
        %v1887 = vld [vmem:[#allocation3 + $0x88] sm:$0xff]
        %v1888 = vld [vmem:[#allocation3 + $0x90] sm:$0xff]
        %v1889 = vld [vmem:[#allocation3 + $0x98] sm:$0xff]
        %v1890 = vld [vmem:[#allocation3 + $0xa0] sm:$0xff]
        %v1891 = vld [vmem:[#allocation3 + $0xa8] sm:$0xff]
        %v1892 = vld [vmem:[#allocation3 + $0xb0] sm:$0xff]
        %v1893 = vld [vmem:[#allocation3 + $0xb8] sm:$0xff]
        %v1894 = vld [vmem:[#allocation3 + $0xc0] sm:$0xff]
        %v1895 = vld [vmem:[#allocation3 + $0xc8] sm:$0xff]
        %v1896 = vld [vmem:[#allocation3 + $0xd0] sm:$0xff]
        %v1897 = vld [vmem:[#allocation3 + $0xd8] sm:$0xff]
        %v1898 = vld [vmem:[#allocation3 + $0xe0] sm:$0xff]
        %v1899 = vld [vmem:[#allocation3 + $0xe8] sm:$0xff]
        %v1900 = vld [vmem:[#allocation3 + $0xf0] sm:$0xff]
        %v1901 = vld [vmem:[#allocation3 + $0xf8] sm:$0xff]
        %v1902 = vld [vmem:[%s4] sm:$0x3]
        %v1904 = vlaneseq
        %v1905 = vshrl.u32 %v1904, 7
        %v1906 = vsub.s32 0, %v1905
        %v1907 = vrot.slane %v1902, %v1906
        %v1908 = vlaneseq
        %v1909 = vshrl.u32 %v1908, 7
        %v1910 = vsub.s32 1, %v1909
        %v1911 = vrot.slane %v1902, %v1910
        %v1946 = vunpack.c.l.b16 %v1870
        %v1947 = vunpack.c.h.b16 %v1870
        %v1948 = vunpack.c.l.b16 %v1871
        %v1949 = vunpack.c.h.b16 %v1871
        %v1950 = vunpack.c.l.b16 %v1872
        %v1951 = vunpack.c.h.b16 %v1872
        %v1952 = vunpack.c.l.b16 %v1873
        %v1953 = vunpack.c.h.b16 %v1873
        %v1954 = vunpack.c.l.b16 %v1874
        %v1955 = vunpack.c.h.b16 %v1874
        %v1956 = vunpack.c.l.b16 %v1875
        %v1957 = vunpack.c.h.b16 %v1875
        %v1958 = vunpack.c.l.b16 %v1876
        %v1959 = vunpack.c.h.b16 %v1876
        %v1960 = vunpack.c.l.b16 %v1877
        %v1961 = vunpack.c.h.b16 %v1877
        %v1962 = vunpack.c.l.b16 %v1878
        %v1963 = vunpack.c.h.b16 %v1878
        %v1964 = vunpack.c.l.b16 %v1879
        %v1965 = vunpack.c.h.b16 %v1879
        %v1966 = vunpack.c.l.b16 %v1880
        %v1967 = vunpack.c.h.b16 %v1880
        %v1968 = vunpack.c.l.b16 %v1881
        %v1969 = vunpack.c.h.b16 %v1881
        %v1970 = vunpack.c.l.b16 %v1882
        %v1971 = vunpack.c.h.b16 %v1882
        %v1972 = vunpack.c.l.b16 %v1883
        %v1973 = vunpack.c.h.b16 %v1883
        %v1974 = vunpack.c.l.b16 %v1884
        %v1975 = vunpack.c.h.b16 %v1884
        %v1976 = vunpack.c.l.b16 %v1885
        %v1977 = vunpack.c.h.b16 %v1885
        %v1978 = vunpack.c.l.b16 %v1886
        %v1979 = vunpack.c.h.b16 %v1886
        %v1980 = vunpack.c.l.b16 %v1887
        %v1981 = vunpack.c.h.b16 %v1887
        %v1982 = vunpack.c.l.b16 %v1888
        %v1983 = vunpack.c.h.b16 %v1888
        %v1984 = vunpack.c.l.b16 %v1889
        %v1985 = vunpack.c.h.b16 %v1889
        %v1986 = vunpack.c.l.b16 %v1890
        %v1987 = vunpack.c.h.b16 %v1890
        %v1988 = vunpack.c.l.b16 %v1891
        %v1989 = vunpack.c.h.b16 %v1891
        %v1990 = vunpack.c.l.b16 %v1892
        %v1991 = vunpack.c.h.b16 %v1892
        %v1992 = vunpack.c.l.b16 %v1893
        %v1993 = vunpack.c.h.b16 %v1893
        %v1994 = vunpack.c.l.b16 %v1894
        %v1995 = vunpack.c.h.b16 %v1894
        %v1996 = vunpack.c.l.b16 %v1895
        %v1997 = vunpack.c.h.b16 %v1895
        %v1998 = vunpack.c.l.b16 %v1896
        %v1999 = vunpack.c.h.b16 %v1896
        %v2000 = vunpack.c.l.b16 %v1897
        %v2001 = vunpack.c.h.b16 %v1897
        %v2002 = vunpack.c.l.b16 %v1898
        %v2003 = vunpack.c.h.b16 %v1898
        %v2004 = vunpack.c.l.b16 %v1899
        %v2005 = vunpack.c.h.b16 %v1899
        %v2006 = vunpack.c.l.b16 %v1900
        %v2007 = vunpack.c.h.b16 %v1900
        %v2008 = vunpack.c.l.b16 %v1901
        %v2009 = vunpack.c.h.b16 %v1901
        %v2010 = vpack.c.b16 %v1948, %v1946
        %v2011 = vpack.c.b16 %v1949, %v1947
        %v2012 = vpack.c.b16 %v1952, %v1950
        %v2013 = vpack.c.b16 %v1953, %v1951
        %v2014 = vpack.c.b16 %v1956, %v1954
        %v2015 = vpack.c.b16 %v1957, %v1955
        %v2016 = vpack.c.b16 %v1960, %v1958
        %v2017 = vpack.c.b16 %v1961, %v1959
        %v2018 = vpack.c.b16 %v1964, %v1962
        %v2019 = vpack.c.b16 %v1965, %v1963
        %v2020 = vpack.c.b16 %v1968, %v1966
        %v2021 = vpack.c.b16 %v1969, %v1967
        %v2022 = vpack.c.b16 %v1972, %v1970
        %v2023 = vpack.c.b16 %v1973, %v1971
        %v2024 = vpack.c.b16 %v1976, %v1974
        %v2025 = vpack.c.b16 %v1977, %v1975
        %v2026 = vpack.c.b16 %v1980, %v1978
        %v2027 = vpack.c.b16 %v1981, %v1979
        %v2028 = vpack.c.b16 %v1984, %v1982
        %v2029 = vpack.c.b16 %v1985, %v1983
        %v2030 = vpack.c.b16 %v1988, %v1986
        %v2031 = vpack.c.b16 %v1989, %v1987
        %v2032 = vpack.c.b16 %v1992, %v1990
        %v2033 = vpack.c.b16 %v1993, %v1991
        %v2034 = vpack.c.b16 %v1996, %v1994
        %v2035 = vpack.c.b16 %v1997, %v1995
        %v2036 = vpack.c.b16 %v2000, %v1998
        %v2037 = vpack.c.b16 %v2001, %v1999
        %v2038 = vpack.c.b16 %v2004, %v2002
        %v2039 = vpack.c.b16 %v2005, %v2003
        %v2040 = vpack.c.b16 %v2008, %v2006
        %v2041 = vpack.c.b16 %v2009, %v2007
        %2074 = vmatprep.subr.bf16.mxu0 %v2011
        %2075 = vmatpush1.bf16.msra.mxu0 %v2010
        %2076 = vmatprep.subr.bf16.mxu0 %v2013
        %2077 = vmatpush1.bf16.msra.mxu0 %v2012
        %2078 = vmatprep.subr.bf16.mxu0 %v2015
        %2079 = vmatpush1.bf16.msra.mxu0 %v2014
        %2080 = vmatprep.subr.bf16.mxu0 %v2017
        %2081 = vmatpush1.bf16.msra.mxu0 %v2016
        %2082 = vmatprep.subr.bf16.mxu0 %v2019
        %2083 = vmatpush1.bf16.msra.mxu0 %v2018
        %2084 = vmatprep.subr.bf16.mxu0 %v2021
        %2085 = vmatpush1.bf16.msra.mxu0 %v2020
        %2086 = vmatprep.subr.bf16.mxu0 %v2023
        %2087 = vmatpush1.bf16.msra.mxu0 %v2022
        %2088 = vmatprep.subr.bf16.mxu0 %v2025
        %2089 = vmatpush1.bf16.msra.mxu0 %v2024
        %2090 = vmatprep.subr.bf16.mxu0 %v2027
        %2091 = vmatpush1.bf16.msra.mxu0 %v2026
        %2092 = vmatprep.subr.bf16.mxu0 %v2029
        %2093 = vmatpush1.bf16.msra.mxu0 %v2028
        %2094 = vmatprep.subr.bf16.mxu0 %v2031
        %2095 = vmatpush1.bf16.msra.mxu0 %v2030
        %2096 = vmatprep.subr.bf16.mxu0 %v2033
        %2097 = vmatpush1.bf16.msra.mxu0 %v2032
        %2098 = vmatprep.subr.bf16.mxu0 %v2035
        %2099 = vmatpush1.bf16.msra.mxu0 %v2034
        %2100 = vmatprep.subr.bf16.mxu0 %v2037
        %2101 = vmatpush1.bf16.msra.mxu0 %v2036
        %2102 = vmatprep.subr.bf16.mxu0 %v2039
        %2103 = vmatpush1.bf16.msra.mxu0 %v2038
        %2104 = vmatprep.subr.bf16.mxu0 %v2041
        %2105 = vmatpush1.bf16.msra.mxu0 %v2040
        %2106 = vmatprep.mubr.bf16.mxu0 %v1869
        %2107 = vmatmul.mubr.bf16.gmra.mrb[0].mxu0 %v1868
        %v2108 = vpop.f32.mrb[0].mxu0
        %v2109 = vadd.f32 %v1907, %v2108
        %v2110 = vpop.f32.mrb[0].mxu0
        %v2111 = vadd.f32 %v1911, %v2110
        %v2112 = vpop.f32.mrb[0].mxu0
        %v2113 = vadd.f32 %v1907, %v2112
        %v2114 = vpop.f32.mrb[0].mxu0
        %v2115 = vadd.f32 %v1911, %v2114
        %2116 = vdwg.mxu0
        %v2117 = vadd.f32 %v575, %v2109
        %v2118 = vadd.f32 %v576, %v2111
        %v2119 = vadd.f32 %v577, %v2113
        %v2120 = vadd.f32 %v578, %v2115
        %v2121 = vld [vmem:[%s5] sm:$0x3]
        %v2122 = vld [vmem:[%s6] sm:$0x3]
        %v2123 = vadd.f32 %v2117, %v2118
        %2124 = vadd.xlane.f32.xlu0 %v2123
        %v2125 = vpop.xlane.xlu0 %2124
        %v2126 = vadd.f32 %v2119, %v2120
        %2127 = vadd.xlane.f32.xlu0 %v2126
        %v2128 = vpop.xlane.xlu0 %2127
        %v2129 = vrcp.pop 256.0
        %v2130 = vmul.f32 %v2125, %v2129
        %v2131 = vmul.f32 %v2128, %v2129
        %v2132 = vsub.f32 %v2117, %v2130
        %v2133 = vsub.f32 %v2118, %v2130
        %v2134 = vsub.f32 %v2119, %v2131
        %v2135 = vsub.f32 %v2120, %v2131
        %v2136 = vmul.f32 %v2132, %v2132
        %v2137 = vmul.f32 %v2133, %v2133
        %v2138 = vmul.f32 %v2134, %v2134
        %v2139 = vmul.f32 %v2135, %v2135
        %v2140 = vadd.f32 %v2136, %v2137
        %2141 = vadd.xlane.f32.xlu0 %v2140
        %v2142 = vpop.xlane.xlu0 %2141
        %v2143 = vadd.f32 %v2138, %v2139
        %2144 = vadd.xlane.f32.xlu0 %v2143
        %v2145 = vpop.xlane.xlu0 %2144
        %v2146 = vmul.f32 %v2142, %v2129
        %v2147 = vmul.f32 %v2145, %v2129
        %v2148 = vadd.f32 %v2146, 1e-05
        %v2149 = vadd.f32 %v2147, 1e-05
        %v2150 = vrsqrt.pop %v2148
        %v2151 = vrsqrt.pop %v2149
        %v2152 = vmul.f32 %v2132, %v2150
        %v2153 = vmul.f32 %v2133, %v2150
        %v2154 = vmul.f32 %v2134, %v2151
        %v2155 = vmul.f32 %v2135, %v2151
        %v2157 = vlaneseq
        %v2158 = vshrl.u32 %v2157, 7
        %v2159 = vsub.s32 0, %v2158
        %v2160 = vrot.slane %v2121, %v2159
        %v2161 = vlaneseq
        %v2162 = vshrl.u32 %v2161, 7
        %v2163 = vsub.s32 1, %v2162
        %v2164 = vrot.slane %v2121, %v2163
        %v2167 = vmul.f32 %v2152, %v2160
        %v2168 = vmul.f32 %v2153, %v2164
        %v2169 = vmul.f32 %v2154, %v2160
        %v2170 = vmul.f32 %v2155, %v2164
        %v2172 = vlaneseq
        %v2173 = vshrl.u32 %v2172, 7
        %v2174 = vsub.s32 0, %v2173
        %v2175 = vrot.slane %v2122, %v2174
        %v2176 = vlaneseq
        %v2177 = vshrl.u32 %v2176, 7
        %v2178 = vsub.s32 1, %v2177
        %v2179 = vrot.slane %v2122, %v2178
        %v2182 = vadd.f32 %v2167, %v2175
        %v2183 = vadd.f32 %v2168, %v2179
        %v2184 = vadd.f32 %v2169, %v2175
        %v2185 = vadd.f32 %v2170, %v2179
        %v2186 = vpack.c.bf16 %v2184, %v2182
        %v2187 = vpack.c.bf16 %v2185, %v2183
        %v2188 = vld [vmem:[#allocation5] sm:$0xff]
        %v2189 = vld [vmem:[#allocation5 + $0x8] sm:$0xff]
        %v2190 = vld [vmem:[#allocation5 + $0x10] sm:$0xff]
        %v2191 = vld [vmem:[#allocation5 + $0x18] sm:$0xff]
        %v2192 = vld [vmem:[#allocation5 + $0x20] sm:$0xff]
        %v2193 = vld [vmem:[#allocation5 + $0x28] sm:$0xff]
        %v2194 = vld [vmem:[#allocation5 + $0x30] sm:$0xff]
        %v2195 = vld [vmem:[#allocation5 + $0x38] sm:$0xff]
        %v2196 = vld [vmem:[#allocation5 + $0x40] sm:$0xff]
        %v2197 = vld [vmem:[#allocation5 + $0x48] sm:$0xff]
        %v2198 = vld [vmem:[#allocation5 + $0x50] sm:$0xff]
        %v2199 = vld [vmem:[#allocation5 + $0x58] sm:$0xff]
        %v2200 = vld [vmem:[#allocation5 + $0x60] sm:$0xff]
        %v2201 = vld [vmem:[#allocation5 + $0x68] sm:$0xff]
        %v2202 = vld [vmem:[#allocation5 + $0x70] sm:$0xff]
        %v2203 = vld [vmem:[#allocation5 + $0x78] sm:$0xff]
        %v2204 = vld [vmem:[#allocation5 + $0x80] sm:$0xff]
        %v2205 = vld [vmem:[#allocation5 + $0x88] sm:$0xff]
        %v2206 = vld [vmem:[#allocation5 + $0x90] sm:$0xff]
        %v2207 = vld [vmem:[#allocation5 + $0x98] sm:$0xff]
        %v2208 = vld [vmem:[#allocation5 + $0xa0] sm:$0xff]
        %v2209 = vld [vmem:[#allocation5 + $0xa8] sm:$0xff]
        %v2210 = vld [vmem:[#allocation5 + $0xb0] sm:$0xff]
        %v2211 = vld [vmem:[#allocation5 + $0xb8] sm:$0xff]
        %v2212 = vld [vmem:[#allocation5 + $0xc0] sm:$0xff]
        %v2213 = vld [vmem:[#allocation5 + $0xc8] sm:$0xff]
        %v2214 = vld [vmem:[#allocation5 + $0xd0] sm:$0xff]
        %v2215 = vld [vmem:[#allocation5 + $0xd8] sm:$0xff]
        %v2216 = vld [vmem:[#allocation5 + $0xe0] sm:$0xff]
        %v2217 = vld [vmem:[#allocation5 + $0xe8] sm:$0xff]
        %v2218 = vld [vmem:[#allocation5 + $0xf0] sm:$0xff]
        %v2219 = vld [vmem:[#allocation5 + $0xf8] sm:$0xff]
        %v2220 = vld [vmem:[#allocation5 + $0x100] sm:$0xff]
        %v2221 = vld [vmem:[#allocation5 + $0x108] sm:$0xff]
        %v2222 = vld [vmem:[#allocation5 + $0x110] sm:$0xff]
        %v2223 = vld [vmem:[#allocation5 + $0x118] sm:$0xff]
        %v2224 = vld [vmem:[#allocation5 + $0x120] sm:$0xff]
        %v2225 = vld [vmem:[#allocation5 + $0x128] sm:$0xff]
        %v2226 = vld [vmem:[#allocation5 + $0x130] sm:$0xff]
        %v2227 = vld [vmem:[#allocation5 + $0x138] sm:$0xff]
        %v2228 = vld [vmem:[#allocation5 + $0x140] sm:$0xff]
        %v2229 = vld [vmem:[#allocation5 + $0x148] sm:$0xff]
        %v2230 = vld [vmem:[#allocation5 + $0x150] sm:$0xff]
        %v2231 = vld [vmem:[#allocation5 + $0x158] sm:$0xff]
        %v2232 = vld [vmem:[#allocation5 + $0x160] sm:$0xff]
        %v2233 = vld [vmem:[#allocation5 + $0x168] sm:$0xff]
        %v2234 = vld [vmem:[#allocation5 + $0x170] sm:$0xff]
        %v2235 = vld [vmem:[#allocation5 + $0x178] sm:$0xff]
        %v2236 = vld [vmem:[#allocation5 + $0x180] sm:$0xff]
        %v2237 = vld [vmem:[#allocation5 + $0x188] sm:$0xff]
        %v2238 = vld [vmem:[#allocation5 + $0x190] sm:$0xff]
        %v2239 = vld [vmem:[#allocation5 + $0x198] sm:$0xff]
        %v2240 = vld [vmem:[#allocation5 + $0x1a0] sm:$0xff]
        %v2241 = vld [vmem:[#allocation5 + $0x1a8] sm:$0xff]
        %v2242 = vld [vmem:[#allocation5 + $0x1b0] sm:$0xff]
        %v2243 = vld [vmem:[#allocation5 + $0x1b8] sm:$0xff]
        %v2244 = vld [vmem:[#allocation5 + $0x1c0] sm:$0xff]
        %v2245 = vld [vmem:[#allocation5 + $0x1c8] sm:$0xff]
        %v2246 = vld [vmem:[#allocation5 + $0x1d0] sm:$0xff]
        %v2247 = vld [vmem:[#allocation5 + $0x1d8] sm:$0xff]
        %v2248 = vld [vmem:[#allocation5 + $0x1e0] sm:$0xff]
        %v2249 = vld [vmem:[#allocation5 + $0x1e8] sm:$0xff]
        %v2250 = vld [vmem:[#allocation5 + $0x1f0] sm:$0xff]
        %v2251 = vld [vmem:[#allocation5 + $0x1f8] sm:$0xff]
        %v2252 = vld [vmem:[%s8] sm:$0xf]
        %v2254 = vlaneseq
        %v2255 = vshrl.u32 %v2254, 7
        %v2256 = vsub.s32 0, %v2255
        %v2257 = vrot.slane %v2252, %v2256
        %v2258 = vlaneseq
        %v2259 = vshrl.u32 %v2258, 7
        %v2260 = vsub.s32 1, %v2259
        %v2261 = vrot.slane %v2252, %v2260
        %v2262 = vlaneseq
        %v2263 = vshrl.u32 %v2262, 7
        %v2264 = vsub.s32 2, %v2263
        %v2265 = vrot.slane %v2252, %v2264
        %v2266 = vlaneseq
        %v2267 = vshrl.u32 %v2266, 7
        %v2268 = vsub.s32 3, %v2267
        %v2269 = vrot.slane %v2252, %v2268
        %v2338 = vunpack.c.l.b16 %v2188
        %v2339 = vunpack.c.h.b16 %v2188
        %v2340 = vunpack.c.l.b16 %v2189
        %v2341 = vunpack.c.h.b16 %v2189
        %v2342 = vunpack.c.l.b16 %v2190
        %v2343 = vunpack.c.h.b16 %v2190
        %v2344 = vunpack.c.l.b16 %v2191
        %v2345 = vunpack.c.h.b16 %v2191
        %v2346 = vunpack.c.l.b16 %v2192
        %v2347 = vunpack.c.h.b16 %v2192
        %v2348 = vunpack.c.l.b16 %v2193
        %v2349 = vunpack.c.h.b16 %v2193
        %v2350 = vunpack.c.l.b16 %v2194
        %v2351 = vunpack.c.h.b16 %v2194
        %v2352 = vunpack.c.l.b16 %v2195
        %v2353 = vunpack.c.h.b16 %v2195
        %v2354 = vunpack.c.l.b16 %v2196
        %v2355 = vunpack.c.h.b16 %v2196
        %v2356 = vunpack.c.l.b16 %v2197
        %v2357 = vunpack.c.h.b16 %v2197
        %v2358 = vunpack.c.l.b16 %v2198
        %v2359 = vunpack.c.h.b16 %v2198
        %v2360 = vunpack.c.l.b16 %v2199
        %v2361 = vunpack.c.h.b16 %v2199
        %v2362 = vunpack.c.l.b16 %v2200
        %v2363 = vunpack.c.h.b16 %v2200
        %v2364 = vunpack.c.l.b16 %v2201
        %v2365 = vunpack.c.h.b16 %v2201
        %v2366 = vunpack.c.l.b16 %v2202
        %v2367 = vunpack.c.h.b16 %v2202
        %v2368 = vunpack.c.l.b16 %v2203
        %v2369 = vunpack.c.h.b16 %v2203
        %v2370 = vunpack.c.l.b16 %v2204
        %v2371 = vunpack.c.h.b16 %v2204
        %v2372 = vunpack.c.l.b16 %v2205
        %v2373 = vunpack.c.h.b16 %v2205
        %v2374 = vunpack.c.l.b16 %v2206
        %v2375 = vunpack.c.h.b16 %v2206
        %v2376 = vunpack.c.l.b16 %v2207
        %v2377 = vunpack.c.h.b16 %v2207
        %v2378 = vunpack.c.l.b16 %v2208
        %v2379 = vunpack.c.h.b16 %v2208
        %v2380 = vunpack.c.l.b16 %v2209
        %v2381 = vunpack.c.h.b16 %v2209
        %v2382 = vunpack.c.l.b16 %v2210
        %v2383 = vunpack.c.h.b16 %v2210
        %v2384 = vunpack.c.l.b16 %v2211
        %v2385 = vunpack.c.h.b16 %v2211
        %v2386 = vunpack.c.l.b16 %v2212
        %v2387 = vunpack.c.h.b16 %v2212
        %v2388 = vunpack.c.l.b16 %v2213
        %v2389 = vunpack.c.h.b16 %v2213
        %v2390 = vunpack.c.l.b16 %v2214
        %v2391 = vunpack.c.h.b16 %v2214
        %v2392 = vunpack.c.l.b16 %v2215
        %v2393 = vunpack.c.h.b16 %v2215
        %v2394 = vunpack.c.l.b16 %v2216
        %v2395 = vunpack.c.h.b16 %v2216
        %v2396 = vunpack.c.l.b16 %v2217
        %v2397 = vunpack.c.h.b16 %v2217
        %v2398 = vunpack.c.l.b16 %v2218
        %v2399 = vunpack.c.h.b16 %v2218
        %v2400 = vunpack.c.l.b16 %v2219
        %v2401 = vunpack.c.h.b16 %v2219
        %v2402 = vunpack.c.l.b16 %v2220
        %v2403 = vunpack.c.h.b16 %v2220
        %v2404 = vunpack.c.l.b16 %v2221
        %v2405 = vunpack.c.h.b16 %v2221
        %v2406 = vunpack.c.l.b16 %v2222
        %v2407 = vunpack.c.h.b16 %v2222
        %v2408 = vunpack.c.l.b16 %v2223
        %v2409 = vunpack.c.h.b16 %v2223
        %v2410 = vunpack.c.l.b16 %v2224
        %v2411 = vunpack.c.h.b16 %v2224
        %v2412 = vunpack.c.l.b16 %v2225
        %v2413 = vunpack.c.h.b16 %v2225
        %v2414 = vunpack.c.l.b16 %v2226
        %v2415 = vunpack.c.h.b16 %v2226
        %v2416 = vunpack.c.l.b16 %v2227
        %v2417 = vunpack.c.h.b16 %v2227
        %v2418 = vunpack.c.l.b16 %v2228
        %v2419 = vunpack.c.h.b16 %v2228
        %v2420 = vunpack.c.l.b16 %v2229
        %v2421 = vunpack.c.h.b16 %v2229
        %v2422 = vunpack.c.l.b16 %v2230
        %v2423 = vunpack.c.h.b16 %v2230
        %v2424 = vunpack.c.l.b16 %v2231
        %v2425 = vunpack.c.h.b16 %v2231
        %v2426 = vunpack.c.l.b16 %v2232
        %v2427 = vunpack.c.h.b16 %v2232
        %v2428 = vunpack.c.l.b16 %v2233
        %v2429 = vunpack.c.h.b16 %v2233
        %v2430 = vunpack.c.l.b16 %v2234
        %v2431 = vunpack.c.h.b16 %v2234
        %v2432 = vunpack.c.l.b16 %v2235
        %v2433 = vunpack.c.h.b16 %v2235
        %v2434 = vunpack.c.l.b16 %v2236
        %v2435 = vunpack.c.h.b16 %v2236
        %v2436 = vunpack.c.l.b16 %v2237
        %v2437 = vunpack.c.h.b16 %v2237
        %v2438 = vunpack.c.l.b16 %v2238
        %v2439 = vunpack.c.h.b16 %v2238
        %v2440 = vunpack.c.l.b16 %v2239
        %v2441 = vunpack.c.h.b16 %v2239
        %v2442 = vunpack.c.l.b16 %v2240
        %v2443 = vunpack.c.h.b16 %v2240
        %v2444 = vunpack.c.l.b16 %v2241
        %v2445 = vunpack.c.h.b16 %v2241
        %v2446 = vunpack.c.l.b16 %v2242
        %v2447 = vunpack.c.h.b16 %v2242
        %v2448 = vunpack.c.l.b16 %v2243
        %v2449 = vunpack.c.h.b16 %v2243
        %v2450 = vunpack.c.l.b16 %v2244
        %v2451 = vunpack.c.h.b16 %v2244
        %v2452 = vunpack.c.l.b16 %v2245
        %v2453 = vunpack.c.h.b16 %v2245
        %v2454 = vunpack.c.l.b16 %v2246
        %v2455 = vunpack.c.h.b16 %v2246
        %v2456 = vunpack.c.l.b16 %v2247
        %v2457 = vunpack.c.h.b16 %v2247
        %v2458 = vunpack.c.l.b16 %v2248
        %v2459 = vunpack.c.h.b16 %v2248
        %v2460 = vunpack.c.l.b16 %v2249
        %v2461 = vunpack.c.h.b16 %v2249
        %v2462 = vunpack.c.l.b16 %v2250
        %v2463 = vunpack.c.h.b16 %v2250
        %v2464 = vunpack.c.l.b16 %v2251
        %v2465 = vunpack.c.h.b16 %v2251
        %v2466 = vpack.c.b16 %v2342, %v2338
        %v2467 = vpack.c.b16 %v2343, %v2339
        %v2468 = vpack.c.b16 %v2344, %v2340
        %v2469 = vpack.c.b16 %v2345, %v2341
        %v2470 = vpack.c.b16 %v2350, %v2346
        %v2471 = vpack.c.b16 %v2351, %v2347
        %v2472 = vpack.c.b16 %v2352, %v2348
        %v2473 = vpack.c.b16 %v2353, %v2349
        %v2474 = vpack.c.b16 %v2358, %v2354
        %v2475 = vpack.c.b16 %v2359, %v2355
        %v2476 = vpack.c.b16 %v2360, %v2356
        %v2477 = vpack.c.b16 %v2361, %v2357
        %v2478 = vpack.c.b16 %v2366, %v2362
        %v2479 = vpack.c.b16 %v2367, %v2363
        %v2480 = vpack.c.b16 %v2368, %v2364
        %v2481 = vpack.c.b16 %v2369, %v2365
        %v2482 = vpack.c.b16 %v2374, %v2370
        %v2483 = vpack.c.b16 %v2375, %v2371
        %v2484 = vpack.c.b16 %v2376, %v2372
        %v2485 = vpack.c.b16 %v2377, %v2373
        %v2486 = vpack.c.b16 %v2382, %v2378
        %v2487 = vpack.c.b16 %v2383, %v2379
        %v2488 = vpack.c.b16 %v2384, %v2380
        %v2489 = vpack.c.b16 %v2385, %v2381
        %v2490 = vpack.c.b16 %v2390, %v2386
        %v2491 = vpack.c.b16 %v2391, %v2387
        %v2492 = vpack.c.b16 %v2392, %v2388
        %v2493 = vpack.c.b16 %v2393, %v2389
        %v2494 = vpack.c.b16 %v2398, %v2394
        %v2495 = vpack.c.b16 %v2399, %v2395
        %v2496 = vpack.c.b16 %v2400, %v2396
        %v2497 = vpack.c.b16 %v2401, %v2397
        %v2498 = vpack.c.b16 %v2406, %v2402
        %v2499 = vpack.c.b16 %v2407, %v2403
        %v2500 = vpack.c.b16 %v2408, %v2404
        %v2501 = vpack.c.b16 %v2409, %v2405
        %v2502 = vpack.c.b16 %v2414, %v2410
        %v2503 = vpack.c.b16 %v2415, %v2411
        %v2504 = vpack.c.b16 %v2416, %v2412
        %v2505 = vpack.c.b16 %v2417, %v2413
        %v2506 = vpack.c.b16 %v2422, %v2418
        %v2507 = vpack.c.b16 %v2423, %v2419
        %v2508 = vpack.c.b16 %v2424, %v2420
        %v2509 = vpack.c.b16 %v2425, %v2421
        %v2510 = vpack.c.b16 %v2430, %v2426
        %v2511 = vpack.c.b16 %v2431, %v2427
        %v2512 = vpack.c.b16 %v2432, %v2428
        %v2513 = vpack.c.b16 %v2433, %v2429
        %v2514 = vpack.c.b16 %v2438, %v2434
        %v2515 = vpack.c.b16 %v2439, %v2435
        %v2516 = vpack.c.b16 %v2440, %v2436
        %v2517 = vpack.c.b16 %v2441, %v2437
        %v2518 = vpack.c.b16 %v2446, %v2442
        %v2519 = vpack.c.b16 %v2447, %v2443
        %v2520 = vpack.c.b16 %v2448, %v2444
        %v2521 = vpack.c.b16 %v2449, %v2445
        %v2522 = vpack.c.b16 %v2454, %v2450
        %v2523 = vpack.c.b16 %v2455, %v2451
        %v2524 = vpack.c.b16 %v2456, %v2452
        %v2525 = vpack.c.b16 %v2457, %v2453
        %v2526 = vpack.c.b16 %v2462, %v2458
        %v2527 = vpack.c.b16 %v2463, %v2459
        %v2528 = vpack.c.b16 %v2464, %v2460
        %v2529 = vpack.c.b16 %v2465, %v2461
        %2594 = vmatprep.subr.bf16.mxu0 %v2467
        %2595 = vmatpush1.bf16.msra.mxu0 %v2466
        %2596 = vmatprep.subr.bf16.mxu0 %v2471
        %2597 = vmatpush1.bf16.msra.mxu0 %v2470
        %2598 = vmatprep.subr.bf16.mxu0 %v2475
        %2599 = vmatpush1.bf16.msra.mxu0 %v2474
        %2600 = vmatprep.subr.bf16.mxu0 %v2479
        %2601 = vmatpush1.bf16.msra.mxu0 %v2478
        %2602 = vmatprep.subr.bf16.mxu0 %v2483
        %2603 = vmatpush1.bf16.msra.mxu0 %v2482
        %2604 = vmatprep.subr.bf16.mxu0 %v2487
        %2605 = vmatpush1.bf16.msra.mxu0 %v2486
        %2606 = vmatprep.subr.bf16.mxu0 %v2491
        %2607 = vmatpush1.bf16.msra.mxu0 %v2490
        %2608 = vmatprep.subr.bf16.mxu0 %v2495
        %2609 = vmatpush1.bf16.msra.mxu0 %v2494
        %2610 = vmatprep.subr.bf16.mxu0 %v2499
        %2611 = vmatpush1.bf16.msra.mxu0 %v2498
        %2612 = vmatprep.subr.bf16.mxu0 %v2503
        %2613 = vmatpush1.bf16.msra.mxu0 %v2502
        %2614 = vmatprep.subr.bf16.mxu0 %v2507
        %2615 = vmatpush1.bf16.msra.mxu0 %v2506
        %2616 = vmatprep.subr.bf16.mxu0 %v2511
        %2617 = vmatpush1.bf16.msra.mxu0 %v2510
        %2618 = vmatprep.subr.bf16.mxu0 %v2515
        %2619 = vmatpush1.bf16.msra.mxu0 %v2514
        %2620 = vmatprep.subr.bf16.mxu0 %v2519
        %2621 = vmatpush1.bf16.msra.mxu0 %v2518
        %2622 = vmatprep.subr.bf16.mxu0 %v2523
        %2623 = vmatpush1.bf16.msra.mxu0 %v2522
        %2624 = vmatprep.subr.bf16.mxu0 %v2527
        %2625 = vmatpush1.bf16.msra.mxu0 %v2526
        %2626 = vmatprep.mubr.bf16.mxu0 %v2187
        %2627 = vmatmul.mubr.bf16.gmra.mrb[0].mxu0 %v2186
        %v2628 = vpop.f32.mrb[0].mxu0
        %v2629 = vadd.f32 %v2257, %v2628
        %v2630 = vpop.f32.mrb[0].mxu0
        %v2631 = vadd.f32 %v2261, %v2630
        %v2632 = vpop.f32.mrb[0].mxu0
        %v2633 = vadd.f32 %v2257, %v2632
        %v2634 = vpop.f32.mrb[0].mxu0
        %v2635 = vadd.f32 %v2261, %v2634
        %2636 = vdwg.mxu0
        %2637 = vmatprep.subr.bf16.mxu0 %v2469
        %2638 = vmatpush1.bf16.msra.mxu0 %v2468
        %2639 = vmatprep.subr.bf16.mxu0 %v2473
        %2640 = vmatpush1.bf16.msra.mxu0 %v2472
        %2641 = vmatprep.subr.bf16.mxu0 %v2477
        %2642 = vmatpush1.bf16.msra.mxu0 %v2476
        %2643 = vmatprep.subr.bf16.mxu0 %v2481
        %2644 = vmatpush1.bf16.msra.mxu0 %v2480
        %2645 = vmatprep.subr.bf16.mxu0 %v2485
        %2646 = vmatpush1.bf16.msra.mxu0 %v2484
        %2647 = vmatprep.subr.bf16.mxu0 %v2489
        %2648 = vmatpush1.bf16.msra.mxu0 %v2488
        %2649 = vmatprep.subr.bf16.mxu0 %v2493
        %2650 = vmatpush1.bf16.msra.mxu0 %v2492
        %2651 = vmatprep.subr.bf16.mxu0 %v2497
        %2652 = vmatpush1.bf16.msra.mxu0 %v2496
        %2653 = vmatprep.subr.bf16.mxu0 %v2501
        %2654 = vmatpush1.bf16.msra.mxu0 %v2500
        %2655 = vmatprep.subr.bf16.mxu0 %v2505
        %2656 = vmatpush1.bf16.msra.mxu0 %v2504
        %2657 = vmatprep.subr.bf16.mxu0 %v2509
        %2658 = vmatpush1.bf16.msra.mxu0 %v2508
        %2659 = vmatprep.subr.bf16.mxu0 %v2513
        %2660 = vmatpush1.bf16.msra.mxu0 %v2512
        %2661 = vmatprep.subr.bf16.mxu0 %v2517
        %2662 = vmatpush1.bf16.msra.mxu0 %v2516
        %2663 = vmatprep.subr.bf16.mxu0 %v2521
        %2664 = vmatpush1.bf16.msra.mxu0 %v2520
        %2665 = vmatprep.subr.bf16.mxu0 %v2525
        %2666 = vmatpush1.bf16.msra.mxu0 %v2524
        %2667 = vmatprep.subr.bf16.mxu0 %v2529
        %2668 = vmatpush1.bf16.msra.mxu0 %v2528
        %2669 = vmatprep.mubr.bf16.mxu0 %v2187
        %2670 = vmatmul.mubr.bf16.gmra.mrb[0].mxu0 %v2186
        %v2671 = vpop.f32.mrb[0].mxu0
        %v2672 = vadd.f32 %v2265, %v2671
        %v2673 = vpop.f32.mrb[0].mxu0
        %v2674 = vadd.f32 %v2269, %v2673
        %v2675 = vpop.f32.mrb[0].mxu0
        %v2676 = vadd.f32 %v2265, %v2675
        %v2677 = vpop.f32.mrb[0].mxu0
        %v2678 = vadd.f32 %v2269, %v2677
        %2679 = vdwg.mxu0
        %v2680 = vmax.f32 %v2629, 0.0
        %v2681 = vmax.f32 %v2631, 0.0
        %v2682 = vmax.f32 %v2672, 0.0
        %v2683 = vmax.f32 %v2674, 0.0
        %v2684 = vmax.f32 %v2633, 0.0
        %v2685 = vmax.f32 %v2635, 0.0
        %v2686 = vmax.f32 %v2676, 0.0
        %v2687 = vmax.f32 %v2678, 0.0
        %v2688 = vpack.c.bf16 %v2684, %v2680
        %v2689 = vpack.c.bf16 %v2685, %v2681
        %v2690 = vpack.c.bf16 %v2686, %v2682
        %v2691 = vpack.c.bf16 %v2687, %v2683
        %v2692 = vld [vmem:[#allocation7] sm:$0xff]
        %v2693 = vld [vmem:[#allocation7 + $0x8] sm:$0xff]
        %v2694 = vld [vmem:[#allocation7 + $0x10] sm:$0xff]
        %v2695 = vld [vmem:[#allocation7 + $0x18] sm:$0xff]
        %v2696 = vld [vmem:[#allocation7 + $0x20] sm:$0xff]
        %v2697 = vld [vmem:[#allocation7 + $0x28] sm:$0xff]
        %v2698 = vld [vmem:[#allocation7 + $0x30] sm:$0xff]
        %v2699 = vld [vmem:[#allocation7 + $0x38] sm:$0xff]
        %v2700 = vld [vmem:[#allocation7 + $0x40] sm:$0xff]
        %v2701 = vld [vmem:[#allocation7 + $0x48] sm:$0xff]
        %v2702 = vld [vmem:[#allocation7 + $0x50] sm:$0xff]
        %v2703 = vld [vmem:[#allocation7 + $0x58] sm:$0xff]
        %v2704 = vld [vmem:[#allocation7 + $0x60] sm:$0xff]
        %v2705 = vld [vmem:[#allocation7 + $0x68] sm:$0xff]
        %v2706 = vld [vmem:[#allocation7 + $0x70] sm:$0xff]
        %v2707 = vld [vmem:[#allocation7 + $0x78] sm:$0xff]
        %v2708 = vld [vmem:[#allocation7 + $0x80] sm:$0xff]
        %v2709 = vld [vmem:[#allocation7 + $0x88] sm:$0xff]
        %v2710 = vld [vmem:[#allocation7 + $0x90] sm:$0xff]
        %v2711 = vld [vmem:[#allocation7 + $0x98] sm:$0xff]
        %v2712 = vld [vmem:[#allocation7 + $0xa0] sm:$0xff]
        %v2713 = vld [vmem:[#allocation7 + $0xa8] sm:$0xff]
        %v2714 = vld [vmem:[#allocation7 + $0xb0] sm:$0xff]
        %v2715 = vld [vmem:[#allocation7 + $0xb8] sm:$0xff]
        %v2716 = vld [vmem:[#allocation7 + $0xc0] sm:$0xff]
        %v2717 = vld [vmem:[#allocation7 + $0xc8] sm:$0xff]
        %v2718 = vld [vmem:[#allocation7 + $0xd0] sm:$0xff]
        %v2719 = vld [vmem:[#allocation7 + $0xd8] sm:$0xff]
        %v2720 = vld [vmem:[#allocation7 + $0xe0] sm:$0xff]
        %v2721 = vld [vmem:[#allocation7 + $0xe8] sm:$0xff]
        %v2722 = vld [vmem:[#allocation7 + $0xf0] sm:$0xff]
        %v2723 = vld [vmem:[#allocation7 + $0xf8] sm:$0xff]
        %v2724 = vld [vmem:[#allocation7 + $0x100] sm:$0xff]
        %v2725 = vld [vmem:[#allocation7 + $0x108] sm:$0xff]
        %v2726 = vld [vmem:[#allocation7 + $0x110] sm:$0xff]
        %v2727 = vld [vmem:[#allocation7 + $0x118] sm:$0xff]
        %v2728 = vld [vmem:[#allocation7 + $0x120] sm:$0xff]
        %v2729 = vld [vmem:[#allocation7 + $0x128] sm:$0xff]
        %v2730 = vld [vmem:[#allocation7 + $0x130] sm:$0xff]
        %v2731 = vld [vmem:[#allocation7 + $0x138] sm:$0xff]
        %v2732 = vld [vmem:[#allocation7 + $0x140] sm:$0xff]
        %v2733 = vld [vmem:[#allocation7 + $0x148] sm:$0xff]
        %v2734 = vld [vmem:[#allocation7 + $0x150] sm:$0xff]
        %v2735 = vld [vmem:[#allocation7 + $0x158] sm:$0xff]
        %v2736 = vld [vmem:[#allocation7 + $0x160] sm:$0xff]
        %v2737 = vld [vmem:[#allocation7 + $0x168] sm:$0xff]
        %v2738 = vld [vmem:[#allocation7 + $0x170] sm:$0xff]
        %v2739 = vld [vmem:[#allocation7 + $0x178] sm:$0xff]
        %v2740 = vld [vmem:[#allocation7 + $0x180] sm:$0xff]
        %v2741 = vld [vmem:[#allocation7 + $0x188] sm:$0xff]
        %v2742 = vld [vmem:[#allocation7 + $0x190] sm:$0xff]
        %v2743 = vld [vmem:[#allocation7 + $0x198] sm:$0xff]
        %v2744 = vld [vmem:[#allocation7 + $0x1a0] sm:$0xff]
        %v2745 = vld [vmem:[#allocation7 + $0x1a8] sm:$0xff]
        %v2746 = vld [vmem:[#allocation7 + $0x1b0] sm:$0xff]
        %v2747 = vld [vmem:[#allocation7 + $0x1b8] sm:$0xff]
        %v2748 = vld [vmem:[#allocation7 + $0x1c0] sm:$0xff]
        %v2749 = vld [vmem:[#allocation7 + $0x1c8] sm:$0xff]
        %v2750 = vld [vmem:[#allocation7 + $0x1d0] sm:$0xff]
        %v2751 = vld [vmem:[#allocation7 + $0x1d8] sm:$0xff]
        %v2752 = vld [vmem:[#allocation7 + $0x1e0] sm:$0xff]
        %v2753 = vld [vmem:[#allocation7 + $0x1e8] sm:$0xff]
        %v2754 = vld [vmem:[#allocation7 + $0x1f0] sm:$0xff]
        %v2755 = vld [vmem:[#allocation7 + $0x1f8] sm:$0xff]
        %v2756 = vld [vmem:[%s10] sm:$0x3]
        %v2758 = vlaneseq
        %v2759 = vshrl.u32 %v2758, 7
        %v2760 = vsub.s32 0, %v2759
        %v2761 = vrot.slane %v2756, %v2760
        %v2762 = vlaneseq
        %v2763 = vshrl.u32 %v2762, 7
        %v2764 = vsub.s32 1, %v2763
        %v2765 = vrot.slane %v2756, %v2764
        %v2832 = vunpack.c.l.b16 %v2692
        %v2833 = vunpack.c.h.b16 %v2692
        %v2834 = vunpack.c.l.b16 %v2693
        %v2835 = vunpack.c.h.b16 %v2693
        %v2836 = vunpack.c.l.b16 %v2694
        %v2837 = vunpack.c.h.b16 %v2694
        %v2838 = vunpack.c.l.b16 %v2695
        %v2839 = vunpack.c.h.b16 %v2695
        %v2840 = vunpack.c.l.b16 %v2696
        %v2841 = vunpack.c.h.b16 %v2696
        %v2842 = vunpack.c.l.b16 %v2697
        %v2843 = vunpack.c.h.b16 %v2697
        %v2844 = vunpack.c.l.b16 %v2698
        %v2845 = vunpack.c.h.b16 %v2698
        %v2846 = vunpack.c.l.b16 %v2699
        %v2847 = vunpack.c.h.b16 %v2699
        %v2848 = vunpack.c.l.b16 %v2700
        %v2849 = vunpack.c.h.b16 %v2700
        %v2850 = vunpack.c.l.b16 %v2701
        %v2851 = vunpack.c.h.b16 %v2701
        %v2852 = vunpack.c.l.b16 %v2702
        %v2853 = vunpack.c.h.b16 %v2702
        %v2854 = vunpack.c.l.b16 %v2703
        %v2855 = vunpack.c.h.b16 %v2703
        %v2856 = vunpack.c.l.b16 %v2704
        %v2857 = vunpack.c.h.b16 %v2704
        %v2858 = vunpack.c.l.b16 %v2705
        %v2859 = vunpack.c.h.b16 %v2705
        %v2860 = vunpack.c.l.b16 %v2706
        %v2861 = vunpack.c.h.b16 %v2706
        %v2862 = vunpack.c.l.b16 %v2707
        %v2863 = vunpack.c.h.b16 %v2707
        %v2864 = vunpack.c.l.b16 %v2708
        %v2865 = vunpack.c.h.b16 %v2708
        %v2866 = vunpack.c.l.b16 %v2709
        %v2867 = vunpack.c.h.b16 %v2709
        %v2868 = vunpack.c.l.b16 %v2710
        %v2869 = vunpack.c.h.b16 %v2710
        %v2870 = vunpack.c.l.b16 %v2711
        %v2871 = vunpack.c.h.b16 %v2711
        %v2872 = vunpack.c.l.b16 %v2712
        %v2873 = vunpack.c.h.b16 %v2712
        %v2874 = vunpack.c.l.b16 %v2713
        %v2875 = vunpack.c.h.b16 %v2713
        %v2876 = vunpack.c.l.b16 %v2714
        %v2877 = vunpack.c.h.b16 %v2714
        %v2878 = vunpack.c.l.b16 %v2715
        %v2879 = vunpack.c.h.b16 %v2715
        %v2880 = vunpack.c.l.b16 %v2716
        %v2881 = vunpack.c.h.b16 %v2716
        %v2882 = vunpack.c.l.b16 %v2717
        %v2883 = vunpack.c.h.b16 %v2717
        %v2884 = vunpack.c.l.b16 %v2718
        %v2885 = vunpack.c.h.b16 %v2718
        %v2886 = vunpack.c.l.b16 %v2719
        %v2887 = vunpack.c.h.b16 %v2719
        %v2888 = vunpack.c.l.b16 %v2720
        %v2889 = vunpack.c.h.b16 %v2720
        %v2890 = vunpack.c.l.b16 %v2721
        %v2891 = vunpack.c.h.b16 %v2721
        %v2892 = vunpack.c.l.b16 %v2722
        %v2893 = vunpack.c.h.b16 %v2722
        %v2894 = vunpack.c.l.b16 %v2723
        %v2895 = vunpack.c.h.b16 %v2723
        %v2896 = vunpack.c.l.b16 %v2724
        %v2897 = vunpack.c.h.b16 %v2724
        %v2898 = vunpack.c.l.b16 %v2725
        %v2899 = vunpack.c.h.b16 %v2725
        %v2900 = vunpack.c.l.b16 %v2726
        %v2901 = vunpack.c.h.b16 %v2726
        %v2902 = vunpack.c.l.b16 %v2727
        %v2903 = vunpack.c.h.b16 %v2727
        %v2904 = vunpack.c.l.b16 %v2728
        %v2905 = vunpack.c.h.b16 %v2728
        %v2906 = vunpack.c.l.b16 %v2729
        %v2907 = vunpack.c.h.b16 %v2729
        %v2908 = vunpack.c.l.b16 %v2730
        %v2909 = vunpack.c.h.b16 %v2730
        %v2910 = vunpack.c.l.b16 %v2731
        %v2911 = vunpack.c.h.b16 %v2731
        %v2912 = vunpack.c.l.b16 %v2732
        %v2913 = vunpack.c.h.b16 %v2732
        %v2914 = vunpack.c.l.b16 %v2733
        %v2915 = vunpack.c.h.b16 %v2733
        %v2916 = vunpack.c.l.b16 %v2734
        %v2917 = vunpack.c.h.b16 %v2734
        %v2918 = vunpack.c.l.b16 %v2735
        %v2919 = vunpack.c.h.b16 %v2735
        %v2920 = vunpack.c.l.b16 %v2736
        %v2921 = vunpack.c.h.b16 %v2736
        %v2922 = vunpack.c.l.b16 %v2737
        %v2923 = vunpack.c.h.b16 %v2737
        %v2924 = vunpack.c.l.b16 %v2738
        %v2925 = vunpack.c.h.b16 %v2738
        %v2926 = vunpack.c.l.b16 %v2739
        %v2927 = vunpack.c.h.b16 %v2739
        %v2928 = vunpack.c.l.b16 %v2740
        %v2929 = vunpack.c.h.b16 %v2740
        %v2930 = vunpack.c.l.b16 %v2741
        %v2931 = vunpack.c.h.b16 %v2741
        %v2932 = vunpack.c.l.b16 %v2742
        %v2933 = vunpack.c.h.b16 %v2742
        %v2934 = vunpack.c.l.b16 %v2743
        %v2935 = vunpack.c.h.b16 %v2743
        %v2936 = vunpack.c.l.b16 %v2744
        %v2937 = vunpack.c.h.b16 %v2744
        %v2938 = vunpack.c.l.b16 %v2745
        %v2939 = vunpack.c.h.b16 %v2745
        %v2940 = vunpack.c.l.b16 %v2746
        %v2941 = vunpack.c.h.b16 %v2746
        %v2942 = vunpack.c.l.b16 %v2747
        %v2943 = vunpack.c.h.b16 %v2747
        %v2944 = vunpack.c.l.b16 %v2748
        %v2945 = vunpack.c.h.b16 %v2748
        %v2946 = vunpack.c.l.b16 %v2749
        %v2947 = vunpack.c.h.b16 %v2749
        %v2948 = vunpack.c.l.b16 %v2750
        %v2949 = vunpack.c.h.b16 %v2750
        %v2950 = vunpack.c.l.b16 %v2751
        %v2951 = vunpack.c.h.b16 %v2751
        %v2952 = vunpack.c.l.b16 %v2752
        %v2953 = vunpack.c.h.b16 %v2752
        %v2954 = vunpack.c.l.b16 %v2753
        %v2955 = vunpack.c.h.b16 %v2753
        %v2956 = vunpack.c.l.b16 %v2754
        %v2957 = vunpack.c.h.b16 %v2754
        %v2958 = vunpack.c.l.b16 %v2755
        %v2959 = vunpack.c.h.b16 %v2755
        %v2960 = vpack.c.b16 %v2834, %v2832
        %v2961 = vpack.c.b16 %v2835, %v2833
        %v2962 = vpack.c.b16 %v2838, %v2836
        %v2963 = vpack.c.b16 %v2839, %v2837
        %v2964 = vpack.c.b16 %v2842, %v2840
        %v2965 = vpack.c.b16 %v2843, %v2841
        %v2966 = vpack.c.b16 %v2846, %v2844
        %v2967 = vpack.c.b16 %v2847, %v2845
        %v2968 = vpack.c.b16 %v2850, %v2848
        %v2969 = vpack.c.b16 %v2851, %v2849
        %v2970 = vpack.c.b16 %v2854, %v2852
        %v2971 = vpack.c.b16 %v2855, %v2853
        %v2972 = vpack.c.b16 %v2858, %v2856
        %v2973 = vpack.c.b16 %v2859, %v2857
        %v2974 = vpack.c.b16 %v2862, %v2860
        %v2975 = vpack.c.b16 %v2863, %v2861
        %v2976 = vpack.c.b16 %v2866, %v2864
        %v2977 = vpack.c.b16 %v2867, %v2865
        %v2978 = vpack.c.b16 %v2870, %v2868
        %v2979 = vpack.c.b16 %v2871, %v2869
        %v2980 = vpack.c.b16 %v2874, %v2872
        %v2981 = vpack.c.b16 %v2875, %v2873
        %v2982 = vpack.c.b16 %v2878, %v2876
        %v2983 = vpack.c.b16 %v2879, %v2877
        %v2984 = vpack.c.b16 %v2882, %v2880
        %v2985 = vpack.c.b16 %v2883, %v2881
        %v2986 = vpack.c.b16 %v2886, %v2884
        %v2987 = vpack.c.b16 %v2887, %v2885
        %v2988 = vpack.c.b16 %v2890, %v2888
        %v2989 = vpack.c.b16 %v2891, %v2889
        %v2990 = vpack.c.b16 %v2894, %v2892
        %v2991 = vpack.c.b16 %v2895, %v2893
        %v2992 = vpack.c.b16 %v2898, %v2896
        %v2993 = vpack.c.b16 %v2899, %v2897
        %v2994 = vpack.c.b16 %v2902, %v2900
        %v2995 = vpack.c.b16 %v2903, %v2901
        %v2996 = vpack.c.b16 %v2906, %v2904
        %v2997 = vpack.c.b16 %v2907, %v2905
        %v2998 = vpack.c.b16 %v2910, %v2908
        %v2999 = vpack.c.b16 %v2911, %v2909
        %v3000 = vpack.c.b16 %v2914, %v2912
        %v3001 = vpack.c.b16 %v2915, %v2913
        %v3002 = vpack.c.b16 %v2918, %v2916
        %v3003 = vpack.c.b16 %v2919, %v2917
        %v3004 = vpack.c.b16 %v2922, %v2920
        %v3005 = vpack.c.b16 %v2923, %v2921
        %v3006 = vpack.c.b16 %v2926, %v2924
        %v3007 = vpack.c.b16 %v2927, %v2925
        %v3008 = vpack.c.b16 %v2930, %v2928
        %v3009 = vpack.c.b16 %v2931, %v2929
        %v3010 = vpack.c.b16 %v2934, %v2932
        %v3011 = vpack.c.b16 %v2935, %v2933
        %v3012 = vpack.c.b16 %v2938, %v2936
        %v3013 = vpack.c.b16 %v2939, %v2937
        %v3014 = vpack.c.b16 %v2942, %v2940
        %v3015 = vpack.c.b16 %v2943, %v2941
        %v3016 = vpack.c.b16 %v2946, %v2944
        %v3017 = vpack.c.b16 %v2947, %v2945
        %v3018 = vpack.c.b16 %v2950, %v2948
        %v3019 = vpack.c.b16 %v2951, %v2949
        %v3020 = vpack.c.b16 %v2954, %v2952
        %v3021 = vpack.c.b16 %v2955, %v2953
        %v3022 = vpack.c.b16 %v2958, %v2956
        %v3023 = vpack.c.b16 %v2959, %v2957
        %3088 = vmatprep.subr.bf16.mxu0 %v2961
        %3089 = vmatpush1.bf16.msra.mxu0 %v2960
        %3090 = vmatprep.subr.bf16.mxu0 %v2963
        %3091 = vmatpush1.bf16.msra.mxu0 %v2962
        %3092 = vmatprep.subr.bf16.mxu0 %v2965
        %3093 = vmatpush1.bf16.msra.mxu0 %v2964
        %3094 = vmatprep.subr.bf16.mxu0 %v2967
        %3095 = vmatpush1.bf16.msra.mxu0 %v2966
        %3096 = vmatprep.subr.bf16.mxu0 %v2969
        %3097 = vmatpush1.bf16.msra.mxu0 %v2968
        %3098 = vmatprep.subr.bf16.mxu0 %v2971
        %3099 = vmatpush1.bf16.msra.mxu0 %v2970
        %3100 = vmatprep.subr.bf16.mxu0 %v2973
        %3101 = vmatpush1.bf16.msra.mxu0 %v2972
        %3102 = vmatprep.subr.bf16.mxu0 %v2975
        %3103 = vmatpush1.bf16.msra.mxu0 %v2974
        %3104 = vmatprep.subr.bf16.mxu0 %v2977
        %3105 = vmatpush1.bf16.msra.mxu0 %v2976
        %3106 = vmatprep.subr.bf16.mxu0 %v2979
        %3107 = vmatpush1.bf16.msra.mxu0 %v2978
        %3108 = vmatprep.subr.bf16.mxu0 %v2981
        %3109 = vmatpush1.bf16.msra.mxu0 %v2980
        %3110 = vmatprep.subr.bf16.mxu0 %v2983
        %3111 = vmatpush1.bf16.msra.mxu0 %v2982
        %3112 = vmatprep.subr.bf16.mxu0 %v2985
        %3113 = vmatpush1.bf16.msra.mxu0 %v2984
        %3114 = vmatprep.subr.bf16.mxu0 %v2987
        %3115 = vmatpush1.bf16.msra.mxu0 %v2986
        %3116 = vmatprep.subr.bf16.mxu0 %v2989
        %3117 = vmatpush1.bf16.msra.mxu0 %v2988
        %3118 = vmatprep.subr.bf16.mxu0 %v2991
        %3119 = vmatpush1.bf16.msra.mxu0 %v2990
        %3120 = vmatprep.mubr.bf16.mxu0 %v2689
        %3121 = vmatmul.mubr.bf16.gmra.mrb[0].mxu0 %v2688
        %v3122 = vpop.f32.mrb[0].mxu0
        %v3123 = vadd.f32 %v2761, %v3122
        %v3124 = vpop.f32.mrb[0].mxu0
        %v3125 = vadd.f32 %v2765, %v3124
        %v3126 = vpop.f32.mrb[0].mxu0
        %v3127 = vadd.f32 %v2761, %v3126
        %v3128 = vpop.f32.mrb[0].mxu0
        %v3129 = vadd.f32 %v2765, %v3128
        %3130 = vdwg.mxu0
        %3131 = vmatprep.subr.bf16.mxu0 %v2993
        %3132 = vmatpush1.bf16.msra.mxu0 %v2992
        %3133 = vmatprep.subr.bf16.mxu0 %v2995
        %3134 = vmatpush1.bf16.msra.mxu0 %v2994
        %3135 = vmatprep.subr.bf16.mxu0 %v2997
        %3136 = vmatpush1.bf16.msra.mxu0 %v2996
        %3137 = vmatprep.subr.bf16.mxu0 %v2999
        %3138 = vmatpush1.bf16.msra.mxu0 %v2998
        %3139 = vmatprep.subr.bf16.mxu0 %v3001
        %3140 = vmatpush1.bf16.msra.mxu0 %v3000
        %3141 = vmatprep.subr.bf16.mxu0 %v3003
        %3142 = vmatpush1.bf16.msra.mxu0 %v3002
        %3143 = vmatprep.subr.bf16.mxu0 %v3005
        %3144 = vmatpush1.bf16.msra.mxu0 %v3004
        %3145 = vmatprep.subr.bf16.mxu0 %v3007
        %3146 = vmatpush1.bf16.msra.mxu0 %v3006
        %3147 = vmatprep.subr.bf16.mxu0 %v3009
        %3148 = vmatpush1.bf16.msra.mxu0 %v3008
        %3149 = vmatprep.subr.bf16.mxu0 %v3011
        %3150 = vmatpush1.bf16.msra.mxu0 %v3010
        %3151 = vmatprep.subr.bf16.mxu0 %v3013
        %3152 = vmatpush1.bf16.msra.mxu0 %v3012
        %3153 = vmatprep.subr.bf16.mxu0 %v3015
        %3154 = vmatpush1.bf16.msra.mxu0 %v3014
        %3155 = vmatprep.subr.bf16.mxu0 %v3017
        %3156 = vmatpush1.bf16.msra.mxu0 %v3016
        %3157 = vmatprep.subr.bf16.mxu0 %v3019
        %3158 = vmatpush1.bf16.msra.mxu0 %v3018
        %3159 = vmatprep.subr.bf16.mxu0 %v3021
        %3160 = vmatpush1.bf16.msra.mxu0 %v3020
        %3161 = vmatprep.subr.bf16.mxu0 %v3023
        %3162 = vmatpush1.bf16.msra.mxu0 %v3022
        %3163 = vmatprep.mubr.bf16.mxu0 %v2691
        %3164 = vmatmul.mubr.bf16.gmra.mrb[0].mxu0 %v2690
        %v3165 = vpop.f32.mrb[0].mxu0
        %v3166 = vadd.f32 %v3123, %v3165
        %v3167 = vpop.f32.mrb[0].mxu0
        %v3168 = vadd.f32 %v3125, %v3167
        %v3169 = vpop.f32.mrb[0].mxu0
        %v3170 = vadd.f32 %v3127, %v3169
        %v3171 = vpop.f32.mrb[0].mxu0
        %v3172 = vadd.f32 %v3129, %v3171
        %3173 = vdwg.mxu0
        %v3174 = vadd.f32 %v2182, %v3166
        %v3175 = vadd.f32 %v2183, %v3168
        %v3176 = vadd.f32 %v2184, %v3170
        %v3177 = vadd.f32 %v2185, %v3172
        %v3178 = vld [vmem:[%s11] sm:$0x3]
        %v3179 = vld [vmem:[%s12] sm:$0x3]
        %v3180 = vadd.f32 %v3174, %v3175
        %3181 = vadd.xlane.f32.xlu0 %v3180
        %v3182 = vpop.xlane.xlu0 %3181
        %v3183 = vadd.f32 %v3176, %v3177
        %3184 = vadd.xlane.f32.xlu0 %v3183
        %v3185 = vpop.xlane.xlu0 %3184
        %v3186 = vmul.f32 %v3182, %v2129
        %v3187 = vmul.f32 %v3185, %v2129
        %v3188 = vsub.f32 %v3174, %v3186
        %v3189 = vsub.f32 %v3175, %v3186
        %v3190 = vsub.f32 %v3176, %v3187
        %v3191 = vsub.f32 %v3177, %v3187
        %v3192 = vmul.f32 %v3188, %v3188
        %v3193 = vmul.f32 %v3189, %v3189
        %v3194 = vmul.f32 %v3190, %v3190
        %v3195 = vmul.f32 %v3191, %v3191
        %v3196 = vadd.f32 %v3192, %v3193
        %3197 = vadd.xlane.f32.xlu0 %v3196
        %v3198 = vpop.xlane.xlu0 %3197
        %v3199 = vadd.f32 %v3194, %v3195
        %3200 = vadd.xlane.f32.xlu0 %v3199
        %v3201 = vpop.xlane.xlu0 %3200
        %v3202 = vmul.f32 %v3198, %v2129
        %v3203 = vmul.f32 %v3201, %v2129
        %v3204 = vadd.f32 %v3202, 1e-05
        %v3205 = vadd.f32 %v3203, 1e-05
        %v3206 = vrsqrt.pop %v3204
        %v3207 = vrsqrt.pop %v3205
        %v3208 = vmul.f32 %v3188, %v3206
        %v3209 = vmul.f32 %v3189, %v3206
        %v3210 = vmul.f32 %v3190, %v3207
        %v3211 = vmul.f32 %v3191, %v3207
        %v3213 = vlaneseq
        %v3214 = vshrl.u32 %v3213, 7
        %v3215 = vsub.s32 0, %v3214
        %v3216 = vrot.slane %v3178, %v3215
        %v3217 = vlaneseq
        %v3218 = vshrl.u32 %v3217, 7
        %v3219 = vsub.s32 1, %v3218
        %v3220 = vrot.slane %v3178, %v3219
        %v3223 = vmul.f32 %v3208, %v3216
        %v3224 = vmul.f32 %v3209, %v3220
        %v3225 = vmul.f32 %v3210, %v3216
        %v3226 = vmul.f32 %v3211, %v3220
        %v3228 = vlaneseq
        %v3229 = vshrl.u32 %v3228, 7
        %v3230 = vsub.s32 0, %v3229
        %v3231 = vrot.slane %v3179, %v3230
        %v3232 = vlaneseq
        %v3233 = vshrl.u32 %v3232, 7
        %v3234 = vsub.s32 1, %v3233
        %v3235 = vrot.slane %v3179, %v3234
        %v3238 = vadd.f32 %v3223, %v3231
        %v3239 = vadd.f32 %v3224, %v3235
        %v3240 = vadd.f32 %v3225, %v3231
        %v3241 = vadd.f32 %v3226, %v3235
        %v3242 = vpack.c.bf16 %v3240, %v3238
        %v3243 = vpack.c.bf16 %v3241, %v3239
        %v3246 = vunpack.c.l.b16 %v3242
        %v3247 = vunpack.c.l.b16 %v3243
        %v3248 = vunpack.c.h.b16 %v3242
        %v3249 = vunpack.c.h.b16 %v3243
        %v3250 = vpack.c.b16 %v3247, %v3246
        %v3251 = vpack.c.b16 %v3249, %v3248
        %3254 = vst [vmem:[%s571] sm:$0xff] %v3250
        %3255 = vst [vmem:[%s571 + $0x8] sm:$0xff] %v3251
        %s3256 = sand.u32 %s356, 1
        %s3257 = sand.u32 %s356, 1
        %s3258 = smul.addr %s3257, 16
        %s3259 = scalar_lea.vmem [#allocation8], %s3258
        // Predicated region
        $region131: #{minimal_llm_forward.3} parent=113 // pred_check
          %p3260 = pneg %p366
        $region132: #{minimal_llm_forward.3} parent=113 // pred_check_branch
          %3262 = sbr.rel (%p3260) target = $region134
        $region133: #{minimal_llm_forward.3} parent=113 // pred_region
          %s3263 = smul.addr %s28, 2
          %s3264 = smul.addr %s3263, 4
          %s3265 = scalar_lea.vmem %s15, %s3264
          // Predicated region
          $region135: #{minimal_llm_forward.3} parent=133 // pred_check
            _
          $region136: #{minimal_llm_forward.3} parent=133 // pred_check_branch
            %3267 = sbr.rel (0) target = $region138
          $region137: #{minimal_llm_forward.3} parent=133 // pred_region
            // Predicated region
            $region139: #{minimal_llm_forward.3} parent=137 // pred_check
              _
            $region140: #{minimal_llm_forward.3} parent=137 // pred_check_branch
              %3269 = sbr.rel (0) target = $region142
            $region141: #{minimal_llm_forward.3} parent=137 // pred_region
              // Predicated region
              $region154: #{minimal_llm_forward.3} parent=141 // pred_check
                _
              $region155: #{minimal_llm_forward.3} parent=141 // pred_check_branch
                %3286 = sbr.rel (0) target = $region157
              $region156: #{minimal_llm_forward.3} parent=141 // pred_region
                loop: start=0, step=1, limit=1
                $region158: #{minimal_llm_forward.3} parent=156 // loop_pre_header
                  _
                $region159: #{minimal_llm_forward.3} parent=156 // loop_header
                  %s3288 = sphi 0, %s3292
                  %p3289 = scmp.ge.s32.totalorder %s3288, 1
                  %s3293 = sphi %s3259, %s3259
                  %s3294 = sphi %s3265, %s3265
                $region160: #{minimal_llm_forward.3} parent=156 // loop_header_branch
                  %3291 = sbr.rel (%p3289) target = $region164
                $region161: #{minimal_llm_forward.3} parent=156 // loop_body
                  %v3295 = vld [vmem:[%s3293] sm:$0xff]
                  %3296 = vst [vmem:[%s3294] sm:$0xff] %v3295
                  %v3297 = vld [vmem:[%s3293 + $0x8] sm:$0xff]
                  %3298 = vst [vmem:[%s3294 + $0x10] sm:$0xff] %v3297
                $region162: #{minimal_llm_forward.3} parent=156 // loop_footer
                  %s3292 = sadd.s32 1, %s3288
                $region163: #{minimal_llm_forward.3} parent=156 // loop_footer_branch
                  %3287 = sbr.rel target = $region159
                $region164: #{minimal_llm_forward.3} parent=156 // loop_exit
                  _
              $region157: #{minimal_llm_forward.3} parent=141 // pred_fallthru
                _
              // Predicated region
              $region165: #{minimal_llm_forward.3} parent=141 // pred_check
                _
              $region166: #{minimal_llm_forward.3} parent=141 // pred_check_branch
                %3300 = sbr.rel target = $region168
              $region167: #{minimal_llm_forward.3} parent=141 // pred_region
                _
              $region168: #{minimal_llm_forward.3} parent=141 // pred_fallthru
                _
            $region142: #{minimal_llm_forward.3} parent=137 // pred_fallthru
              _
            // Predicated region
            $region143: #{minimal_llm_forward.3} parent=137 // pred_check
              _
            $region144: #{minimal_llm_forward.3} parent=137 // pred_check_branch
              %3271 = sbr.rel target = $region146
            $region145: #{minimal_llm_forward.3} parent=137 // pred_region
              loop: start=0, step=1, limit=1
              $region147: #{minimal_llm_forward.3} parent=145 // loop_pre_header
                _
              $region148: #{minimal_llm_forward.3} parent=145 // loop_header
                %s3274 = sphi 0, %s3278
                %p3275 = scmp.ge.s32.totalorder %s3274, 1
                %s3279 = sphi %s3259, %s3259
                %s3280 = sphi %s3265, %s3265
              $region149: #{minimal_llm_forward.3} parent=145 // loop_header_branch
                %3277 = sbr.rel (%p3275) target = $region153
              $region150: #{minimal_llm_forward.3} parent=145 // loop_body
                %v3281 = vld [vmem:[%s3279] sm:$0xff]
                %3282 = vst [vmem:[%s3280] sm:$0xff] %v3281
                %v3283 = vld [vmem:[%s3279 + $0x8] sm:$0xff]
                %3284 = vst [vmem:[%s3280 + $0x10] sm:$0xff] %v3283
              $region151: #{minimal_llm_forward.3} parent=145 // loop_footer
                %s3278 = sadd.s32 1, %s3274
              $region152: #{minimal_llm_forward.3} parent=145 // loop_footer_branch
                %3273 = sbr.rel target = $region148
              $region153: #{minimal_llm_forward.3} parent=145 // loop_exit
                _
            $region146: #{minimal_llm_forward.3} parent=137 // pred_fallthru
              _
          $region138: #{minimal_llm_forward.3} parent=133 // pred_fallthru
            _
          %3301 = vnop
        $region134: #{minimal_llm_forward.3} parent=113 // pred_fallthru
          _
      $region114: #{minimal_llm_forward.3} parent=5 // pred_fallthru
        _
      %p3302 = scmp.le.s32.totalorder 2, %s23
      // Predicated region
      $region169: #{minimal_llm_forward.3} parent=5 // pred_check
        %p3303 = pneg %p3302
      $region170: #{minimal_llm_forward.3} parent=5 // pred_check_branch
        %3305 = sbr.rel (%p3303) target = $region172
      $region171: #{minimal_llm_forward.3} parent=5 // pred_region
        %s3306 = ssub.s32 %s23, 2
        // Predicated region
        $region173: #{minimal_llm_forward.3} parent=171 // pred_check
          %p3307 = pneg %p372
        $region174: #{minimal_llm_forward.3} parent=171 // pred_check_branch
          %3309 = sbr.rel (%p3307) target = $region176
        $region175: #{minimal_llm_forward.3} parent=171 // pred_region
          %s3310 = sand.u32 %s357, 1
          %s3311 = sand.u32 %s357, 1
          %s3312 = smul.addr %s3311, 16
          %s3313 = scalar_lea.vmem [#allocation8], %s3312
        $region176: #{minimal_llm_forward.3} parent=171 // pred_fallthru
          _
      $region172: #{minimal_llm_forward.3} parent=5 // pred_fallthru
        _
    $region6: #{minimal_llm_forward.3} parent=1 // loop_footer
      %s27 = sadd.s32 1, %s23
    $region7: #{minimal_llm_forward.3} parent=1 // loop_footer_branch
      %22 = sbr.rel target = $region3
    $region8: #{minimal_llm_forward.3} parent=1 // loop_exit
      _
    %3314 = vsyncpa [#allocation4], 1
    %s3315 = scalar_lea.sflag [#allocation4], 1
    %3316 = vsyncpa %s3315, 1
    %3317 = vsyncpa [#allocation6], 1

// kernel: minimal_llm_forward.4
$region0: #{minimal_llm_forward.4}
  #allocation0 [shape = 'u32[]', space=smem, size = 0x4, offset = 0x4, fixed_abs, tag = 'smem constant byte address 0x4 - core index']
  #allocation1 [shape = 'u32[144,128]{1,0:T(1,128)}', space=vmem, size = 0x12000, scoped, tag = 'internal scratch']
  %s0 = inlined_call_operand.vmem [shape: bf16[2,16,256], index: 0, kind: input, shape index: {}]
  %s1 = inlined_call_operand.vmem [shape: bf16[256,768], index: 1, kind: input, shape index: {}]
  %s2 = inlined_call_operand.vmem [shape: f32[1,768], index: 2, kind: input, shape index: {}]
  %s3 = inlined_call_operand.vmem [shape: bf16[256,256], index: 3, kind: input, shape index: {}]
  %s4 = inlined_call_operand.vmem [shape: f32[1,256], index: 4, kind: input, shape index: {}]
  %s5 = inlined_call_operand.vmem [shape: f32[1,256], index: 5, kind: input, shape index: {}]
  %s6 = inlined_call_operand.vmem [shape: f32[1,256], index: 6, kind: input, shape index: {}]
  %s7 = inlined_call_operand.vmem [shape: bf16[256,512], index: 7, kind: input, shape index: {}]
  %s8 = inlined_call_operand.vmem [shape: f32[1,512], index: 8, kind: input, shape index: {}]
  %s9 = inlined_call_operand.vmem [shape: bf16[512,256], index: 9, kind: input, shape index: {}]
  %s10 = inlined_call_operand.vmem [shape: f32[1,256], index: 10, kind: input, shape index: {}]
  %s11 = inlined_call_operand.vmem [shape: f32[1,256], index: 11, kind: input, shape index: {}]
  %s12 = inlined_call_operand.vmem [shape: f32[1,256], index: 12, kind: input, shape index: {}]
  %s13 = inlined_call_operand.vmem [shape: bf16[256,4], index: 13, kind: input, shape index: {}]
  %s14 = inlined_call_operand.vmem [shape: bf16[4,256], index: 14, kind: input, shape index: {}]
  %s15 = inlined_call_operand.vmem [shape: bf16[2,16,256], index: 15, kind: output, shape index: {}]
  %s16 = sld [smem:[#allocation0]]
  $region165: #{minimal_llm_forward.4} parent=0
    _
  %s18 = ssub.s32 1, %s16
  %s19 = scalar_select 0, %s18, %s16
  $region1: #{minimal_llm_forward.4} parent=0
    #allocation2 [shape = 'u8[16384]{0}', space=vmem, size = 0x4000, scoped, tag = 'input window, operand 0']
    #allocation3 [shape = 'u8[16384]{0}', space=vmem, size = 0x4000, scoped, tag = 'output window, operand 0']
    loop: start=0, step=1, limit=4
    $region2: #{minimal_llm_forward.4} parent=1 // loop_pre_header
      _
    $region3: #{minimal_llm_forward.4} parent=1 // loop_header
      %s21 = sphi 0, %s25
      %p22 = scmp.ge.s32.totalorder %s21, 4
      %s31 = sphi 0, %s33
      %s34 = sphi 0, %s31
      %s35 = sphi 0, %s34
      %s51 = sphi 0, %s35
      %s55 = sphi 0, %s55
      %s57 = sphi 0, %s55
      %s58 = sphi 0, %s57
      %s72 = sphi 0, %s58
      %s76 = sphi 0, %s76
      %s78 = sphi 0, %s76
      %s79 = sphi 0, %s78
      %s93 = sphi 0, %s79
      %s97 = sphi 0, %s97
      %s99 = sphi 0, %s97
      %s100 = sphi 0, %s99
      %s114 = sphi 0, %s100
      %s118 = sphi 0, %s118
      %s120 = sphi 0, %s118
      %s121 = sphi 0, %s120
      %s135 = sphi 0, %s121
      %s139 = sphi 0, %s139
      %s141 = sphi 0, %s139
      %s142 = sphi 0, %s141
      %s156 = sphi 0, %s142
      %s160 = sphi 0, %s160
      %s162 = sphi 0, %s160
      %s163 = sphi 0, %s162
      %s177 = sphi 0, %s163
      %s181 = sphi 0, %s181
      %s183 = sphi 0, %s181
      %s184 = sphi 0, %s183
      %s198 = sphi 0, %s184
      %s202 = sphi 0, %s202
      %s204 = sphi 0, %s202
      %s205 = sphi 0, %s204
      %s219 = sphi 0, %s205
      %s223 = sphi 0, %s223
      %s225 = sphi 0, %s223
      %s226 = sphi 0, %s225
      %s240 = sphi 0, %s226
      %s244 = sphi 0, %s244
      %s246 = sphi 0, %s244
      %s247 = sphi 0, %s246
      %s261 = sphi 0, %s247
      %s265 = sphi 0, %s265
      %s267 = sphi 0, %s265
      %s268 = sphi 0, %s267
      %s282 = sphi 0, %s268
      %s286 = sphi 0, %s286
      %s288 = sphi 0, %s286
      %s289 = sphi 0, %s288
      %s303 = sphi 0, %s289
      %s307 = sphi 0, %s307
      %s309 = sphi 0, %s307
      %s310 = sphi 0, %s309
      %s324 = sphi 0, %s310
      %s328 = sphi 0, %s328
      %s330 = sphi 0, %s328
      %s331 = sphi 0, %s330
      %s345 = sphi 0, %s331
      %s351 = sphi 0, %s353
      %s354 = sphi 0, %s351
      %s355 = sphi 0, %s354
      %s371 = sphi 0, %s355
    $region4: #{minimal_llm_forward.4} parent=1 // loop_header_branch
      %24 = sbr.rel (%p22) target = $region8
    $region5: #{minimal_llm_forward.4} parent=1 // loop_body
      %s26 = ssub.s32 %s21, 1
      %s27 = ssub.s32 %s21, 2
      %s28 = sadd.s32 %s21, 1
      %s29 = ssub.s32 %s21, %s28
      %p30 = scmp.eq.s32.totalorder %s29, 0
      %s32 = sadd.s32 %s31, 1
      %s33 = scalar_select %p30, %s31, %s32
      %p36 = pneg %p30
      %p37 = scmp.eq.s32.totalorder %s21, 1
      %p38 = por %p36, %p37
      %p39 = scmp.ne.s32.totalorder %s31, %s34
      %p40 = scmp.eq.s32.totalorder %s21, 0
      %p41 = por %p39, %p40
      %p42 = scmp.ne.s32.totalorder %s31, %s34
      %p43 = scmp.eq.s32.totalorder %s26, 1
      %p44 = por %p42, %p43
      %p45 = scmp.ne.s32.totalorder %s34, %s35
      %p46 = scmp.eq.s32.totalorder %s26, 0
      %p47 = por %p45, %p46
      %p48 = scmp.ne.s32.totalorder %s34, %s35
      %p49 = scmp.eq.s32.totalorder %s27, 1
      %p50 = por %p48, %p49
      %p52 = scmp.ne.s32.totalorder %s35, %s51
      %p53 = scmp.eq.s32.totalorder %s27, 0
      %p54 = por %p52, %p53
      %s56 = sadd.s32 %s55, 1
      %p59 = scmp.eq.s32.totalorder %s21, 1
      %p60 = scmp.ne.s32.totalorder %s55, %s57
      %p61 = scmp.eq.s32.totalorder %s21, 0
      %p62 = por %p60, %p61
      %p63 = scmp.ne.s32.totalorder %s55, %s57
      %p64 = scmp.eq.s32.totalorder %s26, 1
      %p65 = por %p63, %p64
      %p66 = scmp.ne.s32.totalorder %s57, %s58
      %p67 = scmp.eq.s32.totalorder %s26, 0
      %p68 = por %p66, %p67
      %p69 = scmp.ne.s32.totalorder %s57, %s58
      %p70 = scmp.eq.s32.totalorder %s27, 1
      %p71 = por %p69, %p70
      %p73 = scmp.ne.s32.totalorder %s58, %s72
      %p74 = scmp.eq.s32.totalorder %s27, 0
      %p75 = por %p73, %p74
      %s77 = sadd.s32 %s76, 1
      %p80 = scmp.eq.s32.totalorder %s21, 1
      %p81 = scmp.ne.s32.totalorder %s76, %s78
      %p82 = scmp.eq.s32.totalorder %s21, 0
      %p83 = por %p81, %p82
      %p84 = scmp.ne.s32.totalorder %s76, %s78
      %p85 = scmp.eq.s32.totalorder %s26, 1
      %p86 = por %p84, %p85
      %p87 = scmp.ne.s32.totalorder %s78, %s79
      %p88 = scmp.eq.s32.totalorder %s26, 0
      %p89 = por %p87, %p88
      %p90 = scmp.ne.s32.totalorder %s78, %s79
      %p91 = scmp.eq.s32.totalorder %s27, 1
      %p92 = por %p90, %p91
      %p94 = scmp.ne.s32.totalorder %s79, %s93
      %p95 = scmp.eq.s32.totalorder %s27, 0
      %p96 = por %p94, %p95
      %s98 = sadd.s32 %s97, 1
      %p101 = scmp.eq.s32.totalorder %s21, 1
      %p102 = scmp.ne.s32.totalorder %s97, %s99
      %p103 = scmp.eq.s32.totalorder %s21, 0
      %p104 = por %p102, %p103
      %p105 = scmp.ne.s32.totalorder %s97, %s99
      %p106 = scmp.eq.s32.totalorder %s26, 1
      %p107 = por %p105, %p106
      %p108 = scmp.ne.s32.totalorder %s99, %s100
      %p109 = scmp.eq.s32.totalorder %s26, 0
      %p110 = por %p108, %p109
      %p111 = scmp.ne.s32.totalorder %s99, %s100
      %p112 = scmp.eq.s32.totalorder %s27, 1
      %p113 = por %p111, %p112
      %p115 = scmp.ne.s32.totalorder %s100, %s114
      %p116 = scmp.eq.s32.totalorder %s27, 0
      %p117 = por %p115, %p116
      %s119 = sadd.s32 %s118, 1
      %p122 = scmp.eq.s32.totalorder %s21, 1
      %p123 = scmp.ne.s32.totalorder %s118, %s120
      %p124 = scmp.eq.s32.totalorder %s21, 0
      %p125 = por %p123, %p124
      %p126 = scmp.ne.s32.totalorder %s118, %s120
      %p127 = scmp.eq.s32.totalorder %s26, 1
      %p128 = por %p126, %p127
      %p129 = scmp.ne.s32.totalorder %s120, %s121
      %p130 = scmp.eq.s32.totalorder %s26, 0
      %p131 = por %p129, %p130
      %p132 = scmp.ne.s32.totalorder %s120, %s121
      %p133 = scmp.eq.s32.totalorder %s27, 1
      %p134 = por %p132, %p133
      %p136 = scmp.ne.s32.totalorder %s121, %s135
      %p137 = scmp.eq.s32.totalorder %s27, 0
      %p138 = por %p136, %p137
      %s140 = sadd.s32 %s139, 1
      %p143 = scmp.eq.s32.totalorder %s21, 1
      %p144 = scmp.ne.s32.totalorder %s139, %s141
      %p145 = scmp.eq.s32.totalorder %s21, 0
      %p146 = por %p144, %p145
      %p147 = scmp.ne.s32.totalorder %s139, %s141
      %p148 = scmp.eq.s32.totalorder %s26, 1
      %p149 = por %p147, %p148
      %p150 = scmp.ne.s32.totalorder %s141, %s142
      %p151 = scmp.eq.s32.totalorder %s26, 0
      %p152 = por %p150, %p151
      %p153 = scmp.ne.s32.totalorder %s141, %s142
      %p154 = scmp.eq.s32.totalorder %s27, 1
      %p155 = por %p153, %p154
      %p157 = scmp.ne.s32.totalorder %s142, %s156
      %p158 = scmp.eq.s32.totalorder %s27, 0
      %p159 = por %p157, %p158
      %s161 = sadd.s32 %s160, 1
      %p164 = scmp.eq.s32.totalorder %s21, 1
      %p165 = scmp.ne.s32.totalorder %s160, %s162
      %p166 = scmp.eq.s32.totalorder %s21, 0
      %p167 = por %p165, %p166
      %p168 = scmp.ne.s32.totalorder %s160, %s162
      %p169 = scmp.eq.s32.totalorder %s26, 1
      %p170 = por %p168, %p169
      %p171 = scmp.ne.s32.totalorder %s162, %s163
      %p172 = scmp.eq.s32.totalorder %s26, 0
      %p173 = por %p171, %p172
      %p174 = scmp.ne.s32.totalorder %s162, %s163
      %p175 = scmp.eq.s32.totalorder %s27, 1
      %p176 = por %p174, %p175
      %p178 = scmp.ne.s32.totalorder %s163, %s177
      %p179 = scmp.eq.s32.totalorder %s27, 0
      %p180 = por %p178, %p179
      %s182 = sadd.s32 %s181, 1
      %p185 = scmp.eq.s32.totalorder %s21, 1
      %p186 = scmp.ne.s32.totalorder %s181, %s183
      %p187 = scmp.eq.s32.totalorder %s21, 0
      %p188 = por %p186, %p187
      %p189 = scmp.ne.s32.totalorder %s181, %s183
      %p190 = scmp.eq.s32.totalorder %s26, 1
      %p191 = por %p189, %p190
      %p192 = scmp.ne.s32.totalorder %s183, %s184
      %p193 = scmp.eq.s32.totalorder %s26, 0
      %p194 = por %p192, %p193
      %p195 = scmp.ne.s32.totalorder %s183, %s184
      %p196 = scmp.eq.s32.totalorder %s27, 1
      %p197 = por %p195, %p196
      %p199 = scmp.ne.s32.totalorder %s184, %s198
      %p200 = scmp.eq.s32.totalorder %s27, 0
      %p201 = por %p199, %p200
      %s203 = sadd.s32 %s202, 1
      %p206 = scmp.eq.s32.totalorder %s21, 1
      %p207 = scmp.ne.s32.totalorder %s202, %s204
      %p208 = scmp.eq.s32.totalorder %s21, 0
      %p209 = por %p207, %p208
      %p210 = scmp.ne.s32.totalorder %s202, %s204
      %p211 = scmp.eq.s32.totalorder %s26, 1
      %p212 = por %p210, %p211
      %p213 = scmp.ne.s32.totalorder %s204, %s205
      %p214 = scmp.eq.s32.totalorder %s26, 0
      %p215 = por %p213, %p214
      %p216 = scmp.ne.s32.totalorder %s204, %s205
      %p217 = scmp.eq.s32.totalorder %s27, 1
      %p218 = por %p216, %p217
      %p220 = scmp.ne.s32.totalorder %s205, %s219
      %p221 = scmp.eq.s32.totalorder %s27, 0
      %p222 = por %p220, %p221
      %s224 = sadd.s32 %s223, 1
      %p227 = scmp.eq.s32.totalorder %s21, 1
      %p228 = scmp.ne.s32.totalorder %s223, %s225
      %p229 = scmp.eq.s32.totalorder %s21, 0
      %p230 = por %p228, %p229
      %p231 = scmp.ne.s32.totalorder %s223, %s225
      %p232 = scmp.eq.s32.totalorder %s26, 1
      %p233 = por %p231, %p232
      %p234 = scmp.ne.s32.totalorder %s225, %s226
      %p235 = scmp.eq.s32.totalorder %s26, 0
      %p236 = por %p234, %p235
      %p237 = scmp.ne.s32.totalorder %s225, %s226
      %p238 = scmp.eq.s32.totalorder %s27, 1
      %p239 = por %p237, %p238
      %p241 = scmp.ne.s32.totalorder %s226, %s240
      %p242 = scmp.eq.s32.totalorder %s27, 0
      %p243 = por %p241, %p242
      %s245 = sadd.s32 %s244, 1
      %p248 = scmp.eq.s32.totalorder %s21, 1
      %p249 = scmp.ne.s32.totalorder %s244, %s246
      %p250 = scmp.eq.s32.totalorder %s21, 0
      %p251 = por %p249, %p250
      %p252 = scmp.ne.s32.totalorder %s244, %s246
      %p253 = scmp.eq.s32.totalorder %s26, 1
      %p254 = por %p252, %p253
      %p255 = scmp.ne.s32.totalorder %s246, %s247
      %p256 = scmp.eq.s32.totalorder %s26, 0
      %p257 = por %p255, %p256
      %p258 = scmp.ne.s32.totalorder %s246, %s247
      %p259 = scmp.eq.s32.totalorder %s27, 1
      %p260 = por %p258, %p259
      %p262 = scmp.ne.s32.totalorder %s247, %s261
      %p263 = scmp.eq.s32.totalorder %s27, 0
      %p264 = por %p262, %p263
      %s266 = sadd.s32 %s265, 1
      %p269 = scmp.eq.s32.totalorder %s21, 1
      %p270 = scmp.ne.s32.totalorder %s265, %s267
      %p271 = scmp.eq.s32.totalorder %s21, 0
      %p272 = por %p270, %p271
      %p273 = scmp.ne.s32.totalorder %s265, %s267
      %p274 = scmp.eq.s32.totalorder %s26, 1
      %p275 = por %p273, %p274
      %p276 = scmp.ne.s32.totalorder %s267, %s268
      %p277 = scmp.eq.s32.totalorder %s26, 0
      %p278 = por %p276, %p277
      %p279 = scmp.ne.s32.totalorder %s267, %s268
      %p280 = scmp.eq.s32.totalorder %s27, 1
      %p281 = por %p279, %p280
      %p283 = scmp.ne.s32.totalorder %s268, %s282
      %p284 = scmp.eq.s32.totalorder %s27, 0
      %p285 = por %p283, %p284
      %s287 = sadd.s32 %s286, 1
      %p290 = scmp.eq.s32.totalorder %s21, 1
      %p291 = scmp.ne.s32.totalorder %s286, %s288
      %p292 = scmp.eq.s32.totalorder %s21, 0
      %p293 = por %p291, %p292
      %p294 = scmp.ne.s32.totalorder %s286, %s288
      %p295 = scmp.eq.s32.totalorder %s26, 1
      %p296 = por %p294, %p295
      %p297 = scmp.ne.s32.totalorder %s288, %s289
      %p298 = scmp.eq.s32.totalorder %s26, 0
      %p299 = por %p297, %p298
      %p300 = scmp.ne.s32.totalorder %s288, %s289
      %p301 = scmp.eq.s32.totalorder %s27, 1
      %p302 = por %p300, %p301
      %p304 = scmp.ne.s32.totalorder %s289, %s303
      %p305 = scmp.eq.s32.totalorder %s27, 0
      %p306 = por %p304, %p305
      %s308 = sadd.s32 %s307, 1
      %p311 = scmp.eq.s32.totalorder %s21, 1
      %p312 = scmp.ne.s32.totalorder %s307, %s309
      %p313 = scmp.eq.s32.totalorder %s21, 0
      %p314 = por %p312, %p313
      %p315 = scmp.ne.s32.totalorder %s307, %s309
      %p316 = scmp.eq.s32.totalorder %s26, 1
      %p317 = por %p315, %p316
      %p318 = scmp.ne.s32.totalorder %s309, %s310
      %p319 = scmp.eq.s32.totalorder %s26, 0
      %p320 = por %p318, %p319
      %p321 = scmp.ne.s32.totalorder %s309, %s310
      %p322 = scmp.eq.s32.totalorder %s27, 1
      %p323 = por %p321, %p322
      %p325 = scmp.ne.s32.totalorder %s310, %s324
      %p326 = scmp.eq.s32.totalorder %s27, 0
      %p327 = por %p325, %p326
      %s329 = sadd.s32 %s328, 1
      %p332 = scmp.eq.s32.totalorder %s21, 1
      %p333 = scmp.ne.s32.totalorder %s328, %s330
      %p334 = scmp.eq.s32.totalorder %s21, 0
      %p335 = por %p333, %p334
      %p336 = scmp.ne.s32.totalorder %s328, %s330
      %p337 = scmp.eq.s32.totalorder %s26, 1
      %p338 = por %p336, %p337
      %p339 = scmp.ne.s32.totalorder %s330, %s331
      %p340 = scmp.eq.s32.totalorder %s26, 0
      %p341 = por %p339, %p340
      %p342 = scmp.ne.s32.totalorder %s330, %s331
      %p343 = scmp.eq.s32.totalorder %s27, 1
      %p344 = por %p342, %p343
      %p346 = scmp.ne.s32.totalorder %s331, %s345
      %p347 = scmp.eq.s32.totalorder %s27, 0
      %p348 = por %p346, %p347
      %s349 = ssub.s32 %s21, %s28
      %p350 = scmp.eq.s32.totalorder %s349, 0
      %s352 = sadd.s32 %s351, 1
      %s353 = scalar_select %p350, %s351, %s352
      %p356 = pneg %p350
      %p357 = scmp.eq.s32.totalorder %s21, 1
      %p358 = por %p356, %p357
      %p359 = scmp.ne.s32.totalorder %s351, %s354
      %p360 = scmp.eq.s32.totalorder %s21, 0
      %p361 = por %p359, %p360
      %p362 = scmp.ne.s32.totalorder %s351, %s354
      %p363 = scmp.eq.s32.totalorder %s26, 1
      %p364 = por %p362, %p363
      %p365 = scmp.ne.s32.totalorder %s354, %s355
      %p366 = scmp.eq.s32.totalorder %s26, 0
      %p367 = por %p365, %p366
      %p368 = scmp.ne.s32.totalorder %s354, %s355
      %p369 = scmp.eq.s32.totalorder %s27, 1
      %p370 = por %p368, %p369
      %p372 = scmp.ne.s32.totalorder %s355, %s371
      %p373 = scmp.eq.s32.totalorder %s27, 0
      %p374 = por %p372, %p373
      %p375 = scmp.le.s32.totalorder 1, %s21
      %p376 = scmp.lt.s32.totalorder %s21, 3
      %p377 = pnand %p375, %p376
      %p378 = pneg %p377
      // Predicated region
      $region9: #{minimal_llm_forward.4} parent=5 // pred_check
        _
      $region10: #{minimal_llm_forward.4} parent=5 // pred_check_branch
        %380 = sbr.rel (%p377) target = $region12
      $region11: #{minimal_llm_forward.4} parent=5 // pred_region
        %s381 = ssub.s32 %s21, 1
        // Predicated region
        $region13: #{minimal_llm_forward.4} parent=11 // pred_check
          %p382 = pneg %p68
        $region14: #{minimal_llm_forward.4} parent=11 // pred_check_branch
          %384 = sbr.rel (%p382) target = $region16
        $region15: #{minimal_llm_forward.4} parent=11 // pred_region
          _
        $region16: #{minimal_llm_forward.4} parent=11 // pred_fallthru
          _
        // Predicated region
        $region17: #{minimal_llm_forward.4} parent=11 // pred_check
          %p385 = pneg %p89
        $region18: #{minimal_llm_forward.4} parent=11 // pred_check_branch
          %387 = sbr.rel (%p385) target = $region20
        $region19: #{minimal_llm_forward.4} parent=11 // pred_region
          _
        $region20: #{minimal_llm_forward.4} parent=11 // pred_fallthru
          _
        // Predicated region
        $region21: #{minimal_llm_forward.4} parent=11 // pred_check
          %p388 = pneg %p110
        $region22: #{minimal_llm_forward.4} parent=11 // pred_check_branch
          %390 = sbr.rel (%p388) target = $region24
        $region23: #{minimal_llm_forward.4} parent=11 // pred_region
          _
        $region24: #{minimal_llm_forward.4} parent=11 // pred_fallthru
          _
        // Predicated region
        $region25: #{minimal_llm_forward.4} parent=11 // pred_check
          %p391 = pneg %p131
        $region26: #{minimal_llm_forward.4} parent=11 // pred_check_branch
          %393 = sbr.rel (%p391) target = $region28
        $region27: #{minimal_llm_forward.4} parent=11 // pred_region
          _
        $region28: #{minimal_llm_forward.4} parent=11 // pred_fallthru
          _
        // Predicated region
        $region29: #{minimal_llm_forward.4} parent=11 // pred_check
          %p394 = pneg %p152
        $region30: #{minimal_llm_forward.4} parent=11 // pred_check_branch
          %396 = sbr.rel (%p394) target = $region32
        $region31: #{minimal_llm_forward.4} parent=11 // pred_region
          _
        $region32: #{minimal_llm_forward.4} parent=11 // pred_fallthru
          _
        // Predicated region
        $region33: #{minimal_llm_forward.4} parent=11 // pred_check
          %p397 = pneg %p173
        $region34: #{minimal_llm_forward.4} parent=11 // pred_check_branch
          %399 = sbr.rel (%p397) target = $region36
        $region35: #{minimal_llm_forward.4} parent=11 // pred_region
          _
        $region36: #{minimal_llm_forward.4} parent=11 // pred_fallthru
          _
        // Predicated region
        $region37: #{minimal_llm_forward.4} parent=11 // pred_check
          %p400 = pneg %p194
        $region38: #{minimal_llm_forward.4} parent=11 // pred_check_branch
          %402 = sbr.rel (%p400) target = $region40
        $region39: #{minimal_llm_forward.4} parent=11 // pred_region
          _
        $region40: #{minimal_llm_forward.4} parent=11 // pred_fallthru
          _
        // Predicated region
        $region41: #{minimal_llm_forward.4} parent=11 // pred_check
          %p403 = pneg %p215
        $region42: #{minimal_llm_forward.4} parent=11 // pred_check_branch
          %405 = sbr.rel (%p403) target = $region44
        $region43: #{minimal_llm_forward.4} parent=11 // pred_region
          _
        $region44: #{minimal_llm_forward.4} parent=11 // pred_fallthru
          _
        // Predicated region
        $region45: #{minimal_llm_forward.4} parent=11 // pred_check
          %p406 = pneg %p236
        $region46: #{minimal_llm_forward.4} parent=11 // pred_check_branch
          %408 = sbr.rel (%p406) target = $region48
        $region47: #{minimal_llm_forward.4} parent=11 // pred_region
          _
        $region48: #{minimal_llm_forward.4} parent=11 // pred_fallthru
          _
        // Predicated region
        $region49: #{minimal_llm_forward.4} parent=11 // pred_check
          %p409 = pneg %p257
        $region50: #{minimal_llm_forward.4} parent=11 // pred_check_branch
          %411 = sbr.rel (%p409) target = $region52
        $region51: #{minimal_llm_forward.4} parent=11 // pred_region
          _
        $region52: #{minimal_llm_forward.4} parent=11 // pred_fallthru
          _
        // Predicated region
        $region53: #{minimal_llm_forward.4} parent=11 // pred_check
          %p412 = pneg %p278
        $region54: #{minimal_llm_forward.4} parent=11 // pred_check_branch
          %414 = sbr.rel (%p412) target = $region56
        $region55: #{minimal_llm_forward.4} parent=11 // pred_region
          _
        $region56: #{minimal_llm_forward.4} parent=11 // pred_fallthru
          _
        // Predicated region
        $region57: #{minimal_llm_forward.4} parent=11 // pred_check
          %p415 = pneg %p299
        $region58: #{minimal_llm_forward.4} parent=11 // pred_check_branch
          %417 = sbr.rel (%p415) target = $region60
        $region59: #{minimal_llm_forward.4} parent=11 // pred_region
          _
        $region60: #{minimal_llm_forward.4} parent=11 // pred_fallthru
          _
        // Predicated region
        $region61: #{minimal_llm_forward.4} parent=11 // pred_check
          %p418 = pneg %p320
        $region62: #{minimal_llm_forward.4} parent=11 // pred_check_branch
          %420 = sbr.rel (%p418) target = $region64
        $region63: #{minimal_llm_forward.4} parent=11 // pred_region
          _
        $region64: #{minimal_llm_forward.4} parent=11 // pred_fallthru
          _
        // Predicated region
        $region65: #{minimal_llm_forward.4} parent=11 // pred_check
          %p421 = pneg %p341
        $region66: #{minimal_llm_forward.4} parent=11 // pred_check_branch
          %423 = sbr.rel (%p421) target = $region68
        $region67: #{minimal_llm_forward.4} parent=11 // pred_region
          _
        $region68: #{minimal_llm_forward.4} parent=11 // pred_fallthru
          _
      $region12: #{minimal_llm_forward.4} parent=5 // pred_fallthru
        _
      %p424 = scmp.lt.s32.totalorder %s21, 2
      // Predicated region
      $region69: #{minimal_llm_forward.4} parent=5 // pred_check
        %p425 = pneg %p424
      $region70: #{minimal_llm_forward.4} parent=5 // pred_check_branch
        %427 = sbr.rel (%p425) target = $region72
      $region71: #{minimal_llm_forward.4} parent=5 // pred_region
        // Predicated region
        $region73: #{minimal_llm_forward.4} parent=71 // pred_check
          %p428 = pneg %p41
        $region74: #{minimal_llm_forward.4} parent=71 // pred_check_branch
          %430 = sbr.rel (%p428) target = $region76
        $region75: #{minimal_llm_forward.4} parent=71 // pred_region
          %s431 = sand.u32 %s31, 1
          %s432 = sand.u32 %s31, 1
          %s433 = smul.addr %s432, 16
          %s434 = scalar_lea.vmem [#allocation2], %s433
          %s435 = smul.addr %s21, 2
          %s436 = smul.addr %s435, 4
          %s437 = scalar_lea.vmem %s0, %s436
          // Predicated region
          $region77: #{minimal_llm_forward.4} parent=75 // pred_check
            _
          $region78: #{minimal_llm_forward.4} parent=75 // pred_check_branch
            %439 = sbr.rel (0) target = $region80
          $region79: #{minimal_llm_forward.4} parent=75 // pred_region
            // Predicated region
            $region81: #{minimal_llm_forward.4} parent=79 // pred_check
              _
            $region82: #{minimal_llm_forward.4} parent=79 // pred_check_branch
              %441 = sbr.rel (0) target = $region84
            $region83: #{minimal_llm_forward.4} parent=79 // pred_region
              // Predicated region
              $region96: #{minimal_llm_forward.4} parent=83 // pred_check
                _
              $region97: #{minimal_llm_forward.4} parent=83 // pred_check_branch
                %458 = sbr.rel (0) target = $region99
              $region98: #{minimal_llm_forward.4} parent=83 // pred_region
                loop: start=0, step=1, limit=1
                $region100: #{minimal_llm_forward.4} parent=98 // loop_pre_header
                  _
                $region101: #{minimal_llm_forward.4} parent=98 // loop_header
                  %s460 = sphi 0, %s464
                  %p461 = scmp.ge.s32.totalorder %s460, 1
                  %s465 = sphi %s437, %s437
                  %s466 = sphi %s434, %s434
                $region102: #{minimal_llm_forward.4} parent=98 // loop_header_branch
                  %463 = sbr.rel (%p461) target = $region106
                $region103: #{minimal_llm_forward.4} parent=98 // loop_body
                  %v467 = vld [vmem:[%s465] sm:$0xff]
                  %468 = vst [vmem:[%s466] sm:$0xff] %v467
                  %v469 = vld [vmem:[%s465 + $0x10] sm:$0xff]
                  %470 = vst [vmem:[%s466 + $0x8] sm:$0xff] %v469
                $region104: #{minimal_llm_forward.4} parent=98 // loop_footer
                  %s464 = sadd.s32 1, %s460
                $region105: #{minimal_llm_forward.4} parent=98 // loop_footer_branch
                  %459 = sbr.rel target = $region101
                $region106: #{minimal_llm_forward.4} parent=98 // loop_exit
                  _
              $region99: #{minimal_llm_forward.4} parent=83 // pred_fallthru
                _
              // Predicated region
              $region107: #{minimal_llm_forward.4} parent=83 // pred_check
                _
              $region108: #{minimal_llm_forward.4} parent=83 // pred_check_branch
                %472 = sbr.rel target = $region110
              $region109: #{minimal_llm_forward.4} parent=83 // pred_region
                _
              $region110: #{minimal_llm_forward.4} parent=83 // pred_fallthru
                _
            $region84: #{minimal_llm_forward.4} parent=79 // pred_fallthru
              _
            // Predicated region
            $region85: #{minimal_llm_forward.4} parent=79 // pred_check
              _
            $region86: #{minimal_llm_forward.4} parent=79 // pred_check_branch
              %443 = sbr.rel target = $region88
            $region87: #{minimal_llm_forward.4} parent=79 // pred_region
              loop: start=0, step=1, limit=1
              $region89: #{minimal_llm_forward.4} parent=87 // loop_pre_header
                _
              $region90: #{minimal_llm_forward.4} parent=87 // loop_header
                %s446 = sphi 0, %s450
                %p447 = scmp.ge.s32.totalorder %s446, 1
                %s451 = sphi %s437, %s437
                %s452 = sphi %s434, %s434
              $region91: #{minimal_llm_forward.4} parent=87 // loop_header_branch
                %449 = sbr.rel (%p447) target = $region95
              $region92: #{minimal_llm_forward.4} parent=87 // loop_body
                %v453 = vld [vmem:[%s451] sm:$0xff]
                %454 = vst [vmem:[%s452] sm:$0xff] %v453
                %v455 = vld [vmem:[%s451 + $0x10] sm:$0xff]
                %456 = vst [vmem:[%s452 + $0x8] sm:$0xff] %v455
              $region93: #{minimal_llm_forward.4} parent=87 // loop_footer
                %s450 = sadd.s32 1, %s446
              $region94: #{minimal_llm_forward.4} parent=87 // loop_footer_branch
                %445 = sbr.rel target = $region90
              $region95: #{minimal_llm_forward.4} parent=87 // loop_exit
                _
            $region88: #{minimal_llm_forward.4} parent=79 // pred_fallthru
              _
          $region80: #{minimal_llm_forward.4} parent=75 // pred_fallthru
            _
          %473 = vnop
        $region76: #{minimal_llm_forward.4} parent=71 // pred_fallthru
          _
      $region72: #{minimal_llm_forward.4} parent=5 // pred_fallthru
        _
      %p474 = scmp.le.s32.totalorder 1, %s21
      %p475 = scmp.lt.s32.totalorder %s21, 3
      %p476 = pnand %p474, %p475
      %p477 = pneg %p476
      // Predicated region
      $region111: #{minimal_llm_forward.4} parent=5 // pred_check
        _
      $region112: #{minimal_llm_forward.4} parent=5 // pred_check_branch
        %479 = sbr.rel (%p476) target = $region114
      $region113: #{minimal_llm_forward.4} parent=5 // pred_region
        %s480 = ssub.s32 %s21, 1
        %s481 = sand.u32 %s34, 1
        %s482 = sand.u32 %s34, 1
        %s483 = smul.addr %s482, 16
        %s484 = scalar_lea.vmem [#allocation2], %s483
        // Predicated region
        $region115: #{minimal_llm_forward.4} parent=113 // pred_check
          %p485 = pneg %p47
        $region116: #{minimal_llm_forward.4} parent=113 // pred_check_branch
          %487 = sbr.rel (%p485) target = $region118
        $region117: #{minimal_llm_forward.4} parent=113 // pred_region
          _
        $region118: #{minimal_llm_forward.4} parent=113 // pred_fallthru
          _
        %s488 = sand.u32 %s34, 1
        %s489 = sand.u32 %s34, 1
        %s490 = smul.addr %s489, 16
        %s491 = scalar_lea.vmem [#allocation2], %s490
        %p492 = pneg %p47
        %p493 = pneg %p44
        %p494 = pneg %p68
        %p495 = pneg %p65
        %p496 = pneg %p89
        %p497 = pneg %p86
        %p498 = pneg %p110
        %p499 = pneg %p107
        %p500 = pneg %p131
        %p501 = pneg %p128
        %p502 = pneg %p152
        %p503 = pneg %p149
        %p504 = pneg %p173
        %p505 = pneg %p170
        %p506 = pneg %p194
        %p507 = pneg %p191
        %p508 = pneg %p215
        %p509 = pneg %p212
        %p510 = pneg %p236
        %p511 = pneg %p233
        %p512 = pneg %p257
        %p513 = pneg %p254
        %p514 = pneg %p278
        %p515 = pneg %p275
        %p516 = pneg %p299
        %p517 = pneg %p296
        %p518 = pneg %p320
        %p519 = pneg %p317
        %p520 = pneg %p341
        %p521 = pneg %p338
        %p522 = pneg %p367
        %p523 = pneg %p364
        %s524 = sand.u32 %s354, 1
        %s525 = sand.u32 %s354, 1
        %s526 = smul.addr %s525, 16
        %s527 = scalar_lea.vmem [#allocation3], %s526
        %v529 = vld [vmem:[%s484] sm:$0xff]
        %v530 = vld [vmem:[%s484 + $0x8] sm:$0xff]
        %v531 = vunpack.c.l.bf16 %v529
        %v532 = vunpack.c.h.bf16 %v529
        %v533 = vunpack.c.l.bf16 %v530
        %v534 = vunpack.c.h.bf16 %v530
        %v535 = vld [vmem:[%s1] sm:$0xff]
        %v536 = vld [vmem:[%s1 + $0x8] sm:$0xff]
        %v537 = vld [vmem:[%s1 + $0x10] sm:$0xff]
        %v538 = vld [vmem:[%s1 + $0x18] sm:$0xff]
        %v539 = vld [vmem:[%s1 + $0x20] sm:$0xff]
        %v540 = vld [vmem:[%s1 + $0x28] sm:$0xff]
        %v541 = vld [vmem:[%s1 + $0x30] sm:$0xff]
        %v542 = vld [vmem:[%s1 + $0x38] sm:$0xff]
        %v543 = vld [vmem:[%s1 + $0x40] sm:$0xff]
        %v544 = vld [vmem:[%s1 + $0x48] sm:$0xff]
        %v545 = vld [vmem:[%s1 + $0x50] sm:$0xff]
        %v546 = vld [vmem:[%s1 + $0x58] sm:$0xff]
        %v547 = vld [vmem:[%s1 + $0x60] sm:$0xff]
        %v548 = vld [vmem:[%s1 + $0x68] sm:$0xff]
        %v549 = vld [vmem:[%s1 + $0x70] sm:$0xff]
        %v550 = vld [vmem:[%s1 + $0x78] sm:$0xff]
        %v551 = vld [vmem:[%s1 + $0x80] sm:$0xff]
        %v552 = vld [vmem:[%s1 + $0x88] sm:$0xff]
        %v553 = vld [vmem:[%s1 + $0x90] sm:$0xff]
        %v554 = vld [vmem:[%s1 + $0x98] sm:$0xff]
        %v555 = vld [vmem:[%s1 + $0xa0] sm:$0xff]
        %v556 = vld [vmem:[%s1 + $0xa8] sm:$0xff]
        %v557 = vld [vmem:[%s1 + $0xb0] sm:$0xff]
        %v558 = vld [vmem:[%s1 + $0xb8] sm:$0xff]
        %v559 = vld [vmem:[%s1 + $0xc0] sm:$0xff]
        %v560 = vld [vmem:[%s1 + $0xc8] sm:$0xff]
        %v561 = vld [vmem:[%s1 + $0xd0] sm:$0xff]
        %v562 = vld [vmem:[%s1 + $0xd8] sm:$0xff]
        %v563 = vld [vmem:[%s1 + $0xe0] sm:$0xff]
        %v564 = vld [vmem:[%s1 + $0xe8] sm:$0xff]
        %v565 = vld [vmem:[%s1 + $0xf0] sm:$0xff]
        %v566 = vld [vmem:[%s1 + $0xf8] sm:$0xff]
        %v567 = vld [vmem:[%s1 + $0x100] sm:$0xff]
        %v568 = vld [vmem:[%s1 + $0x108] sm:$0xff]
        %v569 = vld [vmem:[%s1 + $0x110] sm:$0xff]
        %v570 = vld [vmem:[%s1 + $0x118] sm:$0xff]
        %v571 = vld [vmem:[%s1 + $0x120] sm:$0xff]
        %v572 = vld [vmem:[%s1 + $0x128] sm:$0xff]
        %v573 = vld [vmem:[%s1 + $0x130] sm:$0xff]
        %v574 = vld [vmem:[%s1 + $0x138] sm:$0xff]
        %v575 = vld [vmem:[%s1 + $0x140] sm:$0xff]
        %v576 = vld [vmem:[%s1 + $0x148] sm:$0xff]
        %v577 = vld [vmem:[%s1 + $0x150] sm:$0xff]
        %v578 = vld [vmem:[%s1 + $0x158] sm:$0xff]
        %v579 = vld [vmem:[%s1 + $0x160] sm:$0xff]
        %v580 = vld [vmem:[%s1 + $0x168] sm:$0xff]
        %v581 = vld [vmem:[%s1 + $0x170] sm:$0xff]
        %v582 = vld [vmem:[%s1 + $0x178] sm:$0xff]
        %v583 = vld [vmem:[%s1 + $0x180] sm:$0xff]
        %v584 = vld [vmem:[%s1 + $0x188] sm:$0xff]
        %v585 = vld [vmem:[%s1 + $0x190] sm:$0xff]
        %v586 = vld [vmem:[%s1 + $0x198] sm:$0xff]
        %v587 = vld [vmem:[%s1 + $0x1a0] sm:$0xff]
        %v588 = vld [vmem:[%s1 + $0x1a8] sm:$0xff]
        %v589 = vld [vmem:[%s1 + $0x1b0] sm:$0xff]
        %v590 = vld [vmem:[%s1 + $0x1b8] sm:$0xff]
        %v591 = vld [vmem:[%s1 + $0x1c0] sm:$0xff]
        %v592 = vld [vmem:[%s1 + $0x1c8] sm:$0xff]
        %v593 = vld [vmem:[%s1 + $0x1d0] sm:$0xff]
        %v594 = vld [vmem:[%s1 + $0x1d8] sm:$0xff]
        %v595 = vld [vmem:[%s1 + $0x1e0] sm:$0xff]
        %v596 = vld [vmem:[%s1 + $0x1e8] sm:$0xff]
        %v597 = vld [vmem:[%s1 + $0x1f0] sm:$0xff]
        %v598 = vld [vmem:[%s1 + $0x1f8] sm:$0xff]
        %v599 = vld [vmem:[%s1 + $0x200] sm:$0xff]
        %v600 = vld [vmem:[%s1 + $0x208] sm:$0xff]
        %v601 = vld [vmem:[%s1 + $0x210] sm:$0xff]
        %v602 = vld [vmem:[%s1 + $0x218] sm:$0xff]
        %v603 = vld [vmem:[%s1 + $0x220] sm:$0xff]
        %v604 = vld [vmem:[%s1 + $0x228] sm:$0xff]
        %v605 = vld [vmem:[%s1 + $0x230] sm:$0xff]
        %v606 = vld [vmem:[%s1 + $0x238] sm:$0xff]
        %v607 = vld [vmem:[%s1 + $0x240] sm:$0xff]
        %v608 = vld [vmem:[%s1 + $0x248] sm:$0xff]
        %v609 = vld [vmem:[%s1 + $0x250] sm:$0xff]
        %v610 = vld [vmem:[%s1 + $0x258] sm:$0xff]
        %v611 = vld [vmem:[%s1 + $0x260] sm:$0xff]
        %v612 = vld [vmem:[%s1 + $0x268] sm:$0xff]
        %v613 = vld [vmem:[%s1 + $0x270] sm:$0xff]
        %v614 = vld [vmem:[%s1 + $0x278] sm:$0xff]
        %v615 = vld [vmem:[%s1 + $0x280] sm:$0xff]
        %v616 = vld [vmem:[%s1 + $0x288] sm:$0xff]
        %v617 = vld [vmem:[%s1 + $0x290] sm:$0xff]
        %v618 = vld [vmem:[%s1 + $0x298] sm:$0xff]
        %v619 = vld [vmem:[%s1 + $0x2a0] sm:$0xff]
        %v620 = vld [vmem:[%s1 + $0x2a8] sm:$0xff]
        %v621 = vld [vmem:[%s1 + $0x2b0] sm:$0xff]
        %v622 = vld [vmem:[%s1 + $0x2b8] sm:$0xff]
        %v623 = vld [vmem:[%s1 + $0x2c0] sm:$0xff]
        %v624 = vld [vmem:[%s1 + $0x2c8] sm:$0xff]
        %v625 = vld [vmem:[%s1 + $0x2d0] sm:$0xff]
        %v626 = vld [vmem:[%s1 + $0x2d8] sm:$0xff]
        %v627 = vld [vmem:[%s1 + $0x2e0] sm:$0xff]
        %v628 = vld [vmem:[%s1 + $0x2e8] sm:$0xff]
        %v629 = vld [vmem:[%s1 + $0x2f0] sm:$0xff]
        %v630 = vld [vmem:[%s1 + $0x2f8] sm:$0xff]
        %v631 = vld [vmem:[%s2] sm:$0x3f]
        %v633 = vlaneseq
        %v634 = vshrl.u32 %v633, 7
        %v635 = vsub.s32 0, %v634
        %v636 = vrot.slane %v631, %v635
        %v637 = vlaneseq
        %v638 = vshrl.u32 %v637, 7
        %v639 = vsub.s32 1, %v638
        %v640 = vrot.slane %v631, %v639
        %v641 = vlaneseq
        %v642 = vshrl.u32 %v641, 7
        %v643 = vsub.s32 2, %v642
        %v644 = vrot.slane %v631, %v643
        %v645 = vlaneseq
        %v646 = vshrl.u32 %v645, 7
        %v647 = vsub.s32 3, %v646
        %v648 = vrot.slane %v631, %v647
        %v649 = vlaneseq
        %v650 = vshrl.u32 %v649, 7
        %v651 = vsub.s32 4, %v650
        %v652 = vrot.slane %v631, %v651
        %v653 = vlaneseq
        %v654 = vshrl.u32 %v653, 7
        %v655 = vsub.s32 5, %v654
        %v656 = vrot.slane %v631, %v655
        %v665 = vunpack.c.l.b16 %v529
        %v666 = vunpack.c.h.b16 %v529
        %v667 = vunpack.c.l.b16 %v530
        %v668 = vunpack.c.h.b16 %v530
        %v669 = vpack.c.b16 %v667, %v665
        %v670 = vpack.c.b16 %v668, %v666
        %v769 = vunpack.c.l.b16 %v535
        %v770 = vunpack.c.h.b16 %v535
        %v771 = vunpack.c.l.b16 %v536
        %v772 = vunpack.c.h.b16 %v536
        %v773 = vunpack.c.l.b16 %v537
        %v774 = vunpack.c.h.b16 %v537
        %v775 = vunpack.c.l.b16 %v538
        %v776 = vunpack.c.h.b16 %v538
        %v777 = vunpack.c.l.b16 %v539
        %v778 = vunpack.c.h.b16 %v539
        %v779 = vunpack.c.l.b16 %v540
        %v780 = vunpack.c.h.b16 %v540
        %v781 = vunpack.c.l.b16 %v541
        %v782 = vunpack.c.h.b16 %v541
        %v783 = vunpack.c.l.b16 %v542
        %v784 = vunpack.c.h.b16 %v542
        %v785 = vunpack.c.l.b16 %v543
        %v786 = vunpack.c.h.b16 %v543
        %v787 = vunpack.c.l.b16 %v544
        %v788 = vunpack.c.h.b16 %v544
        %v789 = vunpack.c.l.b16 %v545
        %v790 = vunpack.c.h.b16 %v545
        %v791 = vunpack.c.l.b16 %v546
        %v792 = vunpack.c.h.b16 %v546
        %v793 = vunpack.c.l.b16 %v547
        %v794 = vunpack.c.h.b16 %v547
        %v795 = vunpack.c.l.b16 %v548
        %v796 = vunpack.c.h.b16 %v548
        %v797 = vunpack.c.l.b16 %v549
        %v798 = vunpack.c.h.b16 %v549
        %v799 = vunpack.c.l.b16 %v550
        %v800 = vunpack.c.h.b16 %v550
        %v801 = vunpack.c.l.b16 %v551
        %v802 = vunpack.c.h.b16 %v551
        %v803 = vunpack.c.l.b16 %v552
        %v804 = vunpack.c.h.b16 %v552
        %v805 = vunpack.c.l.b16 %v553
        %v806 = vunpack.c.h.b16 %v553
        %v807 = vunpack.c.l.b16 %v554
        %v808 = vunpack.c.h.b16 %v554
        %v809 = vunpack.c.l.b16 %v555
        %v810 = vunpack.c.h.b16 %v555
        %v811 = vunpack.c.l.b16 %v556
        %v812 = vunpack.c.h.b16 %v556
        %v813 = vunpack.c.l.b16 %v557
        %v814 = vunpack.c.h.b16 %v557
        %v815 = vunpack.c.l.b16 %v558
        %v816 = vunpack.c.h.b16 %v558
        %v817 = vunpack.c.l.b16 %v559
        %v818 = vunpack.c.h.b16 %v559
        %v819 = vunpack.c.l.b16 %v560
        %v820 = vunpack.c.h.b16 %v560
        %v821 = vunpack.c.l.b16 %v561
        %v822 = vunpack.c.h.b16 %v561
        %v823 = vunpack.c.l.b16 %v562
        %v824 = vunpack.c.h.b16 %v562
        %v825 = vunpack.c.l.b16 %v563
        %v826 = vunpack.c.h.b16 %v563
        %v827 = vunpack.c.l.b16 %v564
        %v828 = vunpack.c.h.b16 %v564
        %v829 = vunpack.c.l.b16 %v565
        %v830 = vunpack.c.h.b16 %v565
        %v831 = vunpack.c.l.b16 %v566
        %v832 = vunpack.c.h.b16 %v566
        %v833 = vunpack.c.l.b16 %v567
        %v834 = vunpack.c.h.b16 %v567
        %v835 = vunpack.c.l.b16 %v568
        %v836 = vunpack.c.h.b16 %v568
        %v837 = vunpack.c.l.b16 %v569
        %v838 = vunpack.c.h.b16 %v569
        %v839 = vunpack.c.l.b16 %v570
        %v840 = vunpack.c.h.b16 %v570
        %v841 = vunpack.c.l.b16 %v571
        %v842 = vunpack.c.h.b16 %v571
        %v843 = vunpack.c.l.b16 %v572
        %v844 = vunpack.c.h.b16 %v572
        %v845 = vunpack.c.l.b16 %v573
        %v846 = vunpack.c.h.b16 %v573
        %v847 = vunpack.c.l.b16 %v574
        %v848 = vunpack.c.h.b16 %v574
        %v849 = vunpack.c.l.b16 %v575
        %v850 = vunpack.c.h.b16 %v575
        %v851 = vunpack.c.l.b16 %v576
        %v852 = vunpack.c.h.b16 %v576
        %v853 = vunpack.c.l.b16 %v577
        %v854 = vunpack.c.h.b16 %v577
        %v855 = vunpack.c.l.b16 %v578
        %v856 = vunpack.c.h.b16 %v578
        %v857 = vunpack.c.l.b16 %v579
        %v858 = vunpack.c.h.b16 %v579
        %v859 = vunpack.c.l.b16 %v580
        %v860 = vunpack.c.h.b16 %v580
        %v861 = vunpack.c.l.b16 %v581
        %v862 = vunpack.c.h.b16 %v581
        %v863 = vunpack.c.l.b16 %v582
        %v864 = vunpack.c.h.b16 %v582
        %v865 = vunpack.c.l.b16 %v583
        %v866 = vunpack.c.h.b16 %v583
        %v867 = vunpack.c.l.b16 %v584
        %v868 = vunpack.c.h.b16 %v584
        %v869 = vunpack.c.l.b16 %v585
        %v870 = vunpack.c.h.b16 %v585
        %v871 = vunpack.c.l.b16 %v586
        %v872 = vunpack.c.h.b16 %v586
        %v873 = vunpack.c.l.b16 %v587
        %v874 = vunpack.c.h.b16 %v587
        %v875 = vunpack.c.l.b16 %v588
        %v876 = vunpack.c.h.b16 %v588
        %v877 = vunpack.c.l.b16 %v589
        %v878 = vunpack.c.h.b16 %v589
        %v879 = vunpack.c.l.b16 %v590
        %v880 = vunpack.c.h.b16 %v590
        %v881 = vunpack.c.l.b16 %v591
        %v882 = vunpack.c.h.b16 %v591
        %v883 = vunpack.c.l.b16 %v592
        %v884 = vunpack.c.h.b16 %v592
        %v885 = vunpack.c.l.b16 %v593
        %v886 = vunpack.c.h.b16 %v593
        %v887 = vunpack.c.l.b16 %v594
        %v888 = vunpack.c.h.b16 %v594
        %v889 = vunpack.c.l.b16 %v595
        %v890 = vunpack.c.h.b16 %v595
        %v891 = vunpack.c.l.b16 %v596
        %v892 = vunpack.c.h.b16 %v596
        %v893 = vunpack.c.l.b16 %v597
        %v894 = vunpack.c.h.b16 %v597
        %v895 = vunpack.c.l.b16 %v598
        %v896 = vunpack.c.h.b16 %v598
        %v897 = vunpack.c.l.b16 %v599
        %v898 = vunpack.c.h.b16 %v599
        %v899 = vunpack.c.l.b16 %v600
        %v900 = vunpack.c.h.b16 %v600
        %v901 = vunpack.c.l.b16 %v601
        %v902 = vunpack.c.h.b16 %v601
        %v903 = vunpack.c.l.b16 %v602
        %v904 = vunpack.c.h.b16 %v602
        %v905 = vunpack.c.l.b16 %v603
        %v906 = vunpack.c.h.b16 %v603
        %v907 = vunpack.c.l.b16 %v604
        %v908 = vunpack.c.h.b16 %v604
        %v909 = vunpack.c.l.b16 %v605
        %v910 = vunpack.c.h.b16 %v605
        %v911 = vunpack.c.l.b16 %v606
        %v912 = vunpack.c.h.b16 %v606
        %v913 = vunpack.c.l.b16 %v607
        %v914 = vunpack.c.h.b16 %v607
        %v915 = vunpack.c.l.b16 %v608
        %v916 = vunpack.c.h.b16 %v608
        %v917 = vunpack.c.l.b16 %v609
        %v918 = vunpack.c.h.b16 %v609
        %v919 = vunpack.c.l.b16 %v610
        %v920 = vunpack.c.h.b16 %v610
        %v921 = vunpack.c.l.b16 %v611
        %v922 = vunpack.c.h.b16 %v611
        %v923 = vunpack.c.l.b16 %v612
        %v924 = vunpack.c.h.b16 %v612
        %v925 = vunpack.c.l.b16 %v613
        %v926 = vunpack.c.h.b16 %v613
        %v927 = vunpack.c.l.b16 %v614
        %v928 = vunpack.c.h.b16 %v614
        %v929 = vunpack.c.l.b16 %v615
        %v930 = vunpack.c.h.b16 %v615
        %v931 = vunpack.c.l.b16 %v616
        %v932 = vunpack.c.h.b16 %v616
        %v933 = vunpack.c.l.b16 %v617
        %v934 = vunpack.c.h.b16 %v617
        %v935 = vunpack.c.l.b16 %v618
        %v936 = vunpack.c.h.b16 %v618
        %v937 = vunpack.c.l.b16 %v619
        %v938 = vunpack.c.h.b16 %v619
        %v939 = vunpack.c.l.b16 %v620
        %v940 = vunpack.c.h.b16 %v620
        %v941 = vunpack.c.l.b16 %v621
        %v942 = vunpack.c.h.b16 %v621
        %v943 = vunpack.c.l.b16 %v622
        %v944 = vunpack.c.h.b16 %v622
        %v945 = vunpack.c.l.b16 %v623
        %v946 = vunpack.c.h.b16 %v623
        %v947 = vunpack.c.l.b16 %v624
        %v948 = vunpack.c.h.b16 %v624
        %v949 = vunpack.c.l.b16 %v625
        %v950 = vunpack.c.h.b16 %v625
        %v951 = vunpack.c.l.b16 %v626
        %v952 = vunpack.c.h.b16 %v626
        %v953 = vunpack.c.l.b16 %v627
        %v954 = vunpack.c.h.b16 %v627
        %v955 = vunpack.c.l.b16 %v628
        %v956 = vunpack.c.h.b16 %v628
        %v957 = vunpack.c.l.b16 %v629
        %v958 = vunpack.c.h.b16 %v629
        %v959 = vunpack.c.l.b16 %v630
        %v960 = vunpack.c.h.b16 %v630
        %v961 = vpack.c.b16 %v775, %v769
        %v962 = vpack.c.b16 %v776, %v770
        %v963 = vpack.c.b16 %v777, %v771
        %v964 = vpack.c.b16 %v778, %v772
        %v965 = vpack.c.b16 %v779, %v773
        %v966 = vpack.c.b16 %v780, %v774
        %v967 = vpack.c.b16 %v787, %v781
        %v968 = vpack.c.b16 %v788, %v782
        %v969 = vpack.c.b16 %v789, %v783
        %v970 = vpack.c.b16 %v790, %v784
        %v971 = vpack.c.b16 %v791, %v785
        %v972 = vpack.c.b16 %v792, %v786
        %v973 = vpack.c.b16 %v799, %v793
        %v974 = vpack.c.b16 %v800, %v794
        %v975 = vpack.c.b16 %v801, %v795
        %v976 = vpack.c.b16 %v802, %v796
        %v977 = vpack.c.b16 %v803, %v797
        %v978 = vpack.c.b16 %v804, %v798
        %v979 = vpack.c.b16 %v811, %v805
        %v980 = vpack.c.b16 %v812, %v806
        %v981 = vpack.c.b16 %v813, %v807
        %v982 = vpack.c.b16 %v814, %v808
        %v983 = vpack.c.b16 %v815, %v809
        %v984 = vpack.c.b16 %v816, %v810
        %v985 = vpack.c.b16 %v823, %v817
        %v986 = vpack.c.b16 %v824, %v818
        %v987 = vpack.c.b16 %v825, %v819
        %v988 = vpack.c.b16 %v826, %v820
        %v989 = vpack.c.b16 %v827, %v821
        %v990 = vpack.c.b16 %v828, %v822
        %v991 = vpack.c.b16 %v835, %v829
        %v992 = vpack.c.b16 %v836, %v830
        %v993 = vpack.c.b16 %v837, %v831
        %v994 = vpack.c.b16 %v838, %v832
        %v995 = vpack.c.b16 %v839, %v833
        %v996 = vpack.c.b16 %v840, %v834
        %v997 = vpack.c.b16 %v847, %v841
        %v998 = vpack.c.b16 %v848, %v842
        %v999 = vpack.c.b16 %v849, %v843
        %v1000 = vpack.c.b16 %v850, %v844
        %v1001 = vpack.c.b16 %v851, %v845
        %v1002 = vpack.c.b16 %v852, %v846
        %v1003 = vpack.c.b16 %v859, %v853
        %v1004 = vpack.c.b16 %v860, %v854
        %v1005 = vpack.c.b16 %v861, %v855
        %v1006 = vpack.c.b16 %v862, %v856
        %v1007 = vpack.c.b16 %v863, %v857
        %v1008 = vpack.c.b16 %v864, %v858
        %v1009 = vpack.c.b16 %v871, %v865
        %v1010 = vpack.c.b16 %v872, %v866
        %v1011 = vpack.c.b16 %v873, %v867
        %v1012 = vpack.c.b16 %v874, %v868
        %v1013 = vpack.c.b16 %v875, %v869
        %v1014 = vpack.c.b16 %v876, %v870
        %v1015 = vpack.c.b16 %v883, %v877
        %v1016 = vpack.c.b16 %v884, %v878
        %v1017 = vpack.c.b16 %v885, %v879
        %v1018 = vpack.c.b16 %v886, %v880
        %v1019 = vpack.c.b16 %v887, %v881
        %v1020 = vpack.c.b16 %v888, %v882
        %v1021 = vpack.c.b16 %v895, %v889
        %v1022 = vpack.c.b16 %v896, %v890
        %v1023 = vpack.c.b16 %v897, %v891
        %v1024 = vpack.c.b16 %v898, %v892
        %v1025 = vpack.c.b16 %v899, %v893
        %v1026 = vpack.c.b16 %v900, %v894
        %v1027 = vpack.c.b16 %v907, %v901
        %v1028 = vpack.c.b16 %v908, %v902
        %v1029 = vpack.c.b16 %v909, %v903
        %v1030 = vpack.c.b16 %v910, %v904
        %v1031 = vpack.c.b16 %v911, %v905
        %v1032 = vpack.c.b16 %v912, %v906
        %v1033 = vpack.c.b16 %v919, %v913
        %v1034 = vpack.c.b16 %v920, %v914
        %v1035 = vpack.c.b16 %v921, %v915
        %v1036 = vpack.c.b16 %v922, %v916
        %v1037 = vpack.c.b16 %v923, %v917
        %v1038 = vpack.c.b16 %v924, %v918
        %v1039 = vpack.c.b16 %v931, %v925
        %v1040 = vpack.c.b16 %v932, %v926
        %v1041 = vpack.c.b16 %v933, %v927
        %v1042 = vpack.c.b16 %v934, %v928
        %v1043 = vpack.c.b16 %v935, %v929
        %v1044 = vpack.c.b16 %v936, %v930
        %v1045 = vpack.c.b16 %v943, %v937
        %v1046 = vpack.c.b16 %v944, %v938
        %v1047 = vpack.c.b16 %v945, %v939
        %v1048 = vpack.c.b16 %v946, %v940
        %v1049 = vpack.c.b16 %v947, %v941
        %v1050 = vpack.c.b16 %v948, %v942
        %v1051 = vpack.c.b16 %v955, %v949
        %v1052 = vpack.c.b16 %v956, %v950
        %v1053 = vpack.c.b16 %v957, %v951
        %v1054 = vpack.c.b16 %v958, %v952
        %v1055 = vpack.c.b16 %v959, %v953
        %v1056 = vpack.c.b16 %v960, %v954
        %1153 = vmatprep.subr.bf16.mxu0 %v962
        %1154 = vmatpush1.bf16.msra.mxu0 %v961
        %1155 = vmatprep.subr.bf16.mxu0 %v968
        %1156 = vmatpush1.bf16.msra.mxu0 %v967
        %1157 = vmatprep.subr.bf16.mxu0 %v974
        %1158 = vmatpush1.bf16.msra.mxu0 %v973
        %1159 = vmatprep.subr.bf16.mxu0 %v980
        %1160 = vmatpush1.bf16.msra.mxu0 %v979
        %1161 = vmatprep.subr.bf16.mxu0 %v986
        %1162 = vmatpush1.bf16.msra.mxu0 %v985
        %1163 = vmatprep.subr.bf16.mxu0 %v992
        %1164 = vmatpush1.bf16.msra.mxu0 %v991
        %1165 = vmatprep.subr.bf16.mxu0 %v998
        %1166 = vmatpush1.bf16.msra.mxu0 %v997
        %1167 = vmatprep.subr.bf16.mxu0 %v1004
        %1168 = vmatpush1.bf16.msra.mxu0 %v1003
        %1169 = vmatprep.subr.bf16.mxu0 %v1010
        %1170 = vmatpush1.bf16.msra.mxu0 %v1009
        %1171 = vmatprep.subr.bf16.mxu0 %v1016
        %1172 = vmatpush1.bf16.msra.mxu0 %v1015
        %1173 = vmatprep.subr.bf16.mxu0 %v1022
        %1174 = vmatpush1.bf16.msra.mxu0 %v1021
        %1175 = vmatprep.subr.bf16.mxu0 %v1028
        %1176 = vmatpush1.bf16.msra.mxu0 %v1027
        %1177 = vmatprep.subr.bf16.mxu0 %v1034
        %1178 = vmatpush1.bf16.msra.mxu0 %v1033
        %1179 = vmatprep.subr.bf16.mxu0 %v1040
        %1180 = vmatpush1.bf16.msra.mxu0 %v1039
        %1181 = vmatprep.subr.bf16.mxu0 %v1046
        %1182 = vmatpush1.bf16.msra.mxu0 %v1045
        %1183 = vmatprep.subr.bf16.mxu0 %v1052
        %1184 = vmatpush1.bf16.msra.mxu0 %v1051
        %1185 = vmatprep.mubr.bf16.mxu0 %v670
        %1186 = vmatmul.mubr.bf16.gmra.mrb[0].mxu0 %v669
        %v1187 = vpop.f32.mrb[0].mxu0
        %v1188 = vadd.f32 %v636, %v1187
        %v1189 = vpop.f32.mrb[0].mxu0
        %v1190 = vadd.f32 %v640, %v1189
        %v1191 = vpop.f32.mrb[0].mxu0
        %v1192 = vadd.f32 %v636, %v1191
        %v1193 = vpop.f32.mrb[0].mxu0
        %v1194 = vadd.f32 %v640, %v1193
        %1195 = vdwg.mxu0
        %1196 = vmatprep.subr.bf16.mxu0 %v964
        %1197 = vmatpush1.bf16.msra.mxu0 %v963
        %1198 = vmatprep.subr.bf16.mxu0 %v970
        %1199 = vmatpush1.bf16.msra.mxu0 %v969
        %1200 = vmatprep.subr.bf16.mxu0 %v976
        %1201 = vmatpush1.bf16.msra.mxu0 %v975
        %1202 = vmatprep.subr.bf16.mxu0 %v982
        %1203 = vmatpush1.bf16.msra.mxu0 %v981
        %1204 = vmatprep.subr.bf16.mxu0 %v988
        %1205 = vmatpush1.bf16.msra.mxu0 %v987
        %1206 = vmatprep.subr.bf16.mxu0 %v994
        %1207 = vmatpush1.bf16.msra.mxu0 %v993
        %1208 = vmatprep.subr.bf16.mxu0 %v1000
        %1209 = vmatpush1.bf16.msra.mxu0 %v999
        %1210 = vmatprep.subr.bf16.mxu0 %v1006
        %1211 = vmatpush1.bf16.msra.mxu0 %v1005
        %1212 = vmatprep.subr.bf16.mxu0 %v1012
        %1213 = vmatpush1.bf16.msra.mxu0 %v1011
        %1214 = vmatprep.subr.bf16.mxu0 %v1018
        %1215 = vmatpush1.bf16.msra.mxu0 %v1017
        %1216 = vmatprep.subr.bf16.mxu0 %v1024
        %1217 = vmatpush1.bf16.msra.mxu0 %v1023
        %1218 = vmatprep.subr.bf16.mxu0 %v1030
        %1219 = vmatpush1.bf16.msra.mxu0 %v1029
        %1220 = vmatprep.subr.bf16.mxu0 %v1036
        %1221 = vmatpush1.bf16.msra.mxu0 %v1035
        %1222 = vmatprep.subr.bf16.mxu0 %v1042
        %1223 = vmatpush1.bf16.msra.mxu0 %v1041
        %1224 = vmatprep.subr.bf16.mxu0 %v1048
        %1225 = vmatpush1.bf16.msra.mxu0 %v1047
        %1226 = vmatprep.subr.bf16.mxu0 %v1054
        %1227 = vmatpush1.bf16.msra.mxu0 %v1053
        %1228 = vmatprep.mubr.bf16.mxu0 %v670
        %1229 = vmatmul.mubr.bf16.gmra.mrb[0].mxu0 %v669
        %v1230 = vpop.f32.mrb[0].mxu0
        %v1231 = vadd.f32 %v644, %v1230
        %v1232 = vpop.f32.mrb[0].mxu0
        %v1233 = vadd.f32 %v648, %v1232
        %v1234 = vpop.f32.mrb[0].mxu0
        %v1235 = vadd.f32 %v644, %v1234
        %v1236 = vpop.f32.mrb[0].mxu0
        %v1237 = vadd.f32 %v648, %v1236
        %1238 = vdwg.mxu0
        %1239 = vmatprep.subr.bf16.mxu0 %v966
        %1240 = vmatpush1.bf16.msra.mxu0 %v965
        %1241 = vmatprep.subr.bf16.mxu0 %v972
        %1242 = vmatpush1.bf16.msra.mxu0 %v971
        %1243 = vmatprep.subr.bf16.mxu0 %v978
        %1244 = vmatpush1.bf16.msra.mxu0 %v977
        %1245 = vmatprep.subr.bf16.mxu0 %v984
        %1246 = vmatpush1.bf16.msra.mxu0 %v983
        %1247 = vmatprep.subr.bf16.mxu0 %v990
        %1248 = vmatpush1.bf16.msra.mxu0 %v989
        %1249 = vmatprep.subr.bf16.mxu0 %v996
        %1250 = vmatpush1.bf16.msra.mxu0 %v995
        %1251 = vmatprep.subr.bf16.mxu0 %v1002
        %1252 = vmatpush1.bf16.msra.mxu0 %v1001
        %1253 = vmatprep.subr.bf16.mxu0 %v1008
        %1254 = vmatpush1.bf16.msra.mxu0 %v1007
        %1255 = vmatprep.subr.bf16.mxu0 %v1014
        %1256 = vmatpush1.bf16.msra.mxu0 %v1013
        %1257 = vmatprep.subr.bf16.mxu0 %v1020
        %1258 = vmatpush1.bf16.msra.mxu0 %v1019
        %1259 = vmatprep.subr.bf16.mxu0 %v1026
        %1260 = vmatpush1.bf16.msra.mxu0 %v1025
        %1261 = vmatprep.subr.bf16.mxu0 %v1032
        %1262 = vmatpush1.bf16.msra.mxu0 %v1031
        %1263 = vmatprep.subr.bf16.mxu0 %v1038
        %1264 = vmatpush1.bf16.msra.mxu0 %v1037
        %1265 = vmatprep.subr.bf16.mxu0 %v1044
        %1266 = vmatpush1.bf16.msra.mxu0 %v1043
        %1267 = vmatprep.subr.bf16.mxu0 %v1050
        %1268 = vmatpush1.bf16.msra.mxu0 %v1049
        %1269 = vmatprep.subr.bf16.mxu0 %v1056
        %1270 = vmatpush1.bf16.msra.mxu0 %v1055
        %1271 = vmatprep.mubr.bf16.mxu0 %v670
        %1272 = vmatmul.mubr.bf16.gmra.mrb[0].mxu0 %v669
        %v1273 = vpop.f32.mrb[0].mxu0
        %v1274 = vadd.f32 %v652, %v1273
        %v1275 = vpop.f32.mrb[0].mxu0
        %v1276 = vadd.f32 %v656, %v1275
        %v1277 = vpop.f32.mrb[0].mxu0
        %v1278 = vadd.f32 %v652, %v1277
        %v1279 = vpop.f32.mrb[0].mxu0
        %v1280 = vadd.f32 %v656, %v1279
        %1281 = vdwg.mxu0
        %v1282 = vmul.f32 %v1188, 0.125
        %v1283 = vmul.f32 %v1190, 0.125
        %v1284 = vmul.f32 %v1192, 0.125
        %v1285 = vmul.f32 %v1194, 0.125
        %v1286 = vld [vmem:[%s13] sm:$0xf]
        %v1287 = vld [vmem:[%s13 + $0x4] sm:$0xf]
        %v1288 = vld [vmem:[%s13 + $0x8] sm:$0xf]
        %v1289 = vld [vmem:[%s13 + $0xc] sm:$0xf]
        %v1290 = vld [vmem:[%s13 + $0x10] sm:$0xf]
        %v1291 = vld [vmem:[%s13 + $0x14] sm:$0xf]
        %v1292 = vld [vmem:[%s13 + $0x18] sm:$0xf]
        %v1293 = vld [vmem:[%s13 + $0x1c] sm:$0xf]
        %v1294 = vld [vmem:[%s13 + $0x20] sm:$0xf]
        %v1295 = vld [vmem:[%s13 + $0x24] sm:$0xf]
        %v1296 = vld [vmem:[%s13 + $0x28] sm:$0xf]
        %v1297 = vld [vmem:[%s13 + $0x2c] sm:$0xf]
        %v1298 = vld [vmem:[%s13 + $0x30] sm:$0xf]
        %v1299 = vld [vmem:[%s13 + $0x34] sm:$0xf]
        %v1300 = vld [vmem:[%s13 + $0x38] sm:$0xf]
        %v1301 = vld [vmem:[%s13 + $0x3c] sm:$0xf]
        %v1302 = vld [vmem:[%s13 + $0x40] sm:$0xf]
        %v1303 = vld [vmem:[%s13 + $0x44] sm:$0xf]
        %v1304 = vld [vmem:[%s13 + $0x48] sm:$0xf]
        %v1305 = vld [vmem:[%s13 + $0x4c] sm:$0xf]
        %v1306 = vld [vmem:[%s13 + $0x50] sm:$0xf]
        %v1307 = vld [vmem:[%s13 + $0x54] sm:$0xf]
        %v1308 = vld [vmem:[%s13 + $0x58] sm:$0xf]
        %v1309 = vld [vmem:[%s13 + $0x5c] sm:$0xf]
        %v1310 = vld [vmem:[%s13 + $0x60] sm:$0xf]
        %v1311 = vld [vmem:[%s13 + $0x64] sm:$0xf]
        %v1312 = vld [vmem:[%s13 + $0x68] sm:$0xf]
        %v1313 = vld [vmem:[%s13 + $0x6c] sm:$0xf]
        %v1314 = vld [vmem:[%s13 + $0x70] sm:$0xf]
        %v1315 = vld [vmem:[%s13 + $0x74] sm:$0xf]
        %v1316 = vld [vmem:[%s13 + $0x78] sm:$0xf]
        %v1317 = vld [vmem:[%s13 + $0x7c] sm:$0xf]
        %v1318 = vld [vmem:[%s14] sm:$0xf]
        %v1319 = vmul.f32 %v1282, %v1231
        %v1320 = vmul.f32 %v1283, %v1233
        %v1321 = vpack.c.bf16 %v1319, %v1319
        %v1322 = vpack.c.bf16 %v1320, %v1320
        %v1355 = vunpack.c.l.b16 %v1286
        %v1356 = vunpack.c.l.b16 %v1287
        %v1357 = vunpack.c.l.b16 %v1288
        %v1358 = vunpack.c.l.b16 %v1289
        %v1359 = vunpack.c.l.b16 %v1290
        %v1360 = vunpack.c.l.b16 %v1291
        %v1361 = vunpack.c.l.b16 %v1292
        %v1362 = vunpack.c.l.b16 %v1293
        %v1363 = vunpack.c.l.b16 %v1294
        %v1364 = vunpack.c.l.b16 %v1295
        %v1365 = vunpack.c.l.b16 %v1296
        %v1366 = vunpack.c.l.b16 %v1297
        %v1367 = vunpack.c.l.b16 %v1298
        %v1368 = vunpack.c.l.b16 %v1299
        %v1369 = vunpack.c.l.b16 %v1300
        %v1370 = vunpack.c.l.b16 %v1301
        %v1371 = vunpack.c.l.b16 %v1302
        %v1372 = vunpack.c.l.b16 %v1303
        %v1373 = vunpack.c.l.b16 %v1304
        %v1374 = vunpack.c.l.b16 %v1305
        %v1375 = vunpack.c.l.b16 %v1306
        %v1376 = vunpack.c.l.b16 %v1307
        %v1377 = vunpack.c.l.b16 %v1308
        %v1378 = vunpack.c.l.b16 %v1309
        %v1379 = vunpack.c.l.b16 %v1310
        %v1380 = vunpack.c.l.b16 %v1311
        %v1381 = vunpack.c.l.b16 %v1312
        %v1382 = vunpack.c.l.b16 %v1313
        %v1383 = vunpack.c.l.b16 %v1314
        %v1384 = vunpack.c.l.b16 %v1315
        %v1385 = vunpack.c.l.b16 %v1316
        %v1386 = vunpack.c.l.b16 %v1317
        %v1387 = vpack.c.b16 %v1356, %v1355
        %v1388 = vpack.c.b16 %v1358, %v1357
        %v1389 = vpack.c.b16 %v1360, %v1359
        %v1390 = vpack.c.b16 %v1362, %v1361
        %v1391 = vpack.c.b16 %v1364, %v1363
        %v1392 = vpack.c.b16 %v1366, %v1365
        %v1393 = vpack.c.b16 %v1368, %v1367
        %v1394 = vpack.c.b16 %v1370, %v1369
        %v1395 = vpack.c.b16 %v1372, %v1371
        %v1396 = vpack.c.b16 %v1374, %v1373
        %v1397 = vpack.c.b16 %v1376, %v1375
        %v1398 = vpack.c.b16 %v1378, %v1377
        %v1399 = vpack.c.b16 %v1380, %v1379
        %v1400 = vpack.c.b16 %v1382, %v1381
        %v1401 = vpack.c.b16 %v1384, %v1383
        %v1402 = vpack.c.b16 %v1386, %v1385
        %1419 = vmatprep.subr.bf16.mxu0 0
        %1420 = vmatpush1.bf16.msra.mxu0 %v1387
        %1421 = vmatprep.subr.bf16.mxu0 0
        %1422 = vmatpush1.bf16.msra.mxu0 %v1388
        %1423 = vmatprep.subr.bf16.mxu0 0
        %1424 = vmatpush1.bf16.msra.mxu0 %v1389
        %1425 = vmatprep.subr.bf16.mxu0 0
        %1426 = vmatpush1.bf16.msra.mxu0 %v1390
        %1427 = vmatprep.subr.bf16.mxu0 0
        %1428 = vmatpush1.bf16.msra.mxu0 %v1391
        %1429 = vmatprep.subr.bf16.mxu0 0
        %1430 = vmatpush1.bf16.msra.mxu0 %v1392
        %1431 = vmatprep.subr.bf16.mxu0 0
        %1432 = vmatpush1.bf16.msra.mxu0 %v1393
        %1433 = vmatprep.subr.bf16.mxu0 0
        %1434 = vmatpush1.bf16.msra.mxu0 %v1394
        %1435 = vmatprep.subr.bf16.mxu0 0
        %1436 = vmatpush1.bf16.msra.mxu0 %v1395
        %1437 = vmatprep.subr.bf16.mxu0 0
        %1438 = vmatpush1.bf16.msra.mxu0 %v1396
        %1439 = vmatprep.subr.bf16.mxu0 0
        %1440 = vmatpush1.bf16.msra.mxu0 %v1397
        %1441 = vmatprep.subr.bf16.mxu0 0
        %1442 = vmatpush1.bf16.msra.mxu0 %v1398
        %1443 = vmatprep.subr.bf16.mxu0 0
        %1444 = vmatpush1.bf16.msra.mxu0 %v1399
        %1445 = vmatprep.subr.bf16.mxu0 0
        %1446 = vmatpush1.bf16.msra.mxu0 %v1400
        %1447 = vmatprep.subr.bf16.mxu0 0
        %1448 = vmatpush1.bf16.msra.mxu0 %v1401
        %1449 = vmatprep.subr.bf16.mxu0 0
        %1450 = vmatpush1.bf16.msra.mxu0 %v1402
        %1451 = vmatprep.mubr.bf16.mxu0 %v1322
        %1452 = vmatmul.mubr.bf16.gmra.mrb[0].mxu0 %v1321
        %v1453 = vpop.f32.mrb[0].mxu0
        %v1454 = vadd.f32 0.0, %v1453
        %v1455 = vpop.f32.mrb[0].mxu0
        %v1456 = vpop.f32.mrb[0].mxu0
        %v1457 = vpop.f32.mrb[0].mxu0
        %1458 = vdwg.mxu0
        %v1459 = vmul.f32 %v1282, %v1235
        %v1460 = vmul.f32 %v1283, %v1237
        %v1461 = vpack.c.bf16 %v1459, %v1459
        %v1462 = vpack.c.bf16 %v1460, %v1460
        %1463 = vmatprep.subr.bf16.mxu0 0
        %1464 = vmatpush1.bf16.msra.mxu0 %v1387
        %1465 = vmatprep.subr.bf16.mxu0 0
        %1466 = vmatpush1.bf16.msra.mxu0 %v1388
        %1467 = vmatprep.subr.bf16.mxu0 0
        %1468 = vmatpush1.bf16.msra.mxu0 %v1389
        %1469 = vmatprep.subr.bf16.mxu0 0
        %1470 = vmatpush1.bf16.msra.mxu0 %v1390
        %1471 = vmatprep.subr.bf16.mxu0 0
        %1472 = vmatpush1.bf16.msra.mxu0 %v1391
        %1473 = vmatprep.subr.bf16.mxu0 0
        %1474 = vmatpush1.bf16.msra.mxu0 %v1392
        %1475 = vmatprep.subr.bf16.mxu0 0
        %1476 = vmatpush1.bf16.msra.mxu0 %v1393
        %1477 = vmatprep.subr.bf16.mxu0 0
        %1478 = vmatpush1.bf16.msra.mxu0 %v1394
        %1479 = vmatprep.subr.bf16.mxu0 0
        %1480 = vmatpush1.bf16.msra.mxu0 %v1395
        %1481 = vmatprep.subr.bf16.mxu0 0
        %1482 = vmatpush1.bf16.msra.mxu0 %v1396
        %1483 = vmatprep.subr.bf16.mxu0 0
        %1484 = vmatpush1.bf16.msra.mxu0 %v1397
        %1485 = vmatprep.subr.bf16.mxu0 0
        %1486 = vmatpush1.bf16.msra.mxu0 %v1398
        %1487 = vmatprep.subr.bf16.mxu0 0
        %1488 = vmatpush1.bf16.msra.mxu0 %v1399
        %1489 = vmatprep.subr.bf16.mxu0 0
        %1490 = vmatpush1.bf16.msra.mxu0 %v1400
        %1491 = vmatprep.subr.bf16.mxu0 0
        %1492 = vmatpush1.bf16.msra.mxu0 %v1401
        %1493 = vmatprep.subr.bf16.mxu0 0
        %1494 = vmatpush1.bf16.msra.mxu0 %v1402
        %1495 = vmatprep.mubr.bf16.mxu0 %v1462
        %1496 = vmatmul.mubr.bf16.gmra.mrb[0].mxu0 %v1461
        %v1497 = vpop.f32.mrb[0].mxu0
        %v1498 = vadd.f32 0.0, %v1497
        %v1499 = vpop.f32.mrb[0].mxu0
        %v1500 = vpop.f32.mrb[0].mxu0
        %v1501 = vpop.f32.mrb[0].mxu0
        %1502 = vdwg.mxu0
        %v1503 = vmax.f32 %v1454, %v1498
        %v1504 = vsub.f32 %v1454, %v1503
        %v1505 = vmul.f32 %v1504, 1.442695
        %v1506 = vpow.pop %v1505
        %v1507 = vsub.f32 %v1498, %v1503
        %v1508 = vmul.f32 %v1507, 1.442695
        %v1509 = vpow.pop %v1508
        %v1510 = vadd.f32 %v1506, %v1509
        %v1511 = vrcp.pop %v1510
        %v1512 = vmul.f32 1.0, %v1511
        %v1513 = vmul.f32 %v1506, %v1512
        %v1514 = vpack.c.bf16 %v1513, %v1513
        %v1517 = vunpack.c.l.s4 1983009808
        %v1518 = vunpack.c.0.s8 %v1517
        %v1519 = vlaneseq
        %v1520 = vshrl.u32 %v1519, 7
        %v1521 = vsub.s32 %v1518, %v1520
        %v1522 = vrot.slane %v1318, %v1521
        %v1523 = vcombine.high %v1522, %v1522
        %vm1524 = vcmask 31744
        %v1526 = vsel %vm1524, %v1514, 0
        %vm1528 = vcmask 1041408
        %v1530 = vsel %vm1528, %v1522, 0
        %v1533 = vsel %vm1528, %v1523, 0
        %1535 = vmatprep.subr.bf16.mxu0 %v1533
        %1536 = vmatpush1.bf16.msra.mxu0 %v1530
        %1537 = vmatprep.subr.bf16.mxu0 0
        %1538 = vmatpush1.bf16.msra.mxu0 0
        %1539 = vmatprep.subr.bf16.mxu0 0
        %1540 = vmatpush1.bf16.msra.mxu0 0
        %1541 = vmatprep.subr.bf16.mxu0 0
        %1542 = vmatpush1.bf16.msra.mxu0 0
        %1543 = vmatprep.subr.bf16.mxu0 0
        %1544 = vmatpush1.bf16.msra.mxu0 0
        %1545 = vmatprep.subr.bf16.mxu0 0
        %1546 = vmatpush1.bf16.msra.mxu0 0
        %1547 = vmatprep.subr.bf16.mxu0 0
        %1548 = vmatpush1.bf16.msra.mxu0 0
        %1549 = vmatprep.subr.bf16.mxu0 0
        %1550 = vmatpush1.bf16.msra.mxu0 0
        %1551 = vmatprep.subr.bf16.mxu0 0
        %1552 = vmatpush1.bf16.msra.mxu0 0
        %1553 = vmatprep.subr.bf16.mxu0 0
        %1554 = vmatpush1.bf16.msra.mxu0 0
        %1555 = vmatprep.subr.bf16.mxu0 0
        %1556 = vmatpush1.bf16.msra.mxu0 0
        %1557 = vmatprep.subr.bf16.mxu0 0
        %1558 = vmatpush1.bf16.msra.mxu0 0
        %1559 = vmatprep.subr.bf16.mxu0 0
        %1560 = vmatpush1.bf16.msra.mxu0 0
        %1561 = vmatprep.subr.bf16.mxu0 0
        %1562 = vmatpush1.bf16.msra.mxu0 0
        %1563 = vmatprep.subr.bf16.mxu0 0
        %1564 = vmatpush1.bf16.msra.mxu0 0
        %1565 = vmatprep.subr.bf16.mxu0 0
        %1566 = vmatpush1.bf16.msra.mxu0 0
        %1567 = vmatprep.mubr.bf16.mxu0 0
        %1568 = vmatmul.mubr.bf16.gmra.mrb[0].mxu0 %v1526
        %v1569 = vpop.f32.mrb[0].mxu0
        %v1570 = vadd.f32 0.0, %v1569
        %v1571 = vpop.f32.mrb[0].mxu0
        %v1572 = vadd.f32 0.0, %v1571
        %v1573 = vpop.f32.mrb[0].mxu0
        %v1574 = vpop.f32.mrb[0].mxu0
        %1575 = vdwg.mxu0
        %v1576 = vmul.f32 %v1570, %v1274
        %v1577 = vmul.f32 %v1572, %v1276
        %v1578 = vmul.f32 %v1509, %v1512
        %v1579 = vpack.c.bf16 %v1578, %v1578
        %v1581 = vsel %vm1524, %v1579, 0
        %1583 = vmatprep.subr.bf16.mxu0 %v1533
        %1584 = vmatpush1.bf16.msra.mxu0 %v1530
        %1585 = vmatprep.subr.bf16.mxu0 0
        %1586 = vmatpush1.bf16.msra.mxu0 0
        %1587 = vmatprep.subr.bf16.mxu0 0
        %1588 = vmatpush1.bf16.msra.mxu0 0
        %1589 = vmatprep.subr.bf16.mxu0 0
        %1590 = vmatpush1.bf16.msra.mxu0 0
        %1591 = vmatprep.subr.bf16.mxu0 0
        %1592 = vmatpush1.bf16.msra.mxu0 0
        %1593 = vmatprep.subr.bf16.mxu0 0
        %1594 = vmatpush1.bf16.msra.mxu0 0
        %1595 = vmatprep.subr.bf16.mxu0 0
        %1596 = vmatpush1.bf16.msra.mxu0 0
        %1597 = vmatprep.subr.bf16.mxu0 0
        %1598 = vmatpush1.bf16.msra.mxu0 0
        %1599 = vmatprep.subr.bf16.mxu0 0
        %1600 = vmatpush1.bf16.msra.mxu0 0
        %1601 = vmatprep.subr.bf16.mxu0 0
        %1602 = vmatpush1.bf16.msra.mxu0 0
        %1603 = vmatprep.subr.bf16.mxu0 0
        %1604 = vmatpush1.bf16.msra.mxu0 0
        %1605 = vmatprep.subr.bf16.mxu0 0
        %1606 = vmatpush1.bf16.msra.mxu0 0
        %1607 = vmatprep.subr.bf16.mxu0 0
        %1608 = vmatpush1.bf16.msra.mxu0 0
        %1609 = vmatprep.subr.bf16.mxu0 0
        %1610 = vmatpush1.bf16.msra.mxu0 0
        %1611 = vmatprep.subr.bf16.mxu0 0
        %1612 = vmatpush1.bf16.msra.mxu0 0
        %1613 = vmatprep.subr.bf16.mxu0 0
        %1614 = vmatpush1.bf16.msra.mxu0 0
        %1615 = vmatprep.mubr.bf16.mxu0 0
        %1616 = vmatmul.mubr.bf16.gmra.mrb[0].mxu0 %v1581
        %v1617 = vpop.f32.mrb[0].mxu0
        %v1618 = vadd.f32 0.0, %v1617
        %v1619 = vpop.f32.mrb[0].mxu0
        %v1620 = vadd.f32 0.0, %v1619
        %v1621 = vpop.f32.mrb[0].mxu0
        %v1622 = vpop.f32.mrb[0].mxu0
        %1623 = vdwg.mxu0
        %v1624 = vmul.f32 %v1618, %v1278
        %v1625 = vmul.f32 %v1620, %v1280
        %v1626 = vadd.f32 %v1576, %v1624
        %v1627 = vadd.f32 %v1577, %v1625
        %v1628 = vmul.f32 %v1284, %v1231
        %v1629 = vmul.f32 %v1285, %v1233
        %v1630 = vpack.c.bf16 %v1628, %v1628
        %v1631 = vpack.c.bf16 %v1629, %v1629
        %1632 = vmatprep.subr.bf16.mxu0 0
        %1633 = vmatpush1.bf16.msra.mxu0 %v1387
        %1634 = vmatprep.subr.bf16.mxu0 0
        %1635 = vmatpush1.bf16.msra.mxu0 %v1388
        %1636 = vmatprep.subr.bf16.mxu0 0
        %1637 = vmatpush1.bf16.msra.mxu0 %v1389
        %1638 = vmatprep.subr.bf16.mxu0 0
        %1639 = vmatpush1.bf16.msra.mxu0 %v1390
        %1640 = vmatprep.subr.bf16.mxu0 0
        %1641 = vmatpush1.bf16.msra.mxu0 %v1391
        %1642 = vmatprep.subr.bf16.mxu0 0
        %1643 = vmatpush1.bf16.msra.mxu0 %v1392
        %1644 = vmatprep.subr.bf16.mxu0 0
        %1645 = vmatpush1.bf16.msra.mxu0 %v1393
        %1646 = vmatprep.subr.bf16.mxu0 0
        %1647 = vmatpush1.bf16.msra.mxu0 %v1394
        %1648 = vmatprep.subr.bf16.mxu0 0
        %1649 = vmatpush1.bf16.msra.mxu0 %v1395
        %1650 = vmatprep.subr.bf16.mxu0 0
        %1651 = vmatpush1.bf16.msra.mxu0 %v1396
        %1652 = vmatprep.subr.bf16.mxu0 0
        %1653 = vmatpush1.bf16.msra.mxu0 %v1397
        %1654 = vmatprep.subr.bf16.mxu0 0
        %1655 = vmatpush1.bf16.msra.mxu0 %v1398
        %1656 = vmatprep.subr.bf16.mxu0 0
        %1657 = vmatpush1.bf16.msra.mxu0 %v1399
        %1658 = vmatprep.subr.bf16.mxu0 0
        %1659 = vmatpush1.bf16.msra.mxu0 %v1400
        %1660 = vmatprep.subr.bf16.mxu0 0
        %1661 = vmatpush1.bf16.msra.mxu0 %v1401
        %1662 = vmatprep.subr.bf16.mxu0 0
        %1663 = vmatpush1.bf16.msra.mxu0 %v1402
        %1664 = vmatprep.mubr.bf16.mxu0 %v1631
        %1665 = vmatmul.mubr.bf16.gmra.mrb[0].mxu0 %v1630
        %v1666 = vpop.f32.mrb[0].mxu0
        %v1667 = vadd.f32 0.0, %v1666
        %v1668 = vpop.f32.mrb[0].mxu0
        %v1669 = vpop.f32.mrb[0].mxu0
        %v1670 = vpop.f32.mrb[0].mxu0
        %1671 = vdwg.mxu0
        %v1672 = vmul.f32 %v1284, %v1235
        %v1673 = vmul.f32 %v1285, %v1237
        %v1674 = vpack.c.bf16 %v1672, %v1672
        %v1675 = vpack.c.bf16 %v1673, %v1673
        %1676 = vmatprep.subr.bf16.mxu0 0
        %1677 = vmatpush1.bf16.msra.mxu0 %v1387
        %1678 = vmatprep.subr.bf16.mxu0 0
        %1679 = vmatpush1.bf16.msra.mxu0 %v1388
        %1680 = vmatprep.subr.bf16.mxu0 0
        %1681 = vmatpush1.bf16.msra.mxu0 %v1389
        %1682 = vmatprep.subr.bf16.mxu0 0
        %1683 = vmatpush1.bf16.msra.mxu0 %v1390
        %1684 = vmatprep.subr.bf16.mxu0 0
        %1685 = vmatpush1.bf16.msra.mxu0 %v1391
        %1686 = vmatprep.subr.bf16.mxu0 0
        %1687 = vmatpush1.bf16.msra.mxu0 %v1392
        %1688 = vmatprep.subr.bf16.mxu0 0
        %1689 = vmatpush1.bf16.msra.mxu0 %v1393
        %1690 = vmatprep.subr.bf16.mxu0 0
        %1691 = vmatpush1.bf16.msra.mxu0 %v1394
        %1692 = vmatprep.subr.bf16.mxu0 0
        %1693 = vmatpush1.bf16.msra.mxu0 %v1395
        %1694 = vmatprep.subr.bf16.mxu0 0
        %1695 = vmatpush1.bf16.msra.mxu0 %v1396
        %1696 = vmatprep.subr.bf16.mxu0 0
        %1697 = vmatpush1.bf16.msra.mxu0 %v1397
        %1698 = vmatprep.subr.bf16.mxu0 0
        %1699 = vmatpush1.bf16.msra.mxu0 %v1398
        %1700 = vmatprep.subr.bf16.mxu0 0
        %1701 = vmatpush1.bf16.msra.mxu0 %v1399
        %1702 = vmatprep.subr.bf16.mxu0 0
        %1703 = vmatpush1.bf16.msra.mxu0 %v1400
        %1704 = vmatprep.subr.bf16.mxu0 0
        %1705 = vmatpush1.bf16.msra.mxu0 %v1401
        %1706 = vmatprep.subr.bf16.mxu0 0
        %1707 = vmatpush1.bf16.msra.mxu0 %v1402
        %1708 = vmatprep.mubr.bf16.mxu0 %v1675
        %1709 = vmatmul.mubr.bf16.gmra.mrb[0].mxu0 %v1674
        %v1710 = vpop.f32.mrb[0].mxu0
        %v1711 = vadd.f32 0.0, %v1710
        %v1712 = vpop.f32.mrb[0].mxu0
        %v1713 = vpop.f32.mrb[0].mxu0
        %v1714 = vpop.f32.mrb[0].mxu0
        %1715 = vdwg.mxu0
        %v1716 = vmax.f32 %v1667, %v1711
        %v1717 = vsub.f32 %v1667, %v1716
        %v1718 = vmul.f32 %v1717, 1.442695
        %v1719 = vpow.pop %v1718
        %v1720 = vsub.f32 %v1711, %v1716
        %v1721 = vmul.f32 %v1720, 1.442695
        %v1722 = vpow.pop %v1721
        %v1723 = vadd.f32 %v1719, %v1722
        %v1724 = vrcp.pop %v1723
        %v1725 = vmul.f32 1.0, %v1724
        %v1726 = vmul.f32 %v1719, %v1725
        %v1727 = vpack.c.bf16 %v1726, %v1726
        %v1729 = vsel %vm1524, %v1727, 0
        %1731 = vmatprep.subr.bf16.mxu0 %v1533
        %1732 = vmatpush1.bf16.msra.mxu0 %v1530
        %1733 = vmatprep.subr.bf16.mxu0 0
        %1734 = vmatpush1.bf16.msra.mxu0 0
        %1735 = vmatprep.subr.bf16.mxu0 0
        %1736 = vmatpush1.bf16.msra.mxu0 0
        %1737 = vmatprep.subr.bf16.mxu0 0
        %1738 = vmatpush1.bf16.msra.mxu0 0
        %1739 = vmatprep.subr.bf16.mxu0 0
        %1740 = vmatpush1.bf16.msra.mxu0 0
        %1741 = vmatprep.subr.bf16.mxu0 0
        %1742 = vmatpush1.bf16.msra.mxu0 0
        %1743 = vmatprep.subr.bf16.mxu0 0
        %1744 = vmatpush1.bf16.msra.mxu0 0
        %1745 = vmatprep.subr.bf16.mxu0 0
        %1746 = vmatpush1.bf16.msra.mxu0 0
        %1747 = vmatprep.subr.bf16.mxu0 0
        %1748 = vmatpush1.bf16.msra.mxu0 0
        %1749 = vmatprep.subr.bf16.mxu0 0
        %1750 = vmatpush1.bf16.msra.mxu0 0
        %1751 = vmatprep.subr.bf16.mxu0 0
        %1752 = vmatpush1.bf16.msra.mxu0 0
        %1753 = vmatprep.subr.bf16.mxu0 0
        %1754 = vmatpush1.bf16.msra.mxu0 0
        %1755 = vmatprep.subr.bf16.mxu0 0
        %1756 = vmatpush1.bf16.msra.mxu0 0
        %1757 = vmatprep.subr.bf16.mxu0 0
        %1758 = vmatpush1.bf16.msra.mxu0 0
        %1759 = vmatprep.subr.bf16.mxu0 0
        %1760 = vmatpush1.bf16.msra.mxu0 0
        %1761 = vmatprep.subr.bf16.mxu0 0
        %1762 = vmatpush1.bf16.msra.mxu0 0
        %1763 = vmatprep.mubr.bf16.mxu0 0
        %1764 = vmatmul.mubr.bf16.gmra.mrb[0].mxu0 %v1729
        %v1765 = vpop.f32.mrb[0].mxu0
        %v1766 = vadd.f32 0.0, %v1765
        %v1767 = vpop.f32.mrb[0].mxu0
        %v1768 = vadd.f32 0.0, %v1767
        %v1769 = vpop.f32.mrb[0].mxu0
        %v1770 = vpop.f32.mrb[0].mxu0
        %1771 = vdwg.mxu0
        %v1772 = vmul.f32 %v1766, %v1274
        %v1773 = vmul.f32 %v1768, %v1276
        %v1774 = vmul.f32 %v1722, %v1725
        %v1775 = vpack.c.bf16 %v1774, %v1774
        %v1777 = vsel %vm1524, %v1775, 0
        %1779 = vmatprep.subr.bf16.mxu0 %v1533
        %1780 = vmatpush1.bf16.msra.mxu0 %v1530
        %1781 = vmatprep.subr.bf16.mxu0 0
        %1782 = vmatpush1.bf16.msra.mxu0 0
        %1783 = vmatprep.subr.bf16.mxu0 0
        %1784 = vmatpush1.bf16.msra.mxu0 0
        %1785 = vmatprep.subr.bf16.mxu0 0
        %1786 = vmatpush1.bf16.msra.mxu0 0
        %1787 = vmatprep.subr.bf16.mxu0 0
        %1788 = vmatpush1.bf16.msra.mxu0 0
        %1789 = vmatprep.subr.bf16.mxu0 0
        %1790 = vmatpush1.bf16.msra.mxu0 0
        %1791 = vmatprep.subr.bf16.mxu0 0
        %1792 = vmatpush1.bf16.msra.mxu0 0
        %1793 = vmatprep.subr.bf16.mxu0 0
        %1794 = vmatpush1.bf16.msra.mxu0 0
        %1795 = vmatprep.subr.bf16.mxu0 0
        %1796 = vmatpush1.bf16.msra.mxu0 0
        %1797 = vmatprep.subr.bf16.mxu0 0
        %1798 = vmatpush1.bf16.msra.mxu0 0
        %1799 = vmatprep.subr.bf16.mxu0 0
        %1800 = vmatpush1.bf16.msra.mxu0 0
        %1801 = vmatprep.subr.bf16.mxu0 0
        %1802 = vmatpush1.bf16.msra.mxu0 0
        %1803 = vmatprep.subr.bf16.mxu0 0
        %1804 = vmatpush1.bf16.msra.mxu0 0
        %1805 = vmatprep.subr.bf16.mxu0 0
        %1806 = vmatpush1.bf16.msra.mxu0 0
        %1807 = vmatprep.subr.bf16.mxu0 0
        %1808 = vmatpush1.bf16.msra.mxu0 0
        %1809 = vmatprep.subr.bf16.mxu0 0
        %1810 = vmatpush1.bf16.msra.mxu0 0
        %1811 = vmatprep.mubr.bf16.mxu0 0
        %1812 = vmatmul.mubr.bf16.gmra.mrb[0].mxu0 %v1777
        %v1813 = vpop.f32.mrb[0].mxu0
        %v1814 = vadd.f32 0.0, %v1813
        %v1815 = vpop.f32.mrb[0].mxu0
        %v1816 = vadd.f32 0.0, %v1815
        %v1817 = vpop.f32.mrb[0].mxu0
        %v1818 = vpop.f32.mrb[0].mxu0
        %1819 = vdwg.mxu0
        %v1820 = vmul.f32 %v1814, %v1278
        %v1821 = vmul.f32 %v1816, %v1280
        %v1822 = vadd.f32 %v1772, %v1820
        %v1823 = vadd.f32 %v1773, %v1821
        %v1824 = vpack.c.bf16 %v1822, %v1626
        %v1825 = vpack.c.bf16 %v1823, %v1627
        %v1826 = vld [vmem:[%s3] sm:$0xff]
        %v1827 = vld [vmem:[%s3 + $0x8] sm:$0xff]
        %v1828 = vld [vmem:[%s3 + $0x10] sm:$0xff]
        %v1829 = vld [vmem:[%s3 + $0x18] sm:$0xff]
        %v1830 = vld [vmem:[%s3 + $0x20] sm:$0xff]
        %v1831 = vld [vmem:[%s3 + $0x28] sm:$0xff]
        %v1832 = vld [vmem:[%s3 + $0x30] sm:$0xff]
        %v1833 = vld [vmem:[%s3 + $0x38] sm:$0xff]
        %v1834 = vld [vmem:[%s3 + $0x40] sm:$0xff]
        %v1835 = vld [vmem:[%s3 + $0x48] sm:$0xff]
        %v1836 = vld [vmem:[%s3 + $0x50] sm:$0xff]
        %v1837 = vld [vmem:[%s3 + $0x58] sm:$0xff]
        %v1838 = vld [vmem:[%s3 + $0x60] sm:$0xff]
        %v1839 = vld [vmem:[%s3 + $0x68] sm:$0xff]
        %v1840 = vld [vmem:[%s3 + $0x70] sm:$0xff]
        %v1841 = vld [vmem:[%s3 + $0x78] sm:$0xff]
        %v1842 = vld [vmem:[%s3 + $0x80] sm:$0xff]
        %v1843 = vld [vmem:[%s3 + $0x88] sm:$0xff]
        %v1844 = vld [vmem:[%s3 + $0x90] sm:$0xff]
        %v1845 = vld [vmem:[%s3 + $0x98] sm:$0xff]
        %v1846 = vld [vmem:[%s3 + $0xa0] sm:$0xff]
        %v1847 = vld [vmem:[%s3 + $0xa8] sm:$0xff]
        %v1848 = vld [vmem:[%s3 + $0xb0] sm:$0xff]
        %v1849 = vld [vmem:[%s3 + $0xb8] sm:$0xff]
        %v1850 = vld [vmem:[%s3 + $0xc0] sm:$0xff]
        %v1851 = vld [vmem:[%s3 + $0xc8] sm:$0xff]
        %v1852 = vld [vmem:[%s3 + $0xd0] sm:$0xff]
        %v1853 = vld [vmem:[%s3 + $0xd8] sm:$0xff]
        %v1854 = vld [vmem:[%s3 + $0xe0] sm:$0xff]
        %v1855 = vld [vmem:[%s3 + $0xe8] sm:$0xff]
        %v1856 = vld [vmem:[%s3 + $0xf0] sm:$0xff]
        %v1857 = vld [vmem:[%s3 + $0xf8] sm:$0xff]
        %v1858 = vld [vmem:[%s4] sm:$0x3]
        %v1860 = vlaneseq
        %v1861 = vshrl.u32 %v1860, 7
        %v1862 = vsub.s32 0, %v1861
        %v1863 = vrot.slane %v1858, %v1862
        %v1864 = vlaneseq
        %v1865 = vshrl.u32 %v1864, 7
        %v1866 = vsub.s32 1, %v1865
        %v1867 = vrot.slane %v1858, %v1866
        %v1902 = vunpack.c.l.b16 %v1826
        %v1903 = vunpack.c.h.b16 %v1826
        %v1904 = vunpack.c.l.b16 %v1827
        %v1905 = vunpack.c.h.b16 %v1827
        %v1906 = vunpack.c.l.b16 %v1828
        %v1907 = vunpack.c.h.b16 %v1828
        %v1908 = vunpack.c.l.b16 %v1829
        %v1909 = vunpack.c.h.b16 %v1829
        %v1910 = vunpack.c.l.b16 %v1830
        %v1911 = vunpack.c.h.b16 %v1830
        %v1912 = vunpack.c.l.b16 %v1831
        %v1913 = vunpack.c.h.b16 %v1831
        %v1914 = vunpack.c.l.b16 %v1832
        %v1915 = vunpack.c.h.b16 %v1832
        %v1916 = vunpack.c.l.b16 %v1833
        %v1917 = vunpack.c.h.b16 %v1833
        %v1918 = vunpack.c.l.b16 %v1834
        %v1919 = vunpack.c.h.b16 %v1834
        %v1920 = vunpack.c.l.b16 %v1835
        %v1921 = vunpack.c.h.b16 %v1835
        %v1922 = vunpack.c.l.b16 %v1836
        %v1923 = vunpack.c.h.b16 %v1836
        %v1924 = vunpack.c.l.b16 %v1837
        %v1925 = vunpack.c.h.b16 %v1837
        %v1926 = vunpack.c.l.b16 %v1838
        %v1927 = vunpack.c.h.b16 %v1838
        %v1928 = vunpack.c.l.b16 %v1839
        %v1929 = vunpack.c.h.b16 %v1839
        %v1930 = vunpack.c.l.b16 %v1840
        %v1931 = vunpack.c.h.b16 %v1840
        %v1932 = vunpack.c.l.b16 %v1841
        %v1933 = vunpack.c.h.b16 %v1841
        %v1934 = vunpack.c.l.b16 %v1842
        %v1935 = vunpack.c.h.b16 %v1842
        %v1936 = vunpack.c.l.b16 %v1843
        %v1937 = vunpack.c.h.b16 %v1843
        %v1938 = vunpack.c.l.b16 %v1844
        %v1939 = vunpack.c.h.b16 %v1844
        %v1940 = vunpack.c.l.b16 %v1845
        %v1941 = vunpack.c.h.b16 %v1845
        %v1942 = vunpack.c.l.b16 %v1846
        %v1943 = vunpack.c.h.b16 %v1846
        %v1944 = vunpack.c.l.b16 %v1847
        %v1945 = vunpack.c.h.b16 %v1847
        %v1946 = vunpack.c.l.b16 %v1848
        %v1947 = vunpack.c.h.b16 %v1848
        %v1948 = vunpack.c.l.b16 %v1849
        %v1949 = vunpack.c.h.b16 %v1849
        %v1950 = vunpack.c.l.b16 %v1850
        %v1951 = vunpack.c.h.b16 %v1850
        %v1952 = vunpack.c.l.b16 %v1851
        %v1953 = vunpack.c.h.b16 %v1851
        %v1954 = vunpack.c.l.b16 %v1852
        %v1955 = vunpack.c.h.b16 %v1852
        %v1956 = vunpack.c.l.b16 %v1853
        %v1957 = vunpack.c.h.b16 %v1853
        %v1958 = vunpack.c.l.b16 %v1854
        %v1959 = vunpack.c.h.b16 %v1854
        %v1960 = vunpack.c.l.b16 %v1855
        %v1961 = vunpack.c.h.b16 %v1855
        %v1962 = vunpack.c.l.b16 %v1856
        %v1963 = vunpack.c.h.b16 %v1856
        %v1964 = vunpack.c.l.b16 %v1857
        %v1965 = vunpack.c.h.b16 %v1857
        %v1966 = vpack.c.b16 %v1904, %v1902
        %v1967 = vpack.c.b16 %v1905, %v1903
        %v1968 = vpack.c.b16 %v1908, %v1906
        %v1969 = vpack.c.b16 %v1909, %v1907
        %v1970 = vpack.c.b16 %v1912, %v1910
        %v1971 = vpack.c.b16 %v1913, %v1911
        %v1972 = vpack.c.b16 %v1916, %v1914
        %v1973 = vpack.c.b16 %v1917, %v1915
        %v1974 = vpack.c.b16 %v1920, %v1918
        %v1975 = vpack.c.b16 %v1921, %v1919
        %v1976 = vpack.c.b16 %v1924, %v1922
        %v1977 = vpack.c.b16 %v1925, %v1923
        %v1978 = vpack.c.b16 %v1928, %v1926
        %v1979 = vpack.c.b16 %v1929, %v1927
        %v1980 = vpack.c.b16 %v1932, %v1930
        %v1981 = vpack.c.b16 %v1933, %v1931
        %v1982 = vpack.c.b16 %v1936, %v1934
        %v1983 = vpack.c.b16 %v1937, %v1935
        %v1984 = vpack.c.b16 %v1940, %v1938
        %v1985 = vpack.c.b16 %v1941, %v1939
        %v1986 = vpack.c.b16 %v1944, %v1942
        %v1987 = vpack.c.b16 %v1945, %v1943
        %v1988 = vpack.c.b16 %v1948, %v1946
        %v1989 = vpack.c.b16 %v1949, %v1947
        %v1990 = vpack.c.b16 %v1952, %v1950
        %v1991 = vpack.c.b16 %v1953, %v1951
        %v1992 = vpack.c.b16 %v1956, %v1954
        %v1993 = vpack.c.b16 %v1957, %v1955
        %v1994 = vpack.c.b16 %v1960, %v1958
        %v1995 = vpack.c.b16 %v1961, %v1959
        %v1996 = vpack.c.b16 %v1964, %v1962
        %v1997 = vpack.c.b16 %v1965, %v1963
        %2030 = vmatprep.subr.bf16.mxu0 %v1967
        %2031 = vmatpush1.bf16.msra.mxu0 %v1966
        %2032 = vmatprep.subr.bf16.mxu0 %v1969
        %2033 = vmatpush1.bf16.msra.mxu0 %v1968
        %2034 = vmatprep.subr.bf16.mxu0 %v1971
        %2035 = vmatpush1.bf16.msra.mxu0 %v1970
        %2036 = vmatprep.subr.bf16.mxu0 %v1973
        %2037 = vmatpush1.bf16.msra.mxu0 %v1972
        %2038 = vmatprep.subr.bf16.mxu0 %v1975
        %2039 = vmatpush1.bf16.msra.mxu0 %v1974
        %2040 = vmatprep.subr.bf16.mxu0 %v1977
        %2041 = vmatpush1.bf16.msra.mxu0 %v1976
        %2042 = vmatprep.subr.bf16.mxu0 %v1979
        %2043 = vmatpush1.bf16.msra.mxu0 %v1978
        %2044 = vmatprep.subr.bf16.mxu0 %v1981
        %2045 = vmatpush1.bf16.msra.mxu0 %v1980
        %2046 = vmatprep.subr.bf16.mxu0 %v1983
        %2047 = vmatpush1.bf16.msra.mxu0 %v1982
        %2048 = vmatprep.subr.bf16.mxu0 %v1985
        %2049 = vmatpush1.bf16.msra.mxu0 %v1984
        %2050 = vmatprep.subr.bf16.mxu0 %v1987
        %2051 = vmatpush1.bf16.msra.mxu0 %v1986
        %2052 = vmatprep.subr.bf16.mxu0 %v1989
        %2053 = vmatpush1.bf16.msra.mxu0 %v1988
        %2054 = vmatprep.subr.bf16.mxu0 %v1991
        %2055 = vmatpush1.bf16.msra.mxu0 %v1990
        %2056 = vmatprep.subr.bf16.mxu0 %v1993
        %2057 = vmatpush1.bf16.msra.mxu0 %v1992
        %2058 = vmatprep.subr.bf16.mxu0 %v1995
        %2059 = vmatpush1.bf16.msra.mxu0 %v1994
        %2060 = vmatprep.subr.bf16.mxu0 %v1997
        %2061 = vmatpush1.bf16.msra.mxu0 %v1996
        %2062 = vmatprep.mubr.bf16.mxu0 %v1825
        %2063 = vmatmul.mubr.bf16.gmra.mrb[0].mxu0 %v1824
        %v2064 = vpop.f32.mrb[0].mxu0
        %v2065 = vadd.f32 %v1863, %v2064
        %v2066 = vpop.f32.mrb[0].mxu0
        %v2067 = vadd.f32 %v1867, %v2066
        %v2068 = vpop.f32.mrb[0].mxu0
        %v2069 = vadd.f32 %v1863, %v2068
        %v2070 = vpop.f32.mrb[0].mxu0
        %v2071 = vadd.f32 %v1867, %v2070
        %2072 = vdwg.mxu0
        %v2073 = vadd.f32 %v531, %v2065
        %v2074 = vadd.f32 %v532, %v2067
        %v2075 = vadd.f32 %v533, %v2069
        %v2076 = vadd.f32 %v534, %v2071
        %v2077 = vld [vmem:[%s5] sm:$0x3]
        %v2078 = vld [vmem:[%s6] sm:$0x3]
        %v2079 = vadd.f32 %v2073, %v2074
        %2080 = vadd.xlane.f32.xlu0 %v2079
        %v2081 = vpop.xlane.xlu0 %2080
        %v2082 = vadd.f32 %v2075, %v2076
        %2083 = vadd.xlane.f32.xlu0 %v2082
        %v2084 = vpop.xlane.xlu0 %2083
        %v2085 = vrcp.pop 256.0
        %v2086 = vmul.f32 %v2081, %v2085
        %v2087 = vmul.f32 %v2084, %v2085
        %v2088 = vsub.f32 %v2073, %v2086
        %v2089 = vsub.f32 %v2074, %v2086
        %v2090 = vsub.f32 %v2075, %v2087
        %v2091 = vsub.f32 %v2076, %v2087
        %v2092 = vmul.f32 %v2088, %v2088
        %v2093 = vmul.f32 %v2089, %v2089
        %v2094 = vmul.f32 %v2090, %v2090
        %v2095 = vmul.f32 %v2091, %v2091
        %v2096 = vadd.f32 %v2092, %v2093
        %2097 = vadd.xlane.f32.xlu0 %v2096
        %v2098 = vpop.xlane.xlu0 %2097
        %v2099 = vadd.f32 %v2094, %v2095
        %2100 = vadd.xlane.f32.xlu0 %v2099
        %v2101 = vpop.xlane.xlu0 %2100
        %v2102 = vmul.f32 %v2098, %v2085
        %v2103 = vmul.f32 %v2101, %v2085
        %v2104 = vadd.f32 %v2102, 1e-05
        %v2105 = vadd.f32 %v2103, 1e-05
        %v2106 = vrsqrt.pop %v2104
        %v2107 = vrsqrt.pop %v2105
        %v2108 = vmul.f32 %v2088, %v2106
        %v2109 = vmul.f32 %v2089, %v2106
        %v2110 = vmul.f32 %v2090, %v2107
        %v2111 = vmul.f32 %v2091, %v2107
        %v2113 = vlaneseq
        %v2114 = vshrl.u32 %v2113, 7
        %v2115 = vsub.s32 0, %v2114
        %v2116 = vrot.slane %v2077, %v2115
        %v2117 = vlaneseq
        %v2118 = vshrl.u32 %v2117, 7
        %v2119 = vsub.s32 1, %v2118
        %v2120 = vrot.slane %v2077, %v2119
        %v2123 = vmul.f32 %v2108, %v2116
        %v2124 = vmul.f32 %v2109, %v2120
        %v2125 = vmul.f32 %v2110, %v2116
        %v2126 = vmul.f32 %v2111, %v2120
        %v2128 = vlaneseq
        %v2129 = vshrl.u32 %v2128, 7
        %v2130 = vsub.s32 0, %v2129
        %v2131 = vrot.slane %v2078, %v2130
        %v2132 = vlaneseq
        %v2133 = vshrl.u32 %v2132, 7
        %v2134 = vsub.s32 1, %v2133
        %v2135 = vrot.slane %v2078, %v2134
        %v2138 = vadd.f32 %v2123, %v2131
        %v2139 = vadd.f32 %v2124, %v2135
        %v2140 = vadd.f32 %v2125, %v2131
        %v2141 = vadd.f32 %v2126, %v2135
        %v2142 = vpack.c.bf16 %v2140, %v2138
        %v2143 = vpack.c.bf16 %v2141, %v2139
        %v2144 = vld [vmem:[%s7] sm:$0xff]
        %v2145 = vld [vmem:[%s7 + $0x8] sm:$0xff]
        %v2146 = vld [vmem:[%s7 + $0x10] sm:$0xff]
        %v2147 = vld [vmem:[%s7 + $0x18] sm:$0xff]
        %v2148 = vld [vmem:[%s7 + $0x20] sm:$0xff]
        %v2149 = vld [vmem:[%s7 + $0x28] sm:$0xff]
        %v2150 = vld [vmem:[%s7 + $0x30] sm:$0xff]
        %v2151 = vld [vmem:[%s7 + $0x38] sm:$0xff]
        %v2152 = vld [vmem:[%s7 + $0x40] sm:$0xff]
        %v2153 = vld [vmem:[%s7 + $0x48] sm:$0xff]
        %v2154 = vld [vmem:[%s7 + $0x50] sm:$0xff]
        %v2155 = vld [vmem:[%s7 + $0x58] sm:$0xff]
        %v2156 = vld [vmem:[%s7 + $0x60] sm:$0xff]
        %v2157 = vld [vmem:[%s7 + $0x68] sm:$0xff]
        %v2158 = vld [vmem:[%s7 + $0x70] sm:$0xff]
        %v2159 = vld [vmem:[%s7 + $0x78] sm:$0xff]
        %v2160 = vld [vmem:[%s7 + $0x80] sm:$0xff]
        %v2161 = vld [vmem:[%s7 + $0x88] sm:$0xff]
        %v2162 = vld [vmem:[%s7 + $0x90] sm:$0xff]
        %v2163 = vld [vmem:[%s7 + $0x98] sm:$0xff]
        %v2164 = vld [vmem:[%s7 + $0xa0] sm:$0xff]
        %v2165 = vld [vmem:[%s7 + $0xa8] sm:$0xff]
        %v2166 = vld [vmem:[%s7 + $0xb0] sm:$0xff]
        %v2167 = vld [vmem:[%s7 + $0xb8] sm:$0xff]
        %v2168 = vld [vmem:[%s7 + $0xc0] sm:$0xff]
        %v2169 = vld [vmem:[%s7 + $0xc8] sm:$0xff]
        %v2170 = vld [vmem:[%s7 + $0xd0] sm:$0xff]
        %v2171 = vld [vmem:[%s7 + $0xd8] sm:$0xff]
        %v2172 = vld [vmem:[%s7 + $0xe0] sm:$0xff]
        %v2173 = vld [vmem:[%s7 + $0xe8] sm:$0xff]
        %v2174 = vld [vmem:[%s7 + $0xf0] sm:$0xff]
        %v2175 = vld [vmem:[%s7 + $0xf8] sm:$0xff]
        %v2176 = vld [vmem:[%s7 + $0x100] sm:$0xff]
        %v2177 = vld [vmem:[%s7 + $0x108] sm:$0xff]
        %v2178 = vld [vmem:[%s7 + $0x110] sm:$0xff]
        %v2179 = vld [vmem:[%s7 + $0x118] sm:$0xff]
        %v2180 = vld [vmem:[%s7 + $0x120] sm:$0xff]
        %v2181 = vld [vmem:[%s7 + $0x128] sm:$0xff]
        %v2182 = vld [vmem:[%s7 + $0x130] sm:$0xff]
        %v2183 = vld [vmem:[%s7 + $0x138] sm:$0xff]
        %v2184 = vld [vmem:[%s7 + $0x140] sm:$0xff]
        %v2185 = vld [vmem:[%s7 + $0x148] sm:$0xff]
        %v2186 = vld [vmem:[%s7 + $0x150] sm:$0xff]
        %v2187 = vld [vmem:[%s7 + $0x158] sm:$0xff]
        %v2188 = vld [vmem:[%s7 + $0x160] sm:$0xff]
        %v2189 = vld [vmem:[%s7 + $0x168] sm:$0xff]
        %v2190 = vld [vmem:[%s7 + $0x170] sm:$0xff]
        %v2191 = vld [vmem:[%s7 + $0x178] sm:$0xff]
        %v2192 = vld [vmem:[%s7 + $0x180] sm:$0xff]
        %v2193 = vld [vmem:[%s7 + $0x188] sm:$0xff]
        %v2194 = vld [vmem:[%s7 + $0x190] sm:$0xff]
        %v2195 = vld [vmem:[%s7 + $0x198] sm:$0xff]
        %v2196 = vld [vmem:[%s7 + $0x1a0] sm:$0xff]
        %v2197 = vld [vmem:[%s7 + $0x1a8] sm:$0xff]
        %v2198 = vld [vmem:[%s7 + $0x1b0] sm:$0xff]
        %v2199 = vld [vmem:[%s7 + $0x1b8] sm:$0xff]
        %v2200 = vld [vmem:[%s7 + $0x1c0] sm:$0xff]
        %v2201 = vld [vmem:[%s7 + $0x1c8] sm:$0xff]
        %v2202 = vld [vmem:[%s7 + $0x1d0] sm:$0xff]
        %v2203 = vld [vmem:[%s7 + $0x1d8] sm:$0xff]
        %v2204 = vld [vmem:[%s7 + $0x1e0] sm:$0xff]
        %v2205 = vld [vmem:[%s7 + $0x1e8] sm:$0xff]
        %v2206 = vld [vmem:[%s7 + $0x1f0] sm:$0xff]
        %v2207 = vld [vmem:[%s7 + $0x1f8] sm:$0xff]
        %v2208 = vld [vmem:[%s8] sm:$0xf]
        %v2210 = vlaneseq
        %v2211 = vshrl.u32 %v2210, 7
        %v2212 = vsub.s32 0, %v2211
        %v2213 = vrot.slane %v2208, %v2212
        %v2214 = vlaneseq
        %v2215 = vshrl.u32 %v2214, 7
        %v2216 = vsub.s32 1, %v2215
        %v2217 = vrot.slane %v2208, %v2216
        %v2218 = vlaneseq
        %v2219 = vshrl.u32 %v2218, 7
        %v2220 = vsub.s32 2, %v2219
        %v2221 = vrot.slane %v2208, %v2220
        %v2222 = vlaneseq
        %v2223 = vshrl.u32 %v2222, 7
        %v2224 = vsub.s32 3, %v2223
        %v2225 = vrot.slane %v2208, %v2224
        %v2294 = vunpack.c.l.b16 %v2144
        %v2295 = vunpack.c.h.b16 %v2144
        %v2296 = vunpack.c.l.b16 %v2145
        %v2297 = vunpack.c.h.b16 %v2145
        %v2298 = vunpack.c.l.b16 %v2146
        %v2299 = vunpack.c.h.b16 %v2146
        %v2300 = vunpack.c.l.b16 %v2147
        %v2301 = vunpack.c.h.b16 %v2147
        %v2302 = vunpack.c.l.b16 %v2148
        %v2303 = vunpack.c.h.b16 %v2148
        %v2304 = vunpack.c.l.b16 %v2149
        %v2305 = vunpack.c.h.b16 %v2149
        %v2306 = vunpack.c.l.b16 %v2150
        %v2307 = vunpack.c.h.b16 %v2150
        %v2308 = vunpack.c.l.b16 %v2151
        %v2309 = vunpack.c.h.b16 %v2151
        %v2310 = vunpack.c.l.b16 %v2152
        %v2311 = vunpack.c.h.b16 %v2152
        %v2312 = vunpack.c.l.b16 %v2153
        %v2313 = vunpack.c.h.b16 %v2153
        %v2314 = vunpack.c.l.b16 %v2154
        %v2315 = vunpack.c.h.b16 %v2154
        %v2316 = vunpack.c.l.b16 %v2155
        %v2317 = vunpack.c.h.b16 %v2155
        %v2318 = vunpack.c.l.b16 %v2156
        %v2319 = vunpack.c.h.b16 %v2156
        %v2320 = vunpack.c.l.b16 %v2157
        %v2321 = vunpack.c.h.b16 %v2157
        %v2322 = vunpack.c.l.b16 %v2158
        %v2323 = vunpack.c.h.b16 %v2158
        %v2324 = vunpack.c.l.b16 %v2159
        %v2325 = vunpack.c.h.b16 %v2159
        %v2326 = vunpack.c.l.b16 %v2160
        %v2327 = vunpack.c.h.b16 %v2160
        %v2328 = vunpack.c.l.b16 %v2161
        %v2329 = vunpack.c.h.b16 %v2161
        %v2330 = vunpack.c.l.b16 %v2162
        %v2331 = vunpack.c.h.b16 %v2162
        %v2332 = vunpack.c.l.b16 %v2163
        %v2333 = vunpack.c.h.b16 %v2163
        %v2334 = vunpack.c.l.b16 %v2164
        %v2335 = vunpack.c.h.b16 %v2164
        %v2336 = vunpack.c.l.b16 %v2165
        %v2337 = vunpack.c.h.b16 %v2165
        %v2338 = vunpack.c.l.b16 %v2166
        %v2339 = vunpack.c.h.b16 %v2166
        %v2340 = vunpack.c.l.b16 %v2167
        %v2341 = vunpack.c.h.b16 %v2167
        %v2342 = vunpack.c.l.b16 %v2168
        %v2343 = vunpack.c.h.b16 %v2168
        %v2344 = vunpack.c.l.b16 %v2169
        %v2345 = vunpack.c.h.b16 %v2169
        %v2346 = vunpack.c.l.b16 %v2170
        %v2347 = vunpack.c.h.b16 %v2170
        %v2348 = vunpack.c.l.b16 %v2171
        %v2349 = vunpack.c.h.b16 %v2171
        %v2350 = vunpack.c.l.b16 %v2172
        %v2351 = vunpack.c.h.b16 %v2172
        %v2352 = vunpack.c.l.b16 %v2173
        %v2353 = vunpack.c.h.b16 %v2173
        %v2354 = vunpack.c.l.b16 %v2174
        %v2355 = vunpack.c.h.b16 %v2174
        %v2356 = vunpack.c.l.b16 %v2175
        %v2357 = vunpack.c.h.b16 %v2175
        %v2358 = vunpack.c.l.b16 %v2176
        %v2359 = vunpack.c.h.b16 %v2176
        %v2360 = vunpack.c.l.b16 %v2177
        %v2361 = vunpack.c.h.b16 %v2177
        %v2362 = vunpack.c.l.b16 %v2178
        %v2363 = vunpack.c.h.b16 %v2178
        %v2364 = vunpack.c.l.b16 %v2179
        %v2365 = vunpack.c.h.b16 %v2179
        %v2366 = vunpack.c.l.b16 %v2180
        %v2367 = vunpack.c.h.b16 %v2180
        %v2368 = vunpack.c.l.b16 %v2181
        %v2369 = vunpack.c.h.b16 %v2181
        %v2370 = vunpack.c.l.b16 %v2182
        %v2371 = vunpack.c.h.b16 %v2182
        %v2372 = vunpack.c.l.b16 %v2183
        %v2373 = vunpack.c.h.b16 %v2183
        %v2374 = vunpack.c.l.b16 %v2184
        %v2375 = vunpack.c.h.b16 %v2184
        %v2376 = vunpack.c.l.b16 %v2185
        %v2377 = vunpack.c.h.b16 %v2185
        %v2378 = vunpack.c.l.b16 %v2186
        %v2379 = vunpack.c.h.b16 %v2186
        %v2380 = vunpack.c.l.b16 %v2187
        %v2381 = vunpack.c.h.b16 %v2187
        %v2382 = vunpack.c.l.b16 %v2188
        %v2383 = vunpack.c.h.b16 %v2188
        %v2384 = vunpack.c.l.b16 %v2189
        %v2385 = vunpack.c.h.b16 %v2189
        %v2386 = vunpack.c.l.b16 %v2190
        %v2387 = vunpack.c.h.b16 %v2190
        %v2388 = vunpack.c.l.b16 %v2191
        %v2389 = vunpack.c.h.b16 %v2191
        %v2390 = vunpack.c.l.b16 %v2192
        %v2391 = vunpack.c.h.b16 %v2192
        %v2392 = vunpack.c.l.b16 %v2193
        %v2393 = vunpack.c.h.b16 %v2193
        %v2394 = vunpack.c.l.b16 %v2194
        %v2395 = vunpack.c.h.b16 %v2194
        %v2396 = vunpack.c.l.b16 %v2195
        %v2397 = vunpack.c.h.b16 %v2195
        %v2398 = vunpack.c.l.b16 %v2196
        %v2399 = vunpack.c.h.b16 %v2196
        %v2400 = vunpack.c.l.b16 %v2197
        %v2401 = vunpack.c.h.b16 %v2197
        %v2402 = vunpack.c.l.b16 %v2198
        %v2403 = vunpack.c.h.b16 %v2198
        %v2404 = vunpack.c.l.b16 %v2199
        %v2405 = vunpack.c.h.b16 %v2199
        %v2406 = vunpack.c.l.b16 %v2200
        %v2407 = vunpack.c.h.b16 %v2200
        %v2408 = vunpack.c.l.b16 %v2201
        %v2409 = vunpack.c.h.b16 %v2201
        %v2410 = vunpack.c.l.b16 %v2202
        %v2411 = vunpack.c.h.b16 %v2202
        %v2412 = vunpack.c.l.b16 %v2203
        %v2413 = vunpack.c.h.b16 %v2203
        %v2414 = vunpack.c.l.b16 %v2204
        %v2415 = vunpack.c.h.b16 %v2204
        %v2416 = vunpack.c.l.b16 %v2205
        %v2417 = vunpack.c.h.b16 %v2205
        %v2418 = vunpack.c.l.b16 %v2206
        %v2419 = vunpack.c.h.b16 %v2206
        %v2420 = vunpack.c.l.b16 %v2207
        %v2421 = vunpack.c.h.b16 %v2207
        %v2422 = vpack.c.b16 %v2298, %v2294
        %v2423 = vpack.c.b16 %v2299, %v2295
        %v2424 = vpack.c.b16 %v2300, %v2296
        %v2425 = vpack.c.b16 %v2301, %v2297
        %v2426 = vpack.c.b16 %v2306, %v2302
        %v2427 = vpack.c.b16 %v2307, %v2303
        %v2428 = vpack.c.b16 %v2308, %v2304
        %v2429 = vpack.c.b16 %v2309, %v2305
        %v2430 = vpack.c.b16 %v2314, %v2310
        %v2431 = vpack.c.b16 %v2315, %v2311
        %v2432 = vpack.c.b16 %v2316, %v2312
        %v2433 = vpack.c.b16 %v2317, %v2313
        %v2434 = vpack.c.b16 %v2322, %v2318
        %v2435 = vpack.c.b16 %v2323, %v2319
        %v2436 = vpack.c.b16 %v2324, %v2320
        %v2437 = vpack.c.b16 %v2325, %v2321
        %v2438 = vpack.c.b16 %v2330, %v2326
        %v2439 = vpack.c.b16 %v2331, %v2327
        %v2440 = vpack.c.b16 %v2332, %v2328
        %v2441 = vpack.c.b16 %v2333, %v2329
        %v2442 = vpack.c.b16 %v2338, %v2334
        %v2443 = vpack.c.b16 %v2339, %v2335
        %v2444 = vpack.c.b16 %v2340, %v2336
        %v2445 = vpack.c.b16 %v2341, %v2337
        %v2446 = vpack.c.b16 %v2346, %v2342
        %v2447 = vpack.c.b16 %v2347, %v2343
        %v2448 = vpack.c.b16 %v2348, %v2344
        %v2449 = vpack.c.b16 %v2349, %v2345
        %v2450 = vpack.c.b16 %v2354, %v2350
        %v2451 = vpack.c.b16 %v2355, %v2351
        %v2452 = vpack.c.b16 %v2356, %v2352
        %v2453 = vpack.c.b16 %v2357, %v2353
        %v2454 = vpack.c.b16 %v2362, %v2358
        %v2455 = vpack.c.b16 %v2363, %v2359
        %v2456 = vpack.c.b16 %v2364, %v2360
        %v2457 = vpack.c.b16 %v2365, %v2361
        %v2458 = vpack.c.b16 %v2370, %v2366
        %v2459 = vpack.c.b16 %v2371, %v2367
        %v2460 = vpack.c.b16 %v2372, %v2368
        %v2461 = vpack.c.b16 %v2373, %v2369
        %v2462 = vpack.c.b16 %v2378, %v2374
        %v2463 = vpack.c.b16 %v2379, %v2375
        %v2464 = vpack.c.b16 %v2380, %v2376
        %v2465 = vpack.c.b16 %v2381, %v2377
        %v2466 = vpack.c.b16 %v2386, %v2382
        %v2467 = vpack.c.b16 %v2387, %v2383
        %v2468 = vpack.c.b16 %v2388, %v2384
        %v2469 = vpack.c.b16 %v2389, %v2385
        %v2470 = vpack.c.b16 %v2394, %v2390
        %v2471 = vpack.c.b16 %v2395, %v2391
        %v2472 = vpack.c.b16 %v2396, %v2392
        %v2473 = vpack.c.b16 %v2397, %v2393
        %v2474 = vpack.c.b16 %v2402, %v2398
        %v2475 = vpack.c.b16 %v2403, %v2399
        %v2476 = vpack.c.b16 %v2404, %v2400
        %v2477 = vpack.c.b16 %v2405, %v2401
        %v2478 = vpack.c.b16 %v2410, %v2406
        %v2479 = vpack.c.b16 %v2411, %v2407
        %v2480 = vpack.c.b16 %v2412, %v2408
        %v2481 = vpack.c.b16 %v2413, %v2409
        %v2482 = vpack.c.b16 %v2418, %v2414
        %v2483 = vpack.c.b16 %v2419, %v2415
        %v2484 = vpack.c.b16 %v2420, %v2416
        %v2485 = vpack.c.b16 %v2421, %v2417
        %2550 = vmatprep.subr.bf16.mxu0 %v2423
        %2551 = vmatpush1.bf16.msra.mxu0 %v2422
        %2552 = vmatprep.subr.bf16.mxu0 %v2427
        %2553 = vmatpush1.bf16.msra.mxu0 %v2426
        %2554 = vmatprep.subr.bf16.mxu0 %v2431
        %2555 = vmatpush1.bf16.msra.mxu0 %v2430
        %2556 = vmatprep.subr.bf16.mxu0 %v2435
        %2557 = vmatpush1.bf16.msra.mxu0 %v2434
        %2558 = vmatprep.subr.bf16.mxu0 %v2439
        %2559 = vmatpush1.bf16.msra.mxu0 %v2438
        %2560 = vmatprep.subr.bf16.mxu0 %v2443
        %2561 = vmatpush1.bf16.msra.mxu0 %v2442
        %2562 = vmatprep.subr.bf16.mxu0 %v2447
        %2563 = vmatpush1.bf16.msra.mxu0 %v2446
        %2564 = vmatprep.subr.bf16.mxu0 %v2451
        %2565 = vmatpush1.bf16.msra.mxu0 %v2450
        %2566 = vmatprep.subr.bf16.mxu0 %v2455
        %2567 = vmatpush1.bf16.msra.mxu0 %v2454
        %2568 = vmatprep.subr.bf16.mxu0 %v2459
        %2569 = vmatpush1.bf16.msra.mxu0 %v2458
        %2570 = vmatprep.subr.bf16.mxu0 %v2463
        %2571 = vmatpush1.bf16.msra.mxu0 %v2462
        %2572 = vmatprep.subr.bf16.mxu0 %v2467
        %2573 = vmatpush1.bf16.msra.mxu0 %v2466
        %2574 = vmatprep.subr.bf16.mxu0 %v2471
        %2575 = vmatpush1.bf16.msra.mxu0 %v2470
        %2576 = vmatprep.subr.bf16.mxu0 %v2475
        %2577 = vmatpush1.bf16.msra.mxu0 %v2474
        %2578 = vmatprep.subr.bf16.mxu0 %v2479
        %2579 = vmatpush1.bf16.msra.mxu0 %v2478
        %2580 = vmatprep.subr.bf16.mxu0 %v2483
        %2581 = vmatpush1.bf16.msra.mxu0 %v2482
        %2582 = vmatprep.mubr.bf16.mxu0 %v2143
        %2583 = vmatmul.mubr.bf16.gmra.mrb[0].mxu0 %v2142
        %v2584 = vpop.f32.mrb[0].mxu0
        %v2585 = vadd.f32 %v2213, %v2584
        %v2586 = vpop.f32.mrb[0].mxu0
        %v2587 = vadd.f32 %v2217, %v2586
        %v2588 = vpop.f32.mrb[0].mxu0
        %v2589 = vadd.f32 %v2213, %v2588
        %v2590 = vpop.f32.mrb[0].mxu0
        %v2591 = vadd.f32 %v2217, %v2590
        %2592 = vdwg.mxu0
        %2593 = vmatprep.subr.bf16.mxu0 %v2425
        %2594 = vmatpush1.bf16.msra.mxu0 %v2424
        %2595 = vmatprep.subr.bf16.mxu0 %v2429
        %2596 = vmatpush1.bf16.msra.mxu0 %v2428
        %2597 = vmatprep.subr.bf16.mxu0 %v2433
        %2598 = vmatpush1.bf16.msra.mxu0 %v2432
        %2599 = vmatprep.subr.bf16.mxu0 %v2437
        %2600 = vmatpush1.bf16.msra.mxu0 %v2436
        %2601 = vmatprep.subr.bf16.mxu0 %v2441
        %2602 = vmatpush1.bf16.msra.mxu0 %v2440
        %2603 = vmatprep.subr.bf16.mxu0 %v2445
        %2604 = vmatpush1.bf16.msra.mxu0 %v2444
        %2605 = vmatprep.subr.bf16.mxu0 %v2449
        %2606 = vmatpush1.bf16.msra.mxu0 %v2448
        %2607 = vmatprep.subr.bf16.mxu0 %v2453
        %2608 = vmatpush1.bf16.msra.mxu0 %v2452
        %2609 = vmatprep.subr.bf16.mxu0 %v2457
        %2610 = vmatpush1.bf16.msra.mxu0 %v2456
        %2611 = vmatprep.subr.bf16.mxu0 %v2461
        %2612 = vmatpush1.bf16.msra.mxu0 %v2460
        %2613 = vmatprep.subr.bf16.mxu0 %v2465
        %2614 = vmatpush1.bf16.msra.mxu0 %v2464
        %2615 = vmatprep.subr.bf16.mxu0 %v2469
        %2616 = vmatpush1.bf16.msra.mxu0 %v2468
        %2617 = vmatprep.subr.bf16.mxu0 %v2473
        %2618 = vmatpush1.bf16.msra.mxu0 %v2472
        %2619 = vmatprep.subr.bf16.mxu0 %v2477
        %2620 = vmatpush1.bf16.msra.mxu0 %v2476
        %2621 = vmatprep.subr.bf16.mxu0 %v2481
        %2622 = vmatpush1.bf16.msra.mxu0 %v2480
        %2623 = vmatprep.subr.bf16.mxu0 %v2485
        %2624 = vmatpush1.bf16.msra.mxu0 %v2484
        %2625 = vmatprep.mubr.bf16.mxu0 %v2143
        %2626 = vmatmul.mubr.bf16.gmra.mrb[0].mxu0 %v2142
        %v2627 = vpop.f32.mrb[0].mxu0
        %v2628 = vadd.f32 %v2221, %v2627
        %v2629 = vpop.f32.mrb[0].mxu0
        %v2630 = vadd.f32 %v2225, %v2629
        %v2631 = vpop.f32.mrb[0].mxu0
        %v2632 = vadd.f32 %v2221, %v2631
        %v2633 = vpop.f32.mrb[0].mxu0
        %v2634 = vadd.f32 %v2225, %v2633
        %2635 = vdwg.mxu0
        %v2636 = vmax.f32 %v2585, 0.0
        %v2637 = vmax.f32 %v2587, 0.0
        %v2638 = vmax.f32 %v2628, 0.0
        %v2639 = vmax.f32 %v2630, 0.0
        %v2640 = vmax.f32 %v2589, 0.0
        %v2641 = vmax.f32 %v2591, 0.0
        %v2642 = vmax.f32 %v2632, 0.0
        %v2643 = vmax.f32 %v2634, 0.0
        %v2644 = vpack.c.bf16 %v2640, %v2636
        %v2645 = vpack.c.bf16 %v2641, %v2637
        %v2646 = vpack.c.bf16 %v2642, %v2638
        %v2647 = vpack.c.bf16 %v2643, %v2639
        %v2648 = vld [vmem:[%s9] sm:$0xff]
        %v2649 = vld [vmem:[%s9 + $0x8] sm:$0xff]
        %v2650 = vld [vmem:[%s9 + $0x10] sm:$0xff]
        %v2651 = vld [vmem:[%s9 + $0x18] sm:$0xff]
        %v2652 = vld [vmem:[%s9 + $0x20] sm:$0xff]
        %v2653 = vld [vmem:[%s9 + $0x28] sm:$0xff]
        %v2654 = vld [vmem:[%s9 + $0x30] sm:$0xff]
        %v2655 = vld [vmem:[%s9 + $0x38] sm:$0xff]
        %v2656 = vld [vmem:[%s9 + $0x40] sm:$0xff]
        %v2657 = vld [vmem:[%s9 + $0x48] sm:$0xff]
        %v2658 = vld [vmem:[%s9 + $0x50] sm:$0xff]
        %v2659 = vld [vmem:[%s9 + $0x58] sm:$0xff]
        %v2660 = vld [vmem:[%s9 + $0x60] sm:$0xff]
        %v2661 = vld [vmem:[%s9 + $0x68] sm:$0xff]
        %v2662 = vld [vmem:[%s9 + $0x70] sm:$0xff]
        %v2663 = vld [vmem:[%s9 + $0x78] sm:$0xff]
        %v2664 = vld [vmem:[%s9 + $0x80] sm:$0xff]
        %v2665 = vld [vmem:[%s9 + $0x88] sm:$0xff]
        %v2666 = vld [vmem:[%s9 + $0x90] sm:$0xff]
        %v2667 = vld [vmem:[%s9 + $0x98] sm:$0xff]
        %v2668 = vld [vmem:[%s9 + $0xa0] sm:$0xff]
        %v2669 = vld [vmem:[%s9 + $0xa8] sm:$0xff]
        %v2670 = vld [vmem:[%s9 + $0xb0] sm:$0xff]
        %v2671 = vld [vmem:[%s9 + $0xb8] sm:$0xff]
        %v2672 = vld [vmem:[%s9 + $0xc0] sm:$0xff]
        %v2673 = vld [vmem:[%s9 + $0xc8] sm:$0xff]
        %v2674 = vld [vmem:[%s9 + $0xd0] sm:$0xff]
        %v2675 = vld [vmem:[%s9 + $0xd8] sm:$0xff]
        %v2676 = vld [vmem:[%s9 + $0xe0] sm:$0xff]
        %v2677 = vld [vmem:[%s9 + $0xe8] sm:$0xff]
        %v2678 = vld [vmem:[%s9 + $0xf0] sm:$0xff]
        %v2679 = vld [vmem:[%s9 + $0xf8] sm:$0xff]
        %v2680 = vld [vmem:[%s9 + $0x100] sm:$0xff]
        %v2681 = vld [vmem:[%s9 + $0x108] sm:$0xff]
        %v2682 = vld [vmem:[%s9 + $0x110] sm:$0xff]
        %v2683 = vld [vmem:[%s9 + $0x118] sm:$0xff]
        %v2684 = vld [vmem:[%s9 + $0x120] sm:$0xff]
        %v2685 = vld [vmem:[%s9 + $0x128] sm:$0xff]
        %v2686 = vld [vmem:[%s9 + $0x130] sm:$0xff]
        %v2687 = vld [vmem:[%s9 + $0x138] sm:$0xff]
        %v2688 = vld [vmem:[%s9 + $0x140] sm:$0xff]
        %v2689 = vld [vmem:[%s9 + $0x148] sm:$0xff]
        %v2690 = vld [vmem:[%s9 + $0x150] sm:$0xff]
        %v2691 = vld [vmem:[%s9 + $0x158] sm:$0xff]
        %v2692 = vld [vmem:[%s9 + $0x160] sm:$0xff]
        %v2693 = vld [vmem:[%s9 + $0x168] sm:$0xff]
        %v2694 = vld [vmem:[%s9 + $0x170] sm:$0xff]
        %v2695 = vld [vmem:[%s9 + $0x178] sm:$0xff]
        %v2696 = vld [vmem:[%s9 + $0x180] sm:$0xff]
        %v2697 = vld [vmem:[%s9 + $0x188] sm:$0xff]
        %v2698 = vld [vmem:[%s9 + $0x190] sm:$0xff]
        %v2699 = vld [vmem:[%s9 + $0x198] sm:$0xff]
        %v2700 = vld [vmem:[%s9 + $0x1a0] sm:$0xff]
        %v2701 = vld [vmem:[%s9 + $0x1a8] sm:$0xff]
        %v2702 = vld [vmem:[%s9 + $0x1b0] sm:$0xff]
        %v2703 = vld [vmem:[%s9 + $0x1b8] sm:$0xff]
        %v2704 = vld [vmem:[%s9 + $0x1c0] sm:$0xff]
        %v2705 = vld [vmem:[%s9 + $0x1c8] sm:$0xff]
        %v2706 = vld [vmem:[%s9 + $0x1d0] sm:$0xff]
        %v2707 = vld [vmem:[%s9 + $0x1d8] sm:$0xff]
        %v2708 = vld [vmem:[%s9 + $0x1e0] sm:$0xff]
        %v2709 = vld [vmem:[%s9 + $0x1e8] sm:$0xff]
        %v2710 = vld [vmem:[%s9 + $0x1f0] sm:$0xff]
        %v2711 = vld [vmem:[%s9 + $0x1f8] sm:$0xff]
        %v2712 = vld [vmem:[%s10] sm:$0x3]
        %v2714 = vlaneseq
        %v2715 = vshrl.u32 %v2714, 7
        %v2716 = vsub.s32 0, %v2715
        %v2717 = vrot.slane %v2712, %v2716
        %v2718 = vlaneseq
        %v2719 = vshrl.u32 %v2718, 7
        %v2720 = vsub.s32 1, %v2719
        %v2721 = vrot.slane %v2712, %v2720
        %v2788 = vunpack.c.l.b16 %v2648
        %v2789 = vunpack.c.h.b16 %v2648
        %v2790 = vunpack.c.l.b16 %v2649
        %v2791 = vunpack.c.h.b16 %v2649
        %v2792 = vunpack.c.l.b16 %v2650
        %v2793 = vunpack.c.h.b16 %v2650
        %v2794 = vunpack.c.l.b16 %v2651
        %v2795 = vunpack.c.h.b16 %v2651
        %v2796 = vunpack.c.l.b16 %v2652
        %v2797 = vunpack.c.h.b16 %v2652
        %v2798 = vunpack.c.l.b16 %v2653
        %v2799 = vunpack.c.h.b16 %v2653
        %v2800 = vunpack.c.l.b16 %v2654
        %v2801 = vunpack.c.h.b16 %v2654
        %v2802 = vunpack.c.l.b16 %v2655
        %v2803 = vunpack.c.h.b16 %v2655
        %v2804 = vunpack.c.l.b16 %v2656
        %v2805 = vunpack.c.h.b16 %v2656
        %v2806 = vunpack.c.l.b16 %v2657
        %v2807 = vunpack.c.h.b16 %v2657
        %v2808 = vunpack.c.l.b16 %v2658
        %v2809 = vunpack.c.h.b16 %v2658
        %v2810 = vunpack.c.l.b16 %v2659
        %v2811 = vunpack.c.h.b16 %v2659
        %v2812 = vunpack.c.l.b16 %v2660
        %v2813 = vunpack.c.h.b16 %v2660
        %v2814 = vunpack.c.l.b16 %v2661
        %v2815 = vunpack.c.h.b16 %v2661
        %v2816 = vunpack.c.l.b16 %v2662
        %v2817 = vunpack.c.h.b16 %v2662
        %v2818 = vunpack.c.l.b16 %v2663
        %v2819 = vunpack.c.h.b16 %v2663
        %v2820 = vunpack.c.l.b16 %v2664
        %v2821 = vunpack.c.h.b16 %v2664
        %v2822 = vunpack.c.l.b16 %v2665
        %v2823 = vunpack.c.h.b16 %v2665
        %v2824 = vunpack.c.l.b16 %v2666
        %v2825 = vunpack.c.h.b16 %v2666
        %v2826 = vunpack.c.l.b16 %v2667
        %v2827 = vunpack.c.h.b16 %v2667
        %v2828 = vunpack.c.l.b16 %v2668
        %v2829 = vunpack.c.h.b16 %v2668
        %v2830 = vunpack.c.l.b16 %v2669
        %v2831 = vunpack.c.h.b16 %v2669
        %v2832 = vunpack.c.l.b16 %v2670
        %v2833 = vunpack.c.h.b16 %v2670
        %v2834 = vunpack.c.l.b16 %v2671
        %v2835 = vunpack.c.h.b16 %v2671
        %v2836 = vunpack.c.l.b16 %v2672
        %v2837 = vunpack.c.h.b16 %v2672
        %v2838 = vunpack.c.l.b16 %v2673
        %v2839 = vunpack.c.h.b16 %v2673
        %v2840 = vunpack.c.l.b16 %v2674
        %v2841 = vunpack.c.h.b16 %v2674
        %v2842 = vunpack.c.l.b16 %v2675
        %v2843 = vunpack.c.h.b16 %v2675
        %v2844 = vunpack.c.l.b16 %v2676
        %v2845 = vunpack.c.h.b16 %v2676
        %v2846 = vunpack.c.l.b16 %v2677
        %v2847 = vunpack.c.h.b16 %v2677
        %v2848 = vunpack.c.l.b16 %v2678
        %v2849 = vunpack.c.h.b16 %v2678
        %v2850 = vunpack.c.l.b16 %v2679
        %v2851 = vunpack.c.h.b16 %v2679
        %v2852 = vunpack.c.l.b16 %v2680
        %v2853 = vunpack.c.h.b16 %v2680
        %v2854 = vunpack.c.l.b16 %v2681
        %v2855 = vunpack.c.h.b16 %v2681
        %v2856 = vunpack.c.l.b16 %v2682
        %v2857 = vunpack.c.h.b16 %v2682
        %v2858 = vunpack.c.l.b16 %v2683
        %v2859 = vunpack.c.h.b16 %v2683
        %v2860 = vunpack.c.l.b16 %v2684
        %v2861 = vunpack.c.h.b16 %v2684
        %v2862 = vunpack.c.l.b16 %v2685
        %v2863 = vunpack.c.h.b16 %v2685
        %v2864 = vunpack.c.l.b16 %v2686
        %v2865 = vunpack.c.h.b16 %v2686
        %v2866 = vunpack.c.l.b16 %v2687
        %v2867 = vunpack.c.h.b16 %v2687
        %v2868 = vunpack.c.l.b16 %v2688
        %v2869 = vunpack.c.h.b16 %v2688
        %v2870 = vunpack.c.l.b16 %v2689
        %v2871 = vunpack.c.h.b16 %v2689
        %v2872 = vunpack.c.l.b16 %v2690
        %v2873 = vunpack.c.h.b16 %v2690
        %v2874 = vunpack.c.l.b16 %v2691
        %v2875 = vunpack.c.h.b16 %v2691
        %v2876 = vunpack.c.l.b16 %v2692
        %v2877 = vunpack.c.h.b16 %v2692
        %v2878 = vunpack.c.l.b16 %v2693
        %v2879 = vunpack.c.h.b16 %v2693
        %v2880 = vunpack.c.l.b16 %v2694
        %v2881 = vunpack.c.h.b16 %v2694
        %v2882 = vunpack.c.l.b16 %v2695
        %v2883 = vunpack.c.h.b16 %v2695
        %v2884 = vunpack.c.l.b16 %v2696
        %v2885 = vunpack.c.h.b16 %v2696
        %v2886 = vunpack.c.l.b16 %v2697
        %v2887 = vunpack.c.h.b16 %v2697
        %v2888 = vunpack.c.l.b16 %v2698
        %v2889 = vunpack.c.h.b16 %v2698
        %v2890 = vunpack.c.l.b16 %v2699
        %v2891 = vunpack.c.h.b16 %v2699
        %v2892 = vunpack.c.l.b16 %v2700
        %v2893 = vunpack.c.h.b16 %v2700
        %v2894 = vunpack.c.l.b16 %v2701
        %v2895 = vunpack.c.h.b16 %v2701
        %v2896 = vunpack.c.l.b16 %v2702
        %v2897 = vunpack.c.h.b16 %v2702
        %v2898 = vunpack.c.l.b16 %v2703
        %v2899 = vunpack.c.h.b16 %v2703
        %v2900 = vunpack.c.l.b16 %v2704
        %v2901 = vunpack.c.h.b16 %v2704
        %v2902 = vunpack.c.l.b16 %v2705
        %v2903 = vunpack.c.h.b16 %v2705
        %v2904 = vunpack.c.l.b16 %v2706
        %v2905 = vunpack.c.h.b16 %v2706
        %v2906 = vunpack.c.l.b16 %v2707
        %v2907 = vunpack.c.h.b16 %v2707
        %v2908 = vunpack.c.l.b16 %v2708
        %v2909 = vunpack.c.h.b16 %v2708
        %v2910 = vunpack.c.l.b16 %v2709
        %v2911 = vunpack.c.h.b16 %v2709
        %v2912 = vunpack.c.l.b16 %v2710
        %v2913 = vunpack.c.h.b16 %v2710
        %v2914 = vunpack.c.l.b16 %v2711
        %v2915 = vunpack.c.h.b16 %v2711
        %v2916 = vpack.c.b16 %v2790, %v2788
        %v2917 = vpack.c.b16 %v2791, %v2789
        %v2918 = vpack.c.b16 %v2794, %v2792
        %v2919 = vpack.c.b16 %v2795, %v2793
        %v2920 = vpack.c.b16 %v2798, %v2796
        %v2921 = vpack.c.b16 %v2799, %v2797
        %v2922 = vpack.c.b16 %v2802, %v2800
        %v2923 = vpack.c.b16 %v2803, %v2801
        %v2924 = vpack.c.b16 %v2806, %v2804
        %v2925 = vpack.c.b16 %v2807, %v2805
        %v2926 = vpack.c.b16 %v2810, %v2808
        %v2927 = vpack.c.b16 %v2811, %v2809
        %v2928 = vpack.c.b16 %v2814, %v2812
        %v2929 = vpack.c.b16 %v2815, %v2813
        %v2930 = vpack.c.b16 %v2818, %v2816
        %v2931 = vpack.c.b16 %v2819, %v2817
        %v2932 = vpack.c.b16 %v2822, %v2820
        %v2933 = vpack.c.b16 %v2823, %v2821
        %v2934 = vpack.c.b16 %v2826, %v2824
        %v2935 = vpack.c.b16 %v2827, %v2825
        %v2936 = vpack.c.b16 %v2830, %v2828
        %v2937 = vpack.c.b16 %v2831, %v2829
        %v2938 = vpack.c.b16 %v2834, %v2832
        %v2939 = vpack.c.b16 %v2835, %v2833
        %v2940 = vpack.c.b16 %v2838, %v2836
        %v2941 = vpack.c.b16 %v2839, %v2837
        %v2942 = vpack.c.b16 %v2842, %v2840
        %v2943 = vpack.c.b16 %v2843, %v2841
        %v2944 = vpack.c.b16 %v2846, %v2844
        %v2945 = vpack.c.b16 %v2847, %v2845
        %v2946 = vpack.c.b16 %v2850, %v2848
        %v2947 = vpack.c.b16 %v2851, %v2849
        %v2948 = vpack.c.b16 %v2854, %v2852
        %v2949 = vpack.c.b16 %v2855, %v2853
        %v2950 = vpack.c.b16 %v2858, %v2856
        %v2951 = vpack.c.b16 %v2859, %v2857
        %v2952 = vpack.c.b16 %v2862, %v2860
        %v2953 = vpack.c.b16 %v2863, %v2861
        %v2954 = vpack.c.b16 %v2866, %v2864
        %v2955 = vpack.c.b16 %v2867, %v2865
        %v2956 = vpack.c.b16 %v2870, %v2868
        %v2957 = vpack.c.b16 %v2871, %v2869
        %v2958 = vpack.c.b16 %v2874, %v2872
        %v2959 = vpack.c.b16 %v2875, %v2873
        %v2960 = vpack.c.b16 %v2878, %v2876
        %v2961 = vpack.c.b16 %v2879, %v2877
        %v2962 = vpack.c.b16 %v2882, %v2880
        %v2963 = vpack.c.b16 %v2883, %v2881
        %v2964 = vpack.c.b16 %v2886, %v2884
        %v2965 = vpack.c.b16 %v2887, %v2885
        %v2966 = vpack.c.b16 %v2890, %v2888
        %v2967 = vpack.c.b16 %v2891, %v2889
        %v2968 = vpack.c.b16 %v2894, %v2892
        %v2969 = vpack.c.b16 %v2895, %v2893
        %v2970 = vpack.c.b16 %v2898, %v2896
        %v2971 = vpack.c.b16 %v2899, %v2897
        %v2972 = vpack.c.b16 %v2902, %v2900
        %v2973 = vpack.c.b16 %v2903, %v2901
        %v2974 = vpack.c.b16 %v2906, %v2904
        %v2975 = vpack.c.b16 %v2907, %v2905
        %v2976 = vpack.c.b16 %v2910, %v2908
        %v2977 = vpack.c.b16 %v2911, %v2909
        %v2978 = vpack.c.b16 %v2914, %v2912
        %v2979 = vpack.c.b16 %v2915, %v2913
        %3044 = vmatprep.subr.bf16.mxu0 %v2917
        %3045 = vmatpush1.bf16.msra.mxu0 %v2916
        %3046 = vmatprep.subr.bf16.mxu0 %v2919
        %3047 = vmatpush1.bf16.msra.mxu0 %v2918
        %3048 = vmatprep.subr.bf16.mxu0 %v2921
        %3049 = vmatpush1.bf16.msra.mxu0 %v2920
        %3050 = vmatprep.subr.bf16.mxu0 %v2923
        %3051 = vmatpush1.bf16.msra.mxu0 %v2922
        %3052 = vmatprep.subr.bf16.mxu0 %v2925
        %3053 = vmatpush1.bf16.msra.mxu0 %v2924
        %3054 = vmatprep.subr.bf16.mxu0 %v2927
        %3055 = vmatpush1.bf16.msra.mxu0 %v2926
        %3056 = vmatprep.subr.bf16.mxu0 %v2929
        %3057 = vmatpush1.bf16.msra.mxu0 %v2928
        %3058 = vmatprep.subr.bf16.mxu0 %v2931
        %3059 = vmatpush1.bf16.msra.mxu0 %v2930
        %3060 = vmatprep.subr.bf16.mxu0 %v2933
        %3061 = vmatpush1.bf16.msra.mxu0 %v2932
        %3062 = vmatprep.subr.bf16.mxu0 %v2935
        %3063 = vmatpush1.bf16.msra.mxu0 %v2934
        %3064 = vmatprep.subr.bf16.mxu0 %v2937
        %3065 = vmatpush1.bf16.msra.mxu0 %v2936
        %3066 = vmatprep.subr.bf16.mxu0 %v2939
        %3067 = vmatpush1.bf16.msra.mxu0 %v2938
        %3068 = vmatprep.subr.bf16.mxu0 %v2941
        %3069 = vmatpush1.bf16.msra.mxu0 %v2940
        %3070 = vmatprep.subr.bf16.mxu0 %v2943
        %3071 = vmatpush1.bf16.msra.mxu0 %v2942
        %3072 = vmatprep.subr.bf16.mxu0 %v2945
        %3073 = vmatpush1.bf16.msra.mxu0 %v2944
        %3074 = vmatprep.subr.bf16.mxu0 %v2947
        %3075 = vmatpush1.bf16.msra.mxu0 %v2946
        %3076 = vmatprep.mubr.bf16.mxu0 %v2645
        %3077 = vmatmul.mubr.bf16.gmra.mrb[0].mxu0 %v2644
        %v3078 = vpop.f32.mrb[0].mxu0
        %v3079 = vadd.f32 %v2717, %v3078
        %v3080 = vpop.f32.mrb[0].mxu0
        %v3081 = vadd.f32 %v2721, %v3080
        %v3082 = vpop.f32.mrb[0].mxu0
        %v3083 = vadd.f32 %v2717, %v3082
        %v3084 = vpop.f32.mrb[0].mxu0
        %v3085 = vadd.f32 %v2721, %v3084
        %3086 = vdwg.mxu0
        %3087 = vmatprep.subr.bf16.mxu0 %v2949
        %3088 = vmatpush1.bf16.msra.mxu0 %v2948
        %3089 = vmatprep.subr.bf16.mxu0 %v2951
        %3090 = vmatpush1.bf16.msra.mxu0 %v2950
        %3091 = vmatprep.subr.bf16.mxu0 %v2953
        %3092 = vmatpush1.bf16.msra.mxu0 %v2952
        %3093 = vmatprep.subr.bf16.mxu0 %v2955
        %3094 = vmatpush1.bf16.msra.mxu0 %v2954
        %3095 = vmatprep.subr.bf16.mxu0 %v2957
        %3096 = vmatpush1.bf16.msra.mxu0 %v2956
        %3097 = vmatprep.subr.bf16.mxu0 %v2959
        %3098 = vmatpush1.bf16.msra.mxu0 %v2958
        %3099 = vmatprep.subr.bf16.mxu0 %v2961
        %3100 = vmatpush1.bf16.msra.mxu0 %v2960
        %3101 = vmatprep.subr.bf16.mxu0 %v2963
        %3102 = vmatpush1.bf16.msra.mxu0 %v2962
        %3103 = vmatprep.subr.bf16.mxu0 %v2965
        %3104 = vmatpush1.bf16.msra.mxu0 %v2964
        %3105 = vmatprep.subr.bf16.mxu0 %v2967
        %3106 = vmatpush1.bf16.msra.mxu0 %v2966
        %3107 = vmatprep.subr.bf16.mxu0 %v2969
        %3108 = vmatpush1.bf16.msra.mxu0 %v2968
        %3109 = vmatprep.subr.bf16.mxu0 %v2971
        %3110 = vmatpush1.bf16.msra.mxu0 %v2970
        %3111 = vmatprep.subr.bf16.mxu0 %v2973
        %3112 = vmatpush1.bf16.msra.mxu0 %v2972
        %3113 = vmatprep.subr.bf16.mxu0 %v2975
        %3114 = vmatpush1.bf16.msra.mxu0 %v2974
        %3115 = vmatprep.subr.bf16.mxu0 %v2977
        %3116 = vmatpush1.bf16.msra.mxu0 %v2976
        %3117 = vmatprep.subr.bf16.mxu0 %v2979
        %3118 = vmatpush1.bf16.msra.mxu0 %v2978
        %3119 = vmatprep.mubr.bf16.mxu0 %v2647
        %3120 = vmatmul.mubr.bf16.gmra.mrb[0].mxu0 %v2646
        %v3121 = vpop.f32.mrb[0].mxu0
        %v3122 = vadd.f32 %v3079, %v3121
        %v3123 = vpop.f32.mrb[0].mxu0
        %v3124 = vadd.f32 %v3081, %v3123
        %v3125 = vpop.f32.mrb[0].mxu0
        %v3126 = vadd.f32 %v3083, %v3125
        %v3127 = vpop.f32.mrb[0].mxu0
        %v3128 = vadd.f32 %v3085, %v3127
        %3129 = vdwg.mxu0
        %v3130 = vadd.f32 %v2138, %v3122
        %v3131 = vadd.f32 %v2139, %v3124
        %v3132 = vadd.f32 %v2140, %v3126
        %v3133 = vadd.f32 %v2141, %v3128
        %v3134 = vld [vmem:[%s11] sm:$0x3]
        %v3135 = vld [vmem:[%s12] sm:$0x3]
        %v3136 = vadd.f32 %v3130, %v3131
        %3137 = vadd.xlane.f32.xlu0 %v3136
        %v3138 = vpop.xlane.xlu0 %3137
        %v3139 = vadd.f32 %v3132, %v3133
        %3140 = vadd.xlane.f32.xlu0 %v3139
        %v3141 = vpop.xlane.xlu0 %3140
        %v3142 = vmul.f32 %v3138, %v2085
        %v3143 = vmul.f32 %v3141, %v2085
        %v3144 = vsub.f32 %v3130, %v3142
        %v3145 = vsub.f32 %v3131, %v3142
        %v3146 = vsub.f32 %v3132, %v3143
        %v3147 = vsub.f32 %v3133, %v3143
        %v3148 = vmul.f32 %v3144, %v3144
        %v3149 = vmul.f32 %v3145, %v3145
        %v3150 = vmul.f32 %v3146, %v3146
        %v3151 = vmul.f32 %v3147, %v3147
        %v3152 = vadd.f32 %v3148, %v3149
        %3153 = vadd.xlane.f32.xlu0 %v3152
        %v3154 = vpop.xlane.xlu0 %3153
        %v3155 = vadd.f32 %v3150, %v3151
        %3156 = vadd.xlane.f32.xlu0 %v3155
        %v3157 = vpop.xlane.xlu0 %3156
        %v3158 = vmul.f32 %v3154, %v2085
        %v3159 = vmul.f32 %v3157, %v2085
        %v3160 = vadd.f32 %v3158, 1e-05
        %v3161 = vadd.f32 %v3159, 1e-05
        %v3162 = vrsqrt.pop %v3160
        %v3163 = vrsqrt.pop %v3161
        %v3164 = vmul.f32 %v3144, %v3162
        %v3165 = vmul.f32 %v3145, %v3162
        %v3166 = vmul.f32 %v3146, %v3163
        %v3167 = vmul.f32 %v3147, %v3163
        %v3169 = vlaneseq
        %v3170 = vshrl.u32 %v3169, 7
        %v3171 = vsub.s32 0, %v3170
        %v3172 = vrot.slane %v3134, %v3171
        %v3173 = vlaneseq
        %v3174 = vshrl.u32 %v3173, 7
        %v3175 = vsub.s32 1, %v3174
        %v3176 = vrot.slane %v3134, %v3175
        %v3179 = vmul.f32 %v3164, %v3172
        %v3180 = vmul.f32 %v3165, %v3176
        %v3181 = vmul.f32 %v3166, %v3172
        %v3182 = vmul.f32 %v3167, %v3176
        %v3184 = vlaneseq
        %v3185 = vshrl.u32 %v3184, 7
        %v3186 = vsub.s32 0, %v3185
        %v3187 = vrot.slane %v3135, %v3186
        %v3188 = vlaneseq
        %v3189 = vshrl.u32 %v3188, 7
        %v3190 = vsub.s32 1, %v3189
        %v3191 = vrot.slane %v3135, %v3190
        %v3194 = vadd.f32 %v3179, %v3187
        %v3195 = vadd.f32 %v3180, %v3191
        %v3196 = vadd.f32 %v3181, %v3187
        %v3197 = vadd.f32 %v3182, %v3191
        %v3198 = vpack.c.bf16 %v3196, %v3194
        %v3199 = vpack.c.bf16 %v3197, %v3195
        %v3202 = vunpack.c.l.b16 %v3198
        %v3203 = vunpack.c.l.b16 %v3199
        %v3204 = vunpack.c.h.b16 %v3198
        %v3205 = vunpack.c.h.b16 %v3199
        %v3206 = vpack.c.b16 %v3203, %v3202
        %v3207 = vpack.c.b16 %v3205, %v3204
        %3210 = vst [vmem:[%s527] sm:$0xff] %v3206
        %3211 = vst [vmem:[%s527 + $0x8] sm:$0xff] %v3207
        %s3212 = sand.u32 %s354, 1
        %s3213 = sand.u32 %s354, 1
        %s3214 = smul.addr %s3213, 16
        %s3215 = scalar_lea.vmem [#allocation3], %s3214
        // Predicated region
        $region119: #{minimal_llm_forward.4} parent=113 // pred_check
          %p3216 = pneg %p364
        $region120: #{minimal_llm_forward.4} parent=113 // pred_check_branch
          %3218 = sbr.rel (%p3216) target = $region122
        $region121: #{minimal_llm_forward.4} parent=113 // pred_region
          %s3219 = smul.addr %s26, 2
          %s3220 = smul.addr %s3219, 4
          %s3221 = scalar_lea.vmem %s15, %s3220
          // Predicated region
          $region123: #{minimal_llm_forward.4} parent=121 // pred_check
            _
          $region124: #{minimal_llm_forward.4} parent=121 // pred_check_branch
            %3223 = sbr.rel (0) target = $region126
          $region125: #{minimal_llm_forward.4} parent=121 // pred_region
            // Predicated region
            $region127: #{minimal_llm_forward.4} parent=125 // pred_check
              _
            $region128: #{minimal_llm_forward.4} parent=125 // pred_check_branch
              %3225 = sbr.rel (0) target = $region130
            $region129: #{minimal_llm_forward.4} parent=125 // pred_region
              // Predicated region
              $region142: #{minimal_llm_forward.4} parent=129 // pred_check
                _
              $region143: #{minimal_llm_forward.4} parent=129 // pred_check_branch
                %3242 = sbr.rel (0) target = $region145
              $region144: #{minimal_llm_forward.4} parent=129 // pred_region
                loop: start=0, step=1, limit=1
                $region146: #{minimal_llm_forward.4} parent=144 // loop_pre_header
                  _
                $region147: #{minimal_llm_forward.4} parent=144 // loop_header
                  %s3244 = sphi 0, %s3248
                  %p3245 = scmp.ge.s32.totalorder %s3244, 1
                  %s3249 = sphi %s3215, %s3215
                  %s3250 = sphi %s3221, %s3221
                $region148: #{minimal_llm_forward.4} parent=144 // loop_header_branch
                  %3247 = sbr.rel (%p3245) target = $region152
                $region149: #{minimal_llm_forward.4} parent=144 // loop_body
                  %v3251 = vld [vmem:[%s3249] sm:$0xff]
                  %3252 = vst [vmem:[%s3250] sm:$0xff] %v3251
                  %v3253 = vld [vmem:[%s3249 + $0x8] sm:$0xff]
                  %3254 = vst [vmem:[%s3250 + $0x10] sm:$0xff] %v3253
                $region150: #{minimal_llm_forward.4} parent=144 // loop_footer
                  %s3248 = sadd.s32 1, %s3244
                $region151: #{minimal_llm_forward.4} parent=144 // loop_footer_branch
                  %3243 = sbr.rel target = $region147
                $region152: #{minimal_llm_forward.4} parent=144 // loop_exit
                  _
              $region145: #{minimal_llm_forward.4} parent=129 // pred_fallthru
                _
              // Predicated region
              $region153: #{minimal_llm_forward.4} parent=129 // pred_check
                _
              $region154: #{minimal_llm_forward.4} parent=129 // pred_check_branch
                %3256 = sbr.rel target = $region156
              $region155: #{minimal_llm_forward.4} parent=129 // pred_region
                _
              $region156: #{minimal_llm_forward.4} parent=129 // pred_fallthru
                _
            $region130: #{minimal_llm_forward.4} parent=125 // pred_fallthru
              _
            // Predicated region
            $region131: #{minimal_llm_forward.4} parent=125 // pred_check
              _
            $region132: #{minimal_llm_forward.4} parent=125 // pred_check_branch
              %3227 = sbr.rel target = $region134
            $region133: #{minimal_llm_forward.4} parent=125 // pred_region
              loop: start=0, step=1, limit=1
              $region135: #{minimal_llm_forward.4} parent=133 // loop_pre_header
                _
              $region136: #{minimal_llm_forward.4} parent=133 // loop_header
                %s3230 = sphi 0, %s3234
                %p3231 = scmp.ge.s32.totalorder %s3230, 1
                %s3235 = sphi %s3215, %s3215
                %s3236 = sphi %s3221, %s3221
              $region137: #{minimal_llm_forward.4} parent=133 // loop_header_branch
                %3233 = sbr.rel (%p3231) target = $region141
              $region138: #{minimal_llm_forward.4} parent=133 // loop_body
                %v3237 = vld [vmem:[%s3235] sm:$0xff]
                %3238 = vst [vmem:[%s3236] sm:$0xff] %v3237
                %v3239 = vld [vmem:[%s3235 + $0x8] sm:$0xff]
                %3240 = vst [vmem:[%s3236 + $0x10] sm:$0xff] %v3239
              $region139: #{minimal_llm_forward.4} parent=133 // loop_footer
                %s3234 = sadd.s32 1, %s3230
              $region140: #{minimal_llm_forward.4} parent=133 // loop_footer_branch
                %3229 = sbr.rel target = $region136
              $region141: #{minimal_llm_forward.4} parent=133 // loop_exit
                _
            $region134: #{minimal_llm_forward.4} parent=125 // pred_fallthru
              _
          $region126: #{minimal_llm_forward.4} parent=121 // pred_fallthru
            _
          %3257 = vnop
        $region122: #{minimal_llm_forward.4} parent=113 // pred_fallthru
          _
      $region114: #{minimal_llm_forward.4} parent=5 // pred_fallthru
        _
      %p3258 = scmp.le.s32.totalorder 2, %s21
      // Predicated region
      $region157: #{minimal_llm_forward.4} parent=5 // pred_check
        %p3259 = pneg %p3258
      $region158: #{minimal_llm_forward.4} parent=5 // pred_check_branch
        %3261 = sbr.rel (%p3259) target = $region160
      $region159: #{minimal_llm_forward.4} parent=5 // pred_region
        %s3262 = ssub.s32 %s21, 2
        // Predicated region
        $region161: #{minimal_llm_forward.4} parent=159 // pred_check
          %p3263 = pneg %p370
        $region162: #{minimal_llm_forward.4} parent=159 // pred_check_branch
          %3265 = sbr.rel (%p3263) target = $region164
        $region163: #{minimal_llm_forward.4} parent=159 // pred_region
          %s3266 = sand.u32 %s355, 1
          %s3267 = sand.u32 %s355, 1
          %s3268 = smul.addr %s3267, 16
          %s3269 = scalar_lea.vmem [#allocation3], %s3268
        $region164: #{minimal_llm_forward.4} parent=159 // pred_fallthru
          _
      $region160: #{minimal_llm_forward.4} parent=5 // pred_fallthru
        _
    $region6: #{minimal_llm_forward.4} parent=1 // loop_footer
      %s25 = sadd.s32 1, %s21
    $region7: #{minimal_llm_forward.4} parent=1 // loop_footer_branch
      %20 = sbr.rel target = $region3
    $region8: #{minimal_llm_forward.4} parent=1 // loop_exit
      _

</llo_original>
